<compile_context>
chip_gen: v5e
topology: v5e:2x2
jax: 0.10.0
libtpu: 0.0.40
codegen_flags: <defaults>
</compile_context>

<pallas_src>
import functools

import numpy as np

import jax
import jax.numpy as jnp
from jax import lax
from jax.experimental import pallas as pl
from jax.experimental.pallas import tpu as pltpu

C_MID = 512          # EfficientHeadV2 conv output channels
BN_EPS = 1e-5        # nn.BatchNorm2d default eps
GEM_P = 3.0          # GeM p parameter (Parameter initialized to 3)
GEM_EPS = 1e-6       # GeM eps


# ---------------------------------------------------------------------------
# Parameters
# ---------------------------------------------------------------------------
def init_params(key, c_in, num_classes):
    """PyTorch-equivalent (f32) parameters for EfficientHeadV2."""
    ks = jax.random.split(key, 8)
    scale_c = 1.0 / jnp.sqrt(jnp.float32(c_in * 9))
    scale_f = 1.0 / jnp.sqrt(jnp.float32(C_MID))
    # conv weight in PyTorch layout (C_out, C_in, 3, 3) -> (9, C_in, C_out)
    conv_w_pt = scale_c * jax.random.normal(ks[0], (C_MID, c_in, 3, 3), jnp.float32)
    conv_w = jnp.transpose(conv_w_pt, (2, 3, 1, 0)).reshape(9, c_in, C_MID)
    conv_b = scale_c * jax.random.normal(ks[1], (1, C_MID), jnp.float32)
    bn_gamma = 1.0 + 0.1 * jax.random.normal(ks[2], (1, C_MID), jnp.float32)
    bn_beta = 0.1 * jax.random.normal(ks[3], (1, C_MID), jnp.float32)
    bn_mean = 0.1 * jax.random.normal(ks[4], (1, C_MID), jnp.float32)
    bn_var = 0.5 + jax.random.uniform(ks[5], (1, C_MID), jnp.float32)
    # fc weight in PyTorch layout (num_classes, 512) -> (512, num_classes)
    fc_w_pt = scale_f * jax.random.normal(ks[6], (num_classes, C_MID), jnp.float32)
    fc_w = jnp.transpose(fc_w_pt, (1, 0))
    fc_b = scale_f * jax.random.normal(ks[7], (1, num_classes), jnp.float32)
    return dict(conv_w=conv_w, conv_b=conv_b, bn_gamma=bn_gamma, bn_beta=bn_beta,
                bn_mean=bn_mean, bn_var=bn_var, fc_w=fc_w, fc_b=fc_b)


def fold_params(params):
    """Fold eval-mode BatchNorm into the conv (exact), cast conv weights to
    bf16, and pad the FC to 128 lane-dense output columns."""
    s = params["bn_gamma"] * lax.rsqrt(params["bn_var"] + BN_EPS)     # (1, 512)
    conv_w_fused = params["conv_w"] * s                               # (9, Cin, 512)
    conv_b_fused = (params["conv_b"] - params["bn_mean"]) * s + params["bn_beta"]
    fc_w = params["fc_w"]
    fc_b = params["fc_b"]
    nc = fc_w.shape[1]
    nc_pad = max(128, ((nc + 127) // 128) * 128)
    fc_w = jnp.pad(fc_w, ((0, 0), (0, nc_pad - nc)))
    fc_b = jnp.pad(fc_b, ((0, 0), (0, nc_pad - nc)))
    return dict(
        conv_w=conv_w_fused.astype(jnp.bfloat16),      # resident MXU operand
        conv_b=conv_b_fused.astype(jnp.float32),       # f32 bias (conv + BN)
        fc_w=fc_w.astype(jnp.float32),                 # (512, nc_pad)
        fc_b=fc_b.astype(jnp.float32),                 # (1, nc_pad)
    )


# ---------------------------------------------------------------------------
# Kernel
# ---------------------------------------------------------------------------
def _mish_fast(x):
    """x * tanh(softplus(x)) with ONE exp (exact identity):
       tanh(log1p(e^x)) = (e^2x + 2 e^x) / (e^2x + 2 e^x + 2).
       Matches PyTorch's softplus threshold=20 behaviour via the where-guard."""
    t = jnp.exp(jnp.minimum(x, 20.0))
    num = t * (t + 2.0)
    ratio = num / (num + 2.0)
    return jnp.where(x > 20.0, x, x * ratio)


def _head_kernel(x_ref, wc_ref, bc_ref, mask_ref, wfc_ref, bfc_ref, o_ref,
                 acc_ref, *, W):
    k = pl.program_id(1)                     # Cin-chunk (reduction) axis

    @pl.when(k == 0)
    def _():
        acc_ref[...] = jnp.zeros_like(acc_ref)

    R = acc_ref.shape[0]                     # rows covering all valid positions

    # Mish in f32, cast once to bf16 before the 9 tap slices.
    m = _mish_fast(x_ref[...].astype(jnp.float32)).astype(jnp.bfloat16)

    # 3x3 valid conv as 9 shifted MXU matmuls on the flattened (rows, ck)
    # block: output row p (= b*H*W + y*W + x) needs input row p + dy*W + dx.
    # Each tap accumulates directly into the VMEM accumulator (no big temp).
    for dy in range(3):
        for dx in range(3):
            tap = dy * 3 + dx
            off = dy * W + dx
            acc_ref[...] += jnp.dot(m[off:off + R], wc_ref[tap],
                                    preferred_element_type=jnp.float32)

    @pl.when(k == pl.num_programs(1) - 1)
    def _():
        # conv bias (already includes the folded eval-mode BatchNorm affine)
        y = acc_ref[...] + bc_ref[...]                       # (R, 512) f32
        # GeM p=3: clamp(eps) -> cube -> masked spatial mean -> cube root.
        # The precomputed (bt, R) mask matmul selects each image's Ho*Wo valid
        # conv positions (dropping edge / batch-padding rows) and folds in the
        # 1/(Ho*Wo) mean.
        y = jnp.maximum(y, GEM_EPS)
        cubes = (y * y) * y
        pooled = jnp.dot(mask_ref[...], cubes,
                         preferred_element_type=jnp.float32)  # (bt, 512)
        feat = jnp.exp(jnp.log(pooled) * (1.0 / GEM_P))
        # Flatten (already (bt, 512)) + Linear; output padded to 128 lanes.
        o_ref[...] = (jnp.dot(feat, wfc_ref[...],
                              preferred_element_type=jnp.float32)
                      + bfc_ref[...])


# ---------------------------------------------------------------------------
# Wrapper
# ---------------------------------------------------------------------------
def _pick_cin_chunk(c_in, ck_max):
    """Largest multiple of 128 (<= ck_max) dividing c_in; else full c_in."""
    if c_in % 128 == 0 and ck_max >= 128:
        start = min(ck_max, c_in)
        start -= start % 128
        for cand in range(start, 0, -128):
            if c_in % cand == 0:
                return cand
    return c_in


def efficient_head(x_nhwc, fused, num_classes, *, b_tile=32, ck_max=2560):
    N, H, W, Cin = x_nhwc.shape
    Ho, Wo = H - 2, W - 2
    HW = H * W
    nc_pad = fused["fc_w"].shape[1]

    # Batch tile: one tile if the whole batch fits, otherwise a multiple of 8
    # (keeps the row / output block shapes (8,128)-tileable).
    if N <= b_tile:
        bt = N
    else:
        bt = max(8, (b_tile // 8) * 8)
    n_pad = (-N) % bt
    if n_pad:
        x_nhwc = jnp.pad(x_nhwc, ((0, n_pad), (0, 0), (0, 0), (0, 0)))
    n_total = N + n_pad
    n_tiles = n_total // bt

    ck = _pick_cin_chunk(Cin, ck_max)
    nk = Cin // ck

    rows_blk = bt * HW
    R = rows_blk - (2 * W + 2)          # rows covering every valid conv output

    # Flatten batch+spatial into the sublane axis once, outside the kernel.
    x2 = x_nhwc.reshape(n_total * HW, Cin)

    # GeM pooling mask: (bt, R); mask[b, p] = 1/(Ho*Wo) iff flat position p is
    # a valid 3x3-conv output position of image b within this batch tile.
    p = np.arange(R)
    rem = p % HW
    valid = (rem // W < Ho) & (rem % W < Wo)
    sel = (p // HW)[None, :] == np.arange(bt)[:, None]
    pool_mask = jnp.asarray((sel & valid[None, :]).astype(np.float32)
                            / float(Ho * Wo))

    # Conv weights: resident VMEM block.  With nk == 1 the index never changes
    # -> fetched from HBM exactly once; single-buffered to save VMEM.
    if nk == 1:
        wc_spec = pl.BlockSpec((9, ck, C_MID), lambda n, k: (0, 0, 0),
                               pipeline_mode=pl.Buffered(1))
    else:
        wc_spec = pl.BlockSpec((9, ck, C_MID), lambda n, k: (0, k, 0))

    # VMEM budget (block buffers + compute temps), clipped to the chip's VMEM.
    itemsize = x2.dtype.itemsize
    need = (2 * rows_blk * ck * itemsize              # x blocks (double-buffered)
            + (1 if nk == 1 else 2) * 9 * ck * C_MID * 2
            + R * C_MID * 4                           # accumulator scratch
            + rows_blk * ck * (4 + 2)                 # Mish f32 temp + bf16 copy
            + 2 * R * C_MID * 4                       # bias-add / cubes temps
            + 2 * (bt * R + C_MID * nc_pad + bt * nc_pad) * 4
            + (8 << 20))                              # headroom
    try:
        cap = int(pltpu.get_tpu_info().vmem_capacity_bytes)
    except Exception:
        cap = 64 << 20
    vmem_limit = int(min(max(need, 32 << 20), max(cap - (8 << 20), 32 << 20)))

    kernel = functools.partial(_head_kernel, W=W)
    out = pl.pallas_call(
        kernel,
        out_shape=jax.ShapeDtypeStruct((n_total, nc_pad), jnp.float32),
        grid_spec=pltpu.PrefetchScalarGridSpec(
            num_scalar_prefetch=0,
            grid=(n_tiles, nk),                       # (batch tiles, Cin chunks)
            in_specs=[
                pl.BlockSpec((rows_blk, ck), lambda n, k: (n, k)),
                wc_spec,
                pl.BlockSpec((1, C_MID), lambda n, k: (0, 0)),
                pl.BlockSpec((bt, R), lambda n, k: (0, 0)),
                pl.BlockSpec((C_MID, nc_pad), lambda n, k: (0, 0)),
                pl.BlockSpec((1, nc_pad), lambda n, k: (0, 0)),
            ],
            out_specs=pl.BlockSpec((bt, nc_pad), lambda n, k: (n, 0)),
            scratch_shapes=[pltpu.VMEM((R, C_MID), jnp.float32)],
        ),
        compiler_params=pltpu.CompilerParams(
            dimension_semantics=("parallel", "arbitrary"),
            vmem_limit_bytes=vmem_limit,
        ),
    )(x2, fused["conv_w"], fused["conv_b"], pool_mask,
      fused["fc_w"], fused["fc_b"])
    return out[:N, :num_classes]


# ---------------------------------------------------------------------------
# Pure-JAX reference (mirror of the PyTorch module, f32, no folding)
# ---------------------------------------------------------------------------
def _mish_ref(x):
    sp = jnp.where(x > 20.0, x, jnp.log1p(jnp.exp(jnp.minimum(x, 20.0))))
    return x * jnp.tanh(sp)


def reference_head(x_nhwc, params):
    N, H, W, Cin = x_nhwc.shape
    Ho, Wo = H - 2, W - 2
    m = _mish_ref(x_nhwc)
    acc = jnp.zeros((N, Ho * Wo, C_MID), jnp.float32)
    for t in range(9):
        dy, dx = t // 3, t % 3
        patch = m[:, dy:dy + Ho, dx:dx + Wo, :].reshape(N, Ho * Wo, Cin)
        acc = acc + jnp.einsum("npc,co->npo", patch, params["conv_w"][t])
    acc = acc + params["conv_b"][None]
    inv_std = lax.rsqrt(params["bn_var"] + BN_EPS)
    y = (acc - params["bn_mean"][None]) * inv_std[None] * params["bn_gamma"][None] \
        + params["bn_beta"][None]
    y = jnp.maximum(y, GEM_EPS)
    pooled = jnp.mean(y ** 3, axis=1)                       # (N, 512)
    feat = pooled ** (1.0 / GEM_P)
    return feat @ params["fc_w"] + params["fc_b"]


if __name__ == "__main__":
    key = jax.random.PRNGKey(0)
    k_x, k_p = jax.random.split(key)

    # Small synthetic shapes (real model: Cin = 1280 for efficientnet-b0).
    N, Cin, H, W = 2, 128, 10, 10
    num_classes = 8

    x_nchw = jax.random.normal(k_x, (N, Cin, H, W), jnp.float32)   # PyTorch layout
    params = init_params(k_p, Cin, num_classes)
    fused = fold_params(params)

    x_nhwc = jnp.transpose(x_nchw, (0, 2, 3, 1))                   # kernel layout
    out = efficient_head(x_nhwc, fused, num_classes)
    out = jax.block_until_ready(out)

    ref = reference_head(x_nhwc, params)
    assert out.shape == (N, num_classes), out.shape
    # bf16 MXU conv operands -> looser tolerance than pure f32.
    assert jnp.allclose(out, ref, rtol=2e-2, atol=2e-2), \
        float(jnp.max(jnp.abs(out - ref)))
    print("KERNEL_OK")
</pallas_src>

<mosaic_0001>
module attributes {stable_mosaic.version = 11 : i64} {
  func.func @_head_kernel(%arg0: i32, %arg1: i32, %arg2: memref<200x128xf32, #tpu.memory_space<vmem>>, %arg3: memref<9x128x512xbf16, #tpu.memory_space<vmem>>, %arg4: memref<1x512xf32, #tpu.memory_space<vmem>>, %arg5: memref<2x178xf32, #tpu.memory_space<vmem>>, %arg6: memref<512x128xf32, #tpu.memory_space<vmem>>, %arg7: memref<1x128xf32, #tpu.memory_space<vmem>>, %arg8: memref<2x128xf32, #tpu.memory_space<vmem>>, %arg9: memref<178x512xf32, #tpu.memory_space<vmem>>) attributes {dimension_semantics = [#tpu.dimension_semantics<parallel>, #tpu.dimension_semantics<arbitrary>], iteration_bounds = array<i64: 1, 1>, scalar_prefetch = 0 : i64, scratch_operands = 1 : i64, tpu.core_type = #tpu.core_type<tc>, window_params = [{transform_indices = @transform_0, window_bounds = array<i64: 200, 128>}, {pipeline_mode = #tpu.pipeline_mode<synchronous>, transform_indices = @transform_1, window_bounds = array<i64: 9, 128, 512>}, {pipeline_mode = #tpu.pipeline_mode<synchronous>, transform_indices = @transform_2, window_bounds = array<i64: 1, 512>}, {pipeline_mode = #tpu.pipeline_mode<synchronous>, transform_indices = @transform_3, window_bounds = array<i64: 2, 178>}, {pipeline_mode = #tpu.pipeline_mode<synchronous>, transform_indices = @transform_4, window_bounds = array<i64: 512, 128>}, {pipeline_mode = #tpu.pipeline_mode<synchronous>, transform_indices = @transform_5, window_bounds = array<i64: 1, 128>}, {transform_indices = @transform_6, window_bounds = array<i64: 2, 128>}]} {
    %c0_i32 = arith.constant 0 : i32
    %0 = arith.cmpi eq, %arg1, %c0_i32 : i32
    %1 = arith.extui %0 : i1 to i32
    %c0_i32_0 = arith.constant 0 : i32
    %2 = arith.cmpi ne, %1, %c0_i32_0 : i32
    scf.if %2 {
      %cst_71 = arith.constant 0.000000e+00 : f32
      %84 = vector.broadcast %cst_71 : f32 to vector<178x512xf32>
      %c0_72 = arith.constant 0 : index
      %c0_73 = arith.constant 0 : index
      %85 = vector.load %arg9[%c0_72, %c0_73] : memref<178x512xf32, #tpu.memory_space<vmem>>, vector<178x512xf32>
      tpu.vector_store %arg9[%c0_72, %c0_73], %84 {strides = array<i32>} : memref<178x512xf32, #tpu.memory_space<vmem>>, vector<178x512xf32>,
    } else {
    }
    %c0 = arith.constant 0 : index
    %c0_1 = arith.constant 0 : index
    %3 = vector.load %arg2[%c0, %c0_1] : memref<200x128xf32, #tpu.memory_space<vmem>>, vector<200x128xf32>
    %cst = arith.constant 2.000000e+01 : f32
    %4 = vector.broadcast %cst : f32 to vector<200x128xf32>
    %5 = arith.minimumf %3, %4 : vector<200x128xf32>
    %6 = math.exp %5 : vector<200x128xf32>
    %cst_2 = arith.constant 2.000000e+00 : f32
    %7 = vector.broadcast %cst_2 : f32 to vector<200x128xf32>
    %8 = arith.addf %6, %7 : vector<200x128xf32>
    %9 = arith.mulf %6, %8 : vector<200x128xf32>
    %cst_3 = arith.constant 2.000000e+00 : f32
    %10 = vector.broadcast %cst_3 : f32 to vector<200x128xf32>
    %11 = arith.addf %9, %10 : vector<200x128xf32>
    %12 = arith.divf %9, %11 : vector<200x128xf32>
    %cst_4 = arith.constant 2.000000e+01 : f32
    %13 = vector.broadcast %cst_4 : f32 to vector<200x128xf32>
    %14 = arith.cmpf ogt, %3, %13 : vector<200x128xf32>
    %15 = arith.mulf %3, %12 : vector<200x128xf32>
    %16 = arith.select %14, %3, %15 : vector<200x128xi1>, vector<200x128xf32>
    %17 = arith.truncf %16 : vector<200x128xf32> to vector<200x128xbf16>
    %c0_5 = arith.constant 0 : index
    %c0_6 = arith.constant 0 : index
    %18 = vector.load %arg9[%c0_5, %c0_6] : memref<178x512xf32, #tpu.memory_space<vmem>>, vector<178x512xf32>
    %19 = vector.extract_strided_slice %17 {offsets = [0, 0], sizes = [178, 128], strides = [1, 1]} : vector<200x128xbf16> to vector<178x128xbf16>
    %c0_7 = arith.constant 0 : index
    %c0_8 = arith.constant 0 : index
    %c0_9 = arith.constant 0 : index
    %20 = vector.load %arg3[%c0_7, %c0_8, %c0_9] : memref<9x128x512xbf16, #tpu.memory_space<vmem>>, vector<1x128x512xbf16>
    %21 = vector.shape_cast %20 : vector<1x128x512xbf16> to vector<128x512xbf16>
    %cst_10 = arith.constant dense<0.000000e+00> : vector<178x512xf32>
    %22 = tpu.matmul %19, %21, %cst_10 {dimension_numbers = #tpu.dot_dimension_numbers<[1], [0], [0], [1], [0, 0, 1, 1], [], []>} : vector<178x128xbf16>, vector<128x512xbf16>, vector<178x512xf32> -> vector<178x512xf32>
    %23 = arith.addf %18, %22 : vector<178x512xf32>
    %c0_11 = arith.constant 0 : index
    %c0_12 = arith.constant 0 : index
    %24 = vector.load %arg9[%c0_11, %c0_12] : memref<178x512xf32, #tpu.memory_space<vmem>>, vector<178x512xf32>
    tpu.vector_store %arg9[%c0_11, %c0_12], %23 {strides = array<i32>} : memref<178x512xf32, #tpu.memory_space<vmem>>, vector<178x512xf32>,
    %c0_13 = arith.constant 0 : index
    %c0_14 = arith.constant 0 : index
    %25 = vector.load %arg9[%c0_13, %c0_14] : memref<178x512xf32, #tpu.memory_space<vmem>>, vector<178x512xf32>
    %26 = vector.extract_strided_slice %17 {offsets = [1, 0], sizes = [178, 128], strides = [1, 1]} : vector<200x128xbf16> to vector<178x128xbf16>
    %c1 = arith.constant 1 : index
    %c0_15 = arith.constant 0 : index
    %c0_16 = arith.constant 0 : index
    %27 = vector.load %arg3[%c1, %c0_15, %c0_16] : memref<9x128x512xbf16, #tpu.memory_space<vmem>>, vector<1x128x512xbf16>
    %28 = vector.shape_cast %27 : vector<1x128x512xbf16> to vector<128x512xbf16>
    %cst_17 = arith.constant dense<0.000000e+00> : vector<178x512xf32>
    %29 = tpu.matmul %26, %28, %cst_17 {dimension_numbers = #tpu.dot_dimension_numbers<[1], [0], [0], [1], [0, 0, 1, 1], [], []>} : vector<178x128xbf16>, vector<128x512xbf16>, vector<178x512xf32> -> vector<178x512xf32>
    %30 = arith.addf %25, %29 : vector<178x512xf32>
    %c0_18 = arith.constant 0 : index
    %c0_19 = arith.constant 0 : index
    %31 = vector.load %arg9[%c0_18, %c0_19] : memref<178x512xf32, #tpu.memory_space<vmem>>, vector<178x512xf32>
    tpu.vector_store %arg9[%c0_18, %c0_19], %30 {strides = array<i32>} : memref<178x512xf32, #tpu.memory_space<vmem>>, vector<178x512xf32>,
    %c0_20 = arith.constant 0 : index
    %c0_21 = arith.constant 0 : index
    %32 = vector.load %arg9[%c0_20, %c0_21] : memref<178x512xf32, #tpu.memory_space<vmem>>, vector<178x512xf32>
    %33 = vector.extract_strided_slice %17 {offsets = [2, 0], sizes = [178, 128], strides = [1, 1]} : vector<200x128xbf16> to vector<178x128xbf16>
    %c2 = arith.constant 2 : index
    %c0_22 = arith.constant 0 : index
    %c0_23 = arith.constant 0 : index
    %34 = vector.load %arg3[%c2, %c0_22, %c0_23] : memref<9x128x512xbf16, #tpu.memory_space<vmem>>, vector<1x128x512xbf16>
    %35 = vector.shape_cast %34 : vector<1x128x512xbf16> to vector<128x512xbf16>
    %cst_24 = arith.constant dense<0.000000e+00> : vector<178x512xf32>
    %36 = tpu.matmul %33, %35, %cst_24 {dimension_numbers = #tpu.dot_dimension_numbers<[1], [0], [0], [1], [0, 0, 1, 1], [], []>} : vector<178x128xbf16>, vector<128x512xbf16>, vector<178x512xf32> -> vector<178x512xf32>
    %37 = arith.addf %32, %36 : vector<178x512xf32>
    %c0_25 = arith.constant 0 : index
    %c0_26 = arith.constant 0 : index
    %38 = vector.load %arg9[%c0_25, %c0_26] : memref<178x512xf32, #tpu.memory_space<vmem>>, vector<178x512xf32>
    tpu.vector_store %arg9[%c0_25, %c0_26], %37 {strides = array<i32>} : memref<178x512xf32, #tpu.memory_space<vmem>>, vector<178x512xf32>,
    %c0_27 = arith.constant 0 : index
    %c0_28 = arith.constant 0 : index
    %39 = vector.load %arg9[%c0_27, %c0_28] : memref<178x512xf32, #tpu.memory_space<vmem>>, vector<178x512xf32>
    %40 = vector.extract_strided_slice %17 {offsets = [10, 0], sizes = [178, 128], strides = [1, 1]} : vector<200x128xbf16> to vector<178x128xbf16>
    %c3 = arith.constant 3 : index
    %c0_29 = arith.constant 0 : index
    %c0_30 = arith.constant 0 : index
    %41 = vector.load %arg3[%c3, %c0_29, %c0_30] : memref<9x128x512xbf16, #tpu.memory_space<vmem>>, vector<1x128x512xbf16>
    %42 = vector.shape_cast %41 : vector<1x128x512xbf16> to vector<128x512xbf16>
    %cst_31 = arith.constant dense<0.000000e+00> : vector<178x512xf32>
    %43 = tpu.matmul %40, %42, %cst_31 {dimension_numbers = #tpu.dot_dimension_numbers<[1], [0], [0], [1], [0, 0, 1, 1], [], []>} : vector<178x128xbf16>, vector<128x512xbf16>, vector<178x512xf32> -> vector<178x512xf32>
    %44 = arith.addf %39, %43 : vector<178x512xf32>
    %c0_32 = arith.constant 0 : index
    %c0_33 = arith.constant 0 : index
    %45 = vector.load %arg9[%c0_32, %c0_33] : memref<178x512xf32, #tpu.memory_space<vmem>>, vector<178x512xf32>
    tpu.vector_store %arg9[%c0_32, %c0_33], %44 {strides = array<i32>} : memref<178x512xf32, #tpu.memory_space<vmem>>, vector<178x512xf32>,
    %c0_34 = arith.constant 0 : index
    %c0_35 = arith.constant 0 : index
    %46 = vector.load %arg9[%c0_34, %c0_35] : memref<178x512xf32, #tpu.memory_space<vmem>>, vector<178x512xf32>
    %47 = vector.extract_strided_slice %17 {offsets = [11, 0], sizes = [178, 128], strides = [1, 1]} : vector<200x128xbf16> to vector<178x128xbf16>
    %c4 = arith.constant 4 : index
    %c0_36 = arith.constant 0 : index
    %c0_37 = arith.constant 0 : index
    %48 = vector.load %arg3[%c4, %c0_36, %c0_37] : memref<9x128x512xbf16, #tpu.memory_space<vmem>>, vector<1x128x512xbf16>
    %49 = vector.shape_cast %48 : vector<1x128x512xbf16> to vector<128x512xbf16>
    %cst_38 = arith.constant dense<0.000000e+00> : vector<178x512xf32>
    %50 = tpu.matmul %47, %49, %cst_38 {dimension_numbers = #tpu.dot_dimension_numbers<[1], [0], [0], [1], [0, 0, 1, 1], [], []>} : vector<178x128xbf16>, vector<128x512xbf16>, vector<178x512xf32> -> vector<178x512xf32>
    %51 = arith.addf %46, %50 : vector<178x512xf32>
    %c0_39 = arith.constant 0 : index
    %c0_40 = arith.constant 0 : index
    %52 = vector.load %arg9[%c0_39, %c0_40] : memref<178x512xf32, #tpu.memory_space<vmem>>, vector<178x512xf32>
    tpu.vector_store %arg9[%c0_39, %c0_40], %51 {strides = array<i32>} : memref<178x512xf32, #tpu.memory_space<vmem>>, vector<178x512xf32>,
    %c0_41 = arith.constant 0 : index
    %c0_42 = arith.constant 0 : index
    %53 = vector.load %arg9[%c0_41, %c0_42] : memref<178x512xf32, #tpu.memory_space<vmem>>, vector<178x512xf32>
    %54 = vector.extract_strided_slice %17 {offsets = [12, 0], sizes = [178, 128], strides = [1, 1]} : vector<200x128xbf16> to vector<178x128xbf16>
    %c5 = arith.constant 5 : index
    %c0_43 = arith.constant 0 : index
    %c0_44 = arith.constant 0 : index
    %55 = vector.load %arg3[%c5, %c0_43, %c0_44] : memref<9x128x512xbf16, #tpu.memory_space<vmem>>, vector<1x128x512xbf16>
    %56 = vector.shape_cast %55 : vector<1x128x512xbf16> to vector<128x512xbf16>
    %cst_45 = arith.constant dense<0.000000e+00> : vector<178x512xf32>
    %57 = tpu.matmul %54, %56, %cst_45 {dimension_numbers = #tpu.dot_dimension_numbers<[1], [0], [0], [1], [0, 0, 1, 1], [], []>} : vector<178x128xbf16>, vector<128x512xbf16>, vector<178x512xf32> -> vector<178x512xf32>
    %58 = arith.addf %53, %57 : vector<178x512xf32>
    %c0_46 = arith.constant 0 : index
    %c0_47 = arith.constant 0 : index
    %59 = vector.load %arg9[%c0_46, %c0_47] : memref<178x512xf32, #tpu.memory_space<vmem>>, vector<178x512xf32>
    tpu.vector_store %arg9[%c0_46, %c0_47], %58 {strides = array<i32>} : memref<178x512xf32, #tpu.memory_space<vmem>>, vector<178x512xf32>,
    %c0_48 = arith.constant 0 : index
    %c0_49 = arith.constant 0 : index
    %60 = vector.load %arg9[%c0_48, %c0_49] : memref<178x512xf32, #tpu.memory_space<vmem>>, vector<178x512xf32>
    %61 = vector.extract_strided_slice %17 {offsets = [20, 0], sizes = [178, 128], strides = [1, 1]} : vector<200x128xbf16> to vector<178x128xbf16>
    %c6 = arith.constant 6 : index
    %c0_50 = arith.constant 0 : index
    %c0_51 = arith.constant 0 : index
    %62 = vector.load %arg3[%c6, %c0_50, %c0_51] : memref<9x128x512xbf16, #tpu.memory_space<vmem>>, vector<1x128x512xbf16>
    %63 = vector.shape_cast %62 : vector<1x128x512xbf16> to vector<128x512xbf16>
    %cst_52 = arith.constant dense<0.000000e+00> : vector<178x512xf32>
    %64 = tpu.matmul %61, %63, %cst_52 {dimension_numbers = #tpu.dot_dimension_numbers<[1], [0], [0], [1], [0, 0, 1, 1], [], []>} : vector<178x128xbf16>, vector<128x512xbf16>, vector<178x512xf32> -> vector<178x512xf32>
    %65 = arith.addf %60, %64 : vector<178x512xf32>
    %c0_53 = arith.constant 0 : index
    %c0_54 = arith.constant 0 : index
    %66 = vector.load %arg9[%c0_53, %c0_54] : memref<178x512xf32, #tpu.memory_space<vmem>>, vector<178x512xf32>
    tpu.vector_store %arg9[%c0_53, %c0_54], %65 {strides = array<i32>} : memref<178x512xf32, #tpu.memory_space<vmem>>, vector<178x512xf32>,
    %c0_55 = arith.constant 0 : index
    %c0_56 = arith.constant 0 : index
    %67 = vector.load %arg9[%c0_55, %c0_56] : memref<178x512xf32, #tpu.memory_space<vmem>>, vector<178x512xf32>
    %68 = vector.extract_strided_slice %17 {offsets = [21, 0], sizes = [178, 128], strides = [1, 1]} : vector<200x128xbf16> to vector<178x128xbf16>
    %c7 = arith.constant 7 : index
    %c0_57 = arith.constant 0 : index
    %c0_58 = arith.constant 0 : index
    %69 = vector.load %arg3[%c7, %c0_57, %c0_58] : memref<9x128x512xbf16, #tpu.memory_space<vmem>>, vector<1x128x512xbf16>
    %70 = vector.shape_cast %69 : vector<1x128x512xbf16> to vector<128x512xbf16>
    %cst_59 = arith.constant dense<0.000000e+00> : vector<178x512xf32>
    %71 = tpu.matmul %68, %70, %cst_59 {dimension_numbers = #tpu.dot_dimension_numbers<[1], [0], [0], [1], [0, 0, 1, 1], [], []>} : vector<178x128xbf16>, vector<128x512xbf16>, vector<178x512xf32> -> vector<178x512xf32>
    %72 = arith.addf %67, %71 : vector<178x512xf32>
    %c0_60 = arith.constant 0 : index
    %c0_61 = arith.constant 0 : index
    %73 = vector.load %arg9[%c0_60, %c0_61] : memref<178x512xf32, #tpu.memory_space<vmem>>, vector<178x512xf32>
    tpu.vector_store %arg9[%c0_60, %c0_61], %72 {strides = array<i32>} : memref<178x512xf32, #tpu.memory_space<vmem>>, vector<178x512xf32>,
    %c0_62 = arith.constant 0 : index
    %c0_63 = arith.constant 0 : index
    %74 = vector.load %arg9[%c0_62, %c0_63] : memref<178x512xf32, #tpu.memory_space<vmem>>, vector<178x512xf32>
    %75 = vector.extract_strided_slice %17 {offsets = [22, 0], sizes = [178, 128], strides = [1, 1]} : vector<200x128xbf16> to vector<178x128xbf16>
    %c8 = arith.constant 8 : index
    %c0_64 = arith.constant 0 : index
    %c0_65 = arith.constant 0 : index
    %76 = vector.load %arg3[%c8, %c0_64, %c0_65] : memref<9x128x512xbf16, #tpu.memory_space<vmem>>, vector<1x128x512xbf16>
    %77 = vector.shape_cast %76 : vector<1x128x512xbf16> to vector<128x512xbf16>
    %cst_66 = arith.constant dense<0.000000e+00> : vector<178x512xf32>
    %78 = tpu.matmul %75, %77, %cst_66 {dimension_numbers = #tpu.dot_dimension_numbers<[1], [0], [0], [1], [0, 0, 1, 1], [], []>} : vector<178x128xbf16>, vector<128x512xbf16>, vector<178x512xf32> -> vector<178x512xf32>
    %79 = arith.addf %74, %78 : vector<178x512xf32>
    %c0_67 = arith.constant 0 : index
    %c0_68 = arith.constant 0 : index
    %80 = vector.load %arg9[%c0_67, %c0_68] : memref<178x512xf32, #tpu.memory_space<vmem>>, vector<178x512xf32>
    tpu.vector_store %arg9[%c0_67, %c0_68], %79 {strides = array<i32>} : memref<178x512xf32, #tpu.memory_space<vmem>>, vector<178x512xf32>,
    %c0_i32_69 = arith.constant 0 : i32
    %81 = arith.cmpi eq, %arg1, %c0_i32_69 : i32
    %82 = arith.extui %81 : i1 to i32
    %c0_i32_70 = arith.constant 0 : i32
    %83 = arith.cmpi ne, %82, %c0_i32_70 : i32
    scf.if %83 {
      %c0_71 = arith.constant 0 : index
      %c0_72 = arith.constant 0 : index
      %84 = vector.load %arg9[%c0_71, %c0_72] : memref<178x512xf32, #tpu.memory_space<vmem>>, vector<178x512xf32>
      %c0_73 = arith.constant 0 : index
      %c0_74 = arith.constant 0 : index
      %85 = vector.load %arg4[%c0_73, %c0_74] : memref<1x512xf32, #tpu.memory_space<vmem>>, vector<1x512xf32>
      %86 = vector.broadcast %85 : vector<1x512xf32> to vector<178x512xf32>
      %87 = arith.addf %84, %86 : vector<178x512xf32>
      %cst_75 = arith.constant 9.99999997E-7 : f32
      %88 = vector.broadcast %cst_75 : f32 to vector<178x512xf32>
      %89 = arith.maximumf %87, %88 : vector<178x512xf32>
      %90 = arith.mulf %89, %89 : vector<178x512xf32>
      %91 = arith.mulf %90, %89 : vector<178x512xf32>
      %c0_76 = arith.constant 0 : index
      %c0_77 = arith.constant 0 : index
      %92 = vector.load %arg5[%c0_76, %c0_77] : memref<2x178xf32, #tpu.memory_space<vmem>>, vector<2x178xf32>
      %cst_78 = arith.constant dense<0.000000e+00> : vector<2x512xf32>
      %93 = tpu.matmul %92, %91, %cst_78 {dimension_numbers = #tpu.dot_dimension_numbers<[1], [0], [0], [1], [0, 0, 1, 1], [], []>} : vector<2x178xf32>, vector<178x512xf32>, vector<2x512xf32> -> vector<2x512xf32>
      %94 = math.log %93 : vector<2x512xf32>
      %cst_79 = arith.constant 0.333333343 : f32
      %95 = vector.broadcast %cst_79 : f32 to vector<2x512xf32>
      %96 = arith.mulf %94, %95 : vector<2x512xf32>
      %97 = math.exp %96 : vector<2x512xf32>
      %c0_80 = arith.constant 0 : index
      %c0_81 = arith.constant 0 : index
      %98 = vector.load %arg6[%c0_80, %c0_81] : memref<512x128xf32, #tpu.memory_space<vmem>>, vector<512x128xf32>
      %cst_82 = arith.constant dense<0.000000e+00> : vector<2x128xf32>
      %99 = tpu.matmul %97, %98, %cst_82 {dimension_numbers = #tpu.dot_dimension_numbers<[1], [0], [0], [1], [0, 0, 1, 1], [], []>} : vector<2x512xf32>, vector<512x128xf32>, vector<2x128xf32> -> vector<2x128xf32>
      %c0_83 = arith.constant 0 : index
      %c0_84 = arith.constant 0 : index
      %100 = vector.load %arg7[%c0_83, %c0_84] : memref<1x128xf32, #tpu.memory_space<vmem>>, vector<1x128xf32>
      %101 = vector.broadcast %100 : vector<1x128xf32> to vector<2x128xf32>
      %102 = arith.addf %99, %101 : vector<2x128xf32>
      %c0_85 = arith.constant 0 : index
      %c0_86 = arith.constant 0 : index
      %103 = vector.load %arg8[%c0_85, %c0_86] : memref<2x128xf32, #tpu.memory_space<vmem>>, vector<2x128xf32>
      tpu.vector_store %arg8[%c0_85, %c0_86], %102 {strides = array<i32>} : memref<2x128xf32, #tpu.memory_space<vmem>>, vector<2x128xf32>,
    } else {
    }
    return
  }
  func.func @transform_0(%arg0: i32, %arg1: i32) -> (i32, i32) {
    %c0_i32 = arith.constant 0 : i32
    return %arg0, %arg1 : i32, i32
  }
  func.func @transform_1(%arg0: i32, %arg1: i32) -> (i32, i32, i32) {
    %c0_i32 = arith.constant 0 : i32
    %c0_i32_0 = arith.constant 0 : i32
    %c0_i32_1 = arith.constant 0 : i32
    %c0_i32_2 = arith.constant 0 : i32
    return %c0_i32, %c0_i32_0, %c0_i32_1 : i32, i32, i32
  }
  func.func @transform_2(%arg0: i32, %arg1: i32) -> (i32, i32) {
    %c0_i32 = arith.constant 0 : i32
    %c0_i32_0 = arith.constant 0 : i32
    %c0_i32_1 = arith.constant 0 : i32
    return %c0_i32, %c0_i32_0 : i32, i32
  }
  func.func @transform_3(%arg0: i32, %arg1: i32) -> (i32, i32) {
    %c0_i32 = arith.constant 0 : i32
    %c0_i32_0 = arith.constant 0 : i32
    %c0_i32_1 = arith.constant 0 : i32
    return %c0_i32, %c0_i32_0 : i32, i32
  }
  func.func @transform_4(%arg0: i32, %arg1: i32) -> (i32, i32) {
    %c0_i32 = arith.constant 0 : i32
    %c0_i32_0 = arith.constant 0 : i32
    %c0_i32_1 = arith.constant 0 : i32
    return %c0_i32, %c0_i32_0 : i32, i32
  }
  func.func @transform_5(%arg0: i32, %arg1: i32) -> (i32, i32) {
    %c0_i32 = arith.constant 0 : i32
    %c0_i32_0 = arith.constant 0 : i32
    %c0_i32_1 = arith.constant 0 : i32
    return %c0_i32, %c0_i32_0 : i32, i32
  }
  func.func @transform_6(%arg0: i32, %arg1: i32) -> (i32, i32) {
    %c0_i32 = arith.constant 0 : i32
    %c0_i32_0 = arith.constant 0 : i32
    return %arg0, %c0_i32 : i32, i32
  }
}

</mosaic_0001>

<llo_original>
// kernel: tpu_custom_call.1
$region0: #{tpu_custom_call.1}
  #allocation0 [shape = 'u32[]', space=smem, size = 0x4, offset = 0x4, fixed_abs, tag = 'smem constant byte address 0x4 - core index']
  #allocation1 [shape = 'u32[72,128]{1,0:T(1,128)}', space=vmem, size = 0x9000, scoped, tag = 'internal scratch']
  #allocation2 [shape = 'f32[178,512]{1,0:T(8,128)}', space=vmem, size = 0x5c000, scoped, tag = 'scratch operand']
  %s0 = inlined_call_operand.hbm [shape: f32[200,128], index: 0, kind: input, shape index: {}]
  %s1 = inlined_call_operand.hbm [shape: bf16[9,128,512], index: 1, kind: input, shape index: {}]
  %s2 = inlined_call_operand.hbm [shape: f32[1,512], index: 2, kind: input, shape index: {}]
  %s3 = inlined_call_operand.hbm [shape: f32[2,178], index: 3, kind: input, shape index: {}]
  %s4 = inlined_call_operand.hbm [shape: f32[512,128], index: 4, kind: input, shape index: {}]
  %s5 = inlined_call_operand.hbm [shape: f32[1,128], index: 5, kind: input, shape index: {}]
  %s6 = inlined_call_operand.hbm [shape: f32[2,128], index: 6, kind: output, shape index: {}]
  %s7 = sld [smem:[#allocation0]]
  $region66: #{tpu_custom_call.1} parent=0
    _
  %s9 = ssub.s32 1, %s7
  %s10 = scalar_select 0, %s9, %s7
  $region1: #{tpu_custom_call.1} parent=0
    #allocation3 [shape = 'u8[102400]{0}', space=vmem, size = 0x19000, scoped, tag = 'input window, operand 0, single buffered']
    #allocation4 [shape = 's32[1]{0}', space=sflag, size = 0x4, scoped, tag = 'scoped memory for tpu_custom_call.1']
    #allocation5 [shape = 's32[1]{0}', space=sflag, size = 0x4, scoped, tag = 'scoped memory for tpu_custom_call.1']
    #allocation6 [shape = 'u8[1179648]{0}', space=vmem, size = 0x120000, scoped, tag = 'input window, operand 1, single buffered']
    #allocation7 [shape = 's32[1]{0}', space=sflag, size = 0x4, scoped, tag = 'scoped memory for tpu_custom_call.1']
    #allocation8 [shape = 'u8[2048]{0}', space=vmem, size = 0x800, scoped, tag = 'input window, operand 2, single buffered']
    #allocation9 [shape = 'u8[2048]{0}', space=vmem, size = 0x800, scoped, tag = 'input window, operand 3, single buffered']
    #allocation10 [shape = 's32[1]{0}', space=sflag, size = 0x4, scoped, tag = 'scoped memory for tpu_custom_call.1']
    #allocation11 [shape = 'u8[262144]{0}', space=vmem, size = 0x40000, scoped, tag = 'input window, operand 4, single buffered']
    #allocation12 [shape = 'u8[512]{0}', space=vmem, size = 0x400, scoped, tag = 'input window, operand 5, single buffered']
    #allocation13 [shape = 's32[1]{0}', space=sflag, size = 0x4, scoped, tag = 'scoped memory for tpu_custom_call.1']
    #allocation14 [shape = 'u8[1024]{0}', space=vmem, size = 0x400, scoped, tag = 'output window, operand 0, single buffered']
    %11 = vsyncpa [#allocation4], 0
    %12 = vsyncpa [#allocation7], 0
    %13 = vsyncpa [#allocation10], 0
    %14 = vsyncpa [#allocation13], 0
    %15 = vsyncpa [#allocation5], 0
    // Predicated region
    $region2: #{tpu_custom_call.1} parent=1 // pred_check
      _
    $region3: #{tpu_custom_call.1} parent=1 // pred_check_branch
      %17 = sbr.rel (0) target = $region5
    $region4: #{tpu_custom_call.1} parent=1 // pred_region
      %19 = vsyncadd [#allocation4], 0
      %s20 = sshll.u32 %s0, 4
      %s21 = int_to_ptr.hbm [resolvable:$true] %s20
      %s22 = sshll.u32 [#allocation3], 4
      %s23 = int_to_ptr.vmem [resolvable:$true] %s22
      %28 = dma.hbm_to_vmem [thread:$0]  %s21, 3200, %s23, [#allocation4], 128, 128, 8
    $region5: #{tpu_custom_call.1} parent=1 // pred_fallthru
      _
    // Predicated region
    $region6: #{tpu_custom_call.1} parent=1 // pred_check
      _
    $region7: #{tpu_custom_call.1} parent=1 // pred_check_branch
      %30 = sbr.rel (0) target = $region9
    $region8: #{tpu_custom_call.1} parent=1 // pred_region
      %32 = vsyncadd [#allocation7], 0
      %s33 = sshll.u32 %s1, 4
      %s34 = int_to_ptr.hbm [resolvable:$true] %s33
      %s35 = sshll.u32 [#allocation6], 4
      %s36 = int_to_ptr.vmem [resolvable:$true] %s35
      %41 = dma.hbm_to_vmem [thread:$0]  %s34, 36864, %s36, [#allocation7], 256, 256, 16
    $region9: #{tpu_custom_call.1} parent=1 // pred_fallthru
      _
    // Predicated region
    $region10: #{tpu_custom_call.1} parent=1 // pred_check
      _
    $region11: #{tpu_custom_call.1} parent=1 // pred_check_branch
      %43 = sbr.rel (0) target = $region13
    $region12: #{tpu_custom_call.1} parent=1 // pred_region
      %45 = vsyncadd [#allocation7], 0
      %s47 = sshll.u32 %s2, 4
      %s48 = int_to_ptr.hbm [resolvable:$true] %s47
      %s49 = sshll.u32 [#allocation8], 4
      %s50 = int_to_ptr.vmem [resolvable:$true] %s49
      %52 = dma.hbm_to_vmem [thread:$0]  %s48, 64, %s50, [#allocation7]
    $region13: #{tpu_custom_call.1} parent=1 // pred_fallthru
      _
    // Predicated region
    $region14: #{tpu_custom_call.1} parent=1 // pred_check
      _
    $region15: #{tpu_custom_call.1} parent=1 // pred_check_branch
      %54 = sbr.rel (0) target = $region17
    $region16: #{tpu_custom_call.1} parent=1 // pred_region
      %56 = vsyncadd [#allocation10], 0
      %s58 = sshll.u32 %s3, 4
      %s59 = int_to_ptr.hbm [resolvable:$true] %s58
      %s60 = sshll.u32 [#allocation9], 4
      %s61 = int_to_ptr.vmem [resolvable:$true] %s60
      %63 = dma.hbm_to_vmem [thread:$0]  %s59, 64, %s61, [#allocation10]
    $region17: #{tpu_custom_call.1} parent=1 // pred_fallthru
      _
    // Predicated region
    $region18: #{tpu_custom_call.1} parent=1 // pred_check
      _
    $region19: #{tpu_custom_call.1} parent=1 // pred_check_branch
      %65 = sbr.rel (0) target = $region21
    $region20: #{tpu_custom_call.1} parent=1 // pred_region
      %67 = vsyncadd [#allocation10], 0
      %s68 = sshll.u32 %s4, 4
      %s69 = int_to_ptr.hbm [resolvable:$true] %s68
      %s70 = sshll.u32 [#allocation11], 4
      %s71 = int_to_ptr.vmem [resolvable:$true] %s70
      %76 = dma.hbm_to_vmem [thread:$0]  %s69, 8192, %s71, [#allocation10], 128, 128, 8
    $region21: #{tpu_custom_call.1} parent=1 // pred_fallthru
      _
    // Predicated region
    $region22: #{tpu_custom_call.1} parent=1 // pred_check
      _
    $region23: #{tpu_custom_call.1} parent=1 // pred_check_branch
      %78 = sbr.rel (0) target = $region25
    $region24: #{tpu_custom_call.1} parent=1 // pred_region
      %80 = vsyncadd [#allocation13], 0
      %s82 = sshll.u32 %s5, 4
      %s83 = int_to_ptr.hbm [resolvable:$true] %s82
      %s84 = sshll.u32 [#allocation12], 4
      %s85 = int_to_ptr.vmem [resolvable:$true] %s84
      %87 = dma.hbm_to_vmem [thread:$0]  %s83, 16, %s85, [#allocation13]
    $region25: #{tpu_custom_call.1} parent=1 // pred_fallthru
      _
    // Predicated region
    $region26: #{tpu_custom_call.1} parent=1 // pred_check
      _
    $region27: #{tpu_custom_call.1} parent=1 // pred_check_branch
      %89 = sbr.rel (0) target = $region29
    $region28: #{tpu_custom_call.1} parent=1 // pred_region
      %91 = dma.done [#allocation4], 3200
    $region29: #{tpu_custom_call.1} parent=1 // pred_fallthru
      _
    // Predicated region
    $region30: #{tpu_custom_call.1} parent=1 // pred_check
      _
    $region31: #{tpu_custom_call.1} parent=1 // pred_check_branch
      %93 = sbr.rel (0) target = $region33
    $region32: #{tpu_custom_call.1} parent=1 // pred_region
      %95 = dma.done [#allocation7], 36864
    $region33: #{tpu_custom_call.1} parent=1 // pred_fallthru
      _
    // Predicated region
    $region34: #{tpu_custom_call.1} parent=1 // pred_check
      _
    $region35: #{tpu_custom_call.1} parent=1 // pred_check_branch
      %97 = sbr.rel (0) target = $region37
    $region36: #{tpu_custom_call.1} parent=1 // pred_region
      %99 = dma.done [#allocation7], 64
    $region37: #{tpu_custom_call.1} parent=1 // pred_fallthru
      _
    // Predicated region
    $region38: #{tpu_custom_call.1} parent=1 // pred_check
      _
    $region39: #{tpu_custom_call.1} parent=1 // pred_check_branch
      %101 = sbr.rel (0) target = $region41
    $region40: #{tpu_custom_call.1} parent=1 // pred_region
      %103 = dma.done [#allocation10], 64
    $region41: #{tpu_custom_call.1} parent=1 // pred_fallthru
      _
    // Predicated region
    $region42: #{tpu_custom_call.1} parent=1 // pred_check
      _
    $region43: #{tpu_custom_call.1} parent=1 // pred_check_branch
      %105 = sbr.rel (0) target = $region45
    $region44: #{tpu_custom_call.1} parent=1 // pred_region
      %107 = dma.done [#allocation10], 8192
    $region45: #{tpu_custom_call.1} parent=1 // pred_fallthru
      _
    // Predicated region
    $region46: #{tpu_custom_call.1} parent=1 // pred_check
      _
    $region47: #{tpu_custom_call.1} parent=1 // pred_check_branch
      %109 = sbr.rel (0) target = $region49
    $region48: #{tpu_custom_call.1} parent=1 // pred_region
      %111 = dma.done [#allocation13], 16
    $region49: #{tpu_custom_call.1} parent=1 // pred_fallthru
      _
    %p112 = scmp.eq.s32.totalorder 0, 0
    // Predicated region
    $region50: #{tpu_custom_call.1} parent=1 // pred_check
      %p113 = pneg %p112
    $region51: #{tpu_custom_call.1} parent=1 // pred_check_branch
      %115 = sbr.rel (%p113) target = $region53
    $region52: #{tpu_custom_call.1} parent=1 // pred_region
      %116 = vst [vmem:[#allocation2] sm:$0xff] 0.0
      %117 = vst [vmem:[#allocation2 + $0x8] sm:$0xff] 0.0
      %118 = vst [vmem:[#allocation2 + $0x10] sm:$0xff] 0.0
      %119 = vst [vmem:[#allocation2 + $0x18] sm:$0xff] 0.0
      %120 = vst [vmem:[#allocation2 + $0x20] sm:$0xff] 0.0
      %121 = vst [vmem:[#allocation2 + $0x28] sm:$0xff] 0.0
      %122 = vst [vmem:[#allocation2 + $0x30] sm:$0xff] 0.0
      %123 = vst [vmem:[#allocation2 + $0x38] sm:$0xff] 0.0
      %124 = vst [vmem:[#allocation2 + $0x40] sm:$0xff] 0.0
      %125 = vst [vmem:[#allocation2 + $0x48] sm:$0xff] 0.0
      %126 = vst [vmem:[#allocation2 + $0x50] sm:$0xff] 0.0
      %127 = vst [vmem:[#allocation2 + $0x58] sm:$0xff] 0.0
      %128 = vst [vmem:[#allocation2 + $0x60] sm:$0xff] 0.0
      %129 = vst [vmem:[#allocation2 + $0x68] sm:$0xff] 0.0
      %130 = vst [vmem:[#allocation2 + $0x70] sm:$0xff] 0.0
      %131 = vst [vmem:[#allocation2 + $0x78] sm:$0xff] 0.0
      %132 = vst [vmem:[#allocation2 + $0x80] sm:$0xff] 0.0
      %133 = vst [vmem:[#allocation2 + $0x88] sm:$0xff] 0.0
      %134 = vst [vmem:[#allocation2 + $0x90] sm:$0xff] 0.0
      %135 = vst [vmem:[#allocation2 + $0x98] sm:$0xff] 0.0
      %136 = vst [vmem:[#allocation2 + $0xa0] sm:$0xff] 0.0
      %137 = vst [vmem:[#allocation2 + $0xa8] sm:$0xff] 0.0
      %138 = vst [vmem:[#allocation2 + $0xb0] sm:$0xff] 0.0
      %139 = vst [vmem:[#allocation2 + $0xb8] sm:$0xff] 0.0
      %140 = vst [vmem:[#allocation2 + $0xc0] sm:$0xff] 0.0
      %141 = vst [vmem:[#allocation2 + $0xc8] sm:$0xff] 0.0
      %142 = vst [vmem:[#allocation2 + $0xd0] sm:$0xff] 0.0
      %143 = vst [vmem:[#allocation2 + $0xd8] sm:$0xff] 0.0
      %144 = vst [vmem:[#allocation2 + $0xe0] sm:$0xff] 0.0
      %145 = vst [vmem:[#allocation2 + $0xe8] sm:$0xff] 0.0
      %146 = vst [vmem:[#allocation2 + $0xf0] sm:$0xff] 0.0
      %147 = vst [vmem:[#allocation2 + $0xf8] sm:$0xff] 0.0
      %148 = vst [vmem:[#allocation2 + $0x100] sm:$0xff] 0.0
      %149 = vst [vmem:[#allocation2 + $0x108] sm:$0xff] 0.0
      %150 = vst [vmem:[#allocation2 + $0x110] sm:$0xff] 0.0
      %151 = vst [vmem:[#allocation2 + $0x118] sm:$0xff] 0.0
      %152 = vst [vmem:[#allocation2 + $0x120] sm:$0xff] 0.0
      %153 = vst [vmem:[#allocation2 + $0x128] sm:$0xff] 0.0
      %154 = vst [vmem:[#allocation2 + $0x130] sm:$0xff] 0.0
      %155 = vst [vmem:[#allocation2 + $0x138] sm:$0xff] 0.0
      %156 = vst [vmem:[#allocation2 + $0x140] sm:$0xff] 0.0
      %157 = vst [vmem:[#allocation2 + $0x148] sm:$0xff] 0.0
      %158 = vst [vmem:[#allocation2 + $0x150] sm:$0xff] 0.0
      %159 = vst [vmem:[#allocation2 + $0x158] sm:$0xff] 0.0
      %160 = vst [vmem:[#allocation2 + $0x160] sm:$0xff] 0.0
      %161 = vst [vmem:[#allocation2 + $0x168] sm:$0xff] 0.0
      %162 = vst [vmem:[#allocation2 + $0x170] sm:$0xff] 0.0
      %163 = vst [vmem:[#allocation2 + $0x178] sm:$0xff] 0.0
      %164 = vst [vmem:[#allocation2 + $0x180] sm:$0xff] 0.0
      %165 = vst [vmem:[#allocation2 + $0x188] sm:$0xff] 0.0
      %166 = vst [vmem:[#allocation2 + $0x190] sm:$0xff] 0.0
      %167 = vst [vmem:[#allocation2 + $0x198] sm:$0xff] 0.0
      %168 = vst [vmem:[#allocation2 + $0x1a0] sm:$0xff] 0.0
      %169 = vst [vmem:[#allocation2 + $0x1a8] sm:$0xff] 0.0
      %170 = vst [vmem:[#allocation2 + $0x1b0] sm:$0xff] 0.0
      %171 = vst [vmem:[#allocation2 + $0x1b8] sm:$0xff] 0.0
      %172 = vst [vmem:[#allocation2 + $0x1c0] sm:$0xff] 0.0
      %173 = vst [vmem:[#allocation2 + $0x1c8] sm:$0xff] 0.0
      %174 = vst [vmem:[#allocation2 + $0x1d0] sm:$0xff] 0.0
      %175 = vst [vmem:[#allocation2 + $0x1d8] sm:$0xff] 0.0
      %176 = vst [vmem:[#allocation2 + $0x1e0] sm:$0xff] 0.0
      %177 = vst [vmem:[#allocation2 + $0x1e8] sm:$0xff] 0.0
      %178 = vst [vmem:[#allocation2 + $0x1f0] sm:$0xff] 0.0
      %179 = vst [vmem:[#allocation2 + $0x1f8] sm:$0xff] 0.0
      %180 = vst [vmem:[#allocation2 + $0x200] sm:$0xff] 0.0
      %181 = vst [vmem:[#allocation2 + $0x208] sm:$0xff] 0.0
      %182 = vst [vmem:[#allocation2 + $0x210] sm:$0xff] 0.0
      %183 = vst [vmem:[#allocation2 + $0x218] sm:$0xff] 0.0
      %184 = vst [vmem:[#allocation2 + $0x220] sm:$0xff] 0.0
      %185 = vst [vmem:[#allocation2 + $0x228] sm:$0xff] 0.0
      %186 = vst [vmem:[#allocation2 + $0x230] sm:$0xff] 0.0
      %187 = vst [vmem:[#allocation2 + $0x238] sm:$0xff] 0.0
      %188 = vst [vmem:[#allocation2 + $0x240] sm:$0xff] 0.0
      %189 = vst [vmem:[#allocation2 + $0x248] sm:$0xff] 0.0
      %190 = vst [vmem:[#allocation2 + $0x250] sm:$0xff] 0.0
      %191 = vst [vmem:[#allocation2 + $0x258] sm:$0xff] 0.0
      %192 = vst [vmem:[#allocation2 + $0x260] sm:$0xff] 0.0
      %193 = vst [vmem:[#allocation2 + $0x268] sm:$0xff] 0.0
      %194 = vst [vmem:[#allocation2 + $0x270] sm:$0xff] 0.0
      %195 = vst [vmem:[#allocation2 + $0x278] sm:$0xff] 0.0
      %196 = vst [vmem:[#allocation2 + $0x280] sm:$0xff] 0.0
      %197 = vst [vmem:[#allocation2 + $0x288] sm:$0xff] 0.0
      %198 = vst [vmem:[#allocation2 + $0x290] sm:$0xff] 0.0
      %199 = vst [vmem:[#allocation2 + $0x298] sm:$0xff] 0.0
      %200 = vst [vmem:[#allocation2 + $0x2a0] sm:$0xff] 0.0
      %201 = vst [vmem:[#allocation2 + $0x2a8] sm:$0xff] 0.0
      %202 = vst [vmem:[#allocation2 + $0x2b0] sm:$0xff] 0.0
      %203 = vst [vmem:[#allocation2 + $0x2b8] sm:$0xff] 0.0
      %204 = vst [vmem:[#allocation2 + $0x2c0] sm:$0x3] 0.0
      %205 = vst [vmem:[#allocation2 + $0x2c8] sm:$0x3] 0.0
      %206 = vst [vmem:[#allocation2 + $0x2d0] sm:$0x3] 0.0
      %207 = vst [vmem:[#allocation2 + $0x2d8] sm:$0x3] 0.0
    $region53: #{tpu_custom_call.1} parent=1 // pred_fallthru
      _
    %v208 = vld [vmem:[#allocation3] sm:$0xff]
    %v209 = vld [vmem:[#allocation3 + $0x8] sm:$0xff]
    %v210 = vld [vmem:[#allocation3 + $0x10] sm:$0xff]
    %v211 = vld [vmem:[#allocation3 + $0x18] sm:$0xff]
    %v212 = vld [vmem:[#allocation3 + $0x20] sm:$0xff]
    %v213 = vld [vmem:[#allocation3 + $0x28] sm:$0xff]
    %v214 = vld [vmem:[#allocation3 + $0x30] sm:$0xff]
    %v215 = vld [vmem:[#allocation3 + $0x38] sm:$0xff]
    %v216 = vld [vmem:[#allocation3 + $0x40] sm:$0xff]
    %v217 = vld [vmem:[#allocation3 + $0x48] sm:$0xff]
    %v218 = vld [vmem:[#allocation3 + $0x50] sm:$0xff]
    %v219 = vld [vmem:[#allocation3 + $0x58] sm:$0xff]
    %v220 = vld [vmem:[#allocation3 + $0x60] sm:$0xff]
    %v221 = vld [vmem:[#allocation3 + $0x68] sm:$0xff]
    %v222 = vld [vmem:[#allocation3 + $0x70] sm:$0xff]
    %v223 = vld [vmem:[#allocation3 + $0x78] sm:$0xff]
    %v224 = vld [vmem:[#allocation3 + $0x80] sm:$0xff]
    %v225 = vld [vmem:[#allocation3 + $0x88] sm:$0xff]
    %v226 = vld [vmem:[#allocation3 + $0x90] sm:$0xff]
    %v227 = vld [vmem:[#allocation3 + $0x98] sm:$0xff]
    %v228 = vld [vmem:[#allocation3 + $0xa0] sm:$0xff]
    %v229 = vld [vmem:[#allocation3 + $0xa8] sm:$0xff]
    %v230 = vld [vmem:[#allocation3 + $0xb0] sm:$0xff]
    %v231 = vld [vmem:[#allocation3 + $0xb8] sm:$0xff]
    %v232 = vld [vmem:[#allocation3 + $0xc0] sm:$0xff]
    %v233 = vmin.f32 %v208, 20.0
    %v234 = vmin.f32 %v209, 20.0
    %v235 = vmin.f32 %v210, 20.0
    %v236 = vmin.f32 %v211, 20.0
    %v237 = vmin.f32 %v212, 20.0
    %v238 = vmin.f32 %v213, 20.0
    %v239 = vmin.f32 %v214, 20.0
    %v240 = vmin.f32 %v215, 20.0
    %v241 = vmin.f32 %v216, 20.0
    %v242 = vmin.f32 %v217, 20.0
    %v243 = vmin.f32 %v218, 20.0
    %v244 = vmin.f32 %v219, 20.0
    %v245 = vmin.f32 %v220, 20.0
    %v246 = vmin.f32 %v221, 20.0
    %v247 = vmin.f32 %v222, 20.0
    %v248 = vmin.f32 %v223, 20.0
    %v249 = vmin.f32 %v224, 20.0
    %v250 = vmin.f32 %v225, 20.0
    %v251 = vmin.f32 %v226, 20.0
    %v252 = vmin.f32 %v227, 20.0
    %v253 = vmin.f32 %v228, 20.0
    %v254 = vmin.f32 %v229, 20.0
    %v255 = vmin.f32 %v230, 20.0
    %v256 = vmin.f32 %v231, 20.0
    %v257 = vmin.f32 %v232, 20.0
    %v258 = vmul.f32 %v233, 1.442695
    %v259 = vpow.pop %v258
    %v260 = vmul.f32 %v234, 1.442695
    %v261 = vpow.pop %v260
    %v262 = vmul.f32 %v235, 1.442695
    %v263 = vpow.pop %v262
    %v264 = vmul.f32 %v236, 1.442695
    %v265 = vpow.pop %v264
    %v266 = vmul.f32 %v237, 1.442695
    %v267 = vpow.pop %v266
    %v268 = vmul.f32 %v238, 1.442695
    %v269 = vpow.pop %v268
    %v270 = vmul.f32 %v239, 1.442695
    %v271 = vpow.pop %v270
    %v272 = vmul.f32 %v240, 1.442695
    %v273 = vpow.pop %v272
    %v274 = vmul.f32 %v241, 1.442695
    %v275 = vpow.pop %v274
    %v276 = vmul.f32 %v242, 1.442695
    %v277 = vpow.pop %v276
    %v278 = vmul.f32 %v243, 1.442695
    %v279 = vpow.pop %v278
    %v280 = vmul.f32 %v244, 1.442695
    %v281 = vpow.pop %v280
    %v282 = vmul.f32 %v245, 1.442695
    %v283 = vpow.pop %v282
    %v284 = vmul.f32 %v246, 1.442695
    %v285 = vpow.pop %v284
    %v286 = vmul.f32 %v247, 1.442695
    %v287 = vpow.pop %v286
    %v288 = vmul.f32 %v248, 1.442695
    %v289 = vpow.pop %v288
    %v290 = vmul.f32 %v249, 1.442695
    %v291 = vpow.pop %v290
    %v292 = vmul.f32 %v250, 1.442695
    %v293 = vpow.pop %v292
    %v294 = vmul.f32 %v251, 1.442695
    %v295 = vpow.pop %v294
    %v296 = vmul.f32 %v252, 1.442695
    %v297 = vpow.pop %v296
    %v298 = vmul.f32 %v253, 1.442695
    %v299 = vpow.pop %v298
    %v300 = vmul.f32 %v254, 1.442695
    %v301 = vpow.pop %v300
    %v302 = vmul.f32 %v255, 1.442695
    %v303 = vpow.pop %v302
    %v304 = vmul.f32 %v256, 1.442695
    %v305 = vpow.pop %v304
    %v306 = vmul.f32 %v257, 1.442695
    %v307 = vpow.pop %v306
    %v308 = vadd.f32 %v259, 2.0
    %v309 = vadd.f32 %v261, 2.0
    %v310 = vadd.f32 %v263, 2.0
    %v311 = vadd.f32 %v265, 2.0
    %v312 = vadd.f32 %v267, 2.0
    %v313 = vadd.f32 %v269, 2.0
    %v314 = vadd.f32 %v271, 2.0
    %v315 = vadd.f32 %v273, 2.0
    %v316 = vadd.f32 %v275, 2.0
    %v317 = vadd.f32 %v277, 2.0
    %v318 = vadd.f32 %v279, 2.0
    %v319 = vadd.f32 %v281, 2.0
    %v320 = vadd.f32 %v283, 2.0
    %v321 = vadd.f32 %v285, 2.0
    %v322 = vadd.f32 %v287, 2.0
    %v323 = vadd.f32 %v289, 2.0
    %v324 = vadd.f32 %v291, 2.0
    %v325 = vadd.f32 %v293, 2.0
    %v326 = vadd.f32 %v295, 2.0
    %v327 = vadd.f32 %v297, 2.0
    %v328 = vadd.f32 %v299, 2.0
    %v329 = vadd.f32 %v301, 2.0
    %v330 = vadd.f32 %v303, 2.0
    %v331 = vadd.f32 %v305, 2.0
    %v332 = vadd.f32 %v307, 2.0
    %v333 = vmul.f32 %v259, %v308
    %v334 = vmul.f32 %v261, %v309
    %v335 = vmul.f32 %v263, %v310
    %v336 = vmul.f32 %v265, %v311
    %v337 = vmul.f32 %v267, %v312
    %v338 = vmul.f32 %v269, %v313
    %v339 = vmul.f32 %v271, %v314
    %v340 = vmul.f32 %v273, %v315
    %v341 = vmul.f32 %v275, %v316
    %v342 = vmul.f32 %v277, %v317
    %v343 = vmul.f32 %v279, %v318
    %v344 = vmul.f32 %v281, %v319
    %v345 = vmul.f32 %v283, %v320
    %v346 = vmul.f32 %v285, %v321
    %v347 = vmul.f32 %v287, %v322
    %v348 = vmul.f32 %v289, %v323
    %v349 = vmul.f32 %v291, %v324
    %v350 = vmul.f32 %v293, %v325
    %v351 = vmul.f32 %v295, %v326
    %v352 = vmul.f32 %v297, %v327
    %v353 = vmul.f32 %v299, %v328
    %v354 = vmul.f32 %v301, %v329
    %v355 = vmul.f32 %v303, %v330
    %v356 = vmul.f32 %v305, %v331
    %v357 = vmul.f32 %v307, %v332
    %v358 = vadd.f32 %v333, 2.0
    %v359 = vadd.f32 %v334, 2.0
    %v360 = vadd.f32 %v335, 2.0
    %v361 = vadd.f32 %v336, 2.0
    %v362 = vadd.f32 %v337, 2.0
    %v363 = vadd.f32 %v338, 2.0
    %v364 = vadd.f32 %v339, 2.0
    %v365 = vadd.f32 %v340, 2.0
    %v366 = vadd.f32 %v341, 2.0
    %v367 = vadd.f32 %v342, 2.0
    %v368 = vadd.f32 %v343, 2.0
    %v369 = vadd.f32 %v344, 2.0
    %v370 = vadd.f32 %v345, 2.0
    %v371 = vadd.f32 %v346, 2.0
    %v372 = vadd.f32 %v347, 2.0
    %v373 = vadd.f32 %v348, 2.0
    %v374 = vadd.f32 %v349, 2.0
    %v375 = vadd.f32 %v350, 2.0
    %v376 = vadd.f32 %v351, 2.0
    %v377 = vadd.f32 %v352, 2.0
    %v378 = vadd.f32 %v353, 2.0
    %v379 = vadd.f32 %v354, 2.0
    %v380 = vadd.f32 %v355, 2.0
    %v381 = vadd.f32 %v356, 2.0
    %v382 = vadd.f32 %v357, 2.0
    %v383 = vrcp.pop %v358
    %v384 = vmul.f32 %v358, %v383
    %v385 = vsub.f32 1.0, %v384
    %v386 = vmul.f32 %v383, %v385
    %v387 = vadd.f32 %v383, %v386
    %vm388 = vweird.f32 %v358
    %vm389 = vweird.f32 %v383
    %vm390 = vmor %vm388, %vm389
    %v391 = vsel %vm390, %v383, %v387
    %v392 = vand.u32 2147483647, %v358
    %vm393 = vcmp.eq.f32.partialorder %v392, 8.507059e+37
    %v394 = vand.u32 %v358, 2147483648
    %v395 = vor.u32 1.1754944e-38, %v394
    %v396 = vsel %vm393, %v395, %v391
    %v397 = vmul.f32 %v333, %v396
    %v398 = vrcp.pop %v359
    %v399 = vmul.f32 %v359, %v398
    %v400 = vsub.f32 1.0, %v399
    %v401 = vmul.f32 %v398, %v400
    %v402 = vadd.f32 %v398, %v401
    %vm403 = vweird.f32 %v359
    %vm404 = vweird.f32 %v398
    %vm405 = vmor %vm403, %vm404
    %v406 = vsel %vm405, %v398, %v402
    %v407 = vand.u32 2147483647, %v359
    %vm408 = vcmp.eq.f32.partialorder %v407, 8.507059e+37
    %v409 = vand.u32 %v359, 2147483648
    %v410 = vor.u32 1.1754944e-38, %v409
    %v411 = vsel %vm408, %v410, %v406
    %v412 = vmul.f32 %v334, %v411
    %v413 = vrcp.pop %v360
    %v414 = vmul.f32 %v360, %v413
    %v415 = vsub.f32 1.0, %v414
    %v416 = vmul.f32 %v413, %v415
    %v417 = vadd.f32 %v413, %v416
    %vm418 = vweird.f32 %v360
    %vm419 = vweird.f32 %v413
    %vm420 = vmor %vm418, %vm419
    %v421 = vsel %vm420, %v413, %v417
    %v422 = vand.u32 2147483647, %v360
    %vm423 = vcmp.eq.f32.partialorder %v422, 8.507059e+37
    %v424 = vand.u32 %v360, 2147483648
    %v425 = vor.u32 1.1754944e-38, %v424
    %v426 = vsel %vm423, %v425, %v421
    %v427 = vmul.f32 %v335, %v426
    %v428 = vrcp.pop %v361
    %v429 = vmul.f32 %v361, %v428
    %v430 = vsub.f32 1.0, %v429
    %v431 = vmul.f32 %v428, %v430
    %v432 = vadd.f32 %v428, %v431
    %vm433 = vweird.f32 %v361
    %vm434 = vweird.f32 %v428
    %vm435 = vmor %vm433, %vm434
    %v436 = vsel %vm435, %v428, %v432
    %v437 = vand.u32 2147483647, %v361
    %vm438 = vcmp.eq.f32.partialorder %v437, 8.507059e+37
    %v439 = vand.u32 %v361, 2147483648
    %v440 = vor.u32 1.1754944e-38, %v439
    %v441 = vsel %vm438, %v440, %v436
    %v442 = vmul.f32 %v336, %v441
    %v443 = vrcp.pop %v362
    %v444 = vmul.f32 %v362, %v443
    %v445 = vsub.f32 1.0, %v444
    %v446 = vmul.f32 %v443, %v445
    %v447 = vadd.f32 %v443, %v446
    %vm448 = vweird.f32 %v362
    %vm449 = vweird.f32 %v443
    %vm450 = vmor %vm448, %vm449
    %v451 = vsel %vm450, %v443, %v447
    %v452 = vand.u32 2147483647, %v362
    %vm453 = vcmp.eq.f32.partialorder %v452, 8.507059e+37
    %v454 = vand.u32 %v362, 2147483648
    %v455 = vor.u32 1.1754944e-38, %v454
    %v456 = vsel %vm453, %v455, %v451
    %v457 = vmul.f32 %v337, %v456
    %v458 = vrcp.pop %v363
    %v459 = vmul.f32 %v363, %v458
    %v460 = vsub.f32 1.0, %v459
    %v461 = vmul.f32 %v458, %v460
    %v462 = vadd.f32 %v458, %v461
    %vm463 = vweird.f32 %v363
    %vm464 = vweird.f32 %v458
    %vm465 = vmor %vm463, %vm464
    %v466 = vsel %vm465, %v458, %v462
    %v467 = vand.u32 2147483647, %v363
    %vm468 = vcmp.eq.f32.partialorder %v467, 8.507059e+37
    %v469 = vand.u32 %v363, 2147483648
    %v470 = vor.u32 1.1754944e-38, %v469
    %v471 = vsel %vm468, %v470, %v466
    %v472 = vmul.f32 %v338, %v471
    %v473 = vrcp.pop %v364
    %v474 = vmul.f32 %v364, %v473
    %v475 = vsub.f32 1.0, %v474
    %v476 = vmul.f32 %v473, %v475
    %v477 = vadd.f32 %v473, %v476
    %vm478 = vweird.f32 %v364
    %vm479 = vweird.f32 %v473
    %vm480 = vmor %vm478, %vm479
    %v481 = vsel %vm480, %v473, %v477
    %v482 = vand.u32 2147483647, %v364
    %vm483 = vcmp.eq.f32.partialorder %v482, 8.507059e+37
    %v484 = vand.u32 %v364, 2147483648
    %v485 = vor.u32 1.1754944e-38, %v484
    %v486 = vsel %vm483, %v485, %v481
    %v487 = vmul.f32 %v339, %v486
    %v488 = vrcp.pop %v365
    %v489 = vmul.f32 %v365, %v488
    %v490 = vsub.f32 1.0, %v489
    %v491 = vmul.f32 %v488, %v490
    %v492 = vadd.f32 %v488, %v491
    %vm493 = vweird.f32 %v365
    %vm494 = vweird.f32 %v488
    %vm495 = vmor %vm493, %vm494
    %v496 = vsel %vm495, %v488, %v492
    %v497 = vand.u32 2147483647, %v365
    %vm498 = vcmp.eq.f32.partialorder %v497, 8.507059e+37
    %v499 = vand.u32 %v365, 2147483648
    %v500 = vor.u32 1.1754944e-38, %v499
    %v501 = vsel %vm498, %v500, %v496
    %v502 = vmul.f32 %v340, %v501
    %v503 = vrcp.pop %v366
    %v504 = vmul.f32 %v366, %v503
    %v505 = vsub.f32 1.0, %v504
    %v506 = vmul.f32 %v503, %v505
    %v507 = vadd.f32 %v503, %v506
    %vm508 = vweird.f32 %v366
    %vm509 = vweird.f32 %v503
    %vm510 = vmor %vm508, %vm509
    %v511 = vsel %vm510, %v503, %v507
    %v512 = vand.u32 2147483647, %v366
    %vm513 = vcmp.eq.f32.partialorder %v512, 8.507059e+37
    %v514 = vand.u32 %v366, 2147483648
    %v515 = vor.u32 1.1754944e-38, %v514
    %v516 = vsel %vm513, %v515, %v511
    %v517 = vmul.f32 %v341, %v516
    %v518 = vrcp.pop %v367
    %v519 = vmul.f32 %v367, %v518
    %v520 = vsub.f32 1.0, %v519
    %v521 = vmul.f32 %v518, %v520
    %v522 = vadd.f32 %v518, %v521
    %vm523 = vweird.f32 %v367
    %vm524 = vweird.f32 %v518
    %vm525 = vmor %vm523, %vm524
    %v526 = vsel %vm525, %v518, %v522
    %v527 = vand.u32 2147483647, %v367
    %vm528 = vcmp.eq.f32.partialorder %v527, 8.507059e+37
    %v529 = vand.u32 %v367, 2147483648
    %v530 = vor.u32 1.1754944e-38, %v529
    %v531 = vsel %vm528, %v530, %v526
    %v532 = vmul.f32 %v342, %v531
    %v533 = vrcp.pop %v368
    %v534 = vmul.f32 %v368, %v533
    %v535 = vsub.f32 1.0, %v534
    %v536 = vmul.f32 %v533, %v535
    %v537 = vadd.f32 %v533, %v536
    %vm538 = vweird.f32 %v368
    %vm539 = vweird.f32 %v533
    %vm540 = vmor %vm538, %vm539
    %v541 = vsel %vm540, %v533, %v537
    %v542 = vand.u32 2147483647, %v368
    %vm543 = vcmp.eq.f32.partialorder %v542, 8.507059e+37
    %v544 = vand.u32 %v368, 2147483648
    %v545 = vor.u32 1.1754944e-38, %v544
    %v546 = vsel %vm543, %v545, %v541
    %v547 = vmul.f32 %v343, %v546
    %v548 = vrcp.pop %v369
    %v549 = vmul.f32 %v369, %v548
    %v550 = vsub.f32 1.0, %v549
    %v551 = vmul.f32 %v548, %v550
    %v552 = vadd.f32 %v548, %v551
    %vm553 = vweird.f32 %v369
    %vm554 = vweird.f32 %v548
    %vm555 = vmor %vm553, %vm554
    %v556 = vsel %vm555, %v548, %v552
    %v557 = vand.u32 2147483647, %v369
    %vm558 = vcmp.eq.f32.partialorder %v557, 8.507059e+37
    %v559 = vand.u32 %v369, 2147483648
    %v560 = vor.u32 1.1754944e-38, %v559
    %v561 = vsel %vm558, %v560, %v556
    %v562 = vmul.f32 %v344, %v561
    %v563 = vrcp.pop %v370
    %v564 = vmul.f32 %v370, %v563
    %v565 = vsub.f32 1.0, %v564
    %v566 = vmul.f32 %v563, %v565
    %v567 = vadd.f32 %v563, %v566
    %vm568 = vweird.f32 %v370
    %vm569 = vweird.f32 %v563
    %vm570 = vmor %vm568, %vm569
    %v571 = vsel %vm570, %v563, %v567
    %v572 = vand.u32 2147483647, %v370
    %vm573 = vcmp.eq.f32.partialorder %v572, 8.507059e+37
    %v574 = vand.u32 %v370, 2147483648
    %v575 = vor.u32 1.1754944e-38, %v574
    %v576 = vsel %vm573, %v575, %v571
    %v577 = vmul.f32 %v345, %v576
    %v578 = vrcp.pop %v371
    %v579 = vmul.f32 %v371, %v578
    %v580 = vsub.f32 1.0, %v579
    %v581 = vmul.f32 %v578, %v580
    %v582 = vadd.f32 %v578, %v581
    %vm583 = vweird.f32 %v371
    %vm584 = vweird.f32 %v578
    %vm585 = vmor %vm583, %vm584
    %v586 = vsel %vm585, %v578, %v582
    %v587 = vand.u32 2147483647, %v371
    %vm588 = vcmp.eq.f32.partialorder %v587, 8.507059e+37
    %v589 = vand.u32 %v371, 2147483648
    %v590 = vor.u32 1.1754944e-38, %v589
    %v591 = vsel %vm588, %v590, %v586
    %v592 = vmul.f32 %v346, %v591
    %v593 = vrcp.pop %v372
    %v594 = vmul.f32 %v372, %v593
    %v595 = vsub.f32 1.0, %v594
    %v596 = vmul.f32 %v593, %v595
    %v597 = vadd.f32 %v593, %v596
    %vm598 = vweird.f32 %v372
    %vm599 = vweird.f32 %v593
    %vm600 = vmor %vm598, %vm599
    %v601 = vsel %vm600, %v593, %v597
    %v602 = vand.u32 2147483647, %v372
    %vm603 = vcmp.eq.f32.partialorder %v602, 8.507059e+37
    %v604 = vand.u32 %v372, 2147483648
    %v605 = vor.u32 1.1754944e-38, %v604
    %v606 = vsel %vm603, %v605, %v601
    %v607 = vmul.f32 %v347, %v606
    %v608 = vrcp.pop %v373
    %v609 = vmul.f32 %v373, %v608
    %v610 = vsub.f32 1.0, %v609
    %v611 = vmul.f32 %v608, %v610
    %v612 = vadd.f32 %v608, %v611
    %vm613 = vweird.f32 %v373
    %vm614 = vweird.f32 %v608
    %vm615 = vmor %vm613, %vm614
    %v616 = vsel %vm615, %v608, %v612
    %v617 = vand.u32 2147483647, %v373
    %vm618 = vcmp.eq.f32.partialorder %v617, 8.507059e+37
    %v619 = vand.u32 %v373, 2147483648
    %v620 = vor.u32 1.1754944e-38, %v619
    %v621 = vsel %vm618, %v620, %v616
    %v622 = vmul.f32 %v348, %v621
    %v623 = vrcp.pop %v374
    %v624 = vmul.f32 %v374, %v623
    %v625 = vsub.f32 1.0, %v624
    %v626 = vmul.f32 %v623, %v625
    %v627 = vadd.f32 %v623, %v626
    %vm628 = vweird.f32 %v374
    %vm629 = vweird.f32 %v623
    %vm630 = vmor %vm628, %vm629
    %v631 = vsel %vm630, %v623, %v627
    %v632 = vand.u32 2147483647, %v374
    %vm633 = vcmp.eq.f32.partialorder %v632, 8.507059e+37
    %v634 = vand.u32 %v374, 2147483648
    %v635 = vor.u32 1.1754944e-38, %v634
    %v636 = vsel %vm633, %v635, %v631
    %v637 = vmul.f32 %v349, %v636
    %v638 = vrcp.pop %v375
    %v639 = vmul.f32 %v375, %v638
    %v640 = vsub.f32 1.0, %v639
    %v641 = vmul.f32 %v638, %v640
    %v642 = vadd.f32 %v638, %v641
    %vm643 = vweird.f32 %v375
    %vm644 = vweird.f32 %v638
    %vm645 = vmor %vm643, %vm644
    %v646 = vsel %vm645, %v638, %v642
    %v647 = vand.u32 2147483647, %v375
    %vm648 = vcmp.eq.f32.partialorder %v647, 8.507059e+37
    %v649 = vand.u32 %v375, 2147483648
    %v650 = vor.u32 1.1754944e-38, %v649
    %v651 = vsel %vm648, %v650, %v646
    %v652 = vmul.f32 %v350, %v651
    %v653 = vrcp.pop %v376
    %v654 = vmul.f32 %v376, %v653
    %v655 = vsub.f32 1.0, %v654
    %v656 = vmul.f32 %v653, %v655
    %v657 = vadd.f32 %v653, %v656
    %vm658 = vweird.f32 %v376
    %vm659 = vweird.f32 %v653
    %vm660 = vmor %vm658, %vm659
    %v661 = vsel %vm660, %v653, %v657
    %v662 = vand.u32 2147483647, %v376
    %vm663 = vcmp.eq.f32.partialorder %v662, 8.507059e+37
    %v664 = vand.u32 %v376, 2147483648
    %v665 = vor.u32 1.1754944e-38, %v664
    %v666 = vsel %vm663, %v665, %v661
    %v667 = vmul.f32 %v351, %v666
    %v668 = vrcp.pop %v377
    %v669 = vmul.f32 %v377, %v668
    %v670 = vsub.f32 1.0, %v669
    %v671 = vmul.f32 %v668, %v670
    %v672 = vadd.f32 %v668, %v671
    %vm673 = vweird.f32 %v377
    %vm674 = vweird.f32 %v668
    %vm675 = vmor %vm673, %vm674
    %v676 = vsel %vm675, %v668, %v672
    %v677 = vand.u32 2147483647, %v377
    %vm678 = vcmp.eq.f32.partialorder %v677, 8.507059e+37
    %v679 = vand.u32 %v377, 2147483648
    %v680 = vor.u32 1.1754944e-38, %v679
    %v681 = vsel %vm678, %v680, %v676
    %v682 = vmul.f32 %v352, %v681
    %v683 = vrcp.pop %v378
    %v684 = vmul.f32 %v378, %v683
    %v685 = vsub.f32 1.0, %v684
    %v686 = vmul.f32 %v683, %v685
    %v687 = vadd.f32 %v683, %v686
    %vm688 = vweird.f32 %v378
    %vm689 = vweird.f32 %v683
    %vm690 = vmor %vm688, %vm689
    %v691 = vsel %vm690, %v683, %v687
    %v692 = vand.u32 2147483647, %v378
    %vm693 = vcmp.eq.f32.partialorder %v692, 8.507059e+37
    %v694 = vand.u32 %v378, 2147483648
    %v695 = vor.u32 1.1754944e-38, %v694
    %v696 = vsel %vm693, %v695, %v691
    %v697 = vmul.f32 %v353, %v696
    %v698 = vrcp.pop %v379
    %v699 = vmul.f32 %v379, %v698
    %v700 = vsub.f32 1.0, %v699
    %v701 = vmul.f32 %v698, %v700
    %v702 = vadd.f32 %v698, %v701
    %vm703 = vweird.f32 %v379
    %vm704 = vweird.f32 %v698
    %vm705 = vmor %vm703, %vm704
    %v706 = vsel %vm705, %v698, %v702
    %v707 = vand.u32 2147483647, %v379
    %vm708 = vcmp.eq.f32.partialorder %v707, 8.507059e+37
    %v709 = vand.u32 %v379, 2147483648
    %v710 = vor.u32 1.1754944e-38, %v709
    %v711 = vsel %vm708, %v710, %v706
    %v712 = vmul.f32 %v354, %v711
    %v713 = vrcp.pop %v380
    %v714 = vmul.f32 %v380, %v713
    %v715 = vsub.f32 1.0, %v714
    %v716 = vmul.f32 %v713, %v715
    %v717 = vadd.f32 %v713, %v716
    %vm718 = vweird.f32 %v380
    %vm719 = vweird.f32 %v713
    %vm720 = vmor %vm718, %vm719
    %v721 = vsel %vm720, %v713, %v717
    %v722 = vand.u32 2147483647, %v380
    %vm723 = vcmp.eq.f32.partialorder %v722, 8.507059e+37
    %v724 = vand.u32 %v380, 2147483648
    %v725 = vor.u32 1.1754944e-38, %v724
    %v726 = vsel %vm723, %v725, %v721
    %v727 = vmul.f32 %v355, %v726
    %v728 = vrcp.pop %v381
    %v729 = vmul.f32 %v381, %v728
    %v730 = vsub.f32 1.0, %v729
    %v731 = vmul.f32 %v728, %v730
    %v732 = vadd.f32 %v728, %v731
    %vm733 = vweird.f32 %v381
    %vm734 = vweird.f32 %v728
    %vm735 = vmor %vm733, %vm734
    %v736 = vsel %vm735, %v728, %v732
    %v737 = vand.u32 2147483647, %v381
    %vm738 = vcmp.eq.f32.partialorder %v737, 8.507059e+37
    %v739 = vand.u32 %v381, 2147483648
    %v740 = vor.u32 1.1754944e-38, %v739
    %v741 = vsel %vm738, %v740, %v736
    %v742 = vmul.f32 %v356, %v741
    %v743 = vrcp.pop %v382
    %v744 = vmul.f32 %v382, %v743
    %v745 = vsub.f32 1.0, %v744
    %v746 = vmul.f32 %v743, %v745
    %v747 = vadd.f32 %v743, %v746
    %vm748 = vweird.f32 %v382
    %vm749 = vweird.f32 %v743
    %vm750 = vmor %vm748, %vm749
    %v751 = vsel %vm750, %v743, %v747
    %v752 = vand.u32 2147483647, %v382
    %vm753 = vcmp.eq.f32.partialorder %v752, 8.507059e+37
    %v754 = vand.u32 %v382, 2147483648
    %v755 = vor.u32 1.1754944e-38, %v754
    %v756 = vsel %vm753, %v755, %v751
    %v757 = vmul.f32 %v357, %v756
    %vm758 = vcmp.gt.f32.partialorder %v208, 20.0
    %vm759 = vcmp.gt.f32.partialorder %v209, 20.0
    %vm760 = vcmp.gt.f32.partialorder %v210, 20.0
    %vm761 = vcmp.gt.f32.partialorder %v211, 20.0
    %vm762 = vcmp.gt.f32.partialorder %v212, 20.0
    %vm763 = vcmp.gt.f32.partialorder %v213, 20.0
    %vm764 = vcmp.gt.f32.partialorder %v214, 20.0
    %vm765 = vcmp.gt.f32.partialorder %v215, 20.0
    %vm766 = vcmp.gt.f32.partialorder %v216, 20.0
    %vm767 = vcmp.gt.f32.partialorder %v217, 20.0
    %vm768 = vcmp.gt.f32.partialorder %v218, 20.0
    %vm769 = vcmp.gt.f32.partialorder %v219, 20.0
    %vm770 = vcmp.gt.f32.partialorder %v220, 20.0
    %vm771 = vcmp.gt.f32.partialorder %v221, 20.0
    %vm772 = vcmp.gt.f32.partialorder %v222, 20.0
    %vm773 = vcmp.gt.f32.partialorder %v223, 20.0
    %vm774 = vcmp.gt.f32.partialorder %v224, 20.0
    %vm775 = vcmp.gt.f32.partialorder %v225, 20.0
    %vm776 = vcmp.gt.f32.partialorder %v226, 20.0
    %vm777 = vcmp.gt.f32.partialorder %v227, 20.0
    %vm778 = vcmp.gt.f32.partialorder %v228, 20.0
    %vm779 = vcmp.gt.f32.partialorder %v229, 20.0
    %vm780 = vcmp.gt.f32.partialorder %v230, 20.0
    %vm781 = vcmp.gt.f32.partialorder %v231, 20.0
    %vm782 = vcmp.gt.f32.partialorder %v232, 20.0
    %v783 = vmul.f32 %v208, %v397
    %v784 = vmul.f32 %v209, %v412
    %v785 = vmul.f32 %v210, %v427
    %v786 = vmul.f32 %v211, %v442
    %v787 = vmul.f32 %v212, %v457
    %v788 = vmul.f32 %v213, %v472
    %v789 = vmul.f32 %v214, %v487
    %v790 = vmul.f32 %v215, %v502
    %v791 = vmul.f32 %v216, %v517
    %v792 = vmul.f32 %v217, %v532
    %v793 = vmul.f32 %v218, %v547
    %v794 = vmul.f32 %v219, %v562
    %v795 = vmul.f32 %v220, %v577
    %v796 = vmul.f32 %v221, %v592
    %v797 = vmul.f32 %v222, %v607
    %v798 = vmul.f32 %v223, %v622
    %v799 = vmul.f32 %v224, %v637
    %v800 = vmul.f32 %v225, %v652
    %v801 = vmul.f32 %v226, %v667
    %v802 = vmul.f32 %v227, %v682
    %v803 = vmul.f32 %v228, %v697
    %v804 = vmul.f32 %v229, %v712
    %v805 = vmul.f32 %v230, %v727
    %v806 = vmul.f32 %v231, %v742
    %v807 = vmul.f32 %v232, %v757
    %v808 = vsel %vm758, %v208, %v783
    %v809 = vsel %vm759, %v209, %v784
    %v810 = vsel %vm760, %v210, %v785
    %v811 = vsel %vm761, %v211, %v786
    %v812 = vsel %vm762, %v212, %v787
    %v813 = vsel %vm763, %v213, %v788
    %v814 = vsel %vm764, %v214, %v789
    %v815 = vsel %vm765, %v215, %v790
    %v816 = vsel %vm766, %v216, %v791
    %v817 = vsel %vm767, %v217, %v792
    %v818 = vsel %vm768, %v218, %v793
    %v819 = vsel %vm769, %v219, %v794
    %v820 = vsel %vm770, %v220, %v795
    %v821 = vsel %vm771, %v221, %v796
    %v822 = vsel %vm772, %v222, %v797
    %v823 = vsel %vm773, %v223, %v798
    %v824 = vsel %vm774, %v224, %v799
    %v825 = vsel %vm775, %v225, %v800
    %v826 = vsel %vm776, %v226, %v801
    %v827 = vsel %vm777, %v227, %v802
    %v828 = vsel %vm778, %v228, %v803
    %v829 = vsel %vm779, %v229, %v804
    %v830 = vsel %vm780, %v230, %v805
    %v831 = vsel %vm781, %v231, %v806
    %v832 = vsel %vm782, %v232, %v807
    %v833 = vpack.c.bf16 %v808, %v808
    %v834 = vpack.c.bf16 %v809, %v809
    %v835 = vpack.c.bf16 %v810, %v810
    %v836 = vpack.c.bf16 %v811, %v811
    %v837 = vpack.c.bf16 %v812, %v812
    %v838 = vpack.c.bf16 %v813, %v813
    %v839 = vpack.c.bf16 %v814, %v814
    %v840 = vpack.c.bf16 %v815, %v815
    %v841 = vpack.c.bf16 %v816, %v816
    %v842 = vpack.c.bf16 %v817, %v817
    %v843 = vpack.c.bf16 %v818, %v818
    %v844 = vpack.c.bf16 %v819, %v819
    %v845 = vpack.c.bf16 %v820, %v820
    %v846 = vpack.c.bf16 %v821, %v821
    %v847 = vpack.c.bf16 %v822, %v822
    %v848 = vpack.c.bf16 %v823, %v823
    %v849 = vpack.c.bf16 %v824, %v824
    %v850 = vpack.c.bf16 %v825, %v825
    %v851 = vpack.c.bf16 %v826, %v826
    %v852 = vpack.c.bf16 %v827, %v827
    %v853 = vpack.c.bf16 %v828, %v828
    %v854 = vpack.c.bf16 %v829, %v829
    %v855 = vpack.c.bf16 %v830, %v830
    %v856 = vpack.c.bf16 %v831, %v831
    %v857 = vpack.c.bf16 %v832, %v832
    %v858 = vld [vmem:[#allocation2] sm:$0xff]
    %v859 = vld [vmem:[#allocation2 + $0x8] sm:$0xff]
    %v860 = vld [vmem:[#allocation2 + $0x10] sm:$0xff]
    %v861 = vld [vmem:[#allocation2 + $0x18] sm:$0xff]
    %v862 = vld [vmem:[#allocation2 + $0x20] sm:$0xff]
    %v863 = vld [vmem:[#allocation2 + $0x28] sm:$0xff]
    %v864 = vld [vmem:[#allocation2 + $0x30] sm:$0xff]
    %v865 = vld [vmem:[#allocation2 + $0x38] sm:$0xff]
    %v866 = vld [vmem:[#allocation2 + $0x40] sm:$0xff]
    %v867 = vld [vmem:[#allocation2 + $0x48] sm:$0xff]
    %v868 = vld [vmem:[#allocation2 + $0x50] sm:$0xff]
    %v869 = vld [vmem:[#allocation2 + $0x58] sm:$0xff]
    %v870 = vld [vmem:[#allocation2 + $0x60] sm:$0xff]
    %v871 = vld [vmem:[#allocation2 + $0x68] sm:$0xff]
    %v872 = vld [vmem:[#allocation2 + $0x70] sm:$0xff]
    %v873 = vld [vmem:[#allocation2 + $0x78] sm:$0xff]
    %v874 = vld [vmem:[#allocation2 + $0x80] sm:$0xff]
    %v875 = vld [vmem:[#allocation2 + $0x88] sm:$0xff]
    %v876 = vld [vmem:[#allocation2 + $0x90] sm:$0xff]
    %v877 = vld [vmem:[#allocation2 + $0x98] sm:$0xff]
    %v878 = vld [vmem:[#allocation2 + $0xa0] sm:$0xff]
    %v879 = vld [vmem:[#allocation2 + $0xa8] sm:$0xff]
    %v880 = vld [vmem:[#allocation2 + $0xb0] sm:$0xff]
    %v881 = vld [vmem:[#allocation2 + $0xb8] sm:$0xff]
    %v882 = vld [vmem:[#allocation2 + $0xc0] sm:$0xff]
    %v883 = vld [vmem:[#allocation2 + $0xc8] sm:$0xff]
    %v884 = vld [vmem:[#allocation2 + $0xd0] sm:$0xff]
    %v885 = vld [vmem:[#allocation2 + $0xd8] sm:$0xff]
    %v886 = vld [vmem:[#allocation2 + $0xe0] sm:$0xff]
    %v887 = vld [vmem:[#allocation2 + $0xe8] sm:$0xff]
    %v888 = vld [vmem:[#allocation2 + $0xf0] sm:$0xff]
    %v889 = vld [vmem:[#allocation2 + $0xf8] sm:$0xff]
    %v890 = vld [vmem:[#allocation2 + $0x100] sm:$0xff]
    %v891 = vld [vmem:[#allocation2 + $0x108] sm:$0xff]
    %v892 = vld [vmem:[#allocation2 + $0x110] sm:$0xff]
    %v893 = vld [vmem:[#allocation2 + $0x118] sm:$0xff]
    %v894 = vld [vmem:[#allocation2 + $0x120] sm:$0xff]
    %v895 = vld [vmem:[#allocation2 + $0x128] sm:$0xff]
    %v896 = vld [vmem:[#allocation2 + $0x130] sm:$0xff]
    %v897 = vld [vmem:[#allocation2 + $0x138] sm:$0xff]
    %v898 = vld [vmem:[#allocation2 + $0x140] sm:$0xff]
    %v899 = vld [vmem:[#allocation2 + $0x148] sm:$0xff]
    %v900 = vld [vmem:[#allocation2 + $0x150] sm:$0xff]
    %v901 = vld [vmem:[#allocation2 + $0x158] sm:$0xff]
    %v902 = vld [vmem:[#allocation2 + $0x160] sm:$0xff]
    %v903 = vld [vmem:[#allocation2 + $0x168] sm:$0xff]
    %v904 = vld [vmem:[#allocation2 + $0x170] sm:$0xff]
    %v905 = vld [vmem:[#allocation2 + $0x178] sm:$0xff]
    %v906 = vld [vmem:[#allocation2 + $0x180] sm:$0xff]
    %v907 = vld [vmem:[#allocation2 + $0x188] sm:$0xff]
    %v908 = vld [vmem:[#allocation2 + $0x190] sm:$0xff]
    %v909 = vld [vmem:[#allocation2 + $0x198] sm:$0xff]
    %v910 = vld [vmem:[#allocation2 + $0x1a0] sm:$0xff]
    %v911 = vld [vmem:[#allocation2 + $0x1a8] sm:$0xff]
    %v912 = vld [vmem:[#allocation2 + $0x1b0] sm:$0xff]
    %v913 = vld [vmem:[#allocation2 + $0x1b8] sm:$0xff]
    %v914 = vld [vmem:[#allocation2 + $0x1c0] sm:$0xff]
    %v915 = vld [vmem:[#allocation2 + $0x1c8] sm:$0xff]
    %v916 = vld [vmem:[#allocation2 + $0x1d0] sm:$0xff]
    %v917 = vld [vmem:[#allocation2 + $0x1d8] sm:$0xff]
    %v918 = vld [vmem:[#allocation2 + $0x1e0] sm:$0xff]
    %v919 = vld [vmem:[#allocation2 + $0x1e8] sm:$0xff]
    %v920 = vld [vmem:[#allocation2 + $0x1f0] sm:$0xff]
    %v921 = vld [vmem:[#allocation2 + $0x1f8] sm:$0xff]
    %v922 = vld [vmem:[#allocation2 + $0x200] sm:$0xff]
    %v923 = vld [vmem:[#allocation2 + $0x208] sm:$0xff]
    %v924 = vld [vmem:[#allocation2 + $0x210] sm:$0xff]
    %v925 = vld [vmem:[#allocation2 + $0x218] sm:$0xff]
    %v926 = vld [vmem:[#allocation2 + $0x220] sm:$0xff]
    %v927 = vld [vmem:[#allocation2 + $0x228] sm:$0xff]
    %v928 = vld [vmem:[#allocation2 + $0x230] sm:$0xff]
    %v929 = vld [vmem:[#allocation2 + $0x238] sm:$0xff]
    %v930 = vld [vmem:[#allocation2 + $0x240] sm:$0xff]
    %v931 = vld [vmem:[#allocation2 + $0x248] sm:$0xff]
    %v932 = vld [vmem:[#allocation2 + $0x250] sm:$0xff]
    %v933 = vld [vmem:[#allocation2 + $0x258] sm:$0xff]
    %v934 = vld [vmem:[#allocation2 + $0x260] sm:$0xff]
    %v935 = vld [vmem:[#allocation2 + $0x268] sm:$0xff]
    %v936 = vld [vmem:[#allocation2 + $0x270] sm:$0xff]
    %v937 = vld [vmem:[#allocation2 + $0x278] sm:$0xff]
    %v938 = vld [vmem:[#allocation2 + $0x280] sm:$0xff]
    %v939 = vld [vmem:[#allocation2 + $0x288] sm:$0xff]
    %v940 = vld [vmem:[#allocation2 + $0x290] sm:$0xff]
    %v941 = vld [vmem:[#allocation2 + $0x298] sm:$0xff]
    %v942 = vld [vmem:[#allocation2 + $0x2a0] sm:$0xff]
    %v943 = vld [vmem:[#allocation2 + $0x2a8] sm:$0xff]
    %v944 = vld [vmem:[#allocation2 + $0x2b0] sm:$0xff]
    %v945 = vld [vmem:[#allocation2 + $0x2b8] sm:$0xff]
    %v946 = vld [vmem:[#allocation2 + $0x2c0] sm:$0x3]
    %v947 = vld [vmem:[#allocation2 + $0x2c8] sm:$0x3]
    %v948 = vld [vmem:[#allocation2 + $0x2d0] sm:$0x3]
    %v949 = vld [vmem:[#allocation2 + $0x2d8] sm:$0x3]
    %v950 = vld [vmem:[#allocation6] sm:$0xff]
    %v951 = vld [vmem:[#allocation6 + $0x8] sm:$0xff]
    %v952 = vld [vmem:[#allocation6 + $0x10] sm:$0xff]
    %v953 = vld [vmem:[#allocation6 + $0x18] sm:$0xff]
    %v954 = vld [vmem:[#allocation6 + $0x20] sm:$0xff]
    %v955 = vld [vmem:[#allocation6 + $0x28] sm:$0xff]
    %v956 = vld [vmem:[#allocation6 + $0x30] sm:$0xff]
    %v957 = vld [vmem:[#allocation6 + $0x38] sm:$0xff]
    %v958 = vld [vmem:[#allocation6 + $0x40] sm:$0xff]
    %v959 = vld [vmem:[#allocation6 + $0x48] sm:$0xff]
    %v960 = vld [vmem:[#allocation6 + $0x50] sm:$0xff]
    %v961 = vld [vmem:[#allocation6 + $0x58] sm:$0xff]
    %v962 = vld [vmem:[#allocation6 + $0x60] sm:$0xff]
    %v963 = vld [vmem:[#allocation6 + $0x68] sm:$0xff]
    %v964 = vld [vmem:[#allocation6 + $0x70] sm:$0xff]
    %v965 = vld [vmem:[#allocation6 + $0x78] sm:$0xff]
    %v966 = vld [vmem:[#allocation6 + $0x80] sm:$0xff]
    %v967 = vld [vmem:[#allocation6 + $0x88] sm:$0xff]
    %v968 = vld [vmem:[#allocation6 + $0x90] sm:$0xff]
    %v969 = vld [vmem:[#allocation6 + $0x98] sm:$0xff]
    %v970 = vld [vmem:[#allocation6 + $0xa0] sm:$0xff]
    %v971 = vld [vmem:[#allocation6 + $0xa8] sm:$0xff]
    %v972 = vld [vmem:[#allocation6 + $0xb0] sm:$0xff]
    %v973 = vld [vmem:[#allocation6 + $0xb8] sm:$0xff]
    %v974 = vld [vmem:[#allocation6 + $0xc0] sm:$0xff]
    %v975 = vld [vmem:[#allocation6 + $0xc8] sm:$0xff]
    %v976 = vld [vmem:[#allocation6 + $0xd0] sm:$0xff]
    %v977 = vld [vmem:[#allocation6 + $0xd8] sm:$0xff]
    %v978 = vld [vmem:[#allocation6 + $0xe0] sm:$0xff]
    %v979 = vld [vmem:[#allocation6 + $0xe8] sm:$0xff]
    %v980 = vld [vmem:[#allocation6 + $0xf0] sm:$0xff]
    %v981 = vld [vmem:[#allocation6 + $0xf8] sm:$0xff]
    %v1005 = vunpack.c.l.b16 %v833
    %v1006 = vunpack.c.l.b16 %v834
    %v1007 = vunpack.c.l.b16 %v835
    %v1008 = vunpack.c.l.b16 %v836
    %v1009 = vunpack.c.l.b16 %v837
    %v1010 = vunpack.c.l.b16 %v838
    %v1011 = vunpack.c.l.b16 %v839
    %v1012 = vunpack.c.l.b16 %v840
    %v1013 = vunpack.c.l.b16 %v841
    %v1014 = vunpack.c.l.b16 %v842
    %v1015 = vunpack.c.l.b16 %v843
    %v1016 = vunpack.c.l.b16 %v844
    %v1017 = vunpack.c.l.b16 %v845
    %v1018 = vunpack.c.l.b16 %v846
    %v1019 = vunpack.c.l.b16 %v847
    %v1020 = vunpack.c.l.b16 %v848
    %v1021 = vunpack.c.l.b16 %v849
    %v1022 = vunpack.c.l.b16 %v850
    %v1023 = vunpack.c.l.b16 %v851
    %v1024 = vunpack.c.l.b16 %v852
    %v1025 = vunpack.c.l.b16 %v853
    %v1026 = vunpack.c.l.b16 %v854
    %v1027 = vunpack.c.l.b16 %v855
    %v1028 = vpack.c.b16 %v1006, %v1005
    %v1029 = vpack.c.b16 %v1008, %v1007
    %v1030 = vpack.c.b16 %v1010, %v1009
    %v1031 = vpack.c.b16 %v1012, %v1011
    %v1032 = vpack.c.b16 %v1014, %v1013
    %v1033 = vpack.c.b16 %v1016, %v1015
    %v1034 = vpack.c.b16 %v1018, %v1017
    %v1035 = vpack.c.b16 %v1020, %v1019
    %v1036 = vpack.c.b16 %v1022, %v1021
    %v1037 = vpack.c.b16 %v1024, %v1023
    %v1038 = vpack.c.b16 %v1026, %v1025
    %v1039 = vpack.c.b16 %v1027, %v1027
    %v1084 = vunpack.c.l.b16 %v950
    %v1085 = vunpack.c.h.b16 %v950
    %v1086 = vunpack.c.l.b16 %v951
    %v1087 = vunpack.c.h.b16 %v951
    %v1088 = vunpack.c.l.b16 %v952
    %v1089 = vunpack.c.h.b16 %v952
    %v1090 = vunpack.c.l.b16 %v953
    %v1091 = vunpack.c.h.b16 %v953
    %v1092 = vunpack.c.l.b16 %v954
    %v1093 = vunpack.c.h.b16 %v954
    %v1094 = vunpack.c.l.b16 %v955
    %v1095 = vunpack.c.h.b16 %v955
    %v1096 = vunpack.c.l.b16 %v956
    %v1097 = vunpack.c.h.b16 %v956
    %v1098 = vunpack.c.l.b16 %v957
    %v1099 = vunpack.c.h.b16 %v957
    %v1100 = vunpack.c.l.b16 %v958
    %v1101 = vunpack.c.h.b16 %v958
    %v1102 = vunpack.c.l.b16 %v959
    %v1103 = vunpack.c.h.b16 %v959
    %v1104 = vunpack.c.l.b16 %v960
    %v1105 = vunpack.c.h.b16 %v960
    %v1106 = vunpack.c.l.b16 %v961
    %v1107 = vunpack.c.h.b16 %v961
    %v1108 = vunpack.c.l.b16 %v962
    %v1109 = vunpack.c.h.b16 %v962
    %v1110 = vunpack.c.l.b16 %v963
    %v1111 = vunpack.c.h.b16 %v963
    %v1112 = vunpack.c.l.b16 %v964
    %v1113 = vunpack.c.h.b16 %v964
    %v1114 = vunpack.c.l.b16 %v965
    %v1115 = vunpack.c.h.b16 %v965
    %v1116 = vunpack.c.l.b16 %v966
    %v1117 = vunpack.c.h.b16 %v966
    %v1118 = vunpack.c.l.b16 %v967
    %v1119 = vunpack.c.h.b16 %v967
    %v1120 = vunpack.c.l.b16 %v968
    %v1121 = vunpack.c.h.b16 %v968
    %v1122 = vunpack.c.l.b16 %v969
    %v1123 = vunpack.c.h.b16 %v969
    %v1124 = vunpack.c.l.b16 %v970
    %v1125 = vunpack.c.h.b16 %v970
    %v1126 = vunpack.c.l.b16 %v971
    %v1127 = vunpack.c.h.b16 %v971
    %v1128 = vunpack.c.l.b16 %v972
    %v1129 = vunpack.c.h.b16 %v972
    %v1130 = vunpack.c.l.b16 %v973
    %v1131 = vunpack.c.h.b16 %v973
    %v1132 = vunpack.c.l.b16 %v974
    %v1133 = vunpack.c.h.b16 %v974
    %v1134 = vunpack.c.l.b16 %v975
    %v1135 = vunpack.c.h.b16 %v975
    %v1136 = vunpack.c.l.b16 %v976
    %v1137 = vunpack.c.h.b16 %v976
    %v1138 = vunpack.c.l.b16 %v977
    %v1139 = vunpack.c.h.b16 %v977
    %v1140 = vunpack.c.l.b16 %v978
    %v1141 = vunpack.c.h.b16 %v978
    %v1142 = vunpack.c.l.b16 %v979
    %v1143 = vunpack.c.h.b16 %v979
    %v1144 = vunpack.c.l.b16 %v980
    %v1145 = vunpack.c.h.b16 %v980
    %v1146 = vunpack.c.l.b16 %v981
    %v1147 = vunpack.c.h.b16 %v981
    %v1148 = vpack.c.b16 %v1088, %v1084
    %v1149 = vpack.c.b16 %v1089, %v1085
    %v1150 = vpack.c.b16 %v1090, %v1086
    %v1151 = vpack.c.b16 %v1091, %v1087
    %v1152 = vpack.c.b16 %v1096, %v1092
    %v1153 = vpack.c.b16 %v1097, %v1093
    %v1154 = vpack.c.b16 %v1098, %v1094
    %v1155 = vpack.c.b16 %v1099, %v1095
    %v1156 = vpack.c.b16 %v1104, %v1100
    %v1157 = vpack.c.b16 %v1105, %v1101
    %v1158 = vpack.c.b16 %v1106, %v1102
    %v1159 = vpack.c.b16 %v1107, %v1103
    %v1160 = vpack.c.b16 %v1112, %v1108
    %v1161 = vpack.c.b16 %v1113, %v1109
    %v1162 = vpack.c.b16 %v1114, %v1110
    %v1163 = vpack.c.b16 %v1115, %v1111
    %v1164 = vpack.c.b16 %v1120, %v1116
    %v1165 = vpack.c.b16 %v1121, %v1117
    %v1166 = vpack.c.b16 %v1122, %v1118
    %v1167 = vpack.c.b16 %v1123, %v1119
    %v1168 = vpack.c.b16 %v1128, %v1124
    %v1169 = vpack.c.b16 %v1129, %v1125
    %v1170 = vpack.c.b16 %v1130, %v1126
    %v1171 = vpack.c.b16 %v1131, %v1127
    %v1172 = vpack.c.b16 %v1136, %v1132
    %v1173 = vpack.c.b16 %v1137, %v1133
    %v1174 = vpack.c.b16 %v1138, %v1134
    %v1175 = vpack.c.b16 %v1139, %v1135
    %v1176 = vpack.c.b16 %v1144, %v1140
    %v1177 = vpack.c.b16 %v1145, %v1141
    %v1178 = vpack.c.b16 %v1146, %v1142
    %v1179 = vpack.c.b16 %v1147, %v1143
    %1212 = vmatpush.bf16.msra.mxu0 %v1176
    %1213 = vmatpush.bf16.msra.mxu0 %v1172
    %1214 = vmatpush.bf16.msra.mxu0 %v1168
    %1215 = vmatpush.bf16.msra.mxu0 %v1164
    %1216 = vmatpush.bf16.msra.mxu0 %v1160
    %1217 = vmatpush.bf16.msra.mxu0 %v1156
    %1218 = vmatpush.bf16.msra.mxu0 %v1152
    %1219 = vmatpush.bf16.msra.mxu0 %v1148
    %1220 = vmatmul.bf16.gmra.mxu0 %v1028
    %v1221 = vpop.f32.mrf.mxu0
    %v1222 = vadd.f32 0.0, %v1221
    %v1223 = vpop.f32.mrf.mxu0
    %v1224 = vadd.f32 0.0, %v1223
    %1225 = vmatmul.bf16.gmra.mxu0 %v1029
    %v1226 = vpop.f32.mrf.mxu0
    %v1227 = vadd.f32 0.0, %v1226
    %v1228 = vpop.f32.mrf.mxu0
    %v1229 = vadd.f32 0.0, %v1228
    %1230 = vmatmul.bf16.gmra.mxu0 %v1030
    %v1231 = vpop.f32.mrf.mxu0
    %v1232 = vadd.f32 0.0, %v1231
    %v1233 = vpop.f32.mrf.mxu0
    %v1234 = vadd.f32 0.0, %v1233
    %1235 = vmatmul.bf16.gmra.mxu0 %v1031
    %v1236 = vpop.f32.mrf.mxu0
    %v1237 = vadd.f32 0.0, %v1236
    %v1238 = vpop.f32.mrf.mxu0
    %v1239 = vadd.f32 0.0, %v1238
    %1240 = vmatmul.bf16.gmra.mxu0 %v1032
    %v1241 = vpop.f32.mrf.mxu0
    %v1242 = vadd.f32 0.0, %v1241
    %v1243 = vpop.f32.mrf.mxu0
    %v1244 = vadd.f32 0.0, %v1243
    %1245 = vmatmul.bf16.gmra.mxu0 %v1033
    %v1246 = vpop.f32.mrf.mxu0
    %v1247 = vadd.f32 0.0, %v1246
    %v1248 = vpop.f32.mrf.mxu0
    %v1249 = vadd.f32 0.0, %v1248
    %1250 = vmatmul.bf16.gmra.mxu0 %v1034
    %v1251 = vpop.f32.mrf.mxu0
    %v1252 = vadd.f32 0.0, %v1251
    %v1253 = vpop.f32.mrf.mxu0
    %v1254 = vadd.f32 0.0, %v1253
    %1255 = vmatmul.bf16.gmra.mxu0 %v1035
    %v1256 = vpop.f32.mrf.mxu0
    %v1257 = vadd.f32 0.0, %v1256
    %v1258 = vpop.f32.mrf.mxu0
    %v1259 = vadd.f32 0.0, %v1258
    %1260 = vmatmul.bf16.gmra.mxu0 %v1036
    %v1261 = vpop.f32.mrf.mxu0
    %v1262 = vadd.f32 0.0, %v1261
    %v1263 = vpop.f32.mrf.mxu0
    %v1264 = vadd.f32 0.0, %v1263
    %1265 = vmatmul.bf16.gmra.mxu0 %v1037
    %v1266 = vpop.f32.mrf.mxu0
    %v1267 = vadd.f32 0.0, %v1266
    %v1268 = vpop.f32.mrf.mxu0
    %v1269 = vadd.f32 0.0, %v1268
    %1270 = vmatmul.bf16.gmra.mxu0 %v1038
    %v1271 = vpop.f32.mrf.mxu0
    %v1272 = vadd.f32 0.0, %v1271
    %v1273 = vpop.f32.mrf.mxu0
    %v1274 = vadd.f32 0.0, %v1273
    %1275 = vmatmul.bf16.gmra.mxu0 %v1039
    %v1276 = vpop.f32.mrf.mxu0
    %v1277 = vadd.f32 0.0, %v1276
    %v1278 = vpop.f32.mrf.mxu0
    %1279 = vdwg.mxu0
    %1280 = vmatpush.bf16.msra.mxu0 %v1177
    %1281 = vmatpush.bf16.msra.mxu0 %v1173
    %1282 = vmatpush.bf16.msra.mxu0 %v1169
    %1283 = vmatpush.bf16.msra.mxu0 %v1165
    %1284 = vmatpush.bf16.msra.mxu0 %v1161
    %1285 = vmatpush.bf16.msra.mxu0 %v1157
    %1286 = vmatpush.bf16.msra.mxu0 %v1153
    %1287 = vmatpush.bf16.msra.mxu0 %v1149
    %1288 = vmatmul.bf16.gmra.mxu0 %v1028
    %v1289 = vpop.f32.mrf.mxu0
    %v1290 = vadd.f32 0.0, %v1289
    %v1291 = vpop.f32.mrf.mxu0
    %v1292 = vadd.f32 0.0, %v1291
    %1293 = vmatmul.bf16.gmra.mxu0 %v1029
    %v1294 = vpop.f32.mrf.mxu0
    %v1295 = vadd.f32 0.0, %v1294
    %v1296 = vpop.f32.mrf.mxu0
    %v1297 = vadd.f32 0.0, %v1296
    %1298 = vmatmul.bf16.gmra.mxu0 %v1030
    %v1299 = vpop.f32.mrf.mxu0
    %v1300 = vadd.f32 0.0, %v1299
    %v1301 = vpop.f32.mrf.mxu0
    %v1302 = vadd.f32 0.0, %v1301
    %1303 = vmatmul.bf16.gmra.mxu0 %v1031
    %v1304 = vpop.f32.mrf.mxu0
    %v1305 = vadd.f32 0.0, %v1304
    %v1306 = vpop.f32.mrf.mxu0
    %v1307 = vadd.f32 0.0, %v1306
    %1308 = vmatmul.bf16.gmra.mxu0 %v1032
    %v1309 = vpop.f32.mrf.mxu0
    %v1310 = vadd.f32 0.0, %v1309
    %v1311 = vpop.f32.mrf.mxu0
    %v1312 = vadd.f32 0.0, %v1311
    %1313 = vmatmul.bf16.gmra.mxu0 %v1033
    %v1314 = vpop.f32.mrf.mxu0
    %v1315 = vadd.f32 0.0, %v1314
    %v1316 = vpop.f32.mrf.mxu0
    %v1317 = vadd.f32 0.0, %v1316
    %1318 = vmatmul.bf16.gmra.mxu0 %v1034
    %v1319 = vpop.f32.mrf.mxu0
    %v1320 = vadd.f32 0.0, %v1319
    %v1321 = vpop.f32.mrf.mxu0
    %v1322 = vadd.f32 0.0, %v1321
    %1323 = vmatmul.bf16.gmra.mxu0 %v1035
    %v1324 = vpop.f32.mrf.mxu0
    %v1325 = vadd.f32 0.0, %v1324
    %v1326 = vpop.f32.mrf.mxu0
    %v1327 = vadd.f32 0.0, %v1326
    %1328 = vmatmul.bf16.gmra.mxu0 %v1036
    %v1329 = vpop.f32.mrf.mxu0
    %v1330 = vadd.f32 0.0, %v1329
    %v1331 = vpop.f32.mrf.mxu0
    %v1332 = vadd.f32 0.0, %v1331
    %1333 = vmatmul.bf16.gmra.mxu0 %v1037
    %v1334 = vpop.f32.mrf.mxu0
    %v1335 = vadd.f32 0.0, %v1334
    %v1336 = vpop.f32.mrf.mxu0
    %v1337 = vadd.f32 0.0, %v1336
    %1338 = vmatmul.bf16.gmra.mxu0 %v1038
    %v1339 = vpop.f32.mrf.mxu0
    %v1340 = vadd.f32 0.0, %v1339
    %v1341 = vpop.f32.mrf.mxu0
    %v1342 = vadd.f32 0.0, %v1341
    %1343 = vmatmul.bf16.gmra.mxu0 %v1039
    %v1344 = vpop.f32.mrf.mxu0
    %v1345 = vadd.f32 0.0, %v1344
    %v1346 = vpop.f32.mrf.mxu0
    %1347 = vdwg.mxu0
    %1348 = vmatpush.bf16.msra.mxu0 %v1178
    %1349 = vmatpush.bf16.msra.mxu0 %v1174
    %1350 = vmatpush.bf16.msra.mxu0 %v1170
    %1351 = vmatpush.bf16.msra.mxu0 %v1166
    %1352 = vmatpush.bf16.msra.mxu0 %v1162
    %1353 = vmatpush.bf16.msra.mxu0 %v1158
    %1354 = vmatpush.bf16.msra.mxu0 %v1154
    %1355 = vmatpush.bf16.msra.mxu0 %v1150
    %1356 = vmatmul.bf16.gmra.mxu0 %v1028
    %v1357 = vpop.f32.mrf.mxu0
    %v1358 = vadd.f32 0.0, %v1357
    %v1359 = vpop.f32.mrf.mxu0
    %v1360 = vadd.f32 0.0, %v1359
    %1361 = vmatmul.bf16.gmra.mxu0 %v1029
    %v1362 = vpop.f32.mrf.mxu0
    %v1363 = vadd.f32 0.0, %v1362
    %v1364 = vpop.f32.mrf.mxu0
    %v1365 = vadd.f32 0.0, %v1364
    %1366 = vmatmul.bf16.gmra.mxu0 %v1030
    %v1367 = vpop.f32.mrf.mxu0
    %v1368 = vadd.f32 0.0, %v1367
    %v1369 = vpop.f32.mrf.mxu0
    %v1370 = vadd.f32 0.0, %v1369
    %1371 = vmatmul.bf16.gmra.mxu0 %v1031
    %v1372 = vpop.f32.mrf.mxu0
    %v1373 = vadd.f32 0.0, %v1372
    %v1374 = vpop.f32.mrf.mxu0
    %v1375 = vadd.f32 0.0, %v1374
    %1376 = vmatmul.bf16.gmra.mxu0 %v1032
    %v1377 = vpop.f32.mrf.mxu0
    %v1378 = vadd.f32 0.0, %v1377
    %v1379 = vpop.f32.mrf.mxu0
    %v1380 = vadd.f32 0.0, %v1379
    %1381 = vmatmul.bf16.gmra.mxu0 %v1033
    %v1382 = vpop.f32.mrf.mxu0
    %v1383 = vadd.f32 0.0, %v1382
    %v1384 = vpop.f32.mrf.mxu0
    %v1385 = vadd.f32 0.0, %v1384
    %1386 = vmatmul.bf16.gmra.mxu0 %v1034
    %v1387 = vpop.f32.mrf.mxu0
    %v1388 = vadd.f32 0.0, %v1387
    %v1389 = vpop.f32.mrf.mxu0
    %v1390 = vadd.f32 0.0, %v1389
    %1391 = vmatmul.bf16.gmra.mxu0 %v1035
    %v1392 = vpop.f32.mrf.mxu0
    %v1393 = vadd.f32 0.0, %v1392
    %v1394 = vpop.f32.mrf.mxu0
    %v1395 = vadd.f32 0.0, %v1394
    %1396 = vmatmul.bf16.gmra.mxu0 %v1036
    %v1397 = vpop.f32.mrf.mxu0
    %v1398 = vadd.f32 0.0, %v1397
    %v1399 = vpop.f32.mrf.mxu0
    %v1400 = vadd.f32 0.0, %v1399
    %1401 = vmatmul.bf16.gmra.mxu0 %v1037
    %v1402 = vpop.f32.mrf.mxu0
    %v1403 = vadd.f32 0.0, %v1402
    %v1404 = vpop.f32.mrf.mxu0
    %v1405 = vadd.f32 0.0, %v1404
    %1406 = vmatmul.bf16.gmra.mxu0 %v1038
    %v1407 = vpop.f32.mrf.mxu0
    %v1408 = vadd.f32 0.0, %v1407
    %v1409 = vpop.f32.mrf.mxu0
    %v1410 = vadd.f32 0.0, %v1409
    %1411 = vmatmul.bf16.gmra.mxu0 %v1039
    %v1412 = vpop.f32.mrf.mxu0
    %v1413 = vadd.f32 0.0, %v1412
    %v1414 = vpop.f32.mrf.mxu0
    %1415 = vdwg.mxu0
    %1416 = vmatpush.bf16.msra.mxu0 %v1179
    %1417 = vmatpush.bf16.msra.mxu0 %v1175
    %1418 = vmatpush.bf16.msra.mxu0 %v1171
    %1419 = vmatpush.bf16.msra.mxu0 %v1167
    %1420 = vmatpush.bf16.msra.mxu0 %v1163
    %1421 = vmatpush.bf16.msra.mxu0 %v1159
    %1422 = vmatpush.bf16.msra.mxu0 %v1155
    %1423 = vmatpush.bf16.msra.mxu0 %v1151
    %1424 = vmatmul.bf16.gmra.mxu0 %v1028
    %v1425 = vpop.f32.mrf.mxu0
    %v1426 = vadd.f32 0.0, %v1425
    %v1427 = vpop.f32.mrf.mxu0
    %v1428 = vadd.f32 0.0, %v1427
    %1429 = vmatmul.bf16.gmra.mxu0 %v1029
    %v1430 = vpop.f32.mrf.mxu0
    %v1431 = vadd.f32 0.0, %v1430
    %v1432 = vpop.f32.mrf.mxu0
    %v1433 = vadd.f32 0.0, %v1432
    %1434 = vmatmul.bf16.gmra.mxu0 %v1030
    %v1435 = vpop.f32.mrf.mxu0
    %v1436 = vadd.f32 0.0, %v1435
    %v1437 = vpop.f32.mrf.mxu0
    %v1438 = vadd.f32 0.0, %v1437
    %1439 = vmatmul.bf16.gmra.mxu0 %v1031
    %v1440 = vpop.f32.mrf.mxu0
    %v1441 = vadd.f32 0.0, %v1440
    %v1442 = vpop.f32.mrf.mxu0
    %v1443 = vadd.f32 0.0, %v1442
    %1444 = vmatmul.bf16.gmra.mxu0 %v1032
    %v1445 = vpop.f32.mrf.mxu0
    %v1446 = vadd.f32 0.0, %v1445
    %v1447 = vpop.f32.mrf.mxu0
    %v1448 = vadd.f32 0.0, %v1447
    %1449 = vmatmul.bf16.gmra.mxu0 %v1033
    %v1450 = vpop.f32.mrf.mxu0
    %v1451 = vadd.f32 0.0, %v1450
    %v1452 = vpop.f32.mrf.mxu0
    %v1453 = vadd.f32 0.0, %v1452
    %1454 = vmatmul.bf16.gmra.mxu0 %v1034
    %v1455 = vpop.f32.mrf.mxu0
    %v1456 = vadd.f32 0.0, %v1455
    %v1457 = vpop.f32.mrf.mxu0
    %v1458 = vadd.f32 0.0, %v1457
    %1459 = vmatmul.bf16.gmra.mxu0 %v1035
    %v1460 = vpop.f32.mrf.mxu0
    %v1461 = vadd.f32 0.0, %v1460
    %v1462 = vpop.f32.mrf.mxu0
    %v1463 = vadd.f32 0.0, %v1462
    %1464 = vmatmul.bf16.gmra.mxu0 %v1036
    %v1465 = vpop.f32.mrf.mxu0
    %v1466 = vadd.f32 0.0, %v1465
    %v1467 = vpop.f32.mrf.mxu0
    %v1468 = vadd.f32 0.0, %v1467
    %1469 = vmatmul.bf16.gmra.mxu0 %v1037
    %v1470 = vpop.f32.mrf.mxu0
    %v1471 = vadd.f32 0.0, %v1470
    %v1472 = vpop.f32.mrf.mxu0
    %v1473 = vadd.f32 0.0, %v1472
    %1474 = vmatmul.bf16.gmra.mxu0 %v1038
    %v1475 = vpop.f32.mrf.mxu0
    %v1476 = vadd.f32 0.0, %v1475
    %v1477 = vpop.f32.mrf.mxu0
    %v1478 = vadd.f32 0.0, %v1477
    %1479 = vmatmul.bf16.gmra.mxu0 %v1039
    %v1480 = vpop.f32.mrf.mxu0
    %v1481 = vadd.f32 0.0, %v1480
    %v1482 = vpop.f32.mrf.mxu0
    %1483 = vdwg.mxu0
    %v1484 = vadd.f32 %v858, %v1222
    %v1485 = vadd.f32 %v859, %v1290
    %v1486 = vadd.f32 %v860, %v1358
    %v1487 = vadd.f32 %v861, %v1426
    %v1488 = vadd.f32 %v862, %v1224
    %v1489 = vadd.f32 %v863, %v1292
    %v1490 = vadd.f32 %v864, %v1360
    %v1491 = vadd.f32 %v865, %v1428
    %v1492 = vadd.f32 %v866, %v1227
    %v1493 = vadd.f32 %v867, %v1295
    %v1494 = vadd.f32 %v868, %v1363
    %v1495 = vadd.f32 %v869, %v1431
    %v1496 = vadd.f32 %v870, %v1229
    %v1497 = vadd.f32 %v871, %v1297
    %v1498 = vadd.f32 %v872, %v1365
    %v1499 = vadd.f32 %v873, %v1433
    %v1500 = vadd.f32 %v874, %v1232
    %v1501 = vadd.f32 %v875, %v1300
    %v1502 = vadd.f32 %v876, %v1368
    %v1503 = vadd.f32 %v877, %v1436
    %v1504 = vadd.f32 %v878, %v1234
    %v1505 = vadd.f32 %v879, %v1302
    %v1506 = vadd.f32 %v880, %v1370
    %v1507 = vadd.f32 %v881, %v1438
    %v1508 = vadd.f32 %v882, %v1237
    %v1509 = vadd.f32 %v883, %v1305
    %v1510 = vadd.f32 %v884, %v1373
    %v1511 = vadd.f32 %v885, %v1441
    %v1512 = vadd.f32 %v886, %v1239
    %v1513 = vadd.f32 %v887, %v1307
    %v1514 = vadd.f32 %v888, %v1375
    %v1515 = vadd.f32 %v889, %v1443
    %v1516 = vadd.f32 %v890, %v1242
    %v1517 = vadd.f32 %v891, %v1310
    %v1518 = vadd.f32 %v892, %v1378
    %v1519 = vadd.f32 %v893, %v1446
    %v1520 = vadd.f32 %v894, %v1244
    %v1521 = vadd.f32 %v895, %v1312
    %v1522 = vadd.f32 %v896, %v1380
    %v1523 = vadd.f32 %v897, %v1448
    %v1524 = vadd.f32 %v898, %v1247
    %v1525 = vadd.f32 %v899, %v1315
    %v1526 = vadd.f32 %v900, %v1383
    %v1527 = vadd.f32 %v901, %v1451
    %v1528 = vadd.f32 %v902, %v1249
    %v1529 = vadd.f32 %v903, %v1317
    %v1530 = vadd.f32 %v904, %v1385
    %v1531 = vadd.f32 %v905, %v1453
    %v1532 = vadd.f32 %v906, %v1252
    %v1533 = vadd.f32 %v907, %v1320
    %v1534 = vadd.f32 %v908, %v1388
    %v1535 = vadd.f32 %v909, %v1456
    %v1536 = vadd.f32 %v910, %v1254
    %v1537 = vadd.f32 %v911, %v1322
    %v1538 = vadd.f32 %v912, %v1390
    %v1539 = vadd.f32 %v913, %v1458
    %v1540 = vadd.f32 %v914, %v1257
    %v1541 = vadd.f32 %v915, %v1325
    %v1542 = vadd.f32 %v916, %v1393
    %v1543 = vadd.f32 %v917, %v1461
    %v1544 = vadd.f32 %v918, %v1259
    %v1545 = vadd.f32 %v919, %v1327
    %v1546 = vadd.f32 %v920, %v1395
    %v1547 = vadd.f32 %v921, %v1463
    %v1548 = vadd.f32 %v922, %v1262
    %v1549 = vadd.f32 %v923, %v1330
    %v1550 = vadd.f32 %v924, %v1398
    %v1551 = vadd.f32 %v925, %v1466
    %v1552 = vadd.f32 %v926, %v1264
    %v1553 = vadd.f32 %v927, %v1332
    %v1554 = vadd.f32 %v928, %v1400
    %v1555 = vadd.f32 %v929, %v1468
    %v1556 = vadd.f32 %v930, %v1267
    %v1557 = vadd.f32 %v931, %v1335
    %v1558 = vadd.f32 %v932, %v1403
    %v1559 = vadd.f32 %v933, %v1471
    %v1560 = vadd.f32 %v934, %v1269
    %v1561 = vadd.f32 %v935, %v1337
    %v1562 = vadd.f32 %v936, %v1405
    %v1563 = vadd.f32 %v937, %v1473
    %v1564 = vadd.f32 %v938, %v1272
    %v1565 = vadd.f32 %v939, %v1340
    %v1566 = vadd.f32 %v940, %v1408
    %v1567 = vadd.f32 %v941, %v1476
    %v1568 = vadd.f32 %v942, %v1274
    %v1569 = vadd.f32 %v943, %v1342
    %v1570 = vadd.f32 %v944, %v1410
    %v1571 = vadd.f32 %v945, %v1478
    %v1572 = vadd.f32 %v946, %v1277
    %v1573 = vadd.f32 %v947, %v1345
    %v1574 = vadd.f32 %v948, %v1413
    %v1575 = vadd.f32 %v949, %v1481
    %1576 = vst [vmem:[#allocation2] sm:$0xff] %v1484
    %1577 = vst [vmem:[#allocation2 + $0x8] sm:$0xff] %v1485
    %1578 = vst [vmem:[#allocation2 + $0x10] sm:$0xff] %v1486
    %1579 = vst [vmem:[#allocation2 + $0x18] sm:$0xff] %v1487
    %1580 = vst [vmem:[#allocation2 + $0x20] sm:$0xff] %v1488
    %1581 = vst [vmem:[#allocation2 + $0x28] sm:$0xff] %v1489
    %1582 = vst [vmem:[#allocation2 + $0x30] sm:$0xff] %v1490
    %1583 = vst [vmem:[#allocation2 + $0x38] sm:$0xff] %v1491
    %1584 = vst [vmem:[#allocation2 + $0x40] sm:$0xff] %v1492
    %1585 = vst [vmem:[#allocation2 + $0x48] sm:$0xff] %v1493
    %1586 = vst [vmem:[#allocation2 + $0x50] sm:$0xff] %v1494
    %1587 = vst [vmem:[#allocation2 + $0x58] sm:$0xff] %v1495
    %1588 = vst [vmem:[#allocation2 + $0x60] sm:$0xff] %v1496
    %1589 = vst [vmem:[#allocation2 + $0x68] sm:$0xff] %v1497
    %1590 = vst [vmem:[#allocation2 + $0x70] sm:$0xff] %v1498
    %1591 = vst [vmem:[#allocation2 + $0x78] sm:$0xff] %v1499
    %1592 = vst [vmem:[#allocation2 + $0x80] sm:$0xff] %v1500
    %1593 = vst [vmem:[#allocation2 + $0x88] sm:$0xff] %v1501
    %1594 = vst [vmem:[#allocation2 + $0x90] sm:$0xff] %v1502
    %1595 = vst [vmem:[#allocation2 + $0x98] sm:$0xff] %v1503
    %1596 = vst [vmem:[#allocation2 + $0xa0] sm:$0xff] %v1504
    %1597 = vst [vmem:[#allocation2 + $0xa8] sm:$0xff] %v1505
    %1598 = vst [vmem:[#allocation2 + $0xb0] sm:$0xff] %v1506
    %1599 = vst [vmem:[#allocation2 + $0xb8] sm:$0xff] %v1507
    %1600 = vst [vmem:[#allocation2 + $0xc0] sm:$0xff] %v1508
    %1601 = vst [vmem:[#allocation2 + $0xc8] sm:$0xff] %v1509
    %1602 = vst [vmem:[#allocation2 + $0xd0] sm:$0xff] %v1510
    %1603 = vst [vmem:[#allocation2 + $0xd8] sm:$0xff] %v1511
    %1604 = vst [vmem:[#allocation2 + $0xe0] sm:$0xff] %v1512
    %1605 = vst [vmem:[#allocation2 + $0xe8] sm:$0xff] %v1513
    %1606 = vst [vmem:[#allocation2 + $0xf0] sm:$0xff] %v1514
    %1607 = vst [vmem:[#allocation2 + $0xf8] sm:$0xff] %v1515
    %1608 = vst [vmem:[#allocation2 + $0x100] sm:$0xff] %v1516
    %1609 = vst [vmem:[#allocation2 + $0x108] sm:$0xff] %v1517
    %1610 = vst [vmem:[#allocation2 + $0x110] sm:$0xff] %v1518
    %1611 = vst [vmem:[#allocation2 + $0x118] sm:$0xff] %v1519
    %1612 = vst [vmem:[#allocation2 + $0x120] sm:$0xff] %v1520
    %1613 = vst [vmem:[#allocation2 + $0x128] sm:$0xff] %v1521
    %1614 = vst [vmem:[#allocation2 + $0x130] sm:$0xff] %v1522
    %1615 = vst [vmem:[#allocation2 + $0x138] sm:$0xff] %v1523
    %1616 = vst [vmem:[#allocation2 + $0x140] sm:$0xff] %v1524
    %1617 = vst [vmem:[#allocation2 + $0x148] sm:$0xff] %v1525
    %1618 = vst [vmem:[#allocation2 + $0x150] sm:$0xff] %v1526
    %1619 = vst [vmem:[#allocation2 + $0x158] sm:$0xff] %v1527
    %1620 = vst [vmem:[#allocation2 + $0x160] sm:$0xff] %v1528
    %1621 = vst [vmem:[#allocation2 + $0x168] sm:$0xff] %v1529
    %1622 = vst [vmem:[#allocation2 + $0x170] sm:$0xff] %v1530
    %1623 = vst [vmem:[#allocation2 + $0x178] sm:$0xff] %v1531
    %1624 = vst [vmem:[#allocation2 + $0x180] sm:$0xff] %v1532
    %1625 = vst [vmem:[#allocation2 + $0x188] sm:$0xff] %v1533
    %1626 = vst [vmem:[#allocation2 + $0x190] sm:$0xff] %v1534
    %1627 = vst [vmem:[#allocation2 + $0x198] sm:$0xff] %v1535
    %1628 = vst [vmem:[#allocation2 + $0x1a0] sm:$0xff] %v1536
    %1629 = vst [vmem:[#allocation2 + $0x1a8] sm:$0xff] %v1537
    %1630 = vst [vmem:[#allocation2 + $0x1b0] sm:$0xff] %v1538
    %1631 = vst [vmem:[#allocation2 + $0x1b8] sm:$0xff] %v1539
    %1632 = vst [vmem:[#allocation2 + $0x1c0] sm:$0xff] %v1540
    %1633 = vst [vmem:[#allocation2 + $0x1c8] sm:$0xff] %v1541
    %1634 = vst [vmem:[#allocation2 + $0x1d0] sm:$0xff] %v1542
    %1635 = vst [vmem:[#allocation2 + $0x1d8] sm:$0xff] %v1543
    %1636 = vst [vmem:[#allocation2 + $0x1e0] sm:$0xff] %v1544
    %1637 = vst [vmem:[#allocation2 + $0x1e8] sm:$0xff] %v1545
    %1638 = vst [vmem:[#allocation2 + $0x1f0] sm:$0xff] %v1546
    %1639 = vst [vmem:[#allocation2 + $0x1f8] sm:$0xff] %v1547
    %1640 = vst [vmem:[#allocation2 + $0x200] sm:$0xff] %v1548
    %1641 = vst [vmem:[#allocation2 + $0x208] sm:$0xff] %v1549
    %1642 = vst [vmem:[#allocation2 + $0x210] sm:$0xff] %v1550
    %1643 = vst [vmem:[#allocation2 + $0x218] sm:$0xff] %v1551
    %1644 = vst [vmem:[#allocation2 + $0x220] sm:$0xff] %v1552
    %1645 = vst [vmem:[#allocation2 + $0x228] sm:$0xff] %v1553
    %1646 = vst [vmem:[#allocation2 + $0x230] sm:$0xff] %v1554
    %1647 = vst [vmem:[#allocation2 + $0x238] sm:$0xff] %v1555
    %1648 = vst [vmem:[#allocation2 + $0x240] sm:$0xff] %v1556
    %1649 = vst [vmem:[#allocation2 + $0x248] sm:$0xff] %v1557
    %1650 = vst [vmem:[#allocation2 + $0x250] sm:$0xff] %v1558
    %1651 = vst [vmem:[#allocation2 + $0x258] sm:$0xff] %v1559
    %1652 = vst [vmem:[#allocation2 + $0x260] sm:$0xff] %v1560
    %1653 = vst [vmem:[#allocation2 + $0x268] sm:$0xff] %v1561
    %1654 = vst [vmem:[#allocation2 + $0x270] sm:$0xff] %v1562
    %1655 = vst [vmem:[#allocation2 + $0x278] sm:$0xff] %v1563
    %1656 = vst [vmem:[#allocation2 + $0x280] sm:$0xff] %v1564
    %1657 = vst [vmem:[#allocation2 + $0x288] sm:$0xff] %v1565
    %1658 = vst [vmem:[#allocation2 + $0x290] sm:$0xff] %v1566
    %1659 = vst [vmem:[#allocation2 + $0x298] sm:$0xff] %v1567
    %1660 = vst [vmem:[#allocation2 + $0x2a0] sm:$0xff] %v1568
    %1661 = vst [vmem:[#allocation2 + $0x2a8] sm:$0xff] %v1569
    %1662 = vst [vmem:[#allocation2 + $0x2b0] sm:$0xff] %v1570
    %1663 = vst [vmem:[#allocation2 + $0x2b8] sm:$0xff] %v1571
    %1664 = vst [vmem:[#allocation2 + $0x2c0] sm:$0x3] %v1572
    %1665 = vst [vmem:[#allocation2 + $0x2c8] sm:$0x3] %v1573
    %1666 = vst [vmem:[#allocation2 + $0x2d0] sm:$0x3] %v1574
    %1667 = vst [vmem:[#allocation2 + $0x2d8] sm:$0x3] %v1575
    %v1668 = vld [vmem:[#allocation2] sm:$0xff]
    %v1669 = vld [vmem:[#allocation2 + $0x8] sm:$0xff]
    %v1670 = vld [vmem:[#allocation2 + $0x10] sm:$0xff]
    %v1671 = vld [vmem:[#allocation2 + $0x18] sm:$0xff]
    %v1672 = vld [vmem:[#allocation2 + $0x20] sm:$0xff]
    %v1673 = vld [vmem:[#allocation2 + $0x28] sm:$0xff]
    %v1674 = vld [vmem:[#allocation2 + $0x30] sm:$0xff]
    %v1675 = vld [vmem:[#allocation2 + $0x38] sm:$0xff]
    %v1676 = vld [vmem:[#allocation2 + $0x40] sm:$0xff]
    %v1677 = vld [vmem:[#allocation2 + $0x48] sm:$0xff]
    %v1678 = vld [vmem:[#allocation2 + $0x50] sm:$0xff]
    %v1679 = vld [vmem:[#allocation2 + $0x58] sm:$0xff]
    %v1680 = vld [vmem:[#allocation2 + $0x60] sm:$0xff]
    %v1681 = vld [vmem:[#allocation2 + $0x68] sm:$0xff]
    %v1682 = vld [vmem:[#allocation2 + $0x70] sm:$0xff]
    %v1683 = vld [vmem:[#allocation2 + $0x78] sm:$0xff]
    %v1684 = vld [vmem:[#allocation2 + $0x80] sm:$0xff]
    %v1685 = vld [vmem:[#allocation2 + $0x88] sm:$0xff]
    %v1686 = vld [vmem:[#allocation2 + $0x90] sm:$0xff]
    %v1687 = vld [vmem:[#allocation2 + $0x98] sm:$0xff]
    %v1688 = vld [vmem:[#allocation2 + $0xa0] sm:$0xff]
    %v1689 = vld [vmem:[#allocation2 + $0xa8] sm:$0xff]
    %v1690 = vld [vmem:[#allocation2 + $0xb0] sm:$0xff]
    %v1691 = vld [vmem:[#allocation2 + $0xb8] sm:$0xff]
    %v1692 = vld [vmem:[#allocation2 + $0xc0] sm:$0xff]
    %v1693 = vld [vmem:[#allocation2 + $0xc8] sm:$0xff]
    %v1694 = vld [vmem:[#allocation2 + $0xd0] sm:$0xff]
    %v1695 = vld [vmem:[#allocation2 + $0xd8] sm:$0xff]
    %v1696 = vld [vmem:[#allocation2 + $0xe0] sm:$0xff]
    %v1697 = vld [vmem:[#allocation2 + $0xe8] sm:$0xff]
    %v1698 = vld [vmem:[#allocation2 + $0xf0] sm:$0xff]
    %v1699 = vld [vmem:[#allocation2 + $0xf8] sm:$0xff]
    %v1700 = vld [vmem:[#allocation2 + $0x100] sm:$0xff]
    %v1701 = vld [vmem:[#allocation2 + $0x108] sm:$0xff]
    %v1702 = vld [vmem:[#allocation2 + $0x110] sm:$0xff]
    %v1703 = vld [vmem:[#allocation2 + $0x118] sm:$0xff]
    %v1704 = vld [vmem:[#allocation2 + $0x120] sm:$0xff]
    %v1705 = vld [vmem:[#allocation2 + $0x128] sm:$0xff]
    %v1706 = vld [vmem:[#allocation2 + $0x130] sm:$0xff]
    %v1707 = vld [vmem:[#allocation2 + $0x138] sm:$0xff]
    %v1708 = vld [vmem:[#allocation2 + $0x140] sm:$0xff]
    %v1709 = vld [vmem:[#allocation2 + $0x148] sm:$0xff]
    %v1710 = vld [vmem:[#allocation2 + $0x150] sm:$0xff]
    %v1711 = vld [vmem:[#allocation2 + $0x158] sm:$0xff]
    %v1712 = vld [vmem:[#allocation2 + $0x160] sm:$0xff]
    %v1713 = vld [vmem:[#allocation2 + $0x168] sm:$0xff]
    %v1714 = vld [vmem:[#allocation2 + $0x170] sm:$0xff]
    %v1715 = vld [vmem:[#allocation2 + $0x178] sm:$0xff]
    %v1716 = vld [vmem:[#allocation2 + $0x180] sm:$0xff]
    %v1717 = vld [vmem:[#allocation2 + $0x188] sm:$0xff]
    %v1718 = vld [vmem:[#allocation2 + $0x190] sm:$0xff]
    %v1719 = vld [vmem:[#allocation2 + $0x198] sm:$0xff]
    %v1720 = vld [vmem:[#allocation2 + $0x1a0] sm:$0xff]
    %v1721 = vld [vmem:[#allocation2 + $0x1a8] sm:$0xff]
    %v1722 = vld [vmem:[#allocation2 + $0x1b0] sm:$0xff]
    %v1723 = vld [vmem:[#allocation2 + $0x1b8] sm:$0xff]
    %v1724 = vld [vmem:[#allocation2 + $0x1c0] sm:$0xff]
    %v1725 = vld [vmem:[#allocation2 + $0x1c8] sm:$0xff]
    %v1726 = vld [vmem:[#allocation2 + $0x1d0] sm:$0xff]
    %v1727 = vld [vmem:[#allocation2 + $0x1d8] sm:$0xff]
    %v1728 = vld [vmem:[#allocation2 + $0x1e0] sm:$0xff]
    %v1729 = vld [vmem:[#allocation2 + $0x1e8] sm:$0xff]
    %v1730 = vld [vmem:[#allocation2 + $0x1f0] sm:$0xff]
    %v1731 = vld [vmem:[#allocation2 + $0x1f8] sm:$0xff]
    %v1732 = vld [vmem:[#allocation2 + $0x200] sm:$0xff]
    %v1733 = vld [vmem:[#allocation2 + $0x208] sm:$0xff]
    %v1734 = vld [vmem:[#allocation2 + $0x210] sm:$0xff]
    %v1735 = vld [vmem:[#allocation2 + $0x218] sm:$0xff]
    %v1736 = vld [vmem:[#allocation2 + $0x220] sm:$0xff]
    %v1737 = vld [vmem:[#allocation2 + $0x228] sm:$0xff]
    %v1738 = vld [vmem:[#allocation2 + $0x230] sm:$0xff]
    %v1739 = vld [vmem:[#allocation2 + $0x238] sm:$0xff]
    %v1740 = vld [vmem:[#allocation2 + $0x240] sm:$0xff]
    %v1741 = vld [vmem:[#allocation2 + $0x248] sm:$0xff]
    %v1742 = vld [vmem:[#allocation2 + $0x250] sm:$0xff]
    %v1743 = vld [vmem:[#allocation2 + $0x258] sm:$0xff]
    %v1744 = vld [vmem:[#allocation2 + $0x260] sm:$0xff]
    %v1745 = vld [vmem:[#allocation2 + $0x268] sm:$0xff]
    %v1746 = vld [vmem:[#allocation2 + $0x270] sm:$0xff]
    %v1747 = vld [vmem:[#allocation2 + $0x278] sm:$0xff]
    %v1748 = vld [vmem:[#allocation2 + $0x280] sm:$0xff]
    %v1749 = vld [vmem:[#allocation2 + $0x288] sm:$0xff]
    %v1750 = vld [vmem:[#allocation2 + $0x290] sm:$0xff]
    %v1751 = vld [vmem:[#allocation2 + $0x298] sm:$0xff]
    %v1752 = vld [vmem:[#allocation2 + $0x2a0] sm:$0xff]
    %v1753 = vld [vmem:[#allocation2 + $0x2a8] sm:$0xff]
    %v1754 = vld [vmem:[#allocation2 + $0x2b0] sm:$0xff]
    %v1755 = vld [vmem:[#allocation2 + $0x2b8] sm:$0xff]
    %v1756 = vld [vmem:[#allocation2 + $0x2c0] sm:$0x3]
    %v1757 = vld [vmem:[#allocation2 + $0x2c8] sm:$0x3]
    %v1758 = vld [vmem:[#allocation2 + $0x2d0] sm:$0x3]
    %v1759 = vld [vmem:[#allocation2 + $0x2d8] sm:$0x3]
    %s1760 = scalar_lea.vmem [#allocation6], 256
    %v1761 = vld [vmem:[%s1760] sm:$0xff]
    %v1762 = vld [vmem:[%s1760 + $0x8] sm:$0xff]
    %v1763 = vld [vmem:[%s1760 + $0x10] sm:$0xff]
    %v1764 = vld [vmem:[%s1760 + $0x18] sm:$0xff]
    %v1765 = vld [vmem:[%s1760 + $0x20] sm:$0xff]
    %v1766 = vld [vmem:[%s1760 + $0x28] sm:$0xff]
    %v1767 = vld [vmem:[%s1760 + $0x30] sm:$0xff]
    %v1768 = vld [vmem:[%s1760 + $0x38] sm:$0xff]
    %v1769 = vld [vmem:[%s1760 + $0x40] sm:$0xff]
    %v1770 = vld [vmem:[%s1760 + $0x48] sm:$0xff]
    %v1771 = vld [vmem:[%s1760 + $0x50] sm:$0xff]
    %v1772 = vld [vmem:[%s1760 + $0x58] sm:$0xff]
    %v1773 = vld [vmem:[%s1760 + $0x60] sm:$0xff]
    %v1774 = vld [vmem:[%s1760 + $0x68] sm:$0xff]
    %v1775 = vld [vmem:[%s1760 + $0x70] sm:$0xff]
    %v1776 = vld [vmem:[%s1760 + $0x78] sm:$0xff]
    %v1777 = vld [vmem:[%s1760 + $0x80] sm:$0xff]
    %v1778 = vld [vmem:[%s1760 + $0x88] sm:$0xff]
    %v1779 = vld [vmem:[%s1760 + $0x90] sm:$0xff]
    %v1780 = vld [vmem:[%s1760 + $0x98] sm:$0xff]
    %v1781 = vld [vmem:[%s1760 + $0xa0] sm:$0xff]
    %v1782 = vld [vmem:[%s1760 + $0xa8] sm:$0xff]
    %v1783 = vld [vmem:[%s1760 + $0xb0] sm:$0xff]
    %v1784 = vld [vmem:[%s1760 + $0xb8] sm:$0xff]
    %v1785 = vld [vmem:[%s1760 + $0xc0] sm:$0xff]
    %v1786 = vld [vmem:[%s1760 + $0xc8] sm:$0xff]
    %v1787 = vld [vmem:[%s1760 + $0xd0] sm:$0xff]
    %v1788 = vld [vmem:[%s1760 + $0xd8] sm:$0xff]
    %v1789 = vld [vmem:[%s1760 + $0xe0] sm:$0xff]
    %v1790 = vld [vmem:[%s1760 + $0xe8] sm:$0xff]
    %v1791 = vld [vmem:[%s1760 + $0xf0] sm:$0xff]
    %v1792 = vld [vmem:[%s1760 + $0xf8] sm:$0xff]
    %vm1793 = vsmask.f32 7424
    %v1795 = vshrl.u32 %v1028, 16
    %v1797 = vshll.u32 %v1028, 16
    %v1799 = vrot.slane %v1797, 1
    %v1800 = vor.u32 %v1795, %v1799
    %v1802 = vshll.u32 %v1029, 16
    %v1804 = vrot.slane %v1802, 1
    %v1805 = vsel %vm1793, %v1800, %v1804
    %v1806 = vshrl.u32 %v1029, 16
    %v1808 = vor.u32 %v1806, %v1804
    %v1810 = vshll.u32 %v1030, 16
    %v1812 = vrot.slane %v1810, 1
    %v1813 = vsel %vm1793, %v1808, %v1812
    %v1814 = vshrl.u32 %v1030, 16
    %v1816 = vor.u32 %v1814, %v1812
    %v1818 = vshll.u32 %v1031, 16
    %v1820 = vrot.slane %v1818, 1
    %v1821 = vsel %vm1793, %v1816, %v1820
    %v1822 = vshrl.u32 %v1031, 16
    %v1824 = vor.u32 %v1822, %v1820
    %v1826 = vshll.u32 %v1032, 16
    %v1828 = vrot.slane %v1826, 1
    %v1829 = vsel %vm1793, %v1824, %v1828
    %v1830 = vshrl.u32 %v1032, 16
    %v1832 = vor.u32 %v1830, %v1828
    %v1834 = vshll.u32 %v1033, 16
    %v1836 = vrot.slane %v1834, 1
    %v1837 = vsel %vm1793, %v1832, %v1836
    %v1838 = vshrl.u32 %v1033, 16
    %v1840 = vor.u32 %v1838, %v1836
    %v1842 = vshll.u32 %v1034, 16
    %v1844 = vrot.slane %v1842, 1
    %v1845 = vsel %vm1793, %v1840, %v1844
    %v1846 = vshrl.u32 %v1034, 16
    %v1848 = vor.u32 %v1846, %v1844
    %v1850 = vshll.u32 %v1035, 16
    %v1852 = vrot.slane %v1850, 1
    %v1853 = vsel %vm1793, %v1848, %v1852
    %v1854 = vshrl.u32 %v1035, 16
    %v1856 = vor.u32 %v1854, %v1852
    %v1858 = vshll.u32 %v1036, 16
    %v1860 = vrot.slane %v1858, 1
    %v1861 = vsel %vm1793, %v1856, %v1860
    %v1862 = vshrl.u32 %v1036, 16
    %v1864 = vor.u32 %v1862, %v1860
    %v1866 = vshll.u32 %v1037, 16
    %v1868 = vrot.slane %v1866, 1
    %v1869 = vsel %vm1793, %v1864, %v1868
    %v1870 = vshrl.u32 %v1037, 16
    %v1872 = vor.u32 %v1870, %v1868
    %v1874 = vshll.u32 %v1038, 16
    %v1876 = vrot.slane %v1874, 1
    %v1877 = vsel %vm1793, %v1872, %v1876
    %v1878 = vshrl.u32 %v1038, 16
    %v1880 = vor.u32 %v1878, %v1876
    %v1882 = vshll.u32 %v1039, 16
    %v1884 = vrot.slane %v1882, 1
    %v1885 = vsel %vm1793, %v1880, %v1884
    %v1886 = vshrl.u32 %v1039, 16
    %v1888 = vor.u32 %v1886, %v1884
    %v1933 = vunpack.c.l.b16 %v1761
    %v1934 = vunpack.c.h.b16 %v1761
    %v1935 = vunpack.c.l.b16 %v1762
    %v1936 = vunpack.c.h.b16 %v1762
    %v1937 = vunpack.c.l.b16 %v1763
    %v1938 = vunpack.c.h.b16 %v1763
    %v1939 = vunpack.c.l.b16 %v1764
    %v1940 = vunpack.c.h.b16 %v1764
    %v1941 = vunpack.c.l.b16 %v1765
    %v1942 = vunpack.c.h.b16 %v1765
    %v1943 = vunpack.c.l.b16 %v1766
    %v1944 = vunpack.c.h.b16 %v1766
    %v1945 = vunpack.c.l.b16 %v1767
    %v1946 = vunpack.c.h.b16 %v1767
    %v1947 = vunpack.c.l.b16 %v1768
    %v1948 = vunpack.c.h.b16 %v1768
    %v1949 = vunpack.c.l.b16 %v1769
    %v1950 = vunpack.c.h.b16 %v1769
    %v1951 = vunpack.c.l.b16 %v1770
    %v1952 = vunpack.c.h.b16 %v1770
    %v1953 = vunpack.c.l.b16 %v1771
    %v1954 = vunpack.c.h.b16 %v1771
    %v1955 = vunpack.c.l.b16 %v1772
    %v1956 = vunpack.c.h.b16 %v1772
    %v1957 = vunpack.c.l.b16 %v1773
    %v1958 = vunpack.c.h.b16 %v1773
    %v1959 = vunpack.c.l.b16 %v1774
    %v1960 = vunpack.c.h.b16 %v1774
    %v1961 = vunpack.c.l.b16 %v1775
    %v1962 = vunpack.c.h.b16 %v1775
    %v1963 = vunpack.c.l.b16 %v1776
    %v1964 = vunpack.c.h.b16 %v1776
    %v1965 = vunpack.c.l.b16 %v1777
    %v1966 = vunpack.c.h.b16 %v1777
    %v1967 = vunpack.c.l.b16 %v1778
    %v1968 = vunpack.c.h.b16 %v1778
    %v1969 = vunpack.c.l.b16 %v1779
    %v1970 = vunpack.c.h.b16 %v1779
    %v1971 = vunpack.c.l.b16 %v1780
    %v1972 = vunpack.c.h.b16 %v1780
    %v1973 = vunpack.c.l.b16 %v1781
    %v1974 = vunpack.c.h.b16 %v1781
    %v1975 = vunpack.c.l.b16 %v1782
    %v1976 = vunpack.c.h.b16 %v1782
    %v1977 = vunpack.c.l.b16 %v1783
    %v1978 = vunpack.c.h.b16 %v1783
    %v1979 = vunpack.c.l.b16 %v1784
    %v1980 = vunpack.c.h.b16 %v1784
    %v1981 = vunpack.c.l.b16 %v1785
    %v1982 = vunpack.c.h.b16 %v1785
    %v1983 = vunpack.c.l.b16 %v1786
    %v1984 = vunpack.c.h.b16 %v1786
    %v1985 = vunpack.c.l.b16 %v1787
    %v1986 = vunpack.c.h.b16 %v1787
    %v1987 = vunpack.c.l.b16 %v1788
    %v1988 = vunpack.c.h.b16 %v1788
    %v1989 = vunpack.c.l.b16 %v1789
    %v1990 = vunpack.c.h.b16 %v1789
    %v1991 = vunpack.c.l.b16 %v1790
    %v1992 = vunpack.c.h.b16 %v1790
    %v1993 = vunpack.c.l.b16 %v1791
    %v1994 = vunpack.c.h.b16 %v1791
    %v1995 = vunpack.c.l.b16 %v1792
    %v1996 = vunpack.c.h.b16 %v1792
    %v1997 = vpack.c.b16 %v1937, %v1933
    %v1998 = vpack.c.b16 %v1938, %v1934
    %v1999 = vpack.c.b16 %v1939, %v1935
    %v2000 = vpack.c.b16 %v1940, %v1936
    %v2001 = vpack.c.b16 %v1945, %v1941
    %v2002 = vpack.c.b16 %v1946, %v1942
    %v2003 = vpack.c.b16 %v1947, %v1943
    %v2004 = vpack.c.b16 %v1948, %v1944
    %v2005 = vpack.c.b16 %v1953, %v1949
    %v2006 = vpack.c.b16 %v1954, %v1950
    %v2007 = vpack.c.b16 %v1955, %v1951
    %v2008 = vpack.c.b16 %v1956, %v1952
    %v2009 = vpack.c.b16 %v1961, %v1957
    %v2010 = vpack.c.b16 %v1962, %v1958
    %v2011 = vpack.c.b16 %v1963, %v1959
    %v2012 = vpack.c.b16 %v1964, %v1960
    %v2013 = vpack.c.b16 %v1969, %v1965
    %v2014 = vpack.c.b16 %v1970, %v1966
    %v2015 = vpack.c.b16 %v1971, %v1967
    %v2016 = vpack.c.b16 %v1972, %v1968
    %v2017 = vpack.c.b16 %v1977, %v1973
    %v2018 = vpack.c.b16 %v1978, %v1974
    %v2019 = vpack.c.b16 %v1979, %v1975
    %v2020 = vpack.c.b16 %v1980, %v1976
    %v2021 = vpack.c.b16 %v1985, %v1981
    %v2022 = vpack.c.b16 %v1986, %v1982
    %v2023 = vpack.c.b16 %v1987, %v1983
    %v2024 = vpack.c.b16 %v1988, %v1984
    %v2025 = vpack.c.b16 %v1993, %v1989
    %v2026 = vpack.c.b16 %v1994, %v1990
    %v2027 = vpack.c.b16 %v1995, %v1991
    %v2028 = vpack.c.b16 %v1996, %v1992
    %2061 = vmatpush.bf16.msra.mxu0 %v2025
    %2062 = vmatpush.bf16.msra.mxu0 %v2021
    %2063 = vmatpush.bf16.msra.mxu0 %v2017
    %2064 = vmatpush.bf16.msra.mxu0 %v2013
    %2065 = vmatpush.bf16.msra.mxu0 %v2009
    %2066 = vmatpush.bf16.msra.mxu0 %v2005
    %2067 = vmatpush.bf16.msra.mxu0 %v2001
    %2068 = vmatpush.bf16.msra.mxu0 %v1997
    %2069 = vmatmul.bf16.gmra.mxu0 %v1805
    %v2070 = vpop.f32.mrf.mxu0
    %v2071 = vadd.f32 0.0, %v2070
    %v2072 = vpop.f32.mrf.mxu0
    %v2073 = vadd.f32 0.0, %v2072
    %2074 = vmatmul.bf16.gmra.mxu0 %v1813
    %v2075 = vpop.f32.mrf.mxu0
    %v2076 = vadd.f32 0.0, %v2075
    %v2077 = vpop.f32.mrf.mxu0
    %v2078 = vadd.f32 0.0, %v2077
    %2079 = vmatmul.bf16.gmra.mxu0 %v1821
    %v2080 = vpop.f32.mrf.mxu0
    %v2081 = vadd.f32 0.0, %v2080
    %v2082 = vpop.f32.mrf.mxu0
    %v2083 = vadd.f32 0.0, %v2082
    %2084 = vmatmul.bf16.gmra.mxu0 %v1829
    %v2085 = vpop.f32.mrf.mxu0
    %v2086 = vadd.f32 0.0, %v2085
    %v2087 = vpop.f32.mrf.mxu0
    %v2088 = vadd.f32 0.0, %v2087
    %2089 = vmatmul.bf16.gmra.mxu0 %v1837
    %v2090 = vpop.f32.mrf.mxu0
    %v2091 = vadd.f32 0.0, %v2090
    %v2092 = vpop.f32.mrf.mxu0
    %v2093 = vadd.f32 0.0, %v2092
    %2094 = vmatmul.bf16.gmra.mxu0 %v1845
    %v2095 = vpop.f32.mrf.mxu0
    %v2096 = vadd.f32 0.0, %v2095
    %v2097 = vpop.f32.mrf.mxu0
    %v2098 = vadd.f32 0.0, %v2097
    %2099 = vmatmul.bf16.gmra.mxu0 %v1853
    %v2100 = vpop.f32.mrf.mxu0
    %v2101 = vadd.f32 0.0, %v2100
    %v2102 = vpop.f32.mrf.mxu0
    %v2103 = vadd.f32 0.0, %v2102
    %2104 = vmatmul.bf16.gmra.mxu0 %v1861
    %v2105 = vpop.f32.mrf.mxu0
    %v2106 = vadd.f32 0.0, %v2105
    %v2107 = vpop.f32.mrf.mxu0
    %v2108 = vadd.f32 0.0, %v2107
    %2109 = vmatmul.bf16.gmra.mxu0 %v1869
    %v2110 = vpop.f32.mrf.mxu0
    %v2111 = vadd.f32 0.0, %v2110
    %v2112 = vpop.f32.mrf.mxu0
    %v2113 = vadd.f32 0.0, %v2112
    %2114 = vmatmul.bf16.gmra.mxu0 %v1877
    %v2115 = vpop.f32.mrf.mxu0
    %v2116 = vadd.f32 0.0, %v2115
    %v2117 = vpop.f32.mrf.mxu0
    %v2118 = vadd.f32 0.0, %v2117
    %2119 = vmatmul.bf16.gmra.mxu0 %v1885
    %v2120 = vpop.f32.mrf.mxu0
    %v2121 = vadd.f32 0.0, %v2120
    %v2122 = vpop.f32.mrf.mxu0
    %v2123 = vadd.f32 0.0, %v2122
    %2124 = vmatmul.bf16.gmra.mxu0 %v1888
    %v2125 = vpop.f32.mrf.mxu0
    %v2126 = vadd.f32 0.0, %v2125
    %v2127 = vpop.f32.mrf.mxu0
    %2128 = vdwg.mxu0
    %2129 = vmatpush.bf16.msra.mxu0 %v2026
    %2130 = vmatpush.bf16.msra.mxu0 %v2022
    %2131 = vmatpush.bf16.msra.mxu0 %v2018
    %2132 = vmatpush.bf16.msra.mxu0 %v2014
    %2133 = vmatpush.bf16.msra.mxu0 %v2010
    %2134 = vmatpush.bf16.msra.mxu0 %v2006
    %2135 = vmatpush.bf16.msra.mxu0 %v2002
    %2136 = vmatpush.bf16.msra.mxu0 %v1998
    %2137 = vmatmul.bf16.gmra.mxu0 %v1805
    %v2138 = vpop.f32.mrf.mxu0
    %v2139 = vadd.f32 0.0, %v2138
    %v2140 = vpop.f32.mrf.mxu0
    %v2141 = vadd.f32 0.0, %v2140
    %2142 = vmatmul.bf16.gmra.mxu0 %v1813
    %v2143 = vpop.f32.mrf.mxu0
    %v2144 = vadd.f32 0.0, %v2143
    %v2145 = vpop.f32.mrf.mxu0
    %v2146 = vadd.f32 0.0, %v2145
    %2147 = vmatmul.bf16.gmra.mxu0 %v1821
    %v2148 = vpop.f32.mrf.mxu0
    %v2149 = vadd.f32 0.0, %v2148
    %v2150 = vpop.f32.mrf.mxu0
    %v2151 = vadd.f32 0.0, %v2150
    %2152 = vmatmul.bf16.gmra.mxu0 %v1829
    %v2153 = vpop.f32.mrf.mxu0
    %v2154 = vadd.f32 0.0, %v2153
    %v2155 = vpop.f32.mrf.mxu0
    %v2156 = vadd.f32 0.0, %v2155
    %2157 = vmatmul.bf16.gmra.mxu0 %v1837
    %v2158 = vpop.f32.mrf.mxu0
    %v2159 = vadd.f32 0.0, %v2158
    %v2160 = vpop.f32.mrf.mxu0
    %v2161 = vadd.f32 0.0, %v2160
    %2162 = vmatmul.bf16.gmra.mxu0 %v1845
    %v2163 = vpop.f32.mrf.mxu0
    %v2164 = vadd.f32 0.0, %v2163
    %v2165 = vpop.f32.mrf.mxu0
    %v2166 = vadd.f32 0.0, %v2165
    %2167 = vmatmul.bf16.gmra.mxu0 %v1853
    %v2168 = vpop.f32.mrf.mxu0
    %v2169 = vadd.f32 0.0, %v2168
    %v2170 = vpop.f32.mrf.mxu0
    %v2171 = vadd.f32 0.0, %v2170
    %2172 = vmatmul.bf16.gmra.mxu0 %v1861
    %v2173 = vpop.f32.mrf.mxu0
    %v2174 = vadd.f32 0.0, %v2173
    %v2175 = vpop.f32.mrf.mxu0
    %v2176 = vadd.f32 0.0, %v2175
    %2177 = vmatmul.bf16.gmra.mxu0 %v1869
    %v2178 = vpop.f32.mrf.mxu0
    %v2179 = vadd.f32 0.0, %v2178
    %v2180 = vpop.f32.mrf.mxu0
    %v2181 = vadd.f32 0.0, %v2180
    %2182 = vmatmul.bf16.gmra.mxu0 %v1877
    %v2183 = vpop.f32.mrf.mxu0
    %v2184 = vadd.f32 0.0, %v2183
    %v2185 = vpop.f32.mrf.mxu0
    %v2186 = vadd.f32 0.0, %v2185
    %2187 = vmatmul.bf16.gmra.mxu0 %v1885
    %v2188 = vpop.f32.mrf.mxu0
    %v2189 = vadd.f32 0.0, %v2188
    %v2190 = vpop.f32.mrf.mxu0
    %v2191 = vadd.f32 0.0, %v2190
    %2192 = vmatmul.bf16.gmra.mxu0 %v1888
    %v2193 = vpop.f32.mrf.mxu0
    %v2194 = vadd.f32 0.0, %v2193
    %v2195 = vpop.f32.mrf.mxu0
    %2196 = vdwg.mxu0
    %2197 = vmatpush.bf16.msra.mxu0 %v2027
    %2198 = vmatpush.bf16.msra.mxu0 %v2023
    %2199 = vmatpush.bf16.msra.mxu0 %v2019
    %2200 = vmatpush.bf16.msra.mxu0 %v2015
    %2201 = vmatpush.bf16.msra.mxu0 %v2011
    %2202 = vmatpush.bf16.msra.mxu0 %v2007
    %2203 = vmatpush.bf16.msra.mxu0 %v2003
    %2204 = vmatpush.bf16.msra.mxu0 %v1999
    %2205 = vmatmul.bf16.gmra.mxu0 %v1805
    %v2206 = vpop.f32.mrf.mxu0
    %v2207 = vadd.f32 0.0, %v2206
    %v2208 = vpop.f32.mrf.mxu0
    %v2209 = vadd.f32 0.0, %v2208
    %2210 = vmatmul.bf16.gmra.mxu0 %v1813
    %v2211 = vpop.f32.mrf.mxu0
    %v2212 = vadd.f32 0.0, %v2211
    %v2213 = vpop.f32.mrf.mxu0
    %v2214 = vadd.f32 0.0, %v2213
    %2215 = vmatmul.bf16.gmra.mxu0 %v1821
    %v2216 = vpop.f32.mrf.mxu0
    %v2217 = vadd.f32 0.0, %v2216
    %v2218 = vpop.f32.mrf.mxu0
    %v2219 = vadd.f32 0.0, %v2218
    %2220 = vmatmul.bf16.gmra.mxu0 %v1829
    %v2221 = vpop.f32.mrf.mxu0
    %v2222 = vadd.f32 0.0, %v2221
    %v2223 = vpop.f32.mrf.mxu0
    %v2224 = vadd.f32 0.0, %v2223
    %2225 = vmatmul.bf16.gmra.mxu0 %v1837
    %v2226 = vpop.f32.mrf.mxu0
    %v2227 = vadd.f32 0.0, %v2226
    %v2228 = vpop.f32.mrf.mxu0
    %v2229 = vadd.f32 0.0, %v2228
    %2230 = vmatmul.bf16.gmra.mxu0 %v1845
    %v2231 = vpop.f32.mrf.mxu0
    %v2232 = vadd.f32 0.0, %v2231
    %v2233 = vpop.f32.mrf.mxu0
    %v2234 = vadd.f32 0.0, %v2233
    %2235 = vmatmul.bf16.gmra.mxu0 %v1853
    %v2236 = vpop.f32.mrf.mxu0
    %v2237 = vadd.f32 0.0, %v2236
    %v2238 = vpop.f32.mrf.mxu0
    %v2239 = vadd.f32 0.0, %v2238
    %2240 = vmatmul.bf16.gmra.mxu0 %v1861
    %v2241 = vpop.f32.mrf.mxu0
    %v2242 = vadd.f32 0.0, %v2241
    %v2243 = vpop.f32.mrf.mxu0
    %v2244 = vadd.f32 0.0, %v2243
    %2245 = vmatmul.bf16.gmra.mxu0 %v1869
    %v2246 = vpop.f32.mrf.mxu0
    %v2247 = vadd.f32 0.0, %v2246
    %v2248 = vpop.f32.mrf.mxu0
    %v2249 = vadd.f32 0.0, %v2248
    %2250 = vmatmul.bf16.gmra.mxu0 %v1877
    %v2251 = vpop.f32.mrf.mxu0
    %v2252 = vadd.f32 0.0, %v2251
    %v2253 = vpop.f32.mrf.mxu0
    %v2254 = vadd.f32 0.0, %v2253
    %2255 = vmatmul.bf16.gmra.mxu0 %v1885
    %v2256 = vpop.f32.mrf.mxu0
    %v2257 = vadd.f32 0.0, %v2256
    %v2258 = vpop.f32.mrf.mxu0
    %v2259 = vadd.f32 0.0, %v2258
    %2260 = vmatmul.bf16.gmra.mxu0 %v1888
    %v2261 = vpop.f32.mrf.mxu0
    %v2262 = vadd.f32 0.0, %v2261
    %v2263 = vpop.f32.mrf.mxu0
    %2264 = vdwg.mxu0
    %2265 = vmatpush.bf16.msra.mxu0 %v2028
    %2266 = vmatpush.bf16.msra.mxu0 %v2024
    %2267 = vmatpush.bf16.msra.mxu0 %v2020
    %2268 = vmatpush.bf16.msra.mxu0 %v2016
    %2269 = vmatpush.bf16.msra.mxu0 %v2012
    %2270 = vmatpush.bf16.msra.mxu0 %v2008
    %2271 = vmatpush.bf16.msra.mxu0 %v2004
    %2272 = vmatpush.bf16.msra.mxu0 %v2000
    %2273 = vmatmul.bf16.gmra.mxu0 %v1805
    %v2274 = vpop.f32.mrf.mxu0
    %v2275 = vadd.f32 0.0, %v2274
    %v2276 = vpop.f32.mrf.mxu0
    %v2277 = vadd.f32 0.0, %v2276
    %2278 = vmatmul.bf16.gmra.mxu0 %v1813
    %v2279 = vpop.f32.mrf.mxu0
    %v2280 = vadd.f32 0.0, %v2279
    %v2281 = vpop.f32.mrf.mxu0
    %v2282 = vadd.f32 0.0, %v2281
    %2283 = vmatmul.bf16.gmra.mxu0 %v1821
    %v2284 = vpop.f32.mrf.mxu0
    %v2285 = vadd.f32 0.0, %v2284
    %v2286 = vpop.f32.mrf.mxu0
    %v2287 = vadd.f32 0.0, %v2286
    %2288 = vmatmul.bf16.gmra.mxu0 %v1829
    %v2289 = vpop.f32.mrf.mxu0
    %v2290 = vadd.f32 0.0, %v2289
    %v2291 = vpop.f32.mrf.mxu0
    %v2292 = vadd.f32 0.0, %v2291
    %2293 = vmatmul.bf16.gmra.mxu0 %v1837
    %v2294 = vpop.f32.mrf.mxu0
    %v2295 = vadd.f32 0.0, %v2294
    %v2296 = vpop.f32.mrf.mxu0
    %v2297 = vadd.f32 0.0, %v2296
    %2298 = vmatmul.bf16.gmra.mxu0 %v1845
    %v2299 = vpop.f32.mrf.mxu0
    %v2300 = vadd.f32 0.0, %v2299
    %v2301 = vpop.f32.mrf.mxu0
    %v2302 = vadd.f32 0.0, %v2301
    %2303 = vmatmul.bf16.gmra.mxu0 %v1853
    %v2304 = vpop.f32.mrf.mxu0
    %v2305 = vadd.f32 0.0, %v2304
    %v2306 = vpop.f32.mrf.mxu0
    %v2307 = vadd.f32 0.0, %v2306
    %2308 = vmatmul.bf16.gmra.mxu0 %v1861
    %v2309 = vpop.f32.mrf.mxu0
    %v2310 = vadd.f32 0.0, %v2309
    %v2311 = vpop.f32.mrf.mxu0
    %v2312 = vadd.f32 0.0, %v2311
    %2313 = vmatmul.bf16.gmra.mxu0 %v1869
    %v2314 = vpop.f32.mrf.mxu0
    %v2315 = vadd.f32 0.0, %v2314
    %v2316 = vpop.f32.mrf.mxu0
    %v2317 = vadd.f32 0.0, %v2316
    %2318 = vmatmul.bf16.gmra.mxu0 %v1877
    %v2319 = vpop.f32.mrf.mxu0
    %v2320 = vadd.f32 0.0, %v2319
    %v2321 = vpop.f32.mrf.mxu0
    %v2322 = vadd.f32 0.0, %v2321
    %2323 = vmatmul.bf16.gmra.mxu0 %v1885
    %v2324 = vpop.f32.mrf.mxu0
    %v2325 = vadd.f32 0.0, %v2324
    %v2326 = vpop.f32.mrf.mxu0
    %v2327 = vadd.f32 0.0, %v2326
    %2328 = vmatmul.bf16.gmra.mxu0 %v1888
    %v2329 = vpop.f32.mrf.mxu0
    %v2330 = vadd.f32 0.0, %v2329
    %v2331 = vpop.f32.mrf.mxu0
    %2332 = vdwg.mxu0
    %v2333 = vadd.f32 %v1668, %v2071
    %v2334 = vadd.f32 %v1669, %v2139
    %v2335 = vadd.f32 %v1670, %v2207
    %v2336 = vadd.f32 %v1671, %v2275
    %v2337 = vadd.f32 %v1672, %v2073
    %v2338 = vadd.f32 %v1673, %v2141
    %v2339 = vadd.f32 %v1674, %v2209
    %v2340 = vadd.f32 %v1675, %v2277
    %v2341 = vadd.f32 %v1676, %v2076
    %v2342 = vadd.f32 %v1677, %v2144
    %v2343 = vadd.f32 %v1678, %v2212
    %v2344 = vadd.f32 %v1679, %v2280
    %v2345 = vadd.f32 %v1680, %v2078
    %v2346 = vadd.f32 %v1681, %v2146
    %v2347 = vadd.f32 %v1682, %v2214
    %v2348 = vadd.f32 %v1683, %v2282
    %v2349 = vadd.f32 %v1684, %v2081
    %v2350 = vadd.f32 %v1685, %v2149
    %v2351 = vadd.f32 %v1686, %v2217
    %v2352 = vadd.f32 %v1687, %v2285
    %v2353 = vadd.f32 %v1688, %v2083
    %v2354 = vadd.f32 %v1689, %v2151
    %v2355 = vadd.f32 %v1690, %v2219
    %v2356 = vadd.f32 %v1691, %v2287
    %v2357 = vadd.f32 %v1692, %v2086
    %v2358 = vadd.f32 %v1693, %v2154
    %v2359 = vadd.f32 %v1694, %v2222
    %v2360 = vadd.f32 %v1695, %v2290
    %v2361 = vadd.f32 %v1696, %v2088
    %v2362 = vadd.f32 %v1697, %v2156
    %v2363 = vadd.f32 %v1698, %v2224
    %v2364 = vadd.f32 %v1699, %v2292
    %v2365 = vadd.f32 %v1700, %v2091
    %v2366 = vadd.f32 %v1701, %v2159
    %v2367 = vadd.f32 %v1702, %v2227
    %v2368 = vadd.f32 %v1703, %v2295
    %v2369 = vadd.f32 %v1704, %v2093
    %v2370 = vadd.f32 %v1705, %v2161
    %v2371 = vadd.f32 %v1706, %v2229
    %v2372 = vadd.f32 %v1707, %v2297
    %v2373 = vadd.f32 %v1708, %v2096
    %v2374 = vadd.f32 %v1709, %v2164
    %v2375 = vadd.f32 %v1710, %v2232
    %v2376 = vadd.f32 %v1711, %v2300
    %v2377 = vadd.f32 %v1712, %v2098
    %v2378 = vadd.f32 %v1713, %v2166
    %v2379 = vadd.f32 %v1714, %v2234
    %v2380 = vadd.f32 %v1715, %v2302
    %v2381 = vadd.f32 %v1716, %v2101
    %v2382 = vadd.f32 %v1717, %v2169
    %v2383 = vadd.f32 %v1718, %v2237
    %v2384 = vadd.f32 %v1719, %v2305
    %v2385 = vadd.f32 %v1720, %v2103
    %v2386 = vadd.f32 %v1721, %v2171
    %v2387 = vadd.f32 %v1722, %v2239
    %v2388 = vadd.f32 %v1723, %v2307
    %v2389 = vadd.f32 %v1724, %v2106
    %v2390 = vadd.f32 %v1725, %v2174
    %v2391 = vadd.f32 %v1726, %v2242
    %v2392 = vadd.f32 %v1727, %v2310
    %v2393 = vadd.f32 %v1728, %v2108
    %v2394 = vadd.f32 %v1729, %v2176
    %v2395 = vadd.f32 %v1730, %v2244
    %v2396 = vadd.f32 %v1731, %v2312
    %v2397 = vadd.f32 %v1732, %v2111
    %v2398 = vadd.f32 %v1733, %v2179
    %v2399 = vadd.f32 %v1734, %v2247
    %v2400 = vadd.f32 %v1735, %v2315
    %v2401 = vadd.f32 %v1736, %v2113
    %v2402 = vadd.f32 %v1737, %v2181
    %v2403 = vadd.f32 %v1738, %v2249
    %v2404 = vadd.f32 %v1739, %v2317
    %v2405 = vadd.f32 %v1740, %v2116
    %v2406 = vadd.f32 %v1741, %v2184
    %v2407 = vadd.f32 %v1742, %v2252
    %v2408 = vadd.f32 %v1743, %v2320
    %v2409 = vadd.f32 %v1744, %v2118
    %v2410 = vadd.f32 %v1745, %v2186
    %v2411 = vadd.f32 %v1746, %v2254
    %v2412 = vadd.f32 %v1747, %v2322
    %v2413 = vadd.f32 %v1748, %v2121
    %v2414 = vadd.f32 %v1749, %v2189
    %v2415 = vadd.f32 %v1750, %v2257
    %v2416 = vadd.f32 %v1751, %v2325
    %v2417 = vadd.f32 %v1752, %v2123
    %v2418 = vadd.f32 %v1753, %v2191
    %v2419 = vadd.f32 %v1754, %v2259
    %v2420 = vadd.f32 %v1755, %v2327
    %v2421 = vadd.f32 %v1756, %v2126
    %v2422 = vadd.f32 %v1757, %v2194
    %v2423 = vadd.f32 %v1758, %v2262
    %v2424 = vadd.f32 %v1759, %v2330
    %2425 = vst [vmem:[#allocation2] sm:$0xff] %v2333
    %2426 = vst [vmem:[#allocation2 + $0x8] sm:$0xff] %v2334
    %2427 = vst [vmem:[#allocation2 + $0x10] sm:$0xff] %v2335
    %2428 = vst [vmem:[#allocation2 + $0x18] sm:$0xff] %v2336
    %2429 = vst [vmem:[#allocation2 + $0x20] sm:$0xff] %v2337
    %2430 = vst [vmem:[#allocation2 + $0x28] sm:$0xff] %v2338
    %2431 = vst [vmem:[#allocation2 + $0x30] sm:$0xff] %v2339
    %2432 = vst [vmem:[#allocation2 + $0x38] sm:$0xff] %v2340
    %2433 = vst [vmem:[#allocation2 + $0x40] sm:$0xff] %v2341
    %2434 = vst [vmem:[#allocation2 + $0x48] sm:$0xff] %v2342
    %2435 = vst [vmem:[#allocation2 + $0x50] sm:$0xff] %v2343
    %2436 = vst [vmem:[#allocation2 + $0x58] sm:$0xff] %v2344
    %2437 = vst [vmem:[#allocation2 + $0x60] sm:$0xff] %v2345
    %2438 = vst [vmem:[#allocation2 + $0x68] sm:$0xff] %v2346
    %2439 = vst [vmem:[#allocation2 + $0x70] sm:$0xff] %v2347
    %2440 = vst [vmem:[#allocation2 + $0x78] sm:$0xff] %v2348
    %2441 = vst [vmem:[#allocation2 + $0x80] sm:$0xff] %v2349
    %2442 = vst [vmem:[#allocation2 + $0x88] sm:$0xff] %v2350
    %2443 = vst [vmem:[#allocation2 + $0x90] sm:$0xff] %v2351
    %2444 = vst [vmem:[#allocation2 + $0x98] sm:$0xff] %v2352
    %2445 = vst [vmem:[#allocation2 + $0xa0] sm:$0xff] %v2353
    %2446 = vst [vmem:[#allocation2 + $0xa8] sm:$0xff] %v2354
    %2447 = vst [vmem:[#allocation2 + $0xb0] sm:$0xff] %v2355
    %2448 = vst [vmem:[#allocation2 + $0xb8] sm:$0xff] %v2356
    %2449 = vst [vmem:[#allocation2 + $0xc0] sm:$0xff] %v2357
    %2450 = vst [vmem:[#allocation2 + $0xc8] sm:$0xff] %v2358
    %2451 = vst [vmem:[#allocation2 + $0xd0] sm:$0xff] %v2359
    %2452 = vst [vmem:[#allocation2 + $0xd8] sm:$0xff] %v2360
    %2453 = vst [vmem:[#allocation2 + $0xe0] sm:$0xff] %v2361
    %2454 = vst [vmem:[#allocation2 + $0xe8] sm:$0xff] %v2362
    %2455 = vst [vmem:[#allocation2 + $0xf0] sm:$0xff] %v2363
    %2456 = vst [vmem:[#allocation2 + $0xf8] sm:$0xff] %v2364
    %2457 = vst [vmem:[#allocation2 + $0x100] sm:$0xff] %v2365
    %2458 = vst [vmem:[#allocation2 + $0x108] sm:$0xff] %v2366
    %2459 = vst [vmem:[#allocation2 + $0x110] sm:$0xff] %v2367
    %2460 = vst [vmem:[#allocation2 + $0x118] sm:$0xff] %v2368
    %2461 = vst [vmem:[#allocation2 + $0x120] sm:$0xff] %v2369
    %2462 = vst [vmem:[#allocation2 + $0x128] sm:$0xff] %v2370
    %2463 = vst [vmem:[#allocation2 + $0x130] sm:$0xff] %v2371
    %2464 = vst [vmem:[#allocation2 + $0x138] sm:$0xff] %v2372
    %2465 = vst [vmem:[#allocation2 + $0x140] sm:$0xff] %v2373
    %2466 = vst [vmem:[#allocation2 + $0x148] sm:$0xff] %v2374
    %2467 = vst [vmem:[#allocation2 + $0x150] sm:$0xff] %v2375
    %2468 = vst [vmem:[#allocation2 + $0x158] sm:$0xff] %v2376
    %2469 = vst [vmem:[#allocation2 + $0x160] sm:$0xff] %v2377
    %2470 = vst [vmem:[#allocation2 + $0x168] sm:$0xff] %v2378
    %2471 = vst [vmem:[#allocation2 + $0x170] sm:$0xff] %v2379
    %2472 = vst [vmem:[#allocation2 + $0x178] sm:$0xff] %v2380
    %2473 = vst [vmem:[#allocation2 + $0x180] sm:$0xff] %v2381
    %2474 = vst [vmem:[#allocation2 + $0x188] sm:$0xff] %v2382
    %2475 = vst [vmem:[#allocation2 + $0x190] sm:$0xff] %v2383
    %2476 = vst [vmem:[#allocation2 + $0x198] sm:$0xff] %v2384
    %2477 = vst [vmem:[#allocation2 + $0x1a0] sm:$0xff] %v2385
    %2478 = vst [vmem:[#allocation2 + $0x1a8] sm:$0xff] %v2386
    %2479 = vst [vmem:[#allocation2 + $0x1b0] sm:$0xff] %v2387
    %2480 = vst [vmem:[#allocation2 + $0x1b8] sm:$0xff] %v2388
    %2481 = vst [vmem:[#allocation2 + $0x1c0] sm:$0xff] %v2389
    %2482 = vst [vmem:[#allocation2 + $0x1c8] sm:$0xff] %v2390
    %2483 = vst [vmem:[#allocation2 + $0x1d0] sm:$0xff] %v2391
    %2484 = vst [vmem:[#allocation2 + $0x1d8] sm:$0xff] %v2392
    %2485 = vst [vmem:[#allocation2 + $0x1e0] sm:$0xff] %v2393
    %2486 = vst [vmem:[#allocation2 + $0x1e8] sm:$0xff] %v2394
    %2487 = vst [vmem:[#allocation2 + $0x1f0] sm:$0xff] %v2395
    %2488 = vst [vmem:[#allocation2 + $0x1f8] sm:$0xff] %v2396
    %2489 = vst [vmem:[#allocation2 + $0x200] sm:$0xff] %v2397
    %2490 = vst [vmem:[#allocation2 + $0x208] sm:$0xff] %v2398
    %2491 = vst [vmem:[#allocation2 + $0x210] sm:$0xff] %v2399
    %2492 = vst [vmem:[#allocation2 + $0x218] sm:$0xff] %v2400
    %2493 = vst [vmem:[#allocation2 + $0x220] sm:$0xff] %v2401
    %2494 = vst [vmem:[#allocation2 + $0x228] sm:$0xff] %v2402
    %2495 = vst [vmem:[#allocation2 + $0x230] sm:$0xff] %v2403
    %2496 = vst [vmem:[#allocation2 + $0x238] sm:$0xff] %v2404
    %2497 = vst [vmem:[#allocation2 + $0x240] sm:$0xff] %v2405
    %2498 = vst [vmem:[#allocation2 + $0x248] sm:$0xff] %v2406
    %2499 = vst [vmem:[#allocation2 + $0x250] sm:$0xff] %v2407
    %2500 = vst [vmem:[#allocation2 + $0x258] sm:$0xff] %v2408
    %2501 = vst [vmem:[#allocation2 + $0x260] sm:$0xff] %v2409
    %2502 = vst [vmem:[#allocation2 + $0x268] sm:$0xff] %v2410
    %2503 = vst [vmem:[#allocation2 + $0x270] sm:$0xff] %v2411
    %2504 = vst [vmem:[#allocation2 + $0x278] sm:$0xff] %v2412
    %2505 = vst [vmem:[#allocation2 + $0x280] sm:$0xff] %v2413
    %2506 = vst [vmem:[#allocation2 + $0x288] sm:$0xff] %v2414
    %2507 = vst [vmem:[#allocation2 + $0x290] sm:$0xff] %v2415
    %2508 = vst [vmem:[#allocation2 + $0x298] sm:$0xff] %v2416
    %2509 = vst [vmem:[#allocation2 + $0x2a0] sm:$0xff] %v2417
    %2510 = vst [vmem:[#allocation2 + $0x2a8] sm:$0xff] %v2418
    %2511 = vst [vmem:[#allocation2 + $0x2b0] sm:$0xff] %v2419
    %2512 = vst [vmem:[#allocation2 + $0x2b8] sm:$0xff] %v2420
    %2513 = vst [vmem:[#allocation2 + $0x2c0] sm:$0x3] %v2421
    %2514 = vst [vmem:[#allocation2 + $0x2c8] sm:$0x3] %v2422
    %2515 = vst [vmem:[#allocation2 + $0x2d0] sm:$0x3] %v2423
    %2516 = vst [vmem:[#allocation2 + $0x2d8] sm:$0x3] %v2424
    %v2517 = vld [vmem:[#allocation2] sm:$0xff]
    %v2518 = vld [vmem:[#allocation2 + $0x8] sm:$0xff]
    %v2519 = vld [vmem:[#allocation2 + $0x10] sm:$0xff]
    %v2520 = vld [vmem:[#allocation2 + $0x18] sm:$0xff]
    %v2521 = vld [vmem:[#allocation2 + $0x20] sm:$0xff]
    %v2522 = vld [vmem:[#allocation2 + $0x28] sm:$0xff]
    %v2523 = vld [vmem:[#allocation2 + $0x30] sm:$0xff]
    %v2524 = vld [vmem:[#allocation2 + $0x38] sm:$0xff]
    %v2525 = vld [vmem:[#allocation2 + $0x40] sm:$0xff]
    %v2526 = vld [vmem:[#allocation2 + $0x48] sm:$0xff]
    %v2527 = vld [vmem:[#allocation2 + $0x50] sm:$0xff]
    %v2528 = vld [vmem:[#allocation2 + $0x58] sm:$0xff]
    %v2529 = vld [vmem:[#allocation2 + $0x60] sm:$0xff]
    %v2530 = vld [vmem:[#allocation2 + $0x68] sm:$0xff]
    %v2531 = vld [vmem:[#allocation2 + $0x70] sm:$0xff]
    %v2532 = vld [vmem:[#allocation2 + $0x78] sm:$0xff]
    %v2533 = vld [vmem:[#allocation2 + $0x80] sm:$0xff]
    %v2534 = vld [vmem:[#allocation2 + $0x88] sm:$0xff]
    %v2535 = vld [vmem:[#allocation2 + $0x90] sm:$0xff]
    %v2536 = vld [vmem:[#allocation2 + $0x98] sm:$0xff]
    %v2537 = vld [vmem:[#allocation2 + $0xa0] sm:$0xff]
    %v2538 = vld [vmem:[#allocation2 + $0xa8] sm:$0xff]
    %v2539 = vld [vmem:[#allocation2 + $0xb0] sm:$0xff]
    %v2540 = vld [vmem:[#allocation2 + $0xb8] sm:$0xff]
    %v2541 = vld [vmem:[#allocation2 + $0xc0] sm:$0xff]
    %v2542 = vld [vmem:[#allocation2 + $0xc8] sm:$0xff]
    %v2543 = vld [vmem:[#allocation2 + $0xd0] sm:$0xff]
    %v2544 = vld [vmem:[#allocation2 + $0xd8] sm:$0xff]
    %v2545 = vld [vmem:[#allocation2 + $0xe0] sm:$0xff]
    %v2546 = vld [vmem:[#allocation2 + $0xe8] sm:$0xff]
    %v2547 = vld [vmem:[#allocation2 + $0xf0] sm:$0xff]
    %v2548 = vld [vmem:[#allocation2 + $0xf8] sm:$0xff]
    %v2549 = vld [vmem:[#allocation2 + $0x100] sm:$0xff]
    %v2550 = vld [vmem:[#allocation2 + $0x108] sm:$0xff]
    %v2551 = vld [vmem:[#allocation2 + $0x110] sm:$0xff]
    %v2552 = vld [vmem:[#allocation2 + $0x118] sm:$0xff]
    %v2553 = vld [vmem:[#allocation2 + $0x120] sm:$0xff]
    %v2554 = vld [vmem:[#allocation2 + $0x128] sm:$0xff]
    %v2555 = vld [vmem:[#allocation2 + $0x130] sm:$0xff]
    %v2556 = vld [vmem:[#allocation2 + $0x138] sm:$0xff]
    %v2557 = vld [vmem:[#allocation2 + $0x140] sm:$0xff]
    %v2558 = vld [vmem:[#allocation2 + $0x148] sm:$0xff]
    %v2559 = vld [vmem:[#allocation2 + $0x150] sm:$0xff]
    %v2560 = vld [vmem:[#allocation2 + $0x158] sm:$0xff]
    %v2561 = vld [vmem:[#allocation2 + $0x160] sm:$0xff]
    %v2562 = vld [vmem:[#allocation2 + $0x168] sm:$0xff]
    %v2563 = vld [vmem:[#allocation2 + $0x170] sm:$0xff]
    %v2564 = vld [vmem:[#allocation2 + $0x178] sm:$0xff]
    %v2565 = vld [vmem:[#allocation2 + $0x180] sm:$0xff]
    %v2566 = vld [vmem:[#allocation2 + $0x188] sm:$0xff]
    %v2567 = vld [vmem:[#allocation2 + $0x190] sm:$0xff]
    %v2568 = vld [vmem:[#allocation2 + $0x198] sm:$0xff]
    %v2569 = vld [vmem:[#allocation2 + $0x1a0] sm:$0xff]
    %v2570 = vld [vmem:[#allocation2 + $0x1a8] sm:$0xff]
    %v2571 = vld [vmem:[#allocation2 + $0x1b0] sm:$0xff]
    %v2572 = vld [vmem:[#allocation2 + $0x1b8] sm:$0xff]
    %v2573 = vld [vmem:[#allocation2 + $0x1c0] sm:$0xff]
    %v2574 = vld [vmem:[#allocation2 + $0x1c8] sm:$0xff]
    %v2575 = vld [vmem:[#allocation2 + $0x1d0] sm:$0xff]
    %v2576 = vld [vmem:[#allocation2 + $0x1d8] sm:$0xff]
    %v2577 = vld [vmem:[#allocation2 + $0x1e0] sm:$0xff]
    %v2578 = vld [vmem:[#allocation2 + $0x1e8] sm:$0xff]
    %v2579 = vld [vmem:[#allocation2 + $0x1f0] sm:$0xff]
    %v2580 = vld [vmem:[#allocation2 + $0x1f8] sm:$0xff]
    %v2581 = vld [vmem:[#allocation2 + $0x200] sm:$0xff]
    %v2582 = vld [vmem:[#allocation2 + $0x208] sm:$0xff]
    %v2583 = vld [vmem:[#allocation2 + $0x210] sm:$0xff]
    %v2584 = vld [vmem:[#allocation2 + $0x218] sm:$0xff]
    %v2585 = vld [vmem:[#allocation2 + $0x220] sm:$0xff]
    %v2586 = vld [vmem:[#allocation2 + $0x228] sm:$0xff]
    %v2587 = vld [vmem:[#allocation2 + $0x230] sm:$0xff]
    %v2588 = vld [vmem:[#allocation2 + $0x238] sm:$0xff]
    %v2589 = vld [vmem:[#allocation2 + $0x240] sm:$0xff]
    %v2590 = vld [vmem:[#allocation2 + $0x248] sm:$0xff]
    %v2591 = vld [vmem:[#allocation2 + $0x250] sm:$0xff]
    %v2592 = vld [vmem:[#allocation2 + $0x258] sm:$0xff]
    %v2593 = vld [vmem:[#allocation2 + $0x260] sm:$0xff]
    %v2594 = vld [vmem:[#allocation2 + $0x268] sm:$0xff]
    %v2595 = vld [vmem:[#allocation2 + $0x270] sm:$0xff]
    %v2596 = vld [vmem:[#allocation2 + $0x278] sm:$0xff]
    %v2597 = vld [vmem:[#allocation2 + $0x280] sm:$0xff]
    %v2598 = vld [vmem:[#allocation2 + $0x288] sm:$0xff]
    %v2599 = vld [vmem:[#allocation2 + $0x290] sm:$0xff]
    %v2600 = vld [vmem:[#allocation2 + $0x298] sm:$0xff]
    %v2601 = vld [vmem:[#allocation2 + $0x2a0] sm:$0xff]
    %v2602 = vld [vmem:[#allocation2 + $0x2a8] sm:$0xff]
    %v2603 = vld [vmem:[#allocation2 + $0x2b0] sm:$0xff]
    %v2604 = vld [vmem:[#allocation2 + $0x2b8] sm:$0xff]
    %v2605 = vld [vmem:[#allocation2 + $0x2c0] sm:$0x3]
    %v2606 = vld [vmem:[#allocation2 + $0x2c8] sm:$0x3]
    %v2607 = vld [vmem:[#allocation2 + $0x2d0] sm:$0x3]
    %v2608 = vld [vmem:[#allocation2 + $0x2d8] sm:$0x3]
    %s2609 = scalar_lea.vmem [#allocation6], 512
    %v2610 = vld [vmem:[%s2609] sm:$0xff]
    %v2611 = vld [vmem:[%s2609 + $0x8] sm:$0xff]
    %v2612 = vld [vmem:[%s2609 + $0x10] sm:$0xff]
    %v2613 = vld [vmem:[%s2609 + $0x18] sm:$0xff]
    %v2614 = vld [vmem:[%s2609 + $0x20] sm:$0xff]
    %v2615 = vld [vmem:[%s2609 + $0x28] sm:$0xff]
    %v2616 = vld [vmem:[%s2609 + $0x30] sm:$0xff]
    %v2617 = vld [vmem:[%s2609 + $0x38] sm:$0xff]
    %v2618 = vld [vmem:[%s2609 + $0x40] sm:$0xff]
    %v2619 = vld [vmem:[%s2609 + $0x48] sm:$0xff]
    %v2620 = vld [vmem:[%s2609 + $0x50] sm:$0xff]
    %v2621 = vld [vmem:[%s2609 + $0x58] sm:$0xff]
    %v2622 = vld [vmem:[%s2609 + $0x60] sm:$0xff]
    %v2623 = vld [vmem:[%s2609 + $0x68] sm:$0xff]
    %v2624 = vld [vmem:[%s2609 + $0x70] sm:$0xff]
    %v2625 = vld [vmem:[%s2609 + $0x78] sm:$0xff]
    %v2626 = vld [vmem:[%s2609 + $0x80] sm:$0xff]
    %v2627 = vld [vmem:[%s2609 + $0x88] sm:$0xff]
    %v2628 = vld [vmem:[%s2609 + $0x90] sm:$0xff]
    %v2629 = vld [vmem:[%s2609 + $0x98] sm:$0xff]
    %v2630 = vld [vmem:[%s2609 + $0xa0] sm:$0xff]
    %v2631 = vld [vmem:[%s2609 + $0xa8] sm:$0xff]
    %v2632 = vld [vmem:[%s2609 + $0xb0] sm:$0xff]
    %v2633 = vld [vmem:[%s2609 + $0xb8] sm:$0xff]
    %v2634 = vld [vmem:[%s2609 + $0xc0] sm:$0xff]
    %v2635 = vld [vmem:[%s2609 + $0xc8] sm:$0xff]
    %v2636 = vld [vmem:[%s2609 + $0xd0] sm:$0xff]
    %v2637 = vld [vmem:[%s2609 + $0xd8] sm:$0xff]
    %v2638 = vld [vmem:[%s2609 + $0xe0] sm:$0xff]
    %v2639 = vld [vmem:[%s2609 + $0xe8] sm:$0xff]
    %v2640 = vld [vmem:[%s2609 + $0xf0] sm:$0xff]
    %v2641 = vld [vmem:[%s2609 + $0xf8] sm:$0xff]
    %vm2642 = vcmask 1046528
    %v2643 = vrot.slane %v1028, 1
    %v2644 = vrot.slane %v1029, 1
    %v2645 = vsel %vm2642, %v2643, %v2644
    %v2646 = vrot.slane %v1030, 1
    %v2647 = vsel %vm2642, %v2644, %v2646
    %v2648 = vrot.slane %v1031, 1
    %v2649 = vsel %vm2642, %v2646, %v2648
    %v2650 = vrot.slane %v1032, 1
    %v2651 = vsel %vm2642, %v2648, %v2650
    %v2652 = vrot.slane %v1033, 1
    %v2653 = vsel %vm2642, %v2650, %v2652
    %v2654 = vrot.slane %v1034, 1
    %v2655 = vsel %vm2642, %v2652, %v2654
    %v2656 = vrot.slane %v1035, 1
    %v2657 = vsel %vm2642, %v2654, %v2656
    %v2658 = vrot.slane %v1036, 1
    %v2659 = vsel %vm2642, %v2656, %v2658
    %v2660 = vrot.slane %v1037, 1
    %v2661 = vsel %vm2642, %v2658, %v2660
    %v2662 = vrot.slane %v1038, 1
    %v2663 = vsel %vm2642, %v2660, %v2662
    %v2664 = vrot.slane %v1039, 1
    %v2665 = vsel %vm2642, %v2662, %v2664
    %v2710 = vunpack.c.l.b16 %v2610
    %v2711 = vunpack.c.h.b16 %v2610
    %v2712 = vunpack.c.l.b16 %v2611
    %v2713 = vunpack.c.h.b16 %v2611
    %v2714 = vunpack.c.l.b16 %v2612
    %v2715 = vunpack.c.h.b16 %v2612
    %v2716 = vunpack.c.l.b16 %v2613
    %v2717 = vunpack.c.h.b16 %v2613
    %v2718 = vunpack.c.l.b16 %v2614
    %v2719 = vunpack.c.h.b16 %v2614
    %v2720 = vunpack.c.l.b16 %v2615
    %v2721 = vunpack.c.h.b16 %v2615
    %v2722 = vunpack.c.l.b16 %v2616
    %v2723 = vunpack.c.h.b16 %v2616
    %v2724 = vunpack.c.l.b16 %v2617
    %v2725 = vunpack.c.h.b16 %v2617
    %v2726 = vunpack.c.l.b16 %v2618
    %v2727 = vunpack.c.h.b16 %v2618
    %v2728 = vunpack.c.l.b16 %v2619
    %v2729 = vunpack.c.h.b16 %v2619
    %v2730 = vunpack.c.l.b16 %v2620
    %v2731 = vunpack.c.h.b16 %v2620
    %v2732 = vunpack.c.l.b16 %v2621
    %v2733 = vunpack.c.h.b16 %v2621
    %v2734 = vunpack.c.l.b16 %v2622
    %v2735 = vunpack.c.h.b16 %v2622
    %v2736 = vunpack.c.l.b16 %v2623
    %v2737 = vunpack.c.h.b16 %v2623
    %v2738 = vunpack.c.l.b16 %v2624
    %v2739 = vunpack.c.h.b16 %v2624
    %v2740 = vunpack.c.l.b16 %v2625
    %v2741 = vunpack.c.h.b16 %v2625
    %v2742 = vunpack.c.l.b16 %v2626
    %v2743 = vunpack.c.h.b16 %v2626
    %v2744 = vunpack.c.l.b16 %v2627
    %v2745 = vunpack.c.h.b16 %v2627
    %v2746 = vunpack.c.l.b16 %v2628
    %v2747 = vunpack.c.h.b16 %v2628
    %v2748 = vunpack.c.l.b16 %v2629
    %v2749 = vunpack.c.h.b16 %v2629
    %v2750 = vunpack.c.l.b16 %v2630
    %v2751 = vunpack.c.h.b16 %v2630
    %v2752 = vunpack.c.l.b16 %v2631
    %v2753 = vunpack.c.h.b16 %v2631
    %v2754 = vunpack.c.l.b16 %v2632
    %v2755 = vunpack.c.h.b16 %v2632
    %v2756 = vunpack.c.l.b16 %v2633
    %v2757 = vunpack.c.h.b16 %v2633
    %v2758 = vunpack.c.l.b16 %v2634
    %v2759 = vunpack.c.h.b16 %v2634
    %v2760 = vunpack.c.l.b16 %v2635
    %v2761 = vunpack.c.h.b16 %v2635
    %v2762 = vunpack.c.l.b16 %v2636
    %v2763 = vunpack.c.h.b16 %v2636
    %v2764 = vunpack.c.l.b16 %v2637
    %v2765 = vunpack.c.h.b16 %v2637
    %v2766 = vunpack.c.l.b16 %v2638
    %v2767 = vunpack.c.h.b16 %v2638
    %v2768 = vunpack.c.l.b16 %v2639
    %v2769 = vunpack.c.h.b16 %v2639
    %v2770 = vunpack.c.l.b16 %v2640
    %v2771 = vunpack.c.h.b16 %v2640
    %v2772 = vunpack.c.l.b16 %v2641
    %v2773 = vunpack.c.h.b16 %v2641
    %v2774 = vpack.c.b16 %v2714, %v2710
    %v2775 = vpack.c.b16 %v2715, %v2711
    %v2776 = vpack.c.b16 %v2716, %v2712
    %v2777 = vpack.c.b16 %v2717, %v2713
    %v2778 = vpack.c.b16 %v2722, %v2718
    %v2779 = vpack.c.b16 %v2723, %v2719
    %v2780 = vpack.c.b16 %v2724, %v2720
    %v2781 = vpack.c.b16 %v2725, %v2721
    %v2782 = vpack.c.b16 %v2730, %v2726
    %v2783 = vpack.c.b16 %v2731, %v2727
    %v2784 = vpack.c.b16 %v2732, %v2728
    %v2785 = vpack.c.b16 %v2733, %v2729
    %v2786 = vpack.c.b16 %v2738, %v2734
    %v2787 = vpack.c.b16 %v2739, %v2735
    %v2788 = vpack.c.b16 %v2740, %v2736
    %v2789 = vpack.c.b16 %v2741, %v2737
    %v2790 = vpack.c.b16 %v2746, %v2742
    %v2791 = vpack.c.b16 %v2747, %v2743
    %v2792 = vpack.c.b16 %v2748, %v2744
    %v2793 = vpack.c.b16 %v2749, %v2745
    %v2794 = vpack.c.b16 %v2754, %v2750
    %v2795 = vpack.c.b16 %v2755, %v2751
    %v2796 = vpack.c.b16 %v2756, %v2752
    %v2797 = vpack.c.b16 %v2757, %v2753
    %v2798 = vpack.c.b16 %v2762, %v2758
    %v2799 = vpack.c.b16 %v2763, %v2759
    %v2800 = vpack.c.b16 %v2764, %v2760
    %v2801 = vpack.c.b16 %v2765, %v2761
    %v2802 = vpack.c.b16 %v2770, %v2766
    %v2803 = vpack.c.b16 %v2771, %v2767
    %v2804 = vpack.c.b16 %v2772, %v2768
    %v2805 = vpack.c.b16 %v2773, %v2769
    %2838 = vmatpush.bf16.msra.mxu0 %v2802
    %2839 = vmatpush.bf16.msra.mxu0 %v2798
    %2840 = vmatpush.bf16.msra.mxu0 %v2794
    %2841 = vmatpush.bf16.msra.mxu0 %v2790
    %2842 = vmatpush.bf16.msra.mxu0 %v2786
    %2843 = vmatpush.bf16.msra.mxu0 %v2782
    %2844 = vmatpush.bf16.msra.mxu0 %v2778
    %2845 = vmatpush.bf16.msra.mxu0 %v2774
    %2846 = vmatmul.bf16.gmra.mxu0 %v2645
    %v2847 = vpop.f32.mrf.mxu0
    %v2848 = vadd.f32 0.0, %v2847
    %v2849 = vpop.f32.mrf.mxu0
    %v2850 = vadd.f32 0.0, %v2849
    %2851 = vmatmul.bf16.gmra.mxu0 %v2647
    %v2852 = vpop.f32.mrf.mxu0
    %v2853 = vadd.f32 0.0, %v2852
    %v2854 = vpop.f32.mrf.mxu0
    %v2855 = vadd.f32 0.0, %v2854
    %2856 = vmatmul.bf16.gmra.mxu0 %v2649
    %v2857 = vpop.f32.mrf.mxu0
    %v2858 = vadd.f32 0.0, %v2857
    %v2859 = vpop.f32.mrf.mxu0
    %v2860 = vadd.f32 0.0, %v2859
    %2861 = vmatmul.bf16.gmra.mxu0 %v2651
    %v2862 = vpop.f32.mrf.mxu0
    %v2863 = vadd.f32 0.0, %v2862
    %v2864 = vpop.f32.mrf.mxu0
    %v2865 = vadd.f32 0.0, %v2864
    %2866 = vmatmul.bf16.gmra.mxu0 %v2653
    %v2867 = vpop.f32.mrf.mxu0
    %v2868 = vadd.f32 0.0, %v2867
    %v2869 = vpop.f32.mrf.mxu0
    %v2870 = vadd.f32 0.0, %v2869
    %2871 = vmatmul.bf16.gmra.mxu0 %v2655
    %v2872 = vpop.f32.mrf.mxu0
    %v2873 = vadd.f32 0.0, %v2872
    %v2874 = vpop.f32.mrf.mxu0
    %v2875 = vadd.f32 0.0, %v2874
    %2876 = vmatmul.bf16.gmra.mxu0 %v2657
    %v2877 = vpop.f32.mrf.mxu0
    %v2878 = vadd.f32 0.0, %v2877
    %v2879 = vpop.f32.mrf.mxu0
    %v2880 = vadd.f32 0.0, %v2879
    %2881 = vmatmul.bf16.gmra.mxu0 %v2659
    %v2882 = vpop.f32.mrf.mxu0
    %v2883 = vadd.f32 0.0, %v2882
    %v2884 = vpop.f32.mrf.mxu0
    %v2885 = vadd.f32 0.0, %v2884
    %2886 = vmatmul.bf16.gmra.mxu0 %v2661
    %v2887 = vpop.f32.mrf.mxu0
    %v2888 = vadd.f32 0.0, %v2887
    %v2889 = vpop.f32.mrf.mxu0
    %v2890 = vadd.f32 0.0, %v2889
    %2891 = vmatmul.bf16.gmra.mxu0 %v2663
    %v2892 = vpop.f32.mrf.mxu0
    %v2893 = vadd.f32 0.0, %v2892
    %v2894 = vpop.f32.mrf.mxu0
    %v2895 = vadd.f32 0.0, %v2894
    %2896 = vmatmul.bf16.gmra.mxu0 %v2665
    %v2897 = vpop.f32.mrf.mxu0
    %v2898 = vadd.f32 0.0, %v2897
    %v2899 = vpop.f32.mrf.mxu0
    %v2900 = vadd.f32 0.0, %v2899
    %2901 = vmatmul.bf16.gmra.mxu0 %v2664
    %v2902 = vpop.f32.mrf.mxu0
    %v2903 = vadd.f32 0.0, %v2902
    %v2904 = vpop.f32.mrf.mxu0
    %2905 = vdwg.mxu0
    %2906 = vmatpush.bf16.msra.mxu0 %v2803
    %2907 = vmatpush.bf16.msra.mxu0 %v2799
    %2908 = vmatpush.bf16.msra.mxu0 %v2795
    %2909 = vmatpush.bf16.msra.mxu0 %v2791
    %2910 = vmatpush.bf16.msra.mxu0 %v2787
    %2911 = vmatpush.bf16.msra.mxu0 %v2783
    %2912 = vmatpush.bf16.msra.mxu0 %v2779
    %2913 = vmatpush.bf16.msra.mxu0 %v2775
    %2914 = vmatmul.bf16.gmra.mxu0 %v2645
    %v2915 = vpop.f32.mrf.mxu0
    %v2916 = vadd.f32 0.0, %v2915
    %v2917 = vpop.f32.mrf.mxu0
    %v2918 = vadd.f32 0.0, %v2917
    %2919 = vmatmul.bf16.gmra.mxu0 %v2647
    %v2920 = vpop.f32.mrf.mxu0
    %v2921 = vadd.f32 0.0, %v2920
    %v2922 = vpop.f32.mrf.mxu0
    %v2923 = vadd.f32 0.0, %v2922
    %2924 = vmatmul.bf16.gmra.mxu0 %v2649
    %v2925 = vpop.f32.mrf.mxu0
    %v2926 = vadd.f32 0.0, %v2925
    %v2927 = vpop.f32.mrf.mxu0
    %v2928 = vadd.f32 0.0, %v2927
    %2929 = vmatmul.bf16.gmra.mxu0 %v2651
    %v2930 = vpop.f32.mrf.mxu0
    %v2931 = vadd.f32 0.0, %v2930
    %v2932 = vpop.f32.mrf.mxu0
    %v2933 = vadd.f32 0.0, %v2932
    %2934 = vmatmul.bf16.gmra.mxu0 %v2653
    %v2935 = vpop.f32.mrf.mxu0
    %v2936 = vadd.f32 0.0, %v2935
    %v2937 = vpop.f32.mrf.mxu0
    %v2938 = vadd.f32 0.0, %v2937
    %2939 = vmatmul.bf16.gmra.mxu0 %v2655
    %v2940 = vpop.f32.mrf.mxu0
    %v2941 = vadd.f32 0.0, %v2940
    %v2942 = vpop.f32.mrf.mxu0
    %v2943 = vadd.f32 0.0, %v2942
    %2944 = vmatmul.bf16.gmra.mxu0 %v2657
    %v2945 = vpop.f32.mrf.mxu0
    %v2946 = vadd.f32 0.0, %v2945
    %v2947 = vpop.f32.mrf.mxu0
    %v2948 = vadd.f32 0.0, %v2947
    %2949 = vmatmul.bf16.gmra.mxu0 %v2659
    %v2950 = vpop.f32.mrf.mxu0
    %v2951 = vadd.f32 0.0, %v2950
    %v2952 = vpop.f32.mrf.mxu0
    %v2953 = vadd.f32 0.0, %v2952
    %2954 = vmatmul.bf16.gmra.mxu0 %v2661
    %v2955 = vpop.f32.mrf.mxu0
    %v2956 = vadd.f32 0.0, %v2955
    %v2957 = vpop.f32.mrf.mxu0
    %v2958 = vadd.f32 0.0, %v2957
    %2959 = vmatmul.bf16.gmra.mxu0 %v2663
    %v2960 = vpop.f32.mrf.mxu0
    %v2961 = vadd.f32 0.0, %v2960
    %v2962 = vpop.f32.mrf.mxu0
    %v2963 = vadd.f32 0.0, %v2962
    %2964 = vmatmul.bf16.gmra.mxu0 %v2665
    %v2965 = vpop.f32.mrf.mxu0
    %v2966 = vadd.f32 0.0, %v2965
    %v2967 = vpop.f32.mrf.mxu0
    %v2968 = vadd.f32 0.0, %v2967
    %2969 = vmatmul.bf16.gmra.mxu0 %v2664
    %v2970 = vpop.f32.mrf.mxu0
    %v2971 = vadd.f32 0.0, %v2970
    %v2972 = vpop.f32.mrf.mxu0
    %2973 = vdwg.mxu0
    %2974 = vmatpush.bf16.msra.mxu0 %v2804
    %2975 = vmatpush.bf16.msra.mxu0 %v2800
    %2976 = vmatpush.bf16.msra.mxu0 %v2796
    %2977 = vmatpush.bf16.msra.mxu0 %v2792
    %2978 = vmatpush.bf16.msra.mxu0 %v2788
    %2979 = vmatpush.bf16.msra.mxu0 %v2784
    %2980 = vmatpush.bf16.msra.mxu0 %v2780
    %2981 = vmatpush.bf16.msra.mxu0 %v2776
    %2982 = vmatmul.bf16.gmra.mxu0 %v2645
    %v2983 = vpop.f32.mrf.mxu0
    %v2984 = vadd.f32 0.0, %v2983
    %v2985 = vpop.f32.mrf.mxu0
    %v2986 = vadd.f32 0.0, %v2985
    %2987 = vmatmul.bf16.gmra.mxu0 %v2647
    %v2988 = vpop.f32.mrf.mxu0
    %v2989 = vadd.f32 0.0, %v2988
    %v2990 = vpop.f32.mrf.mxu0
    %v2991 = vadd.f32 0.0, %v2990
    %2992 = vmatmul.bf16.gmra.mxu0 %v2649
    %v2993 = vpop.f32.mrf.mxu0
    %v2994 = vadd.f32 0.0, %v2993
    %v2995 = vpop.f32.mrf.mxu0
    %v2996 = vadd.f32 0.0, %v2995
    %2997 = vmatmul.bf16.gmra.mxu0 %v2651
    %v2998 = vpop.f32.mrf.mxu0
    %v2999 = vadd.f32 0.0, %v2998
    %v3000 = vpop.f32.mrf.mxu0
    %v3001 = vadd.f32 0.0, %v3000
    %3002 = vmatmul.bf16.gmra.mxu0 %v2653
    %v3003 = vpop.f32.mrf.mxu0
    %v3004 = vadd.f32 0.0, %v3003
    %v3005 = vpop.f32.mrf.mxu0
    %v3006 = vadd.f32 0.0, %v3005
    %3007 = vmatmul.bf16.gmra.mxu0 %v2655
    %v3008 = vpop.f32.mrf.mxu0
    %v3009 = vadd.f32 0.0, %v3008
    %v3010 = vpop.f32.mrf.mxu0
    %v3011 = vadd.f32 0.0, %v3010
    %3012 = vmatmul.bf16.gmra.mxu0 %v2657
    %v3013 = vpop.f32.mrf.mxu0
    %v3014 = vadd.f32 0.0, %v3013
    %v3015 = vpop.f32.mrf.mxu0
    %v3016 = vadd.f32 0.0, %v3015
    %3017 = vmatmul.bf16.gmra.mxu0 %v2659
    %v3018 = vpop.f32.mrf.mxu0
    %v3019 = vadd.f32 0.0, %v3018
    %v3020 = vpop.f32.mrf.mxu0
    %v3021 = vadd.f32 0.0, %v3020
    %3022 = vmatmul.bf16.gmra.mxu0 %v2661
    %v3023 = vpop.f32.mrf.mxu0
    %v3024 = vadd.f32 0.0, %v3023
    %v3025 = vpop.f32.mrf.mxu0
    %v3026 = vadd.f32 0.0, %v3025
    %3027 = vmatmul.bf16.gmra.mxu0 %v2663
    %v3028 = vpop.f32.mrf.mxu0
    %v3029 = vadd.f32 0.0, %v3028
    %v3030 = vpop.f32.mrf.mxu0
    %v3031 = vadd.f32 0.0, %v3030
    %3032 = vmatmul.bf16.gmra.mxu0 %v2665
    %v3033 = vpop.f32.mrf.mxu0
    %v3034 = vadd.f32 0.0, %v3033
    %v3035 = vpop.f32.mrf.mxu0
    %v3036 = vadd.f32 0.0, %v3035
    %3037 = vmatmul.bf16.gmra.mxu0 %v2664
    %v3038 = vpop.f32.mrf.mxu0
    %v3039 = vadd.f32 0.0, %v3038
    %v3040 = vpop.f32.mrf.mxu0
    %3041 = vdwg.mxu0
    %3042 = vmatpush.bf16.msra.mxu0 %v2805
    %3043 = vmatpush.bf16.msra.mxu0 %v2801
    %3044 = vmatpush.bf16.msra.mxu0 %v2797
    %3045 = vmatpush.bf16.msra.mxu0 %v2793
    %3046 = vmatpush.bf16.msra.mxu0 %v2789
    %3047 = vmatpush.bf16.msra.mxu0 %v2785
    %3048 = vmatpush.bf16.msra.mxu0 %v2781
    %3049 = vmatpush.bf16.msra.mxu0 %v2777
    %3050 = vmatmul.bf16.gmra.mxu0 %v2645
    %v3051 = vpop.f32.mrf.mxu0
    %v3052 = vadd.f32 0.0, %v3051
    %v3053 = vpop.f32.mrf.mxu0
    %v3054 = vadd.f32 0.0, %v3053
    %3055 = vmatmul.bf16.gmra.mxu0 %v2647
    %v3056 = vpop.f32.mrf.mxu0
    %v3057 = vadd.f32 0.0, %v3056
    %v3058 = vpop.f32.mrf.mxu0
    %v3059 = vadd.f32 0.0, %v3058
    %3060 = vmatmul.bf16.gmra.mxu0 %v2649
    %v3061 = vpop.f32.mrf.mxu0
    %v3062 = vadd.f32 0.0, %v3061
    %v3063 = vpop.f32.mrf.mxu0
    %v3064 = vadd.f32 0.0, %v3063
    %3065 = vmatmul.bf16.gmra.mxu0 %v2651
    %v3066 = vpop.f32.mrf.mxu0
    %v3067 = vadd.f32 0.0, %v3066
    %v3068 = vpop.f32.mrf.mxu0
    %v3069 = vadd.f32 0.0, %v3068
    %3070 = vmatmul.bf16.gmra.mxu0 %v2653
    %v3071 = vpop.f32.mrf.mxu0
    %v3072 = vadd.f32 0.0, %v3071
    %v3073 = vpop.f32.mrf.mxu0
    %v3074 = vadd.f32 0.0, %v3073
    %3075 = vmatmul.bf16.gmra.mxu0 %v2655
    %v3076 = vpop.f32.mrf.mxu0
    %v3077 = vadd.f32 0.0, %v3076
    %v3078 = vpop.f32.mrf.mxu0
    %v3079 = vadd.f32 0.0, %v3078
    %3080 = vmatmul.bf16.gmra.mxu0 %v2657
    %v3081 = vpop.f32.mrf.mxu0
    %v3082 = vadd.f32 0.0, %v3081
    %v3083 = vpop.f32.mrf.mxu0
    %v3084 = vadd.f32 0.0, %v3083
    %3085 = vmatmul.bf16.gmra.mxu0 %v2659
    %v3086 = vpop.f32.mrf.mxu0
    %v3087 = vadd.f32 0.0, %v3086
    %v3088 = vpop.f32.mrf.mxu0
    %v3089 = vadd.f32 0.0, %v3088
    %3090 = vmatmul.bf16.gmra.mxu0 %v2661
    %v3091 = vpop.f32.mrf.mxu0
    %v3092 = vadd.f32 0.0, %v3091
    %v3093 = vpop.f32.mrf.mxu0
    %v3094 = vadd.f32 0.0, %v3093
    %3095 = vmatmul.bf16.gmra.mxu0 %v2663
    %v3096 = vpop.f32.mrf.mxu0
    %v3097 = vadd.f32 0.0, %v3096
    %v3098 = vpop.f32.mrf.mxu0
    %v3099 = vadd.f32 0.0, %v3098
    %3100 = vmatmul.bf16.gmra.mxu0 %v2665
    %v3101 = vpop.f32.mrf.mxu0
    %v3102 = vadd.f32 0.0, %v3101
    %v3103 = vpop.f32.mrf.mxu0
    %v3104 = vadd.f32 0.0, %v3103
    %3105 = vmatmul.bf16.gmra.mxu0 %v2664
    %v3106 = vpop.f32.mrf.mxu0
    %v3107 = vadd.f32 0.0, %v3106
    %v3108 = vpop.f32.mrf.mxu0
    %3109 = vdwg.mxu0
    %v3110 = vadd.f32 %v2517, %v2848
    %v3111 = vadd.f32 %v2518, %v2916
    %v3112 = vadd.f32 %v2519, %v2984
    %v3113 = vadd.f32 %v2520, %v3052
    %v3114 = vadd.f32 %v2521, %v2850
    %v3115 = vadd.f32 %v2522, %v2918
    %v3116 = vadd.f32 %v2523, %v2986
    %v3117 = vadd.f32 %v2524, %v3054
    %v3118 = vadd.f32 %v2525, %v2853
    %v3119 = vadd.f32 %v2526, %v2921
    %v3120 = vadd.f32 %v2527, %v2989
    %v3121 = vadd.f32 %v2528, %v3057
    %v3122 = vadd.f32 %v2529, %v2855
    %v3123 = vadd.f32 %v2530, %v2923
    %v3124 = vadd.f32 %v2531, %v2991
    %v3125 = vadd.f32 %v2532, %v3059
    %v3126 = vadd.f32 %v2533, %v2858
    %v3127 = vadd.f32 %v2534, %v2926
    %v3128 = vadd.f32 %v2535, %v2994
    %v3129 = vadd.f32 %v2536, %v3062
    %v3130 = vadd.f32 %v2537, %v2860
    %v3131 = vadd.f32 %v2538, %v2928
    %v3132 = vadd.f32 %v2539, %v2996
    %v3133 = vadd.f32 %v2540, %v3064
    %v3134 = vadd.f32 %v2541, %v2863
    %v3135 = vadd.f32 %v2542, %v2931
    %v3136 = vadd.f32 %v2543, %v2999
    %v3137 = vadd.f32 %v2544, %v3067
    %v3138 = vadd.f32 %v2545, %v2865
    %v3139 = vadd.f32 %v2546, %v2933
    %v3140 = vadd.f32 %v2547, %v3001
    %v3141 = vadd.f32 %v2548, %v3069
    %v3142 = vadd.f32 %v2549, %v2868
    %v3143 = vadd.f32 %v2550, %v2936
    %v3144 = vadd.f32 %v2551, %v3004
    %v3145 = vadd.f32 %v2552, %v3072
    %v3146 = vadd.f32 %v2553, %v2870
    %v3147 = vadd.f32 %v2554, %v2938
    %v3148 = vadd.f32 %v2555, %v3006
    %v3149 = vadd.f32 %v2556, %v3074
    %v3150 = vadd.f32 %v2557, %v2873
    %v3151 = vadd.f32 %v2558, %v2941
    %v3152 = vadd.f32 %v2559, %v3009
    %v3153 = vadd.f32 %v2560, %v3077
    %v3154 = vadd.f32 %v2561, %v2875
    %v3155 = vadd.f32 %v2562, %v2943
    %v3156 = vadd.f32 %v2563, %v3011
    %v3157 = vadd.f32 %v2564, %v3079
    %v3158 = vadd.f32 %v2565, %v2878
    %v3159 = vadd.f32 %v2566, %v2946
    %v3160 = vadd.f32 %v2567, %v3014
    %v3161 = vadd.f32 %v2568, %v3082
    %v3162 = vadd.f32 %v2569, %v2880
    %v3163 = vadd.f32 %v2570, %v2948
    %v3164 = vadd.f32 %v2571, %v3016
    %v3165 = vadd.f32 %v2572, %v3084
    %v3166 = vadd.f32 %v2573, %v2883
    %v3167 = vadd.f32 %v2574, %v2951
    %v3168 = vadd.f32 %v2575, %v3019
    %v3169 = vadd.f32 %v2576, %v3087
    %v3170 = vadd.f32 %v2577, %v2885
    %v3171 = vadd.f32 %v2578, %v2953
    %v3172 = vadd.f32 %v2579, %v3021
    %v3173 = vadd.f32 %v2580, %v3089
    %v3174 = vadd.f32 %v2581, %v2888
    %v3175 = vadd.f32 %v2582, %v2956
    %v3176 = vadd.f32 %v2583, %v3024
    %v3177 = vadd.f32 %v2584, %v3092
    %v3178 = vadd.f32 %v2585, %v2890
    %v3179 = vadd.f32 %v2586, %v2958
    %v3180 = vadd.f32 %v2587, %v3026
    %v3181 = vadd.f32 %v2588, %v3094
    %v3182 = vadd.f32 %v2589, %v2893
    %v3183 = vadd.f32 %v2590, %v2961
    %v3184 = vadd.f32 %v2591, %v3029
    %v3185 = vadd.f32 %v2592, %v3097
    %v3186 = vadd.f32 %v2593, %v2895
    %v3187 = vadd.f32 %v2594, %v2963
    %v3188 = vadd.f32 %v2595, %v3031
    %v3189 = vadd.f32 %v2596, %v3099
    %v3190 = vadd.f32 %v2597, %v2898
    %v3191 = vadd.f32 %v2598, %v2966
    %v3192 = vadd.f32 %v2599, %v3034
    %v3193 = vadd.f32 %v2600, %v3102
    %v3194 = vadd.f32 %v2601, %v2900
    %v3195 = vadd.f32 %v2602, %v2968
    %v3196 = vadd.f32 %v2603, %v3036
    %v3197 = vadd.f32 %v2604, %v3104
    %v3198 = vadd.f32 %v2605, %v2903
    %v3199 = vadd.f32 %v2606, %v2971
    %v3200 = vadd.f32 %v2607, %v3039
    %v3201 = vadd.f32 %v2608, %v3107
    %3202 = vst [vmem:[#allocation2] sm:$0xff] %v3110
    %3203 = vst [vmem:[#allocation2 + $0x8] sm:$0xff] %v3111
    %3204 = vst [vmem:[#allocation2 + $0x10] sm:$0xff] %v3112
    %3205 = vst [vmem:[#allocation2 + $0x18] sm:$0xff] %v3113
    %3206 = vst [vmem:[#allocation2 + $0x20] sm:$0xff] %v3114
    %3207 = vst [vmem:[#allocation2 + $0x28] sm:$0xff] %v3115
    %3208 = vst [vmem:[#allocation2 + $0x30] sm:$0xff] %v3116
    %3209 = vst [vmem:[#allocation2 + $0x38] sm:$0xff] %v3117
    %3210 = vst [vmem:[#allocation2 + $0x40] sm:$0xff] %v3118
    %3211 = vst [vmem:[#allocation2 + $0x48] sm:$0xff] %v3119
    %3212 = vst [vmem:[#allocation2 + $0x50] sm:$0xff] %v3120
    %3213 = vst [vmem:[#allocation2 + $0x58] sm:$0xff] %v3121
    %3214 = vst [vmem:[#allocation2 + $0x60] sm:$0xff] %v3122
    %3215 = vst [vmem:[#allocation2 + $0x68] sm:$0xff] %v3123
    %3216 = vst [vmem:[#allocation2 + $0x70] sm:$0xff] %v3124
    %3217 = vst [vmem:[#allocation2 + $0x78] sm:$0xff] %v3125
    %3218 = vst [vmem:[#allocation2 + $0x80] sm:$0xff] %v3126
    %3219 = vst [vmem:[#allocation2 + $0x88] sm:$0xff] %v3127
    %3220 = vst [vmem:[#allocation2 + $0x90] sm:$0xff] %v3128
    %3221 = vst [vmem:[#allocation2 + $0x98] sm:$0xff] %v3129
    %3222 = vst [vmem:[#allocation2 + $0xa0] sm:$0xff] %v3130
    %3223 = vst [vmem:[#allocation2 + $0xa8] sm:$0xff] %v3131
    %3224 = vst [vmem:[#allocation2 + $0xb0] sm:$0xff] %v3132
    %3225 = vst [vmem:[#allocation2 + $0xb8] sm:$0xff] %v3133
    %3226 = vst [vmem:[#allocation2 + $0xc0] sm:$0xff] %v3134
    %3227 = vst [vmem:[#allocation2 + $0xc8] sm:$0xff] %v3135
    %3228 = vst [vmem:[#allocation2 + $0xd0] sm:$0xff] %v3136
    %3229 = vst [vmem:[#allocation2 + $0xd8] sm:$0xff] %v3137
    %3230 = vst [vmem:[#allocation2 + $0xe0] sm:$0xff] %v3138
    %3231 = vst [vmem:[#allocation2 + $0xe8] sm:$0xff] %v3139
    %3232 = vst [vmem:[#allocation2 + $0xf0] sm:$0xff] %v3140
    %3233 = vst [vmem:[#allocation2 + $0xf8] sm:$0xff] %v3141
    %3234 = vst [vmem:[#allocation2 + $0x100] sm:$0xff] %v3142
    %3235 = vst [vmem:[#allocation2 + $0x108] sm:$0xff] %v3143
    %3236 = vst [vmem:[#allocation2 + $0x110] sm:$0xff] %v3144
    %3237 = vst [vmem:[#allocation2 + $0x118] sm:$0xff] %v3145
    %3238 = vst [vmem:[#allocation2 + $0x120] sm:$0xff] %v3146
    %3239 = vst [vmem:[#allocation2 + $0x128] sm:$0xff] %v3147
    %3240 = vst [vmem:[#allocation2 + $0x130] sm:$0xff] %v3148
    %3241 = vst [vmem:[#allocation2 + $0x138] sm:$0xff] %v3149
    %3242 = vst [vmem:[#allocation2 + $0x140] sm:$0xff] %v3150
    %3243 = vst [vmem:[#allocation2 + $0x148] sm:$0xff] %v3151
    %3244 = vst [vmem:[#allocation2 + $0x150] sm:$0xff] %v3152
    %3245 = vst [vmem:[#allocation2 + $0x158] sm:$0xff] %v3153
    %3246 = vst [vmem:[#allocation2 + $0x160] sm:$0xff] %v3154
    %3247 = vst [vmem:[#allocation2 + $0x168] sm:$0xff] %v3155
    %3248 = vst [vmem:[#allocation2 + $0x170] sm:$0xff] %v3156
    %3249 = vst [vmem:[#allocation2 + $0x178] sm:$0xff] %v3157
    %3250 = vst [vmem:[#allocation2 + $0x180] sm:$0xff] %v3158
    %3251 = vst [vmem:[#allocation2 + $0x188] sm:$0xff] %v3159
    %3252 = vst [vmem:[#allocation2 + $0x190] sm:$0xff] %v3160
    %3253 = vst [vmem:[#allocation2 + $0x198] sm:$0xff] %v3161
    %3254 = vst [vmem:[#allocation2 + $0x1a0] sm:$0xff] %v3162
    %3255 = vst [vmem:[#allocation2 + $0x1a8] sm:$0xff] %v3163
    %3256 = vst [vmem:[#allocation2 + $0x1b0] sm:$0xff] %v3164
    %3257 = vst [vmem:[#allocation2 + $0x1b8] sm:$0xff] %v3165
    %3258 = vst [vmem:[#allocation2 + $0x1c0] sm:$0xff] %v3166
    %3259 = vst [vmem:[#allocation2 + $0x1c8] sm:$0xff] %v3167
    %3260 = vst [vmem:[#allocation2 + $0x1d0] sm:$0xff] %v3168
    %3261 = vst [vmem:[#allocation2 + $0x1d8] sm:$0xff] %v3169
    %3262 = vst [vmem:[#allocation2 + $0x1e0] sm:$0xff] %v3170
    %3263 = vst [vmem:[#allocation2 + $0x1e8] sm:$0xff] %v3171
    %3264 = vst [vmem:[#allocation2 + $0x1f0] sm:$0xff] %v3172
    %3265 = vst [vmem:[#allocation2 + $0x1f8] sm:$0xff] %v3173
    %3266 = vst [vmem:[#allocation2 + $0x200] sm:$0xff] %v3174
    %3267 = vst [vmem:[#allocation2 + $0x208] sm:$0xff] %v3175
    %3268 = vst [vmem:[#allocation2 + $0x210] sm:$0xff] %v3176
    %3269 = vst [vmem:[#allocation2 + $0x218] sm:$0xff] %v3177
    %3270 = vst [vmem:[#allocation2 + $0x220] sm:$0xff] %v3178
    %3271 = vst [vmem:[#allocation2 + $0x228] sm:$0xff] %v3179
    %3272 = vst [vmem:[#allocation2 + $0x230] sm:$0xff] %v3180
    %3273 = vst [vmem:[#allocation2 + $0x238] sm:$0xff] %v3181
    %3274 = vst [vmem:[#allocation2 + $0x240] sm:$0xff] %v3182
    %3275 = vst [vmem:[#allocation2 + $0x248] sm:$0xff] %v3183
    %3276 = vst [vmem:[#allocation2 + $0x250] sm:$0xff] %v3184
    %3277 = vst [vmem:[#allocation2 + $0x258] sm:$0xff] %v3185
    %3278 = vst [vmem:[#allocation2 + $0x260] sm:$0xff] %v3186
    %3279 = vst [vmem:[#allocation2 + $0x268] sm:$0xff] %v3187
    %3280 = vst [vmem:[#allocation2 + $0x270] sm:$0xff] %v3188
    %3281 = vst [vmem:[#allocation2 + $0x278] sm:$0xff] %v3189
    %3282 = vst [vmem:[#allocation2 + $0x280] sm:$0xff] %v3190
    %3283 = vst [vmem:[#allocation2 + $0x288] sm:$0xff] %v3191
    %3284 = vst [vmem:[#allocation2 + $0x290] sm:$0xff] %v3192
    %3285 = vst [vmem:[#allocation2 + $0x298] sm:$0xff] %v3193
    %3286 = vst [vmem:[#allocation2 + $0x2a0] sm:$0xff] %v3194
    %3287 = vst [vmem:[#allocation2 + $0x2a8] sm:$0xff] %v3195
    %3288 = vst [vmem:[#allocation2 + $0x2b0] sm:$0xff] %v3196
    %3289 = vst [vmem:[#allocation2 + $0x2b8] sm:$0xff] %v3197
    %3290 = vst [vmem:[#allocation2 + $0x2c0] sm:$0x3] %v3198
    %3291 = vst [vmem:[#allocation2 + $0x2c8] sm:$0x3] %v3199
    %3292 = vst [vmem:[#allocation2 + $0x2d0] sm:$0x3] %v3200
    %3293 = vst [vmem:[#allocation2 + $0x2d8] sm:$0x3] %v3201
    %v3294 = vld [vmem:[#allocation2] sm:$0xff]
    %v3295 = vld [vmem:[#allocation2 + $0x8] sm:$0xff]
    %v3296 = vld [vmem:[#allocation2 + $0x10] sm:$0xff]
    %v3297 = vld [vmem:[#allocation2 + $0x18] sm:$0xff]
    %v3298 = vld [vmem:[#allocation2 + $0x20] sm:$0xff]
    %v3299 = vld [vmem:[#allocation2 + $0x28] sm:$0xff]
    %v3300 = vld [vmem:[#allocation2 + $0x30] sm:$0xff]
    %v3301 = vld [vmem:[#allocation2 + $0x38] sm:$0xff]
    %v3302 = vld [vmem:[#allocation2 + $0x40] sm:$0xff]
    %v3303 = vld [vmem:[#allocation2 + $0x48] sm:$0xff]
    %v3304 = vld [vmem:[#allocation2 + $0x50] sm:$0xff]
    %v3305 = vld [vmem:[#allocation2 + $0x58] sm:$0xff]
    %v3306 = vld [vmem:[#allocation2 + $0x60] sm:$0xff]
    %v3307 = vld [vmem:[#allocation2 + $0x68] sm:$0xff]
    %v3308 = vld [vmem:[#allocation2 + $0x70] sm:$0xff]
    %v3309 = vld [vmem:[#allocation2 + $0x78] sm:$0xff]
    %v3310 = vld [vmem:[#allocation2 + $0x80] sm:$0xff]
    %v3311 = vld [vmem:[#allocation2 + $0x88] sm:$0xff]
    %v3312 = vld [vmem:[#allocation2 + $0x90] sm:$0xff]
    %v3313 = vld [vmem:[#allocation2 + $0x98] sm:$0xff]
    %v3314 = vld [vmem:[#allocation2 + $0xa0] sm:$0xff]
    %v3315 = vld [vmem:[#allocation2 + $0xa8] sm:$0xff]
    %v3316 = vld [vmem:[#allocation2 + $0xb0] sm:$0xff]
    %v3317 = vld [vmem:[#allocation2 + $0xb8] sm:$0xff]
    %v3318 = vld [vmem:[#allocation2 + $0xc0] sm:$0xff]
    %v3319 = vld [vmem:[#allocation2 + $0xc8] sm:$0xff]
    %v3320 = vld [vmem:[#allocation2 + $0xd0] sm:$0xff]
    %v3321 = vld [vmem:[#allocation2 + $0xd8] sm:$0xff]
    %v3322 = vld [vmem:[#allocation2 + $0xe0] sm:$0xff]
    %v3323 = vld [vmem:[#allocation2 + $0xe8] sm:$0xff]
    %v3324 = vld [vmem:[#allocation2 + $0xf0] sm:$0xff]
    %v3325 = vld [vmem:[#allocation2 + $0xf8] sm:$0xff]
    %v3326 = vld [vmem:[#allocation2 + $0x100] sm:$0xff]
    %v3327 = vld [vmem:[#allocation2 + $0x108] sm:$0xff]
    %v3328 = vld [vmem:[#allocation2 + $0x110] sm:$0xff]
    %v3329 = vld [vmem:[#allocation2 + $0x118] sm:$0xff]
    %v3330 = vld [vmem:[#allocation2 + $0x120] sm:$0xff]
    %v3331 = vld [vmem:[#allocation2 + $0x128] sm:$0xff]
    %v3332 = vld [vmem:[#allocation2 + $0x130] sm:$0xff]
    %v3333 = vld [vmem:[#allocation2 + $0x138] sm:$0xff]
    %v3334 = vld [vmem:[#allocation2 + $0x140] sm:$0xff]
    %v3335 = vld [vmem:[#allocation2 + $0x148] sm:$0xff]
    %v3336 = vld [vmem:[#allocation2 + $0x150] sm:$0xff]
    %v3337 = vld [vmem:[#allocation2 + $0x158] sm:$0xff]
    %v3338 = vld [vmem:[#allocation2 + $0x160] sm:$0xff]
    %v3339 = vld [vmem:[#allocation2 + $0x168] sm:$0xff]
    %v3340 = vld [vmem:[#allocation2 + $0x170] sm:$0xff]
    %v3341 = vld [vmem:[#allocation2 + $0x178] sm:$0xff]
    %v3342 = vld [vmem:[#allocation2 + $0x180] sm:$0xff]
    %v3343 = vld [vmem:[#allocation2 + $0x188] sm:$0xff]
    %v3344 = vld [vmem:[#allocation2 + $0x190] sm:$0xff]
    %v3345 = vld [vmem:[#allocation2 + $0x198] sm:$0xff]
    %v3346 = vld [vmem:[#allocation2 + $0x1a0] sm:$0xff]
    %v3347 = vld [vmem:[#allocation2 + $0x1a8] sm:$0xff]
    %v3348 = vld [vmem:[#allocation2 + $0x1b0] sm:$0xff]
    %v3349 = vld [vmem:[#allocation2 + $0x1b8] sm:$0xff]
    %v3350 = vld [vmem:[#allocation2 + $0x1c0] sm:$0xff]
    %v3351 = vld [vmem:[#allocation2 + $0x1c8] sm:$0xff]
    %v3352 = vld [vmem:[#allocation2 + $0x1d0] sm:$0xff]
    %v3353 = vld [vmem:[#allocation2 + $0x1d8] sm:$0xff]
    %v3354 = vld [vmem:[#allocation2 + $0x1e0] sm:$0xff]
    %v3355 = vld [vmem:[#allocation2 + $0x1e8] sm:$0xff]
    %v3356 = vld [vmem:[#allocation2 + $0x1f0] sm:$0xff]
    %v3357 = vld [vmem:[#allocation2 + $0x1f8] sm:$0xff]
    %v3358 = vld [vmem:[#allocation2 + $0x200] sm:$0xff]
    %v3359 = vld [vmem:[#allocation2 + $0x208] sm:$0xff]
    %v3360 = vld [vmem:[#allocation2 + $0x210] sm:$0xff]
    %v3361 = vld [vmem:[#allocation2 + $0x218] sm:$0xff]
    %v3362 = vld [vmem:[#allocation2 + $0x220] sm:$0xff]
    %v3363 = vld [vmem:[#allocation2 + $0x228] sm:$0xff]
    %v3364 = vld [vmem:[#allocation2 + $0x230] sm:$0xff]
    %v3365 = vld [vmem:[#allocation2 + $0x238] sm:$0xff]
    %v3366 = vld [vmem:[#allocation2 + $0x240] sm:$0xff]
    %v3367 = vld [vmem:[#allocation2 + $0x248] sm:$0xff]
    %v3368 = vld [vmem:[#allocation2 + $0x250] sm:$0xff]
    %v3369 = vld [vmem:[#allocation2 + $0x258] sm:$0xff]
    %v3370 = vld [vmem:[#allocation2 + $0x260] sm:$0xff]
    %v3371 = vld [vmem:[#allocation2 + $0x268] sm:$0xff]
    %v3372 = vld [vmem:[#allocation2 + $0x270] sm:$0xff]
    %v3373 = vld [vmem:[#allocation2 + $0x278] sm:$0xff]
    %v3374 = vld [vmem:[#allocation2 + $0x280] sm:$0xff]
    %v3375 = vld [vmem:[#allocation2 + $0x288] sm:$0xff]
    %v3376 = vld [vmem:[#allocation2 + $0x290] sm:$0xff]
    %v3377 = vld [vmem:[#allocation2 + $0x298] sm:$0xff]
    %v3378 = vld [vmem:[#allocation2 + $0x2a0] sm:$0xff]
    %v3379 = vld [vmem:[#allocation2 + $0x2a8] sm:$0xff]
    %v3380 = vld [vmem:[#allocation2 + $0x2b0] sm:$0xff]
    %v3381 = vld [vmem:[#allocation2 + $0x2b8] sm:$0xff]
    %v3382 = vld [vmem:[#allocation2 + $0x2c0] sm:$0x3]
    %v3383 = vld [vmem:[#allocation2 + $0x2c8] sm:$0x3]
    %v3384 = vld [vmem:[#allocation2 + $0x2d0] sm:$0x3]
    %v3385 = vld [vmem:[#allocation2 + $0x2d8] sm:$0x3]
    %s3386 = scalar_lea.vmem [#allocation6], 768
    %v3387 = vld [vmem:[%s3386] sm:$0xff]
    %v3388 = vld [vmem:[%s3386 + $0x8] sm:$0xff]
    %v3389 = vld [vmem:[%s3386 + $0x10] sm:$0xff]
    %v3390 = vld [vmem:[%s3386 + $0x18] sm:$0xff]
    %v3391 = vld [vmem:[%s3386 + $0x20] sm:$0xff]
    %v3392 = vld [vmem:[%s3386 + $0x28] sm:$0xff]
    %v3393 = vld [vmem:[%s3386 + $0x30] sm:$0xff]
    %v3394 = vld [vmem:[%s3386 + $0x38] sm:$0xff]
    %v3395 = vld [vmem:[%s3386 + $0x40] sm:$0xff]
    %v3396 = vld [vmem:[%s3386 + $0x48] sm:$0xff]
    %v3397 = vld [vmem:[%s3386 + $0x50] sm:$0xff]
    %v3398 = vld [vmem:[%s3386 + $0x58] sm:$0xff]
    %v3399 = vld [vmem:[%s3386 + $0x60] sm:$0xff]
    %v3400 = vld [vmem:[%s3386 + $0x68] sm:$0xff]
    %v3401 = vld [vmem:[%s3386 + $0x70] sm:$0xff]
    %v3402 = vld [vmem:[%s3386 + $0x78] sm:$0xff]
    %v3403 = vld [vmem:[%s3386 + $0x80] sm:$0xff]
    %v3404 = vld [vmem:[%s3386 + $0x88] sm:$0xff]
    %v3405 = vld [vmem:[%s3386 + $0x90] sm:$0xff]
    %v3406 = vld [vmem:[%s3386 + $0x98] sm:$0xff]
    %v3407 = vld [vmem:[%s3386 + $0xa0] sm:$0xff]
    %v3408 = vld [vmem:[%s3386 + $0xa8] sm:$0xff]
    %v3409 = vld [vmem:[%s3386 + $0xb0] sm:$0xff]
    %v3410 = vld [vmem:[%s3386 + $0xb8] sm:$0xff]
    %v3411 = vld [vmem:[%s3386 + $0xc0] sm:$0xff]
    %v3412 = vld [vmem:[%s3386 + $0xc8] sm:$0xff]
    %v3413 = vld [vmem:[%s3386 + $0xd0] sm:$0xff]
    %v3414 = vld [vmem:[%s3386 + $0xd8] sm:$0xff]
    %v3415 = vld [vmem:[%s3386 + $0xe0] sm:$0xff]
    %v3416 = vld [vmem:[%s3386 + $0xe8] sm:$0xff]
    %v3417 = vld [vmem:[%s3386 + $0xf0] sm:$0xff]
    %v3418 = vld [vmem:[%s3386 + $0xf8] sm:$0xff]
    %v3420 = vunpack.c.l.b16 %v856
    %v3421 = vpack.c.b16 %v1007, %v1006
    %v3422 = vpack.c.b16 %v1009, %v1008
    %v3423 = vpack.c.b16 %v1011, %v1010
    %v3424 = vpack.c.b16 %v1013, %v1012
    %v3425 = vpack.c.b16 %v1015, %v1014
    %v3426 = vpack.c.b16 %v1017, %v1016
    %v3427 = vpack.c.b16 %v1019, %v1018
    %v3428 = vpack.c.b16 %v1021, %v1020
    %v3429 = vpack.c.b16 %v1023, %v1022
    %v3430 = vpack.c.b16 %v1025, %v1024
    %v3431 = vpack.c.b16 %v1027, %v1026
    %v3432 = vpack.c.b16 %v3420, %v3420
    %v3433 = vrot.slane %v3421, 1
    %v3434 = vrot.slane %v3422, 1
    %v3435 = vsel %vm2642, %v3433, %v3434
    %v3436 = vrot.slane %v3423, 1
    %v3437 = vsel %vm2642, %v3434, %v3436
    %v3438 = vrot.slane %v3424, 1
    %v3439 = vsel %vm2642, %v3436, %v3438
    %v3440 = vrot.slane %v3425, 1
    %v3441 = vsel %vm2642, %v3438, %v3440
    %v3442 = vrot.slane %v3426, 1
    %v3443 = vsel %vm2642, %v3440, %v3442
    %v3444 = vrot.slane %v3427, 1
    %v3445 = vsel %vm2642, %v3442, %v3444
    %v3446 = vrot.slane %v3428, 1
    %v3447 = vsel %vm2642, %v3444, %v3446
    %v3448 = vrot.slane %v3429, 1
    %v3449 = vsel %vm2642, %v3446, %v3448
    %v3450 = vrot.slane %v3430, 1
    %v3451 = vsel %vm2642, %v3448, %v3450
    %v3452 = vrot.slane %v3431, 1
    %v3453 = vsel %vm2642, %v3450, %v3452
    %v3454 = vrot.slane %v3432, 1
    %v3455 = vsel %vm2642, %v3452, %v3454
    %v3500 = vunpack.c.l.b16 %v3387
    %v3501 = vunpack.c.h.b16 %v3387
    %v3502 = vunpack.c.l.b16 %v3388
    %v3503 = vunpack.c.h.b16 %v3388
    %v3504 = vunpack.c.l.b16 %v3389
    %v3505 = vunpack.c.h.b16 %v3389
    %v3506 = vunpack.c.l.b16 %v3390
    %v3507 = vunpack.c.h.b16 %v3390
    %v3508 = vunpack.c.l.b16 %v3391
    %v3509 = vunpack.c.h.b16 %v3391
    %v3510 = vunpack.c.l.b16 %v3392
    %v3511 = vunpack.c.h.b16 %v3392
    %v3512 = vunpack.c.l.b16 %v3393
    %v3513 = vunpack.c.h.b16 %v3393
    %v3514 = vunpack.c.l.b16 %v3394
    %v3515 = vunpack.c.h.b16 %v3394
    %v3516 = vunpack.c.l.b16 %v3395
    %v3517 = vunpack.c.h.b16 %v3395
    %v3518 = vunpack.c.l.b16 %v3396
    %v3519 = vunpack.c.h.b16 %v3396
    %v3520 = vunpack.c.l.b16 %v3397
    %v3521 = vunpack.c.h.b16 %v3397
    %v3522 = vunpack.c.l.b16 %v3398
    %v3523 = vunpack.c.h.b16 %v3398
    %v3524 = vunpack.c.l.b16 %v3399
    %v3525 = vunpack.c.h.b16 %v3399
    %v3526 = vunpack.c.l.b16 %v3400
    %v3527 = vunpack.c.h.b16 %v3400
    %v3528 = vunpack.c.l.b16 %v3401
    %v3529 = vunpack.c.h.b16 %v3401
    %v3530 = vunpack.c.l.b16 %v3402
    %v3531 = vunpack.c.h.b16 %v3402
    %v3532 = vunpack.c.l.b16 %v3403
    %v3533 = vunpack.c.h.b16 %v3403
    %v3534 = vunpack.c.l.b16 %v3404
    %v3535 = vunpack.c.h.b16 %v3404
    %v3536 = vunpack.c.l.b16 %v3405
    %v3537 = vunpack.c.h.b16 %v3405
    %v3538 = vunpack.c.l.b16 %v3406
    %v3539 = vunpack.c.h.b16 %v3406
    %v3540 = vunpack.c.l.b16 %v3407
    %v3541 = vunpack.c.h.b16 %v3407
    %v3542 = vunpack.c.l.b16 %v3408
    %v3543 = vunpack.c.h.b16 %v3408
    %v3544 = vunpack.c.l.b16 %v3409
    %v3545 = vunpack.c.h.b16 %v3409
    %v3546 = vunpack.c.l.b16 %v3410
    %v3547 = vunpack.c.h.b16 %v3410
    %v3548 = vunpack.c.l.b16 %v3411
    %v3549 = vunpack.c.h.b16 %v3411
    %v3550 = vunpack.c.l.b16 %v3412
    %v3551 = vunpack.c.h.b16 %v3412
    %v3552 = vunpack.c.l.b16 %v3413
    %v3553 = vunpack.c.h.b16 %v3413
    %v3554 = vunpack.c.l.b16 %v3414
    %v3555 = vunpack.c.h.b16 %v3414
    %v3556 = vunpack.c.l.b16 %v3415
    %v3557 = vunpack.c.h.b16 %v3415
    %v3558 = vunpack.c.l.b16 %v3416
    %v3559 = vunpack.c.h.b16 %v3416
    %v3560 = vunpack.c.l.b16 %v3417
    %v3561 = vunpack.c.h.b16 %v3417
    %v3562 = vunpack.c.l.b16 %v3418
    %v3563 = vunpack.c.h.b16 %v3418
    %v3564 = vpack.c.b16 %v3504, %v3500
    %v3565 = vpack.c.b16 %v3505, %v3501
    %v3566 = vpack.c.b16 %v3506, %v3502
    %v3567 = vpack.c.b16 %v3507, %v3503
    %v3568 = vpack.c.b16 %v3512, %v3508
    %v3569 = vpack.c.b16 %v3513, %v3509
    %v3570 = vpack.c.b16 %v3514, %v3510
    %v3571 = vpack.c.b16 %v3515, %v3511
    %v3572 = vpack.c.b16 %v3520, %v3516
    %v3573 = vpack.c.b16 %v3521, %v3517
    %v3574 = vpack.c.b16 %v3522, %v3518
    %v3575 = vpack.c.b16 %v3523, %v3519
    %v3576 = vpack.c.b16 %v3528, %v3524
    %v3577 = vpack.c.b16 %v3529, %v3525
    %v3578 = vpack.c.b16 %v3530, %v3526
    %v3579 = vpack.c.b16 %v3531, %v3527
    %v3580 = vpack.c.b16 %v3536, %v3532
    %v3581 = vpack.c.b16 %v3537, %v3533
    %v3582 = vpack.c.b16 %v3538, %v3534
    %v3583 = vpack.c.b16 %v3539, %v3535
    %v3584 = vpack.c.b16 %v3544, %v3540
    %v3585 = vpack.c.b16 %v3545, %v3541
    %v3586 = vpack.c.b16 %v3546, %v3542
    %v3587 = vpack.c.b16 %v3547, %v3543
    %v3588 = vpack.c.b16 %v3552, %v3548
    %v3589 = vpack.c.b16 %v3553, %v3549
    %v3590 = vpack.c.b16 %v3554, %v3550
    %v3591 = vpack.c.b16 %v3555, %v3551
    %v3592 = vpack.c.b16 %v3560, %v3556
    %v3593 = vpack.c.b16 %v3561, %v3557
    %v3594 = vpack.c.b16 %v3562, %v3558
    %v3595 = vpack.c.b16 %v3563, %v3559
    %3628 = vmatpush.bf16.msra.mxu0 %v3592
    %3629 = vmatpush.bf16.msra.mxu0 %v3588
    %3630 = vmatpush.bf16.msra.mxu0 %v3584
    %3631 = vmatpush.bf16.msra.mxu0 %v3580
    %3632 = vmatpush.bf16.msra.mxu0 %v3576
    %3633 = vmatpush.bf16.msra.mxu0 %v3572
    %3634 = vmatpush.bf16.msra.mxu0 %v3568
    %3635 = vmatpush.bf16.msra.mxu0 %v3564
    %3636 = vmatmul.bf16.gmra.mxu0 %v3435
    %v3637 = vpop.f32.mrf.mxu0
    %v3638 = vadd.f32 0.0, %v3637
    %v3639 = vpop.f32.mrf.mxu0
    %v3640 = vadd.f32 0.0, %v3639
    %3641 = vmatmul.bf16.gmra.mxu0 %v3437
    %v3642 = vpop.f32.mrf.mxu0
    %v3643 = vadd.f32 0.0, %v3642
    %v3644 = vpop.f32.mrf.mxu0
    %v3645 = vadd.f32 0.0, %v3644
    %3646 = vmatmul.bf16.gmra.mxu0 %v3439
    %v3647 = vpop.f32.mrf.mxu0
    %v3648 = vadd.f32 0.0, %v3647
    %v3649 = vpop.f32.mrf.mxu0
    %v3650 = vadd.f32 0.0, %v3649
    %3651 = vmatmul.bf16.gmra.mxu0 %v3441
    %v3652 = vpop.f32.mrf.mxu0
    %v3653 = vadd.f32 0.0, %v3652
    %v3654 = vpop.f32.mrf.mxu0
    %v3655 = vadd.f32 0.0, %v3654
    %3656 = vmatmul.bf16.gmra.mxu0 %v3443
    %v3657 = vpop.f32.mrf.mxu0
    %v3658 = vadd.f32 0.0, %v3657
    %v3659 = vpop.f32.mrf.mxu0
    %v3660 = vadd.f32 0.0, %v3659
    %3661 = vmatmul.bf16.gmra.mxu0 %v3445
    %v3662 = vpop.f32.mrf.mxu0
    %v3663 = vadd.f32 0.0, %v3662
    %v3664 = vpop.f32.mrf.mxu0
    %v3665 = vadd.f32 0.0, %v3664
    %3666 = vmatmul.bf16.gmra.mxu0 %v3447
    %v3667 = vpop.f32.mrf.mxu0
    %v3668 = vadd.f32 0.0, %v3667
    %v3669 = vpop.f32.mrf.mxu0
    %v3670 = vadd.f32 0.0, %v3669
    %3671 = vmatmul.bf16.gmra.mxu0 %v3449
    %v3672 = vpop.f32.mrf.mxu0
    %v3673 = vadd.f32 0.0, %v3672
    %v3674 = vpop.f32.mrf.mxu0
    %v3675 = vadd.f32 0.0, %v3674
    %3676 = vmatmul.bf16.gmra.mxu0 %v3451
    %v3677 = vpop.f32.mrf.mxu0
    %v3678 = vadd.f32 0.0, %v3677
    %v3679 = vpop.f32.mrf.mxu0
    %v3680 = vadd.f32 0.0, %v3679
    %3681 = vmatmul.bf16.gmra.mxu0 %v3453
    %v3682 = vpop.f32.mrf.mxu0
    %v3683 = vadd.f32 0.0, %v3682
    %v3684 = vpop.f32.mrf.mxu0
    %v3685 = vadd.f32 0.0, %v3684
    %3686 = vmatmul.bf16.gmra.mxu0 %v3455
    %v3687 = vpop.f32.mrf.mxu0
    %v3688 = vadd.f32 0.0, %v3687
    %v3689 = vpop.f32.mrf.mxu0
    %v3690 = vadd.f32 0.0, %v3689
    %3691 = vmatmul.bf16.gmra.mxu0 %v3454
    %v3692 = vpop.f32.mrf.mxu0
    %v3693 = vadd.f32 0.0, %v3692
    %v3694 = vpop.f32.mrf.mxu0
    %3695 = vdwg.mxu0
    %3696 = vmatpush.bf16.msra.mxu0 %v3593
    %3697 = vmatpush.bf16.msra.mxu0 %v3589
    %3698 = vmatpush.bf16.msra.mxu0 %v3585
    %3699 = vmatpush.bf16.msra.mxu0 %v3581
    %3700 = vmatpush.bf16.msra.mxu0 %v3577
    %3701 = vmatpush.bf16.msra.mxu0 %v3573
    %3702 = vmatpush.bf16.msra.mxu0 %v3569
    %3703 = vmatpush.bf16.msra.mxu0 %v3565
    %3704 = vmatmul.bf16.gmra.mxu0 %v3435
    %v3705 = vpop.f32.mrf.mxu0
    %v3706 = vadd.f32 0.0, %v3705
    %v3707 = vpop.f32.mrf.mxu0
    %v3708 = vadd.f32 0.0, %v3707
    %3709 = vmatmul.bf16.gmra.mxu0 %v3437
    %v3710 = vpop.f32.mrf.mxu0
    %v3711 = vadd.f32 0.0, %v3710
    %v3712 = vpop.f32.mrf.mxu0
    %v3713 = vadd.f32 0.0, %v3712
    %3714 = vmatmul.bf16.gmra.mxu0 %v3439
    %v3715 = vpop.f32.mrf.mxu0
    %v3716 = vadd.f32 0.0, %v3715
    %v3717 = vpop.f32.mrf.mxu0
    %v3718 = vadd.f32 0.0, %v3717
    %3719 = vmatmul.bf16.gmra.mxu0 %v3441
    %v3720 = vpop.f32.mrf.mxu0
    %v3721 = vadd.f32 0.0, %v3720
    %v3722 = vpop.f32.mrf.mxu0
    %v3723 = vadd.f32 0.0, %v3722
    %3724 = vmatmul.bf16.gmra.mxu0 %v3443
    %v3725 = vpop.f32.mrf.mxu0
    %v3726 = vadd.f32 0.0, %v3725
    %v3727 = vpop.f32.mrf.mxu0
    %v3728 = vadd.f32 0.0, %v3727
    %3729 = vmatmul.bf16.gmra.mxu0 %v3445
    %v3730 = vpop.f32.mrf.mxu0
    %v3731 = vadd.f32 0.0, %v3730
    %v3732 = vpop.f32.mrf.mxu0
    %v3733 = vadd.f32 0.0, %v3732
    %3734 = vmatmul.bf16.gmra.mxu0 %v3447
    %v3735 = vpop.f32.mrf.mxu0
    %v3736 = vadd.f32 0.0, %v3735
    %v3737 = vpop.f32.mrf.mxu0
    %v3738 = vadd.f32 0.0, %v3737
    %3739 = vmatmul.bf16.gmra.mxu0 %v3449
    %v3740 = vpop.f32.mrf.mxu0
    %v3741 = vadd.f32 0.0, %v3740
    %v3742 = vpop.f32.mrf.mxu0
    %v3743 = vadd.f32 0.0, %v3742
    %3744 = vmatmul.bf16.gmra.mxu0 %v3451
    %v3745 = vpop.f32.mrf.mxu0
    %v3746 = vadd.f32 0.0, %v3745
    %v3747 = vpop.f32.mrf.mxu0
    %v3748 = vadd.f32 0.0, %v3747
    %3749 = vmatmul.bf16.gmra.mxu0 %v3453
    %v3750 = vpop.f32.mrf.mxu0
    %v3751 = vadd.f32 0.0, %v3750
    %v3752 = vpop.f32.mrf.mxu0
    %v3753 = vadd.f32 0.0, %v3752
    %3754 = vmatmul.bf16.gmra.mxu0 %v3455
    %v3755 = vpop.f32.mrf.mxu0
    %v3756 = vadd.f32 0.0, %v3755
    %v3757 = vpop.f32.mrf.mxu0
    %v3758 = vadd.f32 0.0, %v3757
    %3759 = vmatmul.bf16.gmra.mxu0 %v3454
    %v3760 = vpop.f32.mrf.mxu0
    %v3761 = vadd.f32 0.0, %v3760
    %v3762 = vpop.f32.mrf.mxu0
    %3763 = vdwg.mxu0
    %3764 = vmatpush.bf16.msra.mxu0 %v3594
    %3765 = vmatpush.bf16.msra.mxu0 %v3590
    %3766 = vmatpush.bf16.msra.mxu0 %v3586
    %3767 = vmatpush.bf16.msra.mxu0 %v3582
    %3768 = vmatpush.bf16.msra.mxu0 %v3578
    %3769 = vmatpush.bf16.msra.mxu0 %v3574
    %3770 = vmatpush.bf16.msra.mxu0 %v3570
    %3771 = vmatpush.bf16.msra.mxu0 %v3566
    %3772 = vmatmul.bf16.gmra.mxu0 %v3435
    %v3773 = vpop.f32.mrf.mxu0
    %v3774 = vadd.f32 0.0, %v3773
    %v3775 = vpop.f32.mrf.mxu0
    %v3776 = vadd.f32 0.0, %v3775
    %3777 = vmatmul.bf16.gmra.mxu0 %v3437
    %v3778 = vpop.f32.mrf.mxu0
    %v3779 = vadd.f32 0.0, %v3778
    %v3780 = vpop.f32.mrf.mxu0
    %v3781 = vadd.f32 0.0, %v3780
    %3782 = vmatmul.bf16.gmra.mxu0 %v3439
    %v3783 = vpop.f32.mrf.mxu0
    %v3784 = vadd.f32 0.0, %v3783
    %v3785 = vpop.f32.mrf.mxu0
    %v3786 = vadd.f32 0.0, %v3785
    %3787 = vmatmul.bf16.gmra.mxu0 %v3441
    %v3788 = vpop.f32.mrf.mxu0
    %v3789 = vadd.f32 0.0, %v3788
    %v3790 = vpop.f32.mrf.mxu0
    %v3791 = vadd.f32 0.0, %v3790
    %3792 = vmatmul.bf16.gmra.mxu0 %v3443
    %v3793 = vpop.f32.mrf.mxu0
    %v3794 = vadd.f32 0.0, %v3793
    %v3795 = vpop.f32.mrf.mxu0
    %v3796 = vadd.f32 0.0, %v3795
    %3797 = vmatmul.bf16.gmra.mxu0 %v3445
    %v3798 = vpop.f32.mrf.mxu0
    %v3799 = vadd.f32 0.0, %v3798
    %v3800 = vpop.f32.mrf.mxu0
    %v3801 = vadd.f32 0.0, %v3800
    %3802 = vmatmul.bf16.gmra.mxu0 %v3447
    %v3803 = vpop.f32.mrf.mxu0
    %v3804 = vadd.f32 0.0, %v3803
    %v3805 = vpop.f32.mrf.mxu0
    %v3806 = vadd.f32 0.0, %v3805
    %3807 = vmatmul.bf16.gmra.mxu0 %v3449
    %v3808 = vpop.f32.mrf.mxu0
    %v3809 = vadd.f32 0.0, %v3808
    %v3810 = vpop.f32.mrf.mxu0
    %v3811 = vadd.f32 0.0, %v3810
    %3812 = vmatmul.bf16.gmra.mxu0 %v3451
    %v3813 = vpop.f32.mrf.mxu0
    %v3814 = vadd.f32 0.0, %v3813
    %v3815 = vpop.f32.mrf.mxu0
    %v3816 = vadd.f32 0.0, %v3815
    %3817 = vmatmul.bf16.gmra.mxu0 %v3453
    %v3818 = vpop.f32.mrf.mxu0
    %v3819 = vadd.f32 0.0, %v3818
    %v3820 = vpop.f32.mrf.mxu0
    %v3821 = vadd.f32 0.0, %v3820
    %3822 = vmatmul.bf16.gmra.mxu0 %v3455
    %v3823 = vpop.f32.mrf.mxu0
    %v3824 = vadd.f32 0.0, %v3823
    %v3825 = vpop.f32.mrf.mxu0
    %v3826 = vadd.f32 0.0, %v3825
    %3827 = vmatmul.bf16.gmra.mxu0 %v3454
    %v3828 = vpop.f32.mrf.mxu0
    %v3829 = vadd.f32 0.0, %v3828
    %v3830 = vpop.f32.mrf.mxu0
    %3831 = vdwg.mxu0
    %3832 = vmatpush.bf16.msra.mxu0 %v3595
    %3833 = vmatpush.bf16.msra.mxu0 %v3591
    %3834 = vmatpush.bf16.msra.mxu0 %v3587
    %3835 = vmatpush.bf16.msra.mxu0 %v3583
    %3836 = vmatpush.bf16.msra.mxu0 %v3579
    %3837 = vmatpush.bf16.msra.mxu0 %v3575
    %3838 = vmatpush.bf16.msra.mxu0 %v3571
    %3839 = vmatpush.bf16.msra.mxu0 %v3567
    %3840 = vmatmul.bf16.gmra.mxu0 %v3435
    %v3841 = vpop.f32.mrf.mxu0
    %v3842 = vadd.f32 0.0, %v3841
    %v3843 = vpop.f32.mrf.mxu0
    %v3844 = vadd.f32 0.0, %v3843
    %3845 = vmatmul.bf16.gmra.mxu0 %v3437
    %v3846 = vpop.f32.mrf.mxu0
    %v3847 = vadd.f32 0.0, %v3846
    %v3848 = vpop.f32.mrf.mxu0
    %v3849 = vadd.f32 0.0, %v3848
    %3850 = vmatmul.bf16.gmra.mxu0 %v3439
    %v3851 = vpop.f32.mrf.mxu0
    %v3852 = vadd.f32 0.0, %v3851
    %v3853 = vpop.f32.mrf.mxu0
    %v3854 = vadd.f32 0.0, %v3853
    %3855 = vmatmul.bf16.gmra.mxu0 %v3441
    %v3856 = vpop.f32.mrf.mxu0
    %v3857 = vadd.f32 0.0, %v3856
    %v3858 = vpop.f32.mrf.mxu0
    %v3859 = vadd.f32 0.0, %v3858
    %3860 = vmatmul.bf16.gmra.mxu0 %v3443
    %v3861 = vpop.f32.mrf.mxu0
    %v3862 = vadd.f32 0.0, %v3861
    %v3863 = vpop.f32.mrf.mxu0
    %v3864 = vadd.f32 0.0, %v3863
    %3865 = vmatmul.bf16.gmra.mxu0 %v3445
    %v3866 = vpop.f32.mrf.mxu0
    %v3867 = vadd.f32 0.0, %v3866
    %v3868 = vpop.f32.mrf.mxu0
    %v3869 = vadd.f32 0.0, %v3868
    %3870 = vmatmul.bf16.gmra.mxu0 %v3447
    %v3871 = vpop.f32.mrf.mxu0
    %v3872 = vadd.f32 0.0, %v3871
    %v3873 = vpop.f32.mrf.mxu0
    %v3874 = vadd.f32 0.0, %v3873
    %3875 = vmatmul.bf16.gmra.mxu0 %v3449
    %v3876 = vpop.f32.mrf.mxu0
    %v3877 = vadd.f32 0.0, %v3876
    %v3878 = vpop.f32.mrf.mxu0
    %v3879 = vadd.f32 0.0, %v3878
    %3880 = vmatmul.bf16.gmra.mxu0 %v3451
    %v3881 = vpop.f32.mrf.mxu0
    %v3882 = vadd.f32 0.0, %v3881
    %v3883 = vpop.f32.mrf.mxu0
    %v3884 = vadd.f32 0.0, %v3883
    %3885 = vmatmul.bf16.gmra.mxu0 %v3453
    %v3886 = vpop.f32.mrf.mxu0
    %v3887 = vadd.f32 0.0, %v3886
    %v3888 = vpop.f32.mrf.mxu0
    %v3889 = vadd.f32 0.0, %v3888
    %3890 = vmatmul.bf16.gmra.mxu0 %v3455
    %v3891 = vpop.f32.mrf.mxu0
    %v3892 = vadd.f32 0.0, %v3891
    %v3893 = vpop.f32.mrf.mxu0
    %v3894 = vadd.f32 0.0, %v3893
    %3895 = vmatmul.bf16.gmra.mxu0 %v3454
    %v3896 = vpop.f32.mrf.mxu0
    %v3897 = vadd.f32 0.0, %v3896
    %v3898 = vpop.f32.mrf.mxu0
    %3899 = vdwg.mxu0
    %v3900 = vadd.f32 %v3294, %v3638
    %v3901 = vadd.f32 %v3295, %v3706
    %v3902 = vadd.f32 %v3296, %v3774
    %v3903 = vadd.f32 %v3297, %v3842
    %v3904 = vadd.f32 %v3298, %v3640
    %v3905 = vadd.f32 %v3299, %v3708
    %v3906 = vadd.f32 %v3300, %v3776
    %v3907 = vadd.f32 %v3301, %v3844
    %v3908 = vadd.f32 %v3302, %v3643
    %v3909 = vadd.f32 %v3303, %v3711
    %v3910 = vadd.f32 %v3304, %v3779
    %v3911 = vadd.f32 %v3305, %v3847
    %v3912 = vadd.f32 %v3306, %v3645
    %v3913 = vadd.f32 %v3307, %v3713
    %v3914 = vadd.f32 %v3308, %v3781
    %v3915 = vadd.f32 %v3309, %v3849
    %v3916 = vadd.f32 %v3310, %v3648
    %v3917 = vadd.f32 %v3311, %v3716
    %v3918 = vadd.f32 %v3312, %v3784
    %v3919 = vadd.f32 %v3313, %v3852
    %v3920 = vadd.f32 %v3314, %v3650
    %v3921 = vadd.f32 %v3315, %v3718
    %v3922 = vadd.f32 %v3316, %v3786
    %v3923 = vadd.f32 %v3317, %v3854
    %v3924 = vadd.f32 %v3318, %v3653
    %v3925 = vadd.f32 %v3319, %v3721
    %v3926 = vadd.f32 %v3320, %v3789
    %v3927 = vadd.f32 %v3321, %v3857
    %v3928 = vadd.f32 %v3322, %v3655
    %v3929 = vadd.f32 %v3323, %v3723
    %v3930 = vadd.f32 %v3324, %v3791
    %v3931 = vadd.f32 %v3325, %v3859
    %v3932 = vadd.f32 %v3326, %v3658
    %v3933 = vadd.f32 %v3327, %v3726
    %v3934 = vadd.f32 %v3328, %v3794
    %v3935 = vadd.f32 %v3329, %v3862
    %v3936 = vadd.f32 %v3330, %v3660
    %v3937 = vadd.f32 %v3331, %v3728
    %v3938 = vadd.f32 %v3332, %v3796
    %v3939 = vadd.f32 %v3333, %v3864
    %v3940 = vadd.f32 %v3334, %v3663
    %v3941 = vadd.f32 %v3335, %v3731
    %v3942 = vadd.f32 %v3336, %v3799
    %v3943 = vadd.f32 %v3337, %v3867
    %v3944 = vadd.f32 %v3338, %v3665
    %v3945 = vadd.f32 %v3339, %v3733
    %v3946 = vadd.f32 %v3340, %v3801
    %v3947 = vadd.f32 %v3341, %v3869
    %v3948 = vadd.f32 %v3342, %v3668
    %v3949 = vadd.f32 %v3343, %v3736
    %v3950 = vadd.f32 %v3344, %v3804
    %v3951 = vadd.f32 %v3345, %v3872
    %v3952 = vadd.f32 %v3346, %v3670
    %v3953 = vadd.f32 %v3347, %v3738
    %v3954 = vadd.f32 %v3348, %v3806
    %v3955 = vadd.f32 %v3349, %v3874
    %v3956 = vadd.f32 %v3350, %v3673
    %v3957 = vadd.f32 %v3351, %v3741
    %v3958 = vadd.f32 %v3352, %v3809
    %v3959 = vadd.f32 %v3353, %v3877
    %v3960 = vadd.f32 %v3354, %v3675
    %v3961 = vadd.f32 %v3355, %v3743
    %v3962 = vadd.f32 %v3356, %v3811
    %v3963 = vadd.f32 %v3357, %v3879
    %v3964 = vadd.f32 %v3358, %v3678
    %v3965 = vadd.f32 %v3359, %v3746
    %v3966 = vadd.f32 %v3360, %v3814
    %v3967 = vadd.f32 %v3361, %v3882
    %v3968 = vadd.f32 %v3362, %v3680
    %v3969 = vadd.f32 %v3363, %v3748
    %v3970 = vadd.f32 %v3364, %v3816
    %v3971 = vadd.f32 %v3365, %v3884
    %v3972 = vadd.f32 %v3366, %v3683
    %v3973 = vadd.f32 %v3367, %v3751
    %v3974 = vadd.f32 %v3368, %v3819
    %v3975 = vadd.f32 %v3369, %v3887
    %v3976 = vadd.f32 %v3370, %v3685
    %v3977 = vadd.f32 %v3371, %v3753
    %v3978 = vadd.f32 %v3372, %v3821
    %v3979 = vadd.f32 %v3373, %v3889
    %v3980 = vadd.f32 %v3374, %v3688
    %v3981 = vadd.f32 %v3375, %v3756
    %v3982 = vadd.f32 %v3376, %v3824
    %v3983 = vadd.f32 %v3377, %v3892
    %v3984 = vadd.f32 %v3378, %v3690
    %v3985 = vadd.f32 %v3379, %v3758
    %v3986 = vadd.f32 %v3380, %v3826
    %v3987 = vadd.f32 %v3381, %v3894
    %v3988 = vadd.f32 %v3382, %v3693
    %v3989 = vadd.f32 %v3383, %v3761
    %v3990 = vadd.f32 %v3384, %v3829
    %v3991 = vadd.f32 %v3385, %v3897
    %3992 = vst [vmem:[#allocation2] sm:$0xff] %v3900
    %3993 = vst [vmem:[#allocation2 + $0x8] sm:$0xff] %v3901
    %3994 = vst [vmem:[#allocation2 + $0x10] sm:$0xff] %v3902
    %3995 = vst [vmem:[#allocation2 + $0x18] sm:$0xff] %v3903
    %3996 = vst [vmem:[#allocation2 + $0x20] sm:$0xff] %v3904
    %3997 = vst [vmem:[#allocation2 + $0x28] sm:$0xff] %v3905
    %3998 = vst [vmem:[#allocation2 + $0x30] sm:$0xff] %v3906
    %3999 = vst [vmem:[#allocation2 + $0x38] sm:$0xff] %v3907
    %4000 = vst [vmem:[#allocation2 + $0x40] sm:$0xff] %v3908
    %4001 = vst [vmem:[#allocation2 + $0x48] sm:$0xff] %v3909
    %4002 = vst [vmem:[#allocation2 + $0x50] sm:$0xff] %v3910
    %4003 = vst [vmem:[#allocation2 + $0x58] sm:$0xff] %v3911
    %4004 = vst [vmem:[#allocation2 + $0x60] sm:$0xff] %v3912
    %4005 = vst [vmem:[#allocation2 + $0x68] sm:$0xff] %v3913
    %4006 = vst [vmem:[#allocation2 + $0x70] sm:$0xff] %v3914
    %4007 = vst [vmem:[#allocation2 + $0x78] sm:$0xff] %v3915
    %4008 = vst [vmem:[#allocation2 + $0x80] sm:$0xff] %v3916
    %4009 = vst [vmem:[#allocation2 + $0x88] sm:$0xff] %v3917
    %4010 = vst [vmem:[#allocation2 + $0x90] sm:$0xff] %v3918
    %4011 = vst [vmem:[#allocation2 + $0x98] sm:$0xff] %v3919
    %4012 = vst [vmem:[#allocation2 + $0xa0] sm:$0xff] %v3920
    %4013 = vst [vmem:[#allocation2 + $0xa8] sm:$0xff] %v3921
    %4014 = vst [vmem:[#allocation2 + $0xb0] sm:$0xff] %v3922
    %4015 = vst [vmem:[#allocation2 + $0xb8] sm:$0xff] %v3923
    %4016 = vst [vmem:[#allocation2 + $0xc0] sm:$0xff] %v3924
    %4017 = vst [vmem:[#allocation2 + $0xc8] sm:$0xff] %v3925
    %4018 = vst [vmem:[#allocation2 + $0xd0] sm:$0xff] %v3926
    %4019 = vst [vmem:[#allocation2 + $0xd8] sm:$0xff] %v3927
    %4020 = vst [vmem:[#allocation2 + $0xe0] sm:$0xff] %v3928
    %4021 = vst [vmem:[#allocation2 + $0xe8] sm:$0xff] %v3929
    %4022 = vst [vmem:[#allocation2 + $0xf0] sm:$0xff] %v3930
    %4023 = vst [vmem:[#allocation2 + $0xf8] sm:$0xff] %v3931
    %4024 = vst [vmem:[#allocation2 + $0x100] sm:$0xff] %v3932
    %4025 = vst [vmem:[#allocation2 + $0x108] sm:$0xff] %v3933
    %4026 = vst [vmem:[#allocation2 + $0x110] sm:$0xff] %v3934
    %4027 = vst [vmem:[#allocation2 + $0x118] sm:$0xff] %v3935
    %4028 = vst [vmem:[#allocation2 + $0x120] sm:$0xff] %v3936
    %4029 = vst [vmem:[#allocation2 + $0x128] sm:$0xff] %v3937
    %4030 = vst [vmem:[#allocation2 + $0x130] sm:$0xff] %v3938
    %4031 = vst [vmem:[#allocation2 + $0x138] sm:$0xff] %v3939
    %4032 = vst [vmem:[#allocation2 + $0x140] sm:$0xff] %v3940
    %4033 = vst [vmem:[#allocation2 + $0x148] sm:$0xff] %v3941
    %4034 = vst [vmem:[#allocation2 + $0x150] sm:$0xff] %v3942
    %4035 = vst [vmem:[#allocation2 + $0x158] sm:$0xff] %v3943
    %4036 = vst [vmem:[#allocation2 + $0x160] sm:$0xff] %v3944
    %4037 = vst [vmem:[#allocation2 + $0x168] sm:$0xff] %v3945
    %4038 = vst [vmem:[#allocation2 + $0x170] sm:$0xff] %v3946
    %4039 = vst [vmem:[#allocation2 + $0x178] sm:$0xff] %v3947
    %4040 = vst [vmem:[#allocation2 + $0x180] sm:$0xff] %v3948
    %4041 = vst [vmem:[#allocation2 + $0x188] sm:$0xff] %v3949
    %4042 = vst [vmem:[#allocation2 + $0x190] sm:$0xff] %v3950
    %4043 = vst [vmem:[#allocation2 + $0x198] sm:$0xff] %v3951
    %4044 = vst [vmem:[#allocation2 + $0x1a0] sm:$0xff] %v3952
    %4045 = vst [vmem:[#allocation2 + $0x1a8] sm:$0xff] %v3953
    %4046 = vst [vmem:[#allocation2 + $0x1b0] sm:$0xff] %v3954
    %4047 = vst [vmem:[#allocation2 + $0x1b8] sm:$0xff] %v3955
    %4048 = vst [vmem:[#allocation2 + $0x1c0] sm:$0xff] %v3956
    %4049 = vst [vmem:[#allocation2 + $0x1c8] sm:$0xff] %v3957
    %4050 = vst [vmem:[#allocation2 + $0x1d0] sm:$0xff] %v3958
    %4051 = vst [vmem:[#allocation2 + $0x1d8] sm:$0xff] %v3959
    %4052 = vst [vmem:[#allocation2 + $0x1e0] sm:$0xff] %v3960
    %4053 = vst [vmem:[#allocation2 + $0x1e8] sm:$0xff] %v3961
    %4054 = vst [vmem:[#allocation2 + $0x1f0] sm:$0xff] %v3962
    %4055 = vst [vmem:[#allocation2 + $0x1f8] sm:$0xff] %v3963
    %4056 = vst [vmem:[#allocation2 + $0x200] sm:$0xff] %v3964
    %4057 = vst [vmem:[#allocation2 + $0x208] sm:$0xff] %v3965
    %4058 = vst [vmem:[#allocation2 + $0x210] sm:$0xff] %v3966
    %4059 = vst [vmem:[#allocation2 + $0x218] sm:$0xff] %v3967
    %4060 = vst [vmem:[#allocation2 + $0x220] sm:$0xff] %v3968
    %4061 = vst [vmem:[#allocation2 + $0x228] sm:$0xff] %v3969
    %4062 = vst [vmem:[#allocation2 + $0x230] sm:$0xff] %v3970
    %4063 = vst [vmem:[#allocation2 + $0x238] sm:$0xff] %v3971
    %4064 = vst [vmem:[#allocation2 + $0x240] sm:$0xff] %v3972
    %4065 = vst [vmem:[#allocation2 + $0x248] sm:$0xff] %v3973
    %4066 = vst [vmem:[#allocation2 + $0x250] sm:$0xff] %v3974
    %4067 = vst [vmem:[#allocation2 + $0x258] sm:$0xff] %v3975
    %4068 = vst [vmem:[#allocation2 + $0x260] sm:$0xff] %v3976
    %4069 = vst [vmem:[#allocation2 + $0x268] sm:$0xff] %v3977
    %4070 = vst [vmem:[#allocation2 + $0x270] sm:$0xff] %v3978
    %4071 = vst [vmem:[#allocation2 + $0x278] sm:$0xff] %v3979
    %4072 = vst [vmem:[#allocation2 + $0x280] sm:$0xff] %v3980
    %4073 = vst [vmem:[#allocation2 + $0x288] sm:$0xff] %v3981
    %4074 = vst [vmem:[#allocation2 + $0x290] sm:$0xff] %v3982
    %4075 = vst [vmem:[#allocation2 + $0x298] sm:$0xff] %v3983
    %4076 = vst [vmem:[#allocation2 + $0x2a0] sm:$0xff] %v3984
    %4077 = vst [vmem:[#allocation2 + $0x2a8] sm:$0xff] %v3985
    %4078 = vst [vmem:[#allocation2 + $0x2b0] sm:$0xff] %v3986
    %4079 = vst [vmem:[#allocation2 + $0x2b8] sm:$0xff] %v3987
    %4080 = vst [vmem:[#allocation2 + $0x2c0] sm:$0x3] %v3988
    %4081 = vst [vmem:[#allocation2 + $0x2c8] sm:$0x3] %v3989
    %4082 = vst [vmem:[#allocation2 + $0x2d0] sm:$0x3] %v3990
    %4083 = vst [vmem:[#allocation2 + $0x2d8] sm:$0x3] %v3991
    %v4084 = vld [vmem:[#allocation2] sm:$0xff]
    %v4085 = vld [vmem:[#allocation2 + $0x8] sm:$0xff]
    %v4086 = vld [vmem:[#allocation2 + $0x10] sm:$0xff]
    %v4087 = vld [vmem:[#allocation2 + $0x18] sm:$0xff]
    %v4088 = vld [vmem:[#allocation2 + $0x20] sm:$0xff]
    %v4089 = vld [vmem:[#allocation2 + $0x28] sm:$0xff]
    %v4090 = vld [vmem:[#allocation2 + $0x30] sm:$0xff]
    %v4091 = vld [vmem:[#allocation2 + $0x38] sm:$0xff]
    %v4092 = vld [vmem:[#allocation2 + $0x40] sm:$0xff]
    %v4093 = vld [vmem:[#allocation2 + $0x48] sm:$0xff]
    %v4094 = vld [vmem:[#allocation2 + $0x50] sm:$0xff]
    %v4095 = vld [vmem:[#allocation2 + $0x58] sm:$0xff]
    %v4096 = vld [vmem:[#allocation2 + $0x60] sm:$0xff]
    %v4097 = vld [vmem:[#allocation2 + $0x68] sm:$0xff]
    %v4098 = vld [vmem:[#allocation2 + $0x70] sm:$0xff]
    %v4099 = vld [vmem:[#allocation2 + $0x78] sm:$0xff]
    %v4100 = vld [vmem:[#allocation2 + $0x80] sm:$0xff]
    %v4101 = vld [vmem:[#allocation2 + $0x88] sm:$0xff]
    %v4102 = vld [vmem:[#allocation2 + $0x90] sm:$0xff]
    %v4103 = vld [vmem:[#allocation2 + $0x98] sm:$0xff]
    %v4104 = vld [vmem:[#allocation2 + $0xa0] sm:$0xff]
    %v4105 = vld [vmem:[#allocation2 + $0xa8] sm:$0xff]
    %v4106 = vld [vmem:[#allocation2 + $0xb0] sm:$0xff]
    %v4107 = vld [vmem:[#allocation2 + $0xb8] sm:$0xff]
    %v4108 = vld [vmem:[#allocation2 + $0xc0] sm:$0xff]
    %v4109 = vld [vmem:[#allocation2 + $0xc8] sm:$0xff]
    %v4110 = vld [vmem:[#allocation2 + $0xd0] sm:$0xff]
    %v4111 = vld [vmem:[#allocation2 + $0xd8] sm:$0xff]
    %v4112 = vld [vmem:[#allocation2 + $0xe0] sm:$0xff]
    %v4113 = vld [vmem:[#allocation2 + $0xe8] sm:$0xff]
    %v4114 = vld [vmem:[#allocation2 + $0xf0] sm:$0xff]
    %v4115 = vld [vmem:[#allocation2 + $0xf8] sm:$0xff]
    %v4116 = vld [vmem:[#allocation2 + $0x100] sm:$0xff]
    %v4117 = vld [vmem:[#allocation2 + $0x108] sm:$0xff]
    %v4118 = vld [vmem:[#allocation2 + $0x110] sm:$0xff]
    %v4119 = vld [vmem:[#allocation2 + $0x118] sm:$0xff]
    %v4120 = vld [vmem:[#allocation2 + $0x120] sm:$0xff]
    %v4121 = vld [vmem:[#allocation2 + $0x128] sm:$0xff]
    %v4122 = vld [vmem:[#allocation2 + $0x130] sm:$0xff]
    %v4123 = vld [vmem:[#allocation2 + $0x138] sm:$0xff]
    %v4124 = vld [vmem:[#allocation2 + $0x140] sm:$0xff]
    %v4125 = vld [vmem:[#allocation2 + $0x148] sm:$0xff]
    %v4126 = vld [vmem:[#allocation2 + $0x150] sm:$0xff]
    %v4127 = vld [vmem:[#allocation2 + $0x158] sm:$0xff]
    %v4128 = vld [vmem:[#allocation2 + $0x160] sm:$0xff]
    %v4129 = vld [vmem:[#allocation2 + $0x168] sm:$0xff]
    %v4130 = vld [vmem:[#allocation2 + $0x170] sm:$0xff]
    %v4131 = vld [vmem:[#allocation2 + $0x178] sm:$0xff]
    %v4132 = vld [vmem:[#allocation2 + $0x180] sm:$0xff]
    %v4133 = vld [vmem:[#allocation2 + $0x188] sm:$0xff]
    %v4134 = vld [vmem:[#allocation2 + $0x190] sm:$0xff]
    %v4135 = vld [vmem:[#allocation2 + $0x198] sm:$0xff]
    %v4136 = vld [vmem:[#allocation2 + $0x1a0] sm:$0xff]
    %v4137 = vld [vmem:[#allocation2 + $0x1a8] sm:$0xff]
    %v4138 = vld [vmem:[#allocation2 + $0x1b0] sm:$0xff]
    %v4139 = vld [vmem:[#allocation2 + $0x1b8] sm:$0xff]
    %v4140 = vld [vmem:[#allocation2 + $0x1c0] sm:$0xff]
    %v4141 = vld [vmem:[#allocation2 + $0x1c8] sm:$0xff]
    %v4142 = vld [vmem:[#allocation2 + $0x1d0] sm:$0xff]
    %v4143 = vld [vmem:[#allocation2 + $0x1d8] sm:$0xff]
    %v4144 = vld [vmem:[#allocation2 + $0x1e0] sm:$0xff]
    %v4145 = vld [vmem:[#allocation2 + $0x1e8] sm:$0xff]
    %v4146 = vld [vmem:[#allocation2 + $0x1f0] sm:$0xff]
    %v4147 = vld [vmem:[#allocation2 + $0x1f8] sm:$0xff]
    %v4148 = vld [vmem:[#allocation2 + $0x200] sm:$0xff]
    %v4149 = vld [vmem:[#allocation2 + $0x208] sm:$0xff]
    %v4150 = vld [vmem:[#allocation2 + $0x210] sm:$0xff]
    %v4151 = vld [vmem:[#allocation2 + $0x218] sm:$0xff]
    %v4152 = vld [vmem:[#allocation2 + $0x220] sm:$0xff]
    %v4153 = vld [vmem:[#allocation2 + $0x228] sm:$0xff]
    %v4154 = vld [vmem:[#allocation2 + $0x230] sm:$0xff]
    %v4155 = vld [vmem:[#allocation2 + $0x238] sm:$0xff]
    %v4156 = vld [vmem:[#allocation2 + $0x240] sm:$0xff]
    %v4157 = vld [vmem:[#allocation2 + $0x248] sm:$0xff]
    %v4158 = vld [vmem:[#allocation2 + $0x250] sm:$0xff]
    %v4159 = vld [vmem:[#allocation2 + $0x258] sm:$0xff]
    %v4160 = vld [vmem:[#allocation2 + $0x260] sm:$0xff]
    %v4161 = vld [vmem:[#allocation2 + $0x268] sm:$0xff]
    %v4162 = vld [vmem:[#allocation2 + $0x270] sm:$0xff]
    %v4163 = vld [vmem:[#allocation2 + $0x278] sm:$0xff]
    %v4164 = vld [vmem:[#allocation2 + $0x280] sm:$0xff]
    %v4165 = vld [vmem:[#allocation2 + $0x288] sm:$0xff]
    %v4166 = vld [vmem:[#allocation2 + $0x290] sm:$0xff]
    %v4167 = vld [vmem:[#allocation2 + $0x298] sm:$0xff]
    %v4168 = vld [vmem:[#allocation2 + $0x2a0] sm:$0xff]
    %v4169 = vld [vmem:[#allocation2 + $0x2a8] sm:$0xff]
    %v4170 = vld [vmem:[#allocation2 + $0x2b0] sm:$0xff]
    %v4171 = vld [vmem:[#allocation2 + $0x2b8] sm:$0xff]
    %v4172 = vld [vmem:[#allocation2 + $0x2c0] sm:$0x3]
    %v4173 = vld [vmem:[#allocation2 + $0x2c8] sm:$0x3]
    %v4174 = vld [vmem:[#allocation2 + $0x2d0] sm:$0x3]
    %v4175 = vld [vmem:[#allocation2 + $0x2d8] sm:$0x3]
    %s4176 = scalar_lea.vmem [#allocation6], 1024
    %v4177 = vld [vmem:[%s4176] sm:$0xff]
    %v4178 = vld [vmem:[%s4176 + $0x8] sm:$0xff]
    %v4179 = vld [vmem:[%s4176 + $0x10] sm:$0xff]
    %v4180 = vld [vmem:[%s4176 + $0x18] sm:$0xff]
    %v4181 = vld [vmem:[%s4176 + $0x20] sm:$0xff]
    %v4182 = vld [vmem:[%s4176 + $0x28] sm:$0xff]
    %v4183 = vld [vmem:[%s4176 + $0x30] sm:$0xff]
    %v4184 = vld [vmem:[%s4176 + $0x38] sm:$0xff]
    %v4185 = vld [vmem:[%s4176 + $0x40] sm:$0xff]
    %v4186 = vld [vmem:[%s4176 + $0x48] sm:$0xff]
    %v4187 = vld [vmem:[%s4176 + $0x50] sm:$0xff]
    %v4188 = vld [vmem:[%s4176 + $0x58] sm:$0xff]
    %v4189 = vld [vmem:[%s4176 + $0x60] sm:$0xff]
    %v4190 = vld [vmem:[%s4176 + $0x68] sm:$0xff]
    %v4191 = vld [vmem:[%s4176 + $0x70] sm:$0xff]
    %v4192 = vld [vmem:[%s4176 + $0x78] sm:$0xff]
    %v4193 = vld [vmem:[%s4176 + $0x80] sm:$0xff]
    %v4194 = vld [vmem:[%s4176 + $0x88] sm:$0xff]
    %v4195 = vld [vmem:[%s4176 + $0x90] sm:$0xff]
    %v4196 = vld [vmem:[%s4176 + $0x98] sm:$0xff]
    %v4197 = vld [vmem:[%s4176 + $0xa0] sm:$0xff]
    %v4198 = vld [vmem:[%s4176 + $0xa8] sm:$0xff]
    %v4199 = vld [vmem:[%s4176 + $0xb0] sm:$0xff]
    %v4200 = vld [vmem:[%s4176 + $0xb8] sm:$0xff]
    %v4201 = vld [vmem:[%s4176 + $0xc0] sm:$0xff]
    %v4202 = vld [vmem:[%s4176 + $0xc8] sm:$0xff]
    %v4203 = vld [vmem:[%s4176 + $0xd0] sm:$0xff]
    %v4204 = vld [vmem:[%s4176 + $0xd8] sm:$0xff]
    %v4205 = vld [vmem:[%s4176 + $0xe0] sm:$0xff]
    %v4206 = vld [vmem:[%s4176 + $0xe8] sm:$0xff]
    %v4207 = vld [vmem:[%s4176 + $0xf0] sm:$0xff]
    %v4208 = vld [vmem:[%s4176 + $0xf8] sm:$0xff]
    %vm4209 = vsmask.f32 6400
    %v4211 = vshrl.u32 %v3421, 16
    %v4213 = vrot.slane %v4211, 1
    %v4214 = vshll.u32 %v3421, 16
    %v4216 = vrot.slane %v4214, 2
    %v4217 = vor.u32 %v4213, %v4216
    %v4219 = vshrl.u32 %v3422, 16
    %v4221 = vrot.slane %v4219, 1
    %v4222 = vshll.u32 %v3422, 16
    %v4224 = vrot.slane %v4222, 2
    %v4225 = vor.u32 %v4221, %v4224
    %v4226 = vsel %vm4209, %v4217, %v4225
    %v4228 = vshrl.u32 %v3423, 16
    %v4230 = vrot.slane %v4228, 1
    %v4231 = vshll.u32 %v3423, 16
    %v4233 = vrot.slane %v4231, 2
    %v4234 = vor.u32 %v4230, %v4233
    %v4235 = vsel %vm4209, %v4225, %v4234
    %v4237 = vshrl.u32 %v3424, 16
    %v4239 = vrot.slane %v4237, 1
    %v4240 = vshll.u32 %v3424, 16
    %v4242 = vrot.slane %v4240, 2
    %v4243 = vor.u32 %v4239, %v4242
    %v4244 = vsel %vm4209, %v4234, %v4243
    %v4246 = vshrl.u32 %v3425, 16
    %v4248 = vrot.slane %v4246, 1
    %v4249 = vshll.u32 %v3425, 16
    %v4251 = vrot.slane %v4249, 2
    %v4252 = vor.u32 %v4248, %v4251
    %v4253 = vsel %vm4209, %v4243, %v4252
    %v4255 = vshrl.u32 %v3426, 16
    %v4257 = vrot.slane %v4255, 1
    %v4258 = vshll.u32 %v3426, 16
    %v4260 = vrot.slane %v4258, 2
    %v4261 = vor.u32 %v4257, %v4260
    %v4262 = vsel %vm4209, %v4252, %v4261
    %v4264 = vshrl.u32 %v3427, 16
    %v4266 = vrot.slane %v4264, 1
    %v4267 = vshll.u32 %v3427, 16
    %v4269 = vrot.slane %v4267, 2
    %v4270 = vor.u32 %v4266, %v4269
    %v4271 = vsel %vm4209, %v4261, %v4270
    %v4273 = vshrl.u32 %v3428, 16
    %v4275 = vrot.slane %v4273, 1
    %v4276 = vshll.u32 %v3428, 16
    %v4278 = vrot.slane %v4276, 2
    %v4279 = vor.u32 %v4275, %v4278
    %v4280 = vsel %vm4209, %v4270, %v4279
    %v4282 = vshrl.u32 %v3429, 16
    %v4284 = vrot.slane %v4282, 1
    %v4285 = vshll.u32 %v3429, 16
    %v4287 = vrot.slane %v4285, 2
    %v4288 = vor.u32 %v4284, %v4287
    %v4289 = vsel %vm4209, %v4279, %v4288
    %v4291 = vshrl.u32 %v3430, 16
    %v4293 = vrot.slane %v4291, 1
    %v4294 = vshll.u32 %v3430, 16
    %v4296 = vrot.slane %v4294, 2
    %v4297 = vor.u32 %v4293, %v4296
    %v4298 = vsel %vm4209, %v4288, %v4297
    %v4300 = vshrl.u32 %v3431, 16
    %v4302 = vrot.slane %v4300, 1
    %v4303 = vshll.u32 %v3431, 16
    %v4305 = vrot.slane %v4303, 2
    %v4306 = vor.u32 %v4302, %v4305
    %v4307 = vsel %vm4209, %v4297, %v4306
    %v4309 = vshrl.u32 %v3432, 16
    %v4311 = vrot.slane %v4309, 1
    %v4312 = vshll.u32 %v3432, 16
    %v4314 = vrot.slane %v4312, 2
    %v4315 = vor.u32 %v4311, %v4314
    %v4316 = vsel %vm4209, %v4306, %v4315
    %v4361 = vunpack.c.l.b16 %v4177
    %v4362 = vunpack.c.h.b16 %v4177
    %v4363 = vunpack.c.l.b16 %v4178
    %v4364 = vunpack.c.h.b16 %v4178
    %v4365 = vunpack.c.l.b16 %v4179
    %v4366 = vunpack.c.h.b16 %v4179
    %v4367 = vunpack.c.l.b16 %v4180
    %v4368 = vunpack.c.h.b16 %v4180
    %v4369 = vunpack.c.l.b16 %v4181
    %v4370 = vunpack.c.h.b16 %v4181
    %v4371 = vunpack.c.l.b16 %v4182
    %v4372 = vunpack.c.h.b16 %v4182
    %v4373 = vunpack.c.l.b16 %v4183
    %v4374 = vunpack.c.h.b16 %v4183
    %v4375 = vunpack.c.l.b16 %v4184
    %v4376 = vunpack.c.h.b16 %v4184
    %v4377 = vunpack.c.l.b16 %v4185
    %v4378 = vunpack.c.h.b16 %v4185
    %v4379 = vunpack.c.l.b16 %v4186
    %v4380 = vunpack.c.h.b16 %v4186
    %v4381 = vunpack.c.l.b16 %v4187
    %v4382 = vunpack.c.h.b16 %v4187
    %v4383 = vunpack.c.l.b16 %v4188
    %v4384 = vunpack.c.h.b16 %v4188
    %v4385 = vunpack.c.l.b16 %v4189
    %v4386 = vunpack.c.h.b16 %v4189
    %v4387 = vunpack.c.l.b16 %v4190
    %v4388 = vunpack.c.h.b16 %v4190
    %v4389 = vunpack.c.l.b16 %v4191
    %v4390 = vunpack.c.h.b16 %v4191
    %v4391 = vunpack.c.l.b16 %v4192
    %v4392 = vunpack.c.h.b16 %v4192
    %v4393 = vunpack.c.l.b16 %v4193
    %v4394 = vunpack.c.h.b16 %v4193
    %v4395 = vunpack.c.l.b16 %v4194
    %v4396 = vunpack.c.h.b16 %v4194
    %v4397 = vunpack.c.l.b16 %v4195
    %v4398 = vunpack.c.h.b16 %v4195
    %v4399 = vunpack.c.l.b16 %v4196
    %v4400 = vunpack.c.h.b16 %v4196
    %v4401 = vunpack.c.l.b16 %v4197
    %v4402 = vunpack.c.h.b16 %v4197
    %v4403 = vunpack.c.l.b16 %v4198
    %v4404 = vunpack.c.h.b16 %v4198
    %v4405 = vunpack.c.l.b16 %v4199
    %v4406 = vunpack.c.h.b16 %v4199
    %v4407 = vunpack.c.l.b16 %v4200
    %v4408 = vunpack.c.h.b16 %v4200
    %v4409 = vunpack.c.l.b16 %v4201
    %v4410 = vunpack.c.h.b16 %v4201
    %v4411 = vunpack.c.l.b16 %v4202
    %v4412 = vunpack.c.h.b16 %v4202
    %v4413 = vunpack.c.l.b16 %v4203
    %v4414 = vunpack.c.h.b16 %v4203
    %v4415 = vunpack.c.l.b16 %v4204
    %v4416 = vunpack.c.h.b16 %v4204
    %v4417 = vunpack.c.l.b16 %v4205
    %v4418 = vunpack.c.h.b16 %v4205
    %v4419 = vunpack.c.l.b16 %v4206
    %v4420 = vunpack.c.h.b16 %v4206
    %v4421 = vunpack.c.l.b16 %v4207
    %v4422 = vunpack.c.h.b16 %v4207
    %v4423 = vunpack.c.l.b16 %v4208
    %v4424 = vunpack.c.h.b16 %v4208
    %v4425 = vpack.c.b16 %v4365, %v4361
    %v4426 = vpack.c.b16 %v4366, %v4362
    %v4427 = vpack.c.b16 %v4367, %v4363
    %v4428 = vpack.c.b16 %v4368, %v4364
    %v4429 = vpack.c.b16 %v4373, %v4369
    %v4430 = vpack.c.b16 %v4374, %v4370
    %v4431 = vpack.c.b16 %v4375, %v4371
    %v4432 = vpack.c.b16 %v4376, %v4372
    %v4433 = vpack.c.b16 %v4381, %v4377
    %v4434 = vpack.c.b16 %v4382, %v4378
    %v4435 = vpack.c.b16 %v4383, %v4379
    %v4436 = vpack.c.b16 %v4384, %v4380
    %v4437 = vpack.c.b16 %v4389, %v4385
    %v4438 = vpack.c.b16 %v4390, %v4386
    %v4439 = vpack.c.b16 %v4391, %v4387
    %v4440 = vpack.c.b16 %v4392, %v4388
    %v4441 = vpack.c.b16 %v4397, %v4393
    %v4442 = vpack.c.b16 %v4398, %v4394
    %v4443 = vpack.c.b16 %v4399, %v4395
    %v4444 = vpack.c.b16 %v4400, %v4396
    %v4445 = vpack.c.b16 %v4405, %v4401
    %v4446 = vpack.c.b16 %v4406, %v4402
    %v4447 = vpack.c.b16 %v4407, %v4403
    %v4448 = vpack.c.b16 %v4408, %v4404
    %v4449 = vpack.c.b16 %v4413, %v4409
    %v4450 = vpack.c.b16 %v4414, %v4410
    %v4451 = vpack.c.b16 %v4415, %v4411
    %v4452 = vpack.c.b16 %v4416, %v4412
    %v4453 = vpack.c.b16 %v4421, %v4417
    %v4454 = vpack.c.b16 %v4422, %v4418
    %v4455 = vpack.c.b16 %v4423, %v4419
    %v4456 = vpack.c.b16 %v4424, %v4420
    %4489 = vmatpush.bf16.msra.mxu0 %v4453
    %4490 = vmatpush.bf16.msra.mxu0 %v4449
    %4491 = vmatpush.bf16.msra.mxu0 %v4445
    %4492 = vmatpush.bf16.msra.mxu0 %v4441
    %4493 = vmatpush.bf16.msra.mxu0 %v4437
    %4494 = vmatpush.bf16.msra.mxu0 %v4433
    %4495 = vmatpush.bf16.msra.mxu0 %v4429
    %4496 = vmatpush.bf16.msra.mxu0 %v4425
    %4497 = vmatmul.bf16.gmra.mxu0 %v4226
    %v4498 = vpop.f32.mrf.mxu0
    %v4499 = vadd.f32 0.0, %v4498
    %v4500 = vpop.f32.mrf.mxu0
    %v4501 = vadd.f32 0.0, %v4500
    %4502 = vmatmul.bf16.gmra.mxu0 %v4235
    %v4503 = vpop.f32.mrf.mxu0
    %v4504 = vadd.f32 0.0, %v4503
    %v4505 = vpop.f32.mrf.mxu0
    %v4506 = vadd.f32 0.0, %v4505
    %4507 = vmatmul.bf16.gmra.mxu0 %v4244
    %v4508 = vpop.f32.mrf.mxu0
    %v4509 = vadd.f32 0.0, %v4508
    %v4510 = vpop.f32.mrf.mxu0
    %v4511 = vadd.f32 0.0, %v4510
    %4512 = vmatmul.bf16.gmra.mxu0 %v4253
    %v4513 = vpop.f32.mrf.mxu0
    %v4514 = vadd.f32 0.0, %v4513
    %v4515 = vpop.f32.mrf.mxu0
    %v4516 = vadd.f32 0.0, %v4515
    %4517 = vmatmul.bf16.gmra.mxu0 %v4262
    %v4518 = vpop.f32.mrf.mxu0
    %v4519 = vadd.f32 0.0, %v4518
    %v4520 = vpop.f32.mrf.mxu0
    %v4521 = vadd.f32 0.0, %v4520
    %4522 = vmatmul.bf16.gmra.mxu0 %v4271
    %v4523 = vpop.f32.mrf.mxu0
    %v4524 = vadd.f32 0.0, %v4523
    %v4525 = vpop.f32.mrf.mxu0
    %v4526 = vadd.f32 0.0, %v4525
    %4527 = vmatmul.bf16.gmra.mxu0 %v4280
    %v4528 = vpop.f32.mrf.mxu0
    %v4529 = vadd.f32 0.0, %v4528
    %v4530 = vpop.f32.mrf.mxu0
    %v4531 = vadd.f32 0.0, %v4530
    %4532 = vmatmul.bf16.gmra.mxu0 %v4289
    %v4533 = vpop.f32.mrf.mxu0
    %v4534 = vadd.f32 0.0, %v4533
    %v4535 = vpop.f32.mrf.mxu0
    %v4536 = vadd.f32 0.0, %v4535
    %4537 = vmatmul.bf16.gmra.mxu0 %v4298
    %v4538 = vpop.f32.mrf.mxu0
    %v4539 = vadd.f32 0.0, %v4538
    %v4540 = vpop.f32.mrf.mxu0
    %v4541 = vadd.f32 0.0, %v4540
    %4542 = vmatmul.bf16.gmra.mxu0 %v4307
    %v4543 = vpop.f32.mrf.mxu0
    %v4544 = vadd.f32 0.0, %v4543
    %v4545 = vpop.f32.mrf.mxu0
    %v4546 = vadd.f32 0.0, %v4545
    %4547 = vmatmul.bf16.gmra.mxu0 %v4316
    %v4548 = vpop.f32.mrf.mxu0
    %v4549 = vadd.f32 0.0, %v4548
    %v4550 = vpop.f32.mrf.mxu0
    %v4551 = vadd.f32 0.0, %v4550
    %4552 = vmatmul.bf16.gmra.mxu0 %v4315
    %v4553 = vpop.f32.mrf.mxu0
    %v4554 = vadd.f32 0.0, %v4553
    %v4555 = vpop.f32.mrf.mxu0
    %4556 = vdwg.mxu0
    %4557 = vmatpush.bf16.msra.mxu0 %v4454
    %4558 = vmatpush.bf16.msra.mxu0 %v4450
    %4559 = vmatpush.bf16.msra.mxu0 %v4446
    %4560 = vmatpush.bf16.msra.mxu0 %v4442
    %4561 = vmatpush.bf16.msra.mxu0 %v4438
    %4562 = vmatpush.bf16.msra.mxu0 %v4434
    %4563 = vmatpush.bf16.msra.mxu0 %v4430
    %4564 = vmatpush.bf16.msra.mxu0 %v4426
    %4565 = vmatmul.bf16.gmra.mxu0 %v4226
    %v4566 = vpop.f32.mrf.mxu0
    %v4567 = vadd.f32 0.0, %v4566
    %v4568 = vpop.f32.mrf.mxu0
    %v4569 = vadd.f32 0.0, %v4568
    %4570 = vmatmul.bf16.gmra.mxu0 %v4235
    %v4571 = vpop.f32.mrf.mxu0
    %v4572 = vadd.f32 0.0, %v4571
    %v4573 = vpop.f32.mrf.mxu0
    %v4574 = vadd.f32 0.0, %v4573
    %4575 = vmatmul.bf16.gmra.mxu0 %v4244
    %v4576 = vpop.f32.mrf.mxu0
    %v4577 = vadd.f32 0.0, %v4576
    %v4578 = vpop.f32.mrf.mxu0
    %v4579 = vadd.f32 0.0, %v4578
    %4580 = vmatmul.bf16.gmra.mxu0 %v4253
    %v4581 = vpop.f32.mrf.mxu0
    %v4582 = vadd.f32 0.0, %v4581
    %v4583 = vpop.f32.mrf.mxu0
    %v4584 = vadd.f32 0.0, %v4583
    %4585 = vmatmul.bf16.gmra.mxu0 %v4262
    %v4586 = vpop.f32.mrf.mxu0
    %v4587 = vadd.f32 0.0, %v4586
    %v4588 = vpop.f32.mrf.mxu0
    %v4589 = vadd.f32 0.0, %v4588
    %4590 = vmatmul.bf16.gmra.mxu0 %v4271
    %v4591 = vpop.f32.mrf.mxu0
    %v4592 = vadd.f32 0.0, %v4591
    %v4593 = vpop.f32.mrf.mxu0
    %v4594 = vadd.f32 0.0, %v4593
    %4595 = vmatmul.bf16.gmra.mxu0 %v4280
    %v4596 = vpop.f32.mrf.mxu0
    %v4597 = vadd.f32 0.0, %v4596
    %v4598 = vpop.f32.mrf.mxu0
    %v4599 = vadd.f32 0.0, %v4598
    %4600 = vmatmul.bf16.gmra.mxu0 %v4289
    %v4601 = vpop.f32.mrf.mxu0
    %v4602 = vadd.f32 0.0, %v4601
    %v4603 = vpop.f32.mrf.mxu0
    %v4604 = vadd.f32 0.0, %v4603
    %4605 = vmatmul.bf16.gmra.mxu0 %v4298
    %v4606 = vpop.f32.mrf.mxu0
    %v4607 = vadd.f32 0.0, %v4606
    %v4608 = vpop.f32.mrf.mxu0
    %v4609 = vadd.f32 0.0, %v4608
    %4610 = vmatmul.bf16.gmra.mxu0 %v4307
    %v4611 = vpop.f32.mrf.mxu0
    %v4612 = vadd.f32 0.0, %v4611
    %v4613 = vpop.f32.mrf.mxu0
    %v4614 = vadd.f32 0.0, %v4613
    %4615 = vmatmul.bf16.gmra.mxu0 %v4316
    %v4616 = vpop.f32.mrf.mxu0
    %v4617 = vadd.f32 0.0, %v4616
    %v4618 = vpop.f32.mrf.mxu0
    %v4619 = vadd.f32 0.0, %v4618
    %4620 = vmatmul.bf16.gmra.mxu0 %v4315
    %v4621 = vpop.f32.mrf.mxu0
    %v4622 = vadd.f32 0.0, %v4621
    %v4623 = vpop.f32.mrf.mxu0
    %4624 = vdwg.mxu0
    %4625 = vmatpush.bf16.msra.mxu0 %v4455
    %4626 = vmatpush.bf16.msra.mxu0 %v4451
    %4627 = vmatpush.bf16.msra.mxu0 %v4447
    %4628 = vmatpush.bf16.msra.mxu0 %v4443
    %4629 = vmatpush.bf16.msra.mxu0 %v4439
    %4630 = vmatpush.bf16.msra.mxu0 %v4435
    %4631 = vmatpush.bf16.msra.mxu0 %v4431
    %4632 = vmatpush.bf16.msra.mxu0 %v4427
    %4633 = vmatmul.bf16.gmra.mxu0 %v4226
    %v4634 = vpop.f32.mrf.mxu0
    %v4635 = vadd.f32 0.0, %v4634
    %v4636 = vpop.f32.mrf.mxu0
    %v4637 = vadd.f32 0.0, %v4636
    %4638 = vmatmul.bf16.gmra.mxu0 %v4235
    %v4639 = vpop.f32.mrf.mxu0
    %v4640 = vadd.f32 0.0, %v4639
    %v4641 = vpop.f32.mrf.mxu0
    %v4642 = vadd.f32 0.0, %v4641
    %4643 = vmatmul.bf16.gmra.mxu0 %v4244
    %v4644 = vpop.f32.mrf.mxu0
    %v4645 = vadd.f32 0.0, %v4644
    %v4646 = vpop.f32.mrf.mxu0
    %v4647 = vadd.f32 0.0, %v4646
    %4648 = vmatmul.bf16.gmra.mxu0 %v4253
    %v4649 = vpop.f32.mrf.mxu0
    %v4650 = vadd.f32 0.0, %v4649
    %v4651 = vpop.f32.mrf.mxu0
    %v4652 = vadd.f32 0.0, %v4651
    %4653 = vmatmul.bf16.gmra.mxu0 %v4262
    %v4654 = vpop.f32.mrf.mxu0
    %v4655 = vadd.f32 0.0, %v4654
    %v4656 = vpop.f32.mrf.mxu0
    %v4657 = vadd.f32 0.0, %v4656
    %4658 = vmatmul.bf16.gmra.mxu0 %v4271
    %v4659 = vpop.f32.mrf.mxu0
    %v4660 = vadd.f32 0.0, %v4659
    %v4661 = vpop.f32.mrf.mxu0
    %v4662 = vadd.f32 0.0, %v4661
    %4663 = vmatmul.bf16.gmra.mxu0 %v4280
    %v4664 = vpop.f32.mrf.mxu0
    %v4665 = vadd.f32 0.0, %v4664
    %v4666 = vpop.f32.mrf.mxu0
    %v4667 = vadd.f32 0.0, %v4666
    %4668 = vmatmul.bf16.gmra.mxu0 %v4289
    %v4669 = vpop.f32.mrf.mxu0
    %v4670 = vadd.f32 0.0, %v4669
    %v4671 = vpop.f32.mrf.mxu0
    %v4672 = vadd.f32 0.0, %v4671
    %4673 = vmatmul.bf16.gmra.mxu0 %v4298
    %v4674 = vpop.f32.mrf.mxu0
    %v4675 = vadd.f32 0.0, %v4674
    %v4676 = vpop.f32.mrf.mxu0
    %v4677 = vadd.f32 0.0, %v4676
    %4678 = vmatmul.bf16.gmra.mxu0 %v4307
    %v4679 = vpop.f32.mrf.mxu0
    %v4680 = vadd.f32 0.0, %v4679
    %v4681 = vpop.f32.mrf.mxu0
    %v4682 = vadd.f32 0.0, %v4681
    %4683 = vmatmul.bf16.gmra.mxu0 %v4316
    %v4684 = vpop.f32.mrf.mxu0
    %v4685 = vadd.f32 0.0, %v4684
    %v4686 = vpop.f32.mrf.mxu0
    %v4687 = vadd.f32 0.0, %v4686
    %4688 = vmatmul.bf16.gmra.mxu0 %v4315
    %v4689 = vpop.f32.mrf.mxu0
    %v4690 = vadd.f32 0.0, %v4689
    %v4691 = vpop.f32.mrf.mxu0
    %4692 = vdwg.mxu0
    %4693 = vmatpush.bf16.msra.mxu0 %v4456
    %4694 = vmatpush.bf16.msra.mxu0 %v4452
    %4695 = vmatpush.bf16.msra.mxu0 %v4448
    %4696 = vmatpush.bf16.msra.mxu0 %v4444
    %4697 = vmatpush.bf16.msra.mxu0 %v4440
    %4698 = vmatpush.bf16.msra.mxu0 %v4436
    %4699 = vmatpush.bf16.msra.mxu0 %v4432
    %4700 = vmatpush.bf16.msra.mxu0 %v4428
    %4701 = vmatmul.bf16.gmra.mxu0 %v4226
    %v4702 = vpop.f32.mrf.mxu0
    %v4703 = vadd.f32 0.0, %v4702
    %v4704 = vpop.f32.mrf.mxu0
    %v4705 = vadd.f32 0.0, %v4704
    %4706 = vmatmul.bf16.gmra.mxu0 %v4235
    %v4707 = vpop.f32.mrf.mxu0
    %v4708 = vadd.f32 0.0, %v4707
    %v4709 = vpop.f32.mrf.mxu0
    %v4710 = vadd.f32 0.0, %v4709
    %4711 = vmatmul.bf16.gmra.mxu0 %v4244
    %v4712 = vpop.f32.mrf.mxu0
    %v4713 = vadd.f32 0.0, %v4712
    %v4714 = vpop.f32.mrf.mxu0
    %v4715 = vadd.f32 0.0, %v4714
    %4716 = vmatmul.bf16.gmra.mxu0 %v4253
    %v4717 = vpop.f32.mrf.mxu0
    %v4718 = vadd.f32 0.0, %v4717
    %v4719 = vpop.f32.mrf.mxu0
    %v4720 = vadd.f32 0.0, %v4719
    %4721 = vmatmul.bf16.gmra.mxu0 %v4262
    %v4722 = vpop.f32.mrf.mxu0
    %v4723 = vadd.f32 0.0, %v4722
    %v4724 = vpop.f32.mrf.mxu0
    %v4725 = vadd.f32 0.0, %v4724
    %4726 = vmatmul.bf16.gmra.mxu0 %v4271
    %v4727 = vpop.f32.mrf.mxu0
    %v4728 = vadd.f32 0.0, %v4727
    %v4729 = vpop.f32.mrf.mxu0
    %v4730 = vadd.f32 0.0, %v4729
    %4731 = vmatmul.bf16.gmra.mxu0 %v4280
    %v4732 = vpop.f32.mrf.mxu0
    %v4733 = vadd.f32 0.0, %v4732
    %v4734 = vpop.f32.mrf.mxu0
    %v4735 = vadd.f32 0.0, %v4734
    %4736 = vmatmul.bf16.gmra.mxu0 %v4289
    %v4737 = vpop.f32.mrf.mxu0
    %v4738 = vadd.f32 0.0, %v4737
    %v4739 = vpop.f32.mrf.mxu0
    %v4740 = vadd.f32 0.0, %v4739
    %4741 = vmatmul.bf16.gmra.mxu0 %v4298
    %v4742 = vpop.f32.mrf.mxu0
    %v4743 = vadd.f32 0.0, %v4742
    %v4744 = vpop.f32.mrf.mxu0
    %v4745 = vadd.f32 0.0, %v4744
    %4746 = vmatmul.bf16.gmra.mxu0 %v4307
    %v4747 = vpop.f32.mrf.mxu0
    %v4748 = vadd.f32 0.0, %v4747
    %v4749 = vpop.f32.mrf.mxu0
    %v4750 = vadd.f32 0.0, %v4749
    %4751 = vmatmul.bf16.gmra.mxu0 %v4316
    %v4752 = vpop.f32.mrf.mxu0
    %v4753 = vadd.f32 0.0, %v4752
    %v4754 = vpop.f32.mrf.mxu0
    %v4755 = vadd.f32 0.0, %v4754
    %4756 = vmatmul.bf16.gmra.mxu0 %v4315
    %v4757 = vpop.f32.mrf.mxu0
    %v4758 = vadd.f32 0.0, %v4757
    %v4759 = vpop.f32.mrf.mxu0
    %4760 = vdwg.mxu0
    %v4761 = vadd.f32 %v4084, %v4499
    %v4762 = vadd.f32 %v4085, %v4567
    %v4763 = vadd.f32 %v4086, %v4635
    %v4764 = vadd.f32 %v4087, %v4703
    %v4765 = vadd.f32 %v4088, %v4501
    %v4766 = vadd.f32 %v4089, %v4569
    %v4767 = vadd.f32 %v4090, %v4637
    %v4768 = vadd.f32 %v4091, %v4705
    %v4769 = vadd.f32 %v4092, %v4504
    %v4770 = vadd.f32 %v4093, %v4572
    %v4771 = vadd.f32 %v4094, %v4640
    %v4772 = vadd.f32 %v4095, %v4708
    %v4773 = vadd.f32 %v4096, %v4506
    %v4774 = vadd.f32 %v4097, %v4574
    %v4775 = vadd.f32 %v4098, %v4642
    %v4776 = vadd.f32 %v4099, %v4710
    %v4777 = vadd.f32 %v4100, %v4509
    %v4778 = vadd.f32 %v4101, %v4577
    %v4779 = vadd.f32 %v4102, %v4645
    %v4780 = vadd.f32 %v4103, %v4713
    %v4781 = vadd.f32 %v4104, %v4511
    %v4782 = vadd.f32 %v4105, %v4579
    %v4783 = vadd.f32 %v4106, %v4647
    %v4784 = vadd.f32 %v4107, %v4715
    %v4785 = vadd.f32 %v4108, %v4514
    %v4786 = vadd.f32 %v4109, %v4582
    %v4787 = vadd.f32 %v4110, %v4650
    %v4788 = vadd.f32 %v4111, %v4718
    %v4789 = vadd.f32 %v4112, %v4516
    %v4790 = vadd.f32 %v4113, %v4584
    %v4791 = vadd.f32 %v4114, %v4652
    %v4792 = vadd.f32 %v4115, %v4720
    %v4793 = vadd.f32 %v4116, %v4519
    %v4794 = vadd.f32 %v4117, %v4587
    %v4795 = vadd.f32 %v4118, %v4655
    %v4796 = vadd.f32 %v4119, %v4723
    %v4797 = vadd.f32 %v4120, %v4521
    %v4798 = vadd.f32 %v4121, %v4589
    %v4799 = vadd.f32 %v4122, %v4657
    %v4800 = vadd.f32 %v4123, %v4725
    %v4801 = vadd.f32 %v4124, %v4524
    %v4802 = vadd.f32 %v4125, %v4592
    %v4803 = vadd.f32 %v4126, %v4660
    %v4804 = vadd.f32 %v4127, %v4728
    %v4805 = vadd.f32 %v4128, %v4526
    %v4806 = vadd.f32 %v4129, %v4594
    %v4807 = vadd.f32 %v4130, %v4662
    %v4808 = vadd.f32 %v4131, %v4730
    %v4809 = vadd.f32 %v4132, %v4529
    %v4810 = vadd.f32 %v4133, %v4597
    %v4811 = vadd.f32 %v4134, %v4665
    %v4812 = vadd.f32 %v4135, %v4733
    %v4813 = vadd.f32 %v4136, %v4531
    %v4814 = vadd.f32 %v4137, %v4599
    %v4815 = vadd.f32 %v4138, %v4667
    %v4816 = vadd.f32 %v4139, %v4735
    %v4817 = vadd.f32 %v4140, %v4534
    %v4818 = vadd.f32 %v4141, %v4602
    %v4819 = vadd.f32 %v4142, %v4670
    %v4820 = vadd.f32 %v4143, %v4738
    %v4821 = vadd.f32 %v4144, %v4536
    %v4822 = vadd.f32 %v4145, %v4604
    %v4823 = vadd.f32 %v4146, %v4672
    %v4824 = vadd.f32 %v4147, %v4740
    %v4825 = vadd.f32 %v4148, %v4539
    %v4826 = vadd.f32 %v4149, %v4607
    %v4827 = vadd.f32 %v4150, %v4675
    %v4828 = vadd.f32 %v4151, %v4743
    %v4829 = vadd.f32 %v4152, %v4541
    %v4830 = vadd.f32 %v4153, %v4609
    %v4831 = vadd.f32 %v4154, %v4677
    %v4832 = vadd.f32 %v4155, %v4745
    %v4833 = vadd.f32 %v4156, %v4544
    %v4834 = vadd.f32 %v4157, %v4612
    %v4835 = vadd.f32 %v4158, %v4680
    %v4836 = vadd.f32 %v4159, %v4748
    %v4837 = vadd.f32 %v4160, %v4546
    %v4838 = vadd.f32 %v4161, %v4614
    %v4839 = vadd.f32 %v4162, %v4682
    %v4840 = vadd.f32 %v4163, %v4750
    %v4841 = vadd.f32 %v4164, %v4549
    %v4842 = vadd.f32 %v4165, %v4617
    %v4843 = vadd.f32 %v4166, %v4685
    %v4844 = vadd.f32 %v4167, %v4753
    %v4845 = vadd.f32 %v4168, %v4551
    %v4846 = vadd.f32 %v4169, %v4619
    %v4847 = vadd.f32 %v4170, %v4687
    %v4848 = vadd.f32 %v4171, %v4755
    %v4849 = vadd.f32 %v4172, %v4554
    %v4850 = vadd.f32 %v4173, %v4622
    %v4851 = vadd.f32 %v4174, %v4690
    %v4852 = vadd.f32 %v4175, %v4758
    %4853 = vst [vmem:[#allocation2] sm:$0xff] %v4761
    %4854 = vst [vmem:[#allocation2 + $0x8] sm:$0xff] %v4762
    %4855 = vst [vmem:[#allocation2 + $0x10] sm:$0xff] %v4763
    %4856 = vst [vmem:[#allocation2 + $0x18] sm:$0xff] %v4764
    %4857 = vst [vmem:[#allocation2 + $0x20] sm:$0xff] %v4765
    %4858 = vst [vmem:[#allocation2 + $0x28] sm:$0xff] %v4766
    %4859 = vst [vmem:[#allocation2 + $0x30] sm:$0xff] %v4767
    %4860 = vst [vmem:[#allocation2 + $0x38] sm:$0xff] %v4768
    %4861 = vst [vmem:[#allocation2 + $0x40] sm:$0xff] %v4769
    %4862 = vst [vmem:[#allocation2 + $0x48] sm:$0xff] %v4770
    %4863 = vst [vmem:[#allocation2 + $0x50] sm:$0xff] %v4771
    %4864 = vst [vmem:[#allocation2 + $0x58] sm:$0xff] %v4772
    %4865 = vst [vmem:[#allocation2 + $0x60] sm:$0xff] %v4773
    %4866 = vst [vmem:[#allocation2 + $0x68] sm:$0xff] %v4774
    %4867 = vst [vmem:[#allocation2 + $0x70] sm:$0xff] %v4775
    %4868 = vst [vmem:[#allocation2 + $0x78] sm:$0xff] %v4776
    %4869 = vst [vmem:[#allocation2 + $0x80] sm:$0xff] %v4777
    %4870 = vst [vmem:[#allocation2 + $0x88] sm:$0xff] %v4778
    %4871 = vst [vmem:[#allocation2 + $0x90] sm:$0xff] %v4779
    %4872 = vst [vmem:[#allocation2 + $0x98] sm:$0xff] %v4780
    %4873 = vst [vmem:[#allocation2 + $0xa0] sm:$0xff] %v4781
    %4874 = vst [vmem:[#allocation2 + $0xa8] sm:$0xff] %v4782
    %4875 = vst [vmem:[#allocation2 + $0xb0] sm:$0xff] %v4783
    %4876 = vst [vmem:[#allocation2 + $0xb8] sm:$0xff] %v4784
    %4877 = vst [vmem:[#allocation2 + $0xc0] sm:$0xff] %v4785
    %4878 = vst [vmem:[#allocation2 + $0xc8] sm:$0xff] %v4786
    %4879 = vst [vmem:[#allocation2 + $0xd0] sm:$0xff] %v4787
    %4880 = vst [vmem:[#allocation2 + $0xd8] sm:$0xff] %v4788
    %4881 = vst [vmem:[#allocation2 + $0xe0] sm:$0xff] %v4789
    %4882 = vst [vmem:[#allocation2 + $0xe8] sm:$0xff] %v4790
    %4883 = vst [vmem:[#allocation2 + $0xf0] sm:$0xff] %v4791
    %4884 = vst [vmem:[#allocation2 + $0xf8] sm:$0xff] %v4792
    %4885 = vst [vmem:[#allocation2 + $0x100] sm:$0xff] %v4793
    %4886 = vst [vmem:[#allocation2 + $0x108] sm:$0xff] %v4794
    %4887 = vst [vmem:[#allocation2 + $0x110] sm:$0xff] %v4795
    %4888 = vst [vmem:[#allocation2 + $0x118] sm:$0xff] %v4796
    %4889 = vst [vmem:[#allocation2 + $0x120] sm:$0xff] %v4797
    %4890 = vst [vmem:[#allocation2 + $0x128] sm:$0xff] %v4798
    %4891 = vst [vmem:[#allocation2 + $0x130] sm:$0xff] %v4799
    %4892 = vst [vmem:[#allocation2 + $0x138] sm:$0xff] %v4800
    %4893 = vst [vmem:[#allocation2 + $0x140] sm:$0xff] %v4801
    %4894 = vst [vmem:[#allocation2 + $0x148] sm:$0xff] %v4802
    %4895 = vst [vmem:[#allocation2 + $0x150] sm:$0xff] %v4803
    %4896 = vst [vmem:[#allocation2 + $0x158] sm:$0xff] %v4804
    %4897 = vst [vmem:[#allocation2 + $0x160] sm:$0xff] %v4805
    %4898 = vst [vmem:[#allocation2 + $0x168] sm:$0xff] %v4806
    %4899 = vst [vmem:[#allocation2 + $0x170] sm:$0xff] %v4807
    %4900 = vst [vmem:[#allocation2 + $0x178] sm:$0xff] %v4808
    %4901 = vst [vmem:[#allocation2 + $0x180] sm:$0xff] %v4809
    %4902 = vst [vmem:[#allocation2 + $0x188] sm:$0xff] %v4810
    %4903 = vst [vmem:[#allocation2 + $0x190] sm:$0xff] %v4811
    %4904 = vst [vmem:[#allocation2 + $0x198] sm:$0xff] %v4812
    %4905 = vst [vmem:[#allocation2 + $0x1a0] sm:$0xff] %v4813
    %4906 = vst [vmem:[#allocation2 + $0x1a8] sm:$0xff] %v4814
    %4907 = vst [vmem:[#allocation2 + $0x1b0] sm:$0xff] %v4815
    %4908 = vst [vmem:[#allocation2 + $0x1b8] sm:$0xff] %v4816
    %4909 = vst [vmem:[#allocation2 + $0x1c0] sm:$0xff] %v4817
    %4910 = vst [vmem:[#allocation2 + $0x1c8] sm:$0xff] %v4818
    %4911 = vst [vmem:[#allocation2 + $0x1d0] sm:$0xff] %v4819
    %4912 = vst [vmem:[#allocation2 + $0x1d8] sm:$0xff] %v4820
    %4913 = vst [vmem:[#allocation2 + $0x1e0] sm:$0xff] %v4821
    %4914 = vst [vmem:[#allocation2 + $0x1e8] sm:$0xff] %v4822
    %4915 = vst [vmem:[#allocation2 + $0x1f0] sm:$0xff] %v4823
    %4916 = vst [vmem:[#allocation2 + $0x1f8] sm:$0xff] %v4824
    %4917 = vst [vmem:[#allocation2 + $0x200] sm:$0xff] %v4825
    %4918 = vst [vmem:[#allocation2 + $0x208] sm:$0xff] %v4826
    %4919 = vst [vmem:[#allocation2 + $0x210] sm:$0xff] %v4827
    %4920 = vst [vmem:[#allocation2 + $0x218] sm:$0xff] %v4828
    %4921 = vst [vmem:[#allocation2 + $0x220] sm:$0xff] %v4829
    %4922 = vst [vmem:[#allocation2 + $0x228] sm:$0xff] %v4830
    %4923 = vst [vmem:[#allocation2 + $0x230] sm:$0xff] %v4831
    %4924 = vst [vmem:[#allocation2 + $0x238] sm:$0xff] %v4832
    %4925 = vst [vmem:[#allocation2 + $0x240] sm:$0xff] %v4833
    %4926 = vst [vmem:[#allocation2 + $0x248] sm:$0xff] %v4834
    %4927 = vst [vmem:[#allocation2 + $0x250] sm:$0xff] %v4835
    %4928 = vst [vmem:[#allocation2 + $0x258] sm:$0xff] %v4836
    %4929 = vst [vmem:[#allocation2 + $0x260] sm:$0xff] %v4837
    %4930 = vst [vmem:[#allocation2 + $0x268] sm:$0xff] %v4838
    %4931 = vst [vmem:[#allocation2 + $0x270] sm:$0xff] %v4839
    %4932 = vst [vmem:[#allocation2 + $0x278] sm:$0xff] %v4840
    %4933 = vst [vmem:[#allocation2 + $0x280] sm:$0xff] %v4841
    %4934 = vst [vmem:[#allocation2 + $0x288] sm:$0xff] %v4842
    %4935 = vst [vmem:[#allocation2 + $0x290] sm:$0xff] %v4843
    %4936 = vst [vmem:[#allocation2 + $0x298] sm:$0xff] %v4844
    %4937 = vst [vmem:[#allocation2 + $0x2a0] sm:$0xff] %v4845
    %4938 = vst [vmem:[#allocation2 + $0x2a8] sm:$0xff] %v4846
    %4939 = vst [vmem:[#allocation2 + $0x2b0] sm:$0xff] %v4847
    %4940 = vst [vmem:[#allocation2 + $0x2b8] sm:$0xff] %v4848
    %4941 = vst [vmem:[#allocation2 + $0x2c0] sm:$0x3] %v4849
    %4942 = vst [vmem:[#allocation2 + $0x2c8] sm:$0x3] %v4850
    %4943 = vst [vmem:[#allocation2 + $0x2d0] sm:$0x3] %v4851
    %4944 = vst [vmem:[#allocation2 + $0x2d8] sm:$0x3] %v4852
    %v4945 = vld [vmem:[#allocation2] sm:$0xff]
    %v4946 = vld [vmem:[#allocation2 + $0x8] sm:$0xff]
    %v4947 = vld [vmem:[#allocation2 + $0x10] sm:$0xff]
    %v4948 = vld [vmem:[#allocation2 + $0x18] sm:$0xff]
    %v4949 = vld [vmem:[#allocation2 + $0x20] sm:$0xff]
    %v4950 = vld [vmem:[#allocation2 + $0x28] sm:$0xff]
    %v4951 = vld [vmem:[#allocation2 + $0x30] sm:$0xff]
    %v4952 = vld [vmem:[#allocation2 + $0x38] sm:$0xff]
    %v4953 = vld [vmem:[#allocation2 + $0x40] sm:$0xff]
    %v4954 = vld [vmem:[#allocation2 + $0x48] sm:$0xff]
    %v4955 = vld [vmem:[#allocation2 + $0x50] sm:$0xff]
    %v4956 = vld [vmem:[#allocation2 + $0x58] sm:$0xff]
    %v4957 = vld [vmem:[#allocation2 + $0x60] sm:$0xff]
    %v4958 = vld [vmem:[#allocation2 + $0x68] sm:$0xff]
    %v4959 = vld [vmem:[#allocation2 + $0x70] sm:$0xff]
    %v4960 = vld [vmem:[#allocation2 + $0x78] sm:$0xff]
    %v4961 = vld [vmem:[#allocation2 + $0x80] sm:$0xff]
    %v4962 = vld [vmem:[#allocation2 + $0x88] sm:$0xff]
    %v4963 = vld [vmem:[#allocation2 + $0x90] sm:$0xff]
    %v4964 = vld [vmem:[#allocation2 + $0x98] sm:$0xff]
    %v4965 = vld [vmem:[#allocation2 + $0xa0] sm:$0xff]
    %v4966 = vld [vmem:[#allocation2 + $0xa8] sm:$0xff]
    %v4967 = vld [vmem:[#allocation2 + $0xb0] sm:$0xff]
    %v4968 = vld [vmem:[#allocation2 + $0xb8] sm:$0xff]
    %v4969 = vld [vmem:[#allocation2 + $0xc0] sm:$0xff]
    %v4970 = vld [vmem:[#allocation2 + $0xc8] sm:$0xff]
    %v4971 = vld [vmem:[#allocation2 + $0xd0] sm:$0xff]
    %v4972 = vld [vmem:[#allocation2 + $0xd8] sm:$0xff]
    %v4973 = vld [vmem:[#allocation2 + $0xe0] sm:$0xff]
    %v4974 = vld [vmem:[#allocation2 + $0xe8] sm:$0xff]
    %v4975 = vld [vmem:[#allocation2 + $0xf0] sm:$0xff]
    %v4976 = vld [vmem:[#allocation2 + $0xf8] sm:$0xff]
    %v4977 = vld [vmem:[#allocation2 + $0x100] sm:$0xff]
    %v4978 = vld [vmem:[#allocation2 + $0x108] sm:$0xff]
    %v4979 = vld [vmem:[#allocation2 + $0x110] sm:$0xff]
    %v4980 = vld [vmem:[#allocation2 + $0x118] sm:$0xff]
    %v4981 = vld [vmem:[#allocation2 + $0x120] sm:$0xff]
    %v4982 = vld [vmem:[#allocation2 + $0x128] sm:$0xff]
    %v4983 = vld [vmem:[#allocation2 + $0x130] sm:$0xff]
    %v4984 = vld [vmem:[#allocation2 + $0x138] sm:$0xff]
    %v4985 = vld [vmem:[#allocation2 + $0x140] sm:$0xff]
    %v4986 = vld [vmem:[#allocation2 + $0x148] sm:$0xff]
    %v4987 = vld [vmem:[#allocation2 + $0x150] sm:$0xff]
    %v4988 = vld [vmem:[#allocation2 + $0x158] sm:$0xff]
    %v4989 = vld [vmem:[#allocation2 + $0x160] sm:$0xff]
    %v4990 = vld [vmem:[#allocation2 + $0x168] sm:$0xff]
    %v4991 = vld [vmem:[#allocation2 + $0x170] sm:$0xff]
    %v4992 = vld [vmem:[#allocation2 + $0x178] sm:$0xff]
    %v4993 = vld [vmem:[#allocation2 + $0x180] sm:$0xff]
    %v4994 = vld [vmem:[#allocation2 + $0x188] sm:$0xff]
    %v4995 = vld [vmem:[#allocation2 + $0x190] sm:$0xff]
    %v4996 = vld [vmem:[#allocation2 + $0x198] sm:$0xff]
    %v4997 = vld [vmem:[#allocation2 + $0x1a0] sm:$0xff]
    %v4998 = vld [vmem:[#allocation2 + $0x1a8] sm:$0xff]
    %v4999 = vld [vmem:[#allocation2 + $0x1b0] sm:$0xff]
    %v5000 = vld [vmem:[#allocation2 + $0x1b8] sm:$0xff]
    %v5001 = vld [vmem:[#allocation2 + $0x1c0] sm:$0xff]
    %v5002 = vld [vmem:[#allocation2 + $0x1c8] sm:$0xff]
    %v5003 = vld [vmem:[#allocation2 + $0x1d0] sm:$0xff]
    %v5004 = vld [vmem:[#allocation2 + $0x1d8] sm:$0xff]
    %v5005 = vld [vmem:[#allocation2 + $0x1e0] sm:$0xff]
    %v5006 = vld [vmem:[#allocation2 + $0x1e8] sm:$0xff]
    %v5007 = vld [vmem:[#allocation2 + $0x1f0] sm:$0xff]
    %v5008 = vld [vmem:[#allocation2 + $0x1f8] sm:$0xff]
    %v5009 = vld [vmem:[#allocation2 + $0x200] sm:$0xff]
    %v5010 = vld [vmem:[#allocation2 + $0x208] sm:$0xff]
    %v5011 = vld [vmem:[#allocation2 + $0x210] sm:$0xff]
    %v5012 = vld [vmem:[#allocation2 + $0x218] sm:$0xff]
    %v5013 = vld [vmem:[#allocation2 + $0x220] sm:$0xff]
    %v5014 = vld [vmem:[#allocation2 + $0x228] sm:$0xff]
    %v5015 = vld [vmem:[#allocation2 + $0x230] sm:$0xff]
    %v5016 = vld [vmem:[#allocation2 + $0x238] sm:$0xff]
    %v5017 = vld [vmem:[#allocation2 + $0x240] sm:$0xff]
    %v5018 = vld [vmem:[#allocation2 + $0x248] sm:$0xff]
    %v5019 = vld [vmem:[#allocation2 + $0x250] sm:$0xff]
    %v5020 = vld [vmem:[#allocation2 + $0x258] sm:$0xff]
    %v5021 = vld [vmem:[#allocation2 + $0x260] sm:$0xff]
    %v5022 = vld [vmem:[#allocation2 + $0x268] sm:$0xff]
    %v5023 = vld [vmem:[#allocation2 + $0x270] sm:$0xff]
    %v5024 = vld [vmem:[#allocation2 + $0x278] sm:$0xff]
    %v5025 = vld [vmem:[#allocation2 + $0x280] sm:$0xff]
    %v5026 = vld [vmem:[#allocation2 + $0x288] sm:$0xff]
    %v5027 = vld [vmem:[#allocation2 + $0x290] sm:$0xff]
    %v5028 = vld [vmem:[#allocation2 + $0x298] sm:$0xff]
    %v5029 = vld [vmem:[#allocation2 + $0x2a0] sm:$0xff]
    %v5030 = vld [vmem:[#allocation2 + $0x2a8] sm:$0xff]
    %v5031 = vld [vmem:[#allocation2 + $0x2b0] sm:$0xff]
    %v5032 = vld [vmem:[#allocation2 + $0x2b8] sm:$0xff]
    %v5033 = vld [vmem:[#allocation2 + $0x2c0] sm:$0x3]
    %v5034 = vld [vmem:[#allocation2 + $0x2c8] sm:$0x3]
    %v5035 = vld [vmem:[#allocation2 + $0x2d0] sm:$0x3]
    %v5036 = vld [vmem:[#allocation2 + $0x2d8] sm:$0x3]
    %s5037 = scalar_lea.vmem [#allocation6], 1280
    %v5038 = vld [vmem:[%s5037] sm:$0xff]
    %v5039 = vld [vmem:[%s5037 + $0x8] sm:$0xff]
    %v5040 = vld [vmem:[%s5037 + $0x10] sm:$0xff]
    %v5041 = vld [vmem:[%s5037 + $0x18] sm:$0xff]
    %v5042 = vld [vmem:[%s5037 + $0x20] sm:$0xff]
    %v5043 = vld [vmem:[%s5037 + $0x28] sm:$0xff]
    %v5044 = vld [vmem:[%s5037 + $0x30] sm:$0xff]
    %v5045 = vld [vmem:[%s5037 + $0x38] sm:$0xff]
    %v5046 = vld [vmem:[%s5037 + $0x40] sm:$0xff]
    %v5047 = vld [vmem:[%s5037 + $0x48] sm:$0xff]
    %v5048 = vld [vmem:[%s5037 + $0x50] sm:$0xff]
    %v5049 = vld [vmem:[%s5037 + $0x58] sm:$0xff]
    %v5050 = vld [vmem:[%s5037 + $0x60] sm:$0xff]
    %v5051 = vld [vmem:[%s5037 + $0x68] sm:$0xff]
    %v5052 = vld [vmem:[%s5037 + $0x70] sm:$0xff]
    %v5053 = vld [vmem:[%s5037 + $0x78] sm:$0xff]
    %v5054 = vld [vmem:[%s5037 + $0x80] sm:$0xff]
    %v5055 = vld [vmem:[%s5037 + $0x88] sm:$0xff]
    %v5056 = vld [vmem:[%s5037 + $0x90] sm:$0xff]
    %v5057 = vld [vmem:[%s5037 + $0x98] sm:$0xff]
    %v5058 = vld [vmem:[%s5037 + $0xa0] sm:$0xff]
    %v5059 = vld [vmem:[%s5037 + $0xa8] sm:$0xff]
    %v5060 = vld [vmem:[%s5037 + $0xb0] sm:$0xff]
    %v5061 = vld [vmem:[%s5037 + $0xb8] sm:$0xff]
    %v5062 = vld [vmem:[%s5037 + $0xc0] sm:$0xff]
    %v5063 = vld [vmem:[%s5037 + $0xc8] sm:$0xff]
    %v5064 = vld [vmem:[%s5037 + $0xd0] sm:$0xff]
    %v5065 = vld [vmem:[%s5037 + $0xd8] sm:$0xff]
    %v5066 = vld [vmem:[%s5037 + $0xe0] sm:$0xff]
    %v5067 = vld [vmem:[%s5037 + $0xe8] sm:$0xff]
    %v5068 = vld [vmem:[%s5037 + $0xf0] sm:$0xff]
    %v5069 = vld [vmem:[%s5037 + $0xf8] sm:$0xff]
    %vm5070 = vcmask 1045504
    %v5071 = vrot.slane %v3421, 2
    %v5072 = vrot.slane %v3422, 2
    %v5073 = vsel %vm5070, %v5071, %v5072
    %v5074 = vrot.slane %v3423, 2
    %v5075 = vsel %vm5070, %v5072, %v5074
    %v5076 = vrot.slane %v3424, 2
    %v5077 = vsel %vm5070, %v5074, %v5076
    %v5078 = vrot.slane %v3425, 2
    %v5079 = vsel %vm5070, %v5076, %v5078
    %v5080 = vrot.slane %v3426, 2
    %v5081 = vsel %vm5070, %v5078, %v5080
    %v5082 = vrot.slane %v3427, 2
    %v5083 = vsel %vm5070, %v5080, %v5082
    %v5084 = vrot.slane %v3428, 2
    %v5085 = vsel %vm5070, %v5082, %v5084
    %v5086 = vrot.slane %v3429, 2
    %v5087 = vsel %vm5070, %v5084, %v5086
    %v5088 = vrot.slane %v3430, 2
    %v5089 = vsel %vm5070, %v5086, %v5088
    %v5090 = vrot.slane %v3431, 2
    %v5091 = vsel %vm5070, %v5088, %v5090
    %v5092 = vrot.slane %v3432, 2
    %v5093 = vsel %vm5070, %v5090, %v5092
    %v5138 = vunpack.c.l.b16 %v5038
    %v5139 = vunpack.c.h.b16 %v5038
    %v5140 = vunpack.c.l.b16 %v5039
    %v5141 = vunpack.c.h.b16 %v5039
    %v5142 = vunpack.c.l.b16 %v5040
    %v5143 = vunpack.c.h.b16 %v5040
    %v5144 = vunpack.c.l.b16 %v5041
    %v5145 = vunpack.c.h.b16 %v5041
    %v5146 = vunpack.c.l.b16 %v5042
    %v5147 = vunpack.c.h.b16 %v5042
    %v5148 = vunpack.c.l.b16 %v5043
    %v5149 = vunpack.c.h.b16 %v5043
    %v5150 = vunpack.c.l.b16 %v5044
    %v5151 = vunpack.c.h.b16 %v5044
    %v5152 = vunpack.c.l.b16 %v5045
    %v5153 = vunpack.c.h.b16 %v5045
    %v5154 = vunpack.c.l.b16 %v5046
    %v5155 = vunpack.c.h.b16 %v5046
    %v5156 = vunpack.c.l.b16 %v5047
    %v5157 = vunpack.c.h.b16 %v5047
    %v5158 = vunpack.c.l.b16 %v5048
    %v5159 = vunpack.c.h.b16 %v5048
    %v5160 = vunpack.c.l.b16 %v5049
    %v5161 = vunpack.c.h.b16 %v5049
    %v5162 = vunpack.c.l.b16 %v5050
    %v5163 = vunpack.c.h.b16 %v5050
    %v5164 = vunpack.c.l.b16 %v5051
    %v5165 = vunpack.c.h.b16 %v5051
    %v5166 = vunpack.c.l.b16 %v5052
    %v5167 = vunpack.c.h.b16 %v5052
    %v5168 = vunpack.c.l.b16 %v5053
    %v5169 = vunpack.c.h.b16 %v5053
    %v5170 = vunpack.c.l.b16 %v5054
    %v5171 = vunpack.c.h.b16 %v5054
    %v5172 = vunpack.c.l.b16 %v5055
    %v5173 = vunpack.c.h.b16 %v5055
    %v5174 = vunpack.c.l.b16 %v5056
    %v5175 = vunpack.c.h.b16 %v5056
    %v5176 = vunpack.c.l.b16 %v5057
    %v5177 = vunpack.c.h.b16 %v5057
    %v5178 = vunpack.c.l.b16 %v5058
    %v5179 = vunpack.c.h.b16 %v5058
    %v5180 = vunpack.c.l.b16 %v5059
    %v5181 = vunpack.c.h.b16 %v5059
    %v5182 = vunpack.c.l.b16 %v5060
    %v5183 = vunpack.c.h.b16 %v5060
    %v5184 = vunpack.c.l.b16 %v5061
    %v5185 = vunpack.c.h.b16 %v5061
    %v5186 = vunpack.c.l.b16 %v5062
    %v5187 = vunpack.c.h.b16 %v5062
    %v5188 = vunpack.c.l.b16 %v5063
    %v5189 = vunpack.c.h.b16 %v5063
    %v5190 = vunpack.c.l.b16 %v5064
    %v5191 = vunpack.c.h.b16 %v5064
    %v5192 = vunpack.c.l.b16 %v5065
    %v5193 = vunpack.c.h.b16 %v5065
    %v5194 = vunpack.c.l.b16 %v5066
    %v5195 = vunpack.c.h.b16 %v5066
    %v5196 = vunpack.c.l.b16 %v5067
    %v5197 = vunpack.c.h.b16 %v5067
    %v5198 = vunpack.c.l.b16 %v5068
    %v5199 = vunpack.c.h.b16 %v5068
    %v5200 = vunpack.c.l.b16 %v5069
    %v5201 = vunpack.c.h.b16 %v5069
    %v5202 = vpack.c.b16 %v5142, %v5138
    %v5203 = vpack.c.b16 %v5143, %v5139
    %v5204 = vpack.c.b16 %v5144, %v5140
    %v5205 = vpack.c.b16 %v5145, %v5141
    %v5206 = vpack.c.b16 %v5150, %v5146
    %v5207 = vpack.c.b16 %v5151, %v5147
    %v5208 = vpack.c.b16 %v5152, %v5148
    %v5209 = vpack.c.b16 %v5153, %v5149
    %v5210 = vpack.c.b16 %v5158, %v5154
    %v5211 = vpack.c.b16 %v5159, %v5155
    %v5212 = vpack.c.b16 %v5160, %v5156
    %v5213 = vpack.c.b16 %v5161, %v5157
    %v5214 = vpack.c.b16 %v5166, %v5162
    %v5215 = vpack.c.b16 %v5167, %v5163
    %v5216 = vpack.c.b16 %v5168, %v5164
    %v5217 = vpack.c.b16 %v5169, %v5165
    %v5218 = vpack.c.b16 %v5174, %v5170
    %v5219 = vpack.c.b16 %v5175, %v5171
    %v5220 = vpack.c.b16 %v5176, %v5172
    %v5221 = vpack.c.b16 %v5177, %v5173
    %v5222 = vpack.c.b16 %v5182, %v5178
    %v5223 = vpack.c.b16 %v5183, %v5179
    %v5224 = vpack.c.b16 %v5184, %v5180
    %v5225 = vpack.c.b16 %v5185, %v5181
    %v5226 = vpack.c.b16 %v5190, %v5186
    %v5227 = vpack.c.b16 %v5191, %v5187
    %v5228 = vpack.c.b16 %v5192, %v5188
    %v5229 = vpack.c.b16 %v5193, %v5189
    %v5230 = vpack.c.b16 %v5198, %v5194
    %v5231 = vpack.c.b16 %v5199, %v5195
    %v5232 = vpack.c.b16 %v5200, %v5196
    %v5233 = vpack.c.b16 %v5201, %v5197
    %5266 = vmatpush.bf16.msra.mxu0 %v5230
    %5267 = vmatpush.bf16.msra.mxu0 %v5226
    %5268 = vmatpush.bf16.msra.mxu0 %v5222
    %5269 = vmatpush.bf16.msra.mxu0 %v5218
    %5270 = vmatpush.bf16.msra.mxu0 %v5214
    %5271 = vmatpush.bf16.msra.mxu0 %v5210
    %5272 = vmatpush.bf16.msra.mxu0 %v5206
    %5273 = vmatpush.bf16.msra.mxu0 %v5202
    %5274 = vmatmul.bf16.gmra.mxu0 %v5073
    %v5275 = vpop.f32.mrf.mxu0
    %v5276 = vadd.f32 0.0, %v5275
    %v5277 = vpop.f32.mrf.mxu0
    %v5278 = vadd.f32 0.0, %v5277
    %5279 = vmatmul.bf16.gmra.mxu0 %v5075
    %v5280 = vpop.f32.mrf.mxu0
    %v5281 = vadd.f32 0.0, %v5280
    %v5282 = vpop.f32.mrf.mxu0
    %v5283 = vadd.f32 0.0, %v5282
    %5284 = vmatmul.bf16.gmra.mxu0 %v5077
    %v5285 = vpop.f32.mrf.mxu0
    %v5286 = vadd.f32 0.0, %v5285
    %v5287 = vpop.f32.mrf.mxu0
    %v5288 = vadd.f32 0.0, %v5287
    %5289 = vmatmul.bf16.gmra.mxu0 %v5079
    %v5290 = vpop.f32.mrf.mxu0
    %v5291 = vadd.f32 0.0, %v5290
    %v5292 = vpop.f32.mrf.mxu0
    %v5293 = vadd.f32 0.0, %v5292
    %5294 = vmatmul.bf16.gmra.mxu0 %v5081
    %v5295 = vpop.f32.mrf.mxu0
    %v5296 = vadd.f32 0.0, %v5295
    %v5297 = vpop.f32.mrf.mxu0
    %v5298 = vadd.f32 0.0, %v5297
    %5299 = vmatmul.bf16.gmra.mxu0 %v5083
    %v5300 = vpop.f32.mrf.mxu0
    %v5301 = vadd.f32 0.0, %v5300
    %v5302 = vpop.f32.mrf.mxu0
    %v5303 = vadd.f32 0.0, %v5302
    %5304 = vmatmul.bf16.gmra.mxu0 %v5085
    %v5305 = vpop.f32.mrf.mxu0
    %v5306 = vadd.f32 0.0, %v5305
    %v5307 = vpop.f32.mrf.mxu0
    %v5308 = vadd.f32 0.0, %v5307
    %5309 = vmatmul.bf16.gmra.mxu0 %v5087
    %v5310 = vpop.f32.mrf.mxu0
    %v5311 = vadd.f32 0.0, %v5310
    %v5312 = vpop.f32.mrf.mxu0
    %v5313 = vadd.f32 0.0, %v5312
    %5314 = vmatmul.bf16.gmra.mxu0 %v5089
    %v5315 = vpop.f32.mrf.mxu0
    %v5316 = vadd.f32 0.0, %v5315
    %v5317 = vpop.f32.mrf.mxu0
    %v5318 = vadd.f32 0.0, %v5317
    %5319 = vmatmul.bf16.gmra.mxu0 %v5091
    %v5320 = vpop.f32.mrf.mxu0
    %v5321 = vadd.f32 0.0, %v5320
    %v5322 = vpop.f32.mrf.mxu0
    %v5323 = vadd.f32 0.0, %v5322
    %5324 = vmatmul.bf16.gmra.mxu0 %v5093
    %v5325 = vpop.f32.mrf.mxu0
    %v5326 = vadd.f32 0.0, %v5325
    %v5327 = vpop.f32.mrf.mxu0
    %v5328 = vadd.f32 0.0, %v5327
    %5329 = vmatmul.bf16.gmra.mxu0 %v5092
    %v5330 = vpop.f32.mrf.mxu0
    %v5331 = vadd.f32 0.0, %v5330
    %v5332 = vpop.f32.mrf.mxu0
    %5333 = vdwg.mxu0
    %5334 = vmatpush.bf16.msra.mxu0 %v5231
    %5335 = vmatpush.bf16.msra.mxu0 %v5227
    %5336 = vmatpush.bf16.msra.mxu0 %v5223
    %5337 = vmatpush.bf16.msra.mxu0 %v5219
    %5338 = vmatpush.bf16.msra.mxu0 %v5215
    %5339 = vmatpush.bf16.msra.mxu0 %v5211
    %5340 = vmatpush.bf16.msra.mxu0 %v5207
    %5341 = vmatpush.bf16.msra.mxu0 %v5203
    %5342 = vmatmul.bf16.gmra.mxu0 %v5073
    %v5343 = vpop.f32.mrf.mxu0
    %v5344 = vadd.f32 0.0, %v5343
    %v5345 = vpop.f32.mrf.mxu0
    %v5346 = vadd.f32 0.0, %v5345
    %5347 = vmatmul.bf16.gmra.mxu0 %v5075
    %v5348 = vpop.f32.mrf.mxu0
    %v5349 = vadd.f32 0.0, %v5348
    %v5350 = vpop.f32.mrf.mxu0
    %v5351 = vadd.f32 0.0, %v5350
    %5352 = vmatmul.bf16.gmra.mxu0 %v5077
    %v5353 = vpop.f32.mrf.mxu0
    %v5354 = vadd.f32 0.0, %v5353
    %v5355 = vpop.f32.mrf.mxu0
    %v5356 = vadd.f32 0.0, %v5355
    %5357 = vmatmul.bf16.gmra.mxu0 %v5079
    %v5358 = vpop.f32.mrf.mxu0
    %v5359 = vadd.f32 0.0, %v5358
    %v5360 = vpop.f32.mrf.mxu0
    %v5361 = vadd.f32 0.0, %v5360
    %5362 = vmatmul.bf16.gmra.mxu0 %v5081
    %v5363 = vpop.f32.mrf.mxu0
    %v5364 = vadd.f32 0.0, %v5363
    %v5365 = vpop.f32.mrf.mxu0
    %v5366 = vadd.f32 0.0, %v5365
    %5367 = vmatmul.bf16.gmra.mxu0 %v5083
    %v5368 = vpop.f32.mrf.mxu0
    %v5369 = vadd.f32 0.0, %v5368
    %v5370 = vpop.f32.mrf.mxu0
    %v5371 = vadd.f32 0.0, %v5370
    %5372 = vmatmul.bf16.gmra.mxu0 %v5085
    %v5373 = vpop.f32.mrf.mxu0
    %v5374 = vadd.f32 0.0, %v5373
    %v5375 = vpop.f32.mrf.mxu0
    %v5376 = vadd.f32 0.0, %v5375
    %5377 = vmatmul.bf16.gmra.mxu0 %v5087
    %v5378 = vpop.f32.mrf.mxu0
    %v5379 = vadd.f32 0.0, %v5378
    %v5380 = vpop.f32.mrf.mxu0
    %v5381 = vadd.f32 0.0, %v5380
    %5382 = vmatmul.bf16.gmra.mxu0 %v5089
    %v5383 = vpop.f32.mrf.mxu0
    %v5384 = vadd.f32 0.0, %v5383
    %v5385 = vpop.f32.mrf.mxu0
    %v5386 = vadd.f32 0.0, %v5385
    %5387 = vmatmul.bf16.gmra.mxu0 %v5091
    %v5388 = vpop.f32.mrf.mxu0
    %v5389 = vadd.f32 0.0, %v5388
    %v5390 = vpop.f32.mrf.mxu0
    %v5391 = vadd.f32 0.0, %v5390
    %5392 = vmatmul.bf16.gmra.mxu0 %v5093
    %v5393 = vpop.f32.mrf.mxu0
    %v5394 = vadd.f32 0.0, %v5393
    %v5395 = vpop.f32.mrf.mxu0
    %v5396 = vadd.f32 0.0, %v5395
    %5397 = vmatmul.bf16.gmra.mxu0 %v5092
    %v5398 = vpop.f32.mrf.mxu0
    %v5399 = vadd.f32 0.0, %v5398
    %v5400 = vpop.f32.mrf.mxu0
    %5401 = vdwg.mxu0
    %5402 = vmatpush.bf16.msra.mxu0 %v5232
    %5403 = vmatpush.bf16.msra.mxu0 %v5228
    %5404 = vmatpush.bf16.msra.mxu0 %v5224
    %5405 = vmatpush.bf16.msra.mxu0 %v5220
    %5406 = vmatpush.bf16.msra.mxu0 %v5216
    %5407 = vmatpush.bf16.msra.mxu0 %v5212
    %5408 = vmatpush.bf16.msra.mxu0 %v5208
    %5409 = vmatpush.bf16.msra.mxu0 %v5204
    %5410 = vmatmul.bf16.gmra.mxu0 %v5073
    %v5411 = vpop.f32.mrf.mxu0
    %v5412 = vadd.f32 0.0, %v5411
    %v5413 = vpop.f32.mrf.mxu0
    %v5414 = vadd.f32 0.0, %v5413
    %5415 = vmatmul.bf16.gmra.mxu0 %v5075
    %v5416 = vpop.f32.mrf.mxu0
    %v5417 = vadd.f32 0.0, %v5416
    %v5418 = vpop.f32.mrf.mxu0
    %v5419 = vadd.f32 0.0, %v5418
    %5420 = vmatmul.bf16.gmra.mxu0 %v5077
    %v5421 = vpop.f32.mrf.mxu0
    %v5422 = vadd.f32 0.0, %v5421
    %v5423 = vpop.f32.mrf.mxu0
    %v5424 = vadd.f32 0.0, %v5423
    %5425 = vmatmul.bf16.gmra.mxu0 %v5079
    %v5426 = vpop.f32.mrf.mxu0
    %v5427 = vadd.f32 0.0, %v5426
    %v5428 = vpop.f32.mrf.mxu0
    %v5429 = vadd.f32 0.0, %v5428
    %5430 = vmatmul.bf16.gmra.mxu0 %v5081
    %v5431 = vpop.f32.mrf.mxu0
    %v5432 = vadd.f32 0.0, %v5431
    %v5433 = vpop.f32.mrf.mxu0
    %v5434 = vadd.f32 0.0, %v5433
    %5435 = vmatmul.bf16.gmra.mxu0 %v5083
    %v5436 = vpop.f32.mrf.mxu0
    %v5437 = vadd.f32 0.0, %v5436
    %v5438 = vpop.f32.mrf.mxu0
    %v5439 = vadd.f32 0.0, %v5438
    %5440 = vmatmul.bf16.gmra.mxu0 %v5085
    %v5441 = vpop.f32.mrf.mxu0
    %v5442 = vadd.f32 0.0, %v5441
    %v5443 = vpop.f32.mrf.mxu0
    %v5444 = vadd.f32 0.0, %v5443
    %5445 = vmatmul.bf16.gmra.mxu0 %v5087
    %v5446 = vpop.f32.mrf.mxu0
    %v5447 = vadd.f32 0.0, %v5446
    %v5448 = vpop.f32.mrf.mxu0
    %v5449 = vadd.f32 0.0, %v5448
    %5450 = vmatmul.bf16.gmra.mxu0 %v5089
    %v5451 = vpop.f32.mrf.mxu0
    %v5452 = vadd.f32 0.0, %v5451
    %v5453 = vpop.f32.mrf.mxu0
    %v5454 = vadd.f32 0.0, %v5453
    %5455 = vmatmul.bf16.gmra.mxu0 %v5091
    %v5456 = vpop.f32.mrf.mxu0
    %v5457 = vadd.f32 0.0, %v5456
    %v5458 = vpop.f32.mrf.mxu0
    %v5459 = vadd.f32 0.0, %v5458
    %5460 = vmatmul.bf16.gmra.mxu0 %v5093
    %v5461 = vpop.f32.mrf.mxu0
    %v5462 = vadd.f32 0.0, %v5461
    %v5463 = vpop.f32.mrf.mxu0
    %v5464 = vadd.f32 0.0, %v5463
    %5465 = vmatmul.bf16.gmra.mxu0 %v5092
    %v5466 = vpop.f32.mrf.mxu0
    %v5467 = vadd.f32 0.0, %v5466
    %v5468 = vpop.f32.mrf.mxu0
    %5469 = vdwg.mxu0
    %5470 = vmatpush.bf16.msra.mxu0 %v5233
    %5471 = vmatpush.bf16.msra.mxu0 %v5229
    %5472 = vmatpush.bf16.msra.mxu0 %v5225
    %5473 = vmatpush.bf16.msra.mxu0 %v5221
    %5474 = vmatpush.bf16.msra.mxu0 %v5217
    %5475 = vmatpush.bf16.msra.mxu0 %v5213
    %5476 = vmatpush.bf16.msra.mxu0 %v5209
    %5477 = vmatpush.bf16.msra.mxu0 %v5205
    %5478 = vmatmul.bf16.gmra.mxu0 %v5073
    %v5479 = vpop.f32.mrf.mxu0
    %v5480 = vadd.f32 0.0, %v5479
    %v5481 = vpop.f32.mrf.mxu0
    %v5482 = vadd.f32 0.0, %v5481
    %5483 = vmatmul.bf16.gmra.mxu0 %v5075
    %v5484 = vpop.f32.mrf.mxu0
    %v5485 = vadd.f32 0.0, %v5484
    %v5486 = vpop.f32.mrf.mxu0
    %v5487 = vadd.f32 0.0, %v5486
    %5488 = vmatmul.bf16.gmra.mxu0 %v5077
    %v5489 = vpop.f32.mrf.mxu0
    %v5490 = vadd.f32 0.0, %v5489
    %v5491 = vpop.f32.mrf.mxu0
    %v5492 = vadd.f32 0.0, %v5491
    %5493 = vmatmul.bf16.gmra.mxu0 %v5079
    %v5494 = vpop.f32.mrf.mxu0
    %v5495 = vadd.f32 0.0, %v5494
    %v5496 = vpop.f32.mrf.mxu0
    %v5497 = vadd.f32 0.0, %v5496
    %5498 = vmatmul.bf16.gmra.mxu0 %v5081
    %v5499 = vpop.f32.mrf.mxu0
    %v5500 = vadd.f32 0.0, %v5499
    %v5501 = vpop.f32.mrf.mxu0
    %v5502 = vadd.f32 0.0, %v5501
    %5503 = vmatmul.bf16.gmra.mxu0 %v5083
    %v5504 = vpop.f32.mrf.mxu0
    %v5505 = vadd.f32 0.0, %v5504
    %v5506 = vpop.f32.mrf.mxu0
    %v5507 = vadd.f32 0.0, %v5506
    %5508 = vmatmul.bf16.gmra.mxu0 %v5085
    %v5509 = vpop.f32.mrf.mxu0
    %v5510 = vadd.f32 0.0, %v5509
    %v5511 = vpop.f32.mrf.mxu0
    %v5512 = vadd.f32 0.0, %v5511
    %5513 = vmatmul.bf16.gmra.mxu0 %v5087
    %v5514 = vpop.f32.mrf.mxu0
    %v5515 = vadd.f32 0.0, %v5514
    %v5516 = vpop.f32.mrf.mxu0
    %v5517 = vadd.f32 0.0, %v5516
    %5518 = vmatmul.bf16.gmra.mxu0 %v5089
    %v5519 = vpop.f32.mrf.mxu0
    %v5520 = vadd.f32 0.0, %v5519
    %v5521 = vpop.f32.mrf.mxu0
    %v5522 = vadd.f32 0.0, %v5521
    %5523 = vmatmul.bf16.gmra.mxu0 %v5091
    %v5524 = vpop.f32.mrf.mxu0
    %v5525 = vadd.f32 0.0, %v5524
    %v5526 = vpop.f32.mrf.mxu0
    %v5527 = vadd.f32 0.0, %v5526
    %5528 = vmatmul.bf16.gmra.mxu0 %v5093
    %v5529 = vpop.f32.mrf.mxu0
    %v5530 = vadd.f32 0.0, %v5529
    %v5531 = vpop.f32.mrf.mxu0
    %v5532 = vadd.f32 0.0, %v5531
    %5533 = vmatmul.bf16.gmra.mxu0 %v5092
    %v5534 = vpop.f32.mrf.mxu0
    %v5535 = vadd.f32 0.0, %v5534
    %v5536 = vpop.f32.mrf.mxu0
    %5537 = vdwg.mxu0
    %v5538 = vadd.f32 %v4945, %v5276
    %v5539 = vadd.f32 %v4946, %v5344
    %v5540 = vadd.f32 %v4947, %v5412
    %v5541 = vadd.f32 %v4948, %v5480
    %v5542 = vadd.f32 %v4949, %v5278
    %v5543 = vadd.f32 %v4950, %v5346
    %v5544 = vadd.f32 %v4951, %v5414
    %v5545 = vadd.f32 %v4952, %v5482
    %v5546 = vadd.f32 %v4953, %v5281
    %v5547 = vadd.f32 %v4954, %v5349
    %v5548 = vadd.f32 %v4955, %v5417
    %v5549 = vadd.f32 %v4956, %v5485
    %v5550 = vadd.f32 %v4957, %v5283
    %v5551 = vadd.f32 %v4958, %v5351
    %v5552 = vadd.f32 %v4959, %v5419
    %v5553 = vadd.f32 %v4960, %v5487
    %v5554 = vadd.f32 %v4961, %v5286
    %v5555 = vadd.f32 %v4962, %v5354
    %v5556 = vadd.f32 %v4963, %v5422
    %v5557 = vadd.f32 %v4964, %v5490
    %v5558 = vadd.f32 %v4965, %v5288
    %v5559 = vadd.f32 %v4966, %v5356
    %v5560 = vadd.f32 %v4967, %v5424
    %v5561 = vadd.f32 %v4968, %v5492
    %v5562 = vadd.f32 %v4969, %v5291
    %v5563 = vadd.f32 %v4970, %v5359
    %v5564 = vadd.f32 %v4971, %v5427
    %v5565 = vadd.f32 %v4972, %v5495
    %v5566 = vadd.f32 %v4973, %v5293
    %v5567 = vadd.f32 %v4974, %v5361
    %v5568 = vadd.f32 %v4975, %v5429
    %v5569 = vadd.f32 %v4976, %v5497
    %v5570 = vadd.f32 %v4977, %v5296
    %v5571 = vadd.f32 %v4978, %v5364
    %v5572 = vadd.f32 %v4979, %v5432
    %v5573 = vadd.f32 %v4980, %v5500
    %v5574 = vadd.f32 %v4981, %v5298
    %v5575 = vadd.f32 %v4982, %v5366
    %v5576 = vadd.f32 %v4983, %v5434
    %v5577 = vadd.f32 %v4984, %v5502
    %v5578 = vadd.f32 %v4985, %v5301
    %v5579 = vadd.f32 %v4986, %v5369
    %v5580 = vadd.f32 %v4987, %v5437
    %v5581 = vadd.f32 %v4988, %v5505
    %v5582 = vadd.f32 %v4989, %v5303
    %v5583 = vadd.f32 %v4990, %v5371
    %v5584 = vadd.f32 %v4991, %v5439
    %v5585 = vadd.f32 %v4992, %v5507
    %v5586 = vadd.f32 %v4993, %v5306
    %v5587 = vadd.f32 %v4994, %v5374
    %v5588 = vadd.f32 %v4995, %v5442
    %v5589 = vadd.f32 %v4996, %v5510
    %v5590 = vadd.f32 %v4997, %v5308
    %v5591 = vadd.f32 %v4998, %v5376
    %v5592 = vadd.f32 %v4999, %v5444
    %v5593 = vadd.f32 %v5000, %v5512
    %v5594 = vadd.f32 %v5001, %v5311
    %v5595 = vadd.f32 %v5002, %v5379
    %v5596 = vadd.f32 %v5003, %v5447
    %v5597 = vadd.f32 %v5004, %v5515
    %v5598 = vadd.f32 %v5005, %v5313
    %v5599 = vadd.f32 %v5006, %v5381
    %v5600 = vadd.f32 %v5007, %v5449
    %v5601 = vadd.f32 %v5008, %v5517
    %v5602 = vadd.f32 %v5009, %v5316
    %v5603 = vadd.f32 %v5010, %v5384
    %v5604 = vadd.f32 %v5011, %v5452
    %v5605 = vadd.f32 %v5012, %v5520
    %v5606 = vadd.f32 %v5013, %v5318
    %v5607 = vadd.f32 %v5014, %v5386
    %v5608 = vadd.f32 %v5015, %v5454
    %v5609 = vadd.f32 %v5016, %v5522
    %v5610 = vadd.f32 %v5017, %v5321
    %v5611 = vadd.f32 %v5018, %v5389
    %v5612 = vadd.f32 %v5019, %v5457
    %v5613 = vadd.f32 %v5020, %v5525
    %v5614 = vadd.f32 %v5021, %v5323
    %v5615 = vadd.f32 %v5022, %v5391
    %v5616 = vadd.f32 %v5023, %v5459
    %v5617 = vadd.f32 %v5024, %v5527
    %v5618 = vadd.f32 %v5025, %v5326
    %v5619 = vadd.f32 %v5026, %v5394
    %v5620 = vadd.f32 %v5027, %v5462
    %v5621 = vadd.f32 %v5028, %v5530
    %v5622 = vadd.f32 %v5029, %v5328
    %v5623 = vadd.f32 %v5030, %v5396
    %v5624 = vadd.f32 %v5031, %v5464
    %v5625 = vadd.f32 %v5032, %v5532
    %v5626 = vadd.f32 %v5033, %v5331
    %v5627 = vadd.f32 %v5034, %v5399
    %v5628 = vadd.f32 %v5035, %v5467
    %v5629 = vadd.f32 %v5036, %v5535
    %5630 = vst [vmem:[#allocation2] sm:$0xff] %v5538
    %5631 = vst [vmem:[#allocation2 + $0x8] sm:$0xff] %v5539
    %5632 = vst [vmem:[#allocation2 + $0x10] sm:$0xff] %v5540
    %5633 = vst [vmem:[#allocation2 + $0x18] sm:$0xff] %v5541
    %5634 = vst [vmem:[#allocation2 + $0x20] sm:$0xff] %v5542
    %5635 = vst [vmem:[#allocation2 + $0x28] sm:$0xff] %v5543
    %5636 = vst [vmem:[#allocation2 + $0x30] sm:$0xff] %v5544
    %5637 = vst [vmem:[#allocation2 + $0x38] sm:$0xff] %v5545
    %5638 = vst [vmem:[#allocation2 + $0x40] sm:$0xff] %v5546
    %5639 = vst [vmem:[#allocation2 + $0x48] sm:$0xff] %v5547
    %5640 = vst [vmem:[#allocation2 + $0x50] sm:$0xff] %v5548
    %5641 = vst [vmem:[#allocation2 + $0x58] sm:$0xff] %v5549
    %5642 = vst [vmem:[#allocation2 + $0x60] sm:$0xff] %v5550
    %5643 = vst [vmem:[#allocation2 + $0x68] sm:$0xff] %v5551
    %5644 = vst [vmem:[#allocation2 + $0x70] sm:$0xff] %v5552
    %5645 = vst [vmem:[#allocation2 + $0x78] sm:$0xff] %v5553
    %5646 = vst [vmem:[#allocation2 + $0x80] sm:$0xff] %v5554
    %5647 = vst [vmem:[#allocation2 + $0x88] sm:$0xff] %v5555
    %5648 = vst [vmem:[#allocation2 + $0x90] sm:$0xff] %v5556
    %5649 = vst [vmem:[#allocation2 + $0x98] sm:$0xff] %v5557
    %5650 = vst [vmem:[#allocation2 + $0xa0] sm:$0xff] %v5558
    %5651 = vst [vmem:[#allocation2 + $0xa8] sm:$0xff] %v5559
    %5652 = vst [vmem:[#allocation2 + $0xb0] sm:$0xff] %v5560
    %5653 = vst [vmem:[#allocation2 + $0xb8] sm:$0xff] %v5561
    %5654 = vst [vmem:[#allocation2 + $0xc0] sm:$0xff] %v5562
    %5655 = vst [vmem:[#allocation2 + $0xc8] sm:$0xff] %v5563
    %5656 = vst [vmem:[#allocation2 + $0xd0] sm:$0xff] %v5564
    %5657 = vst [vmem:[#allocation2 + $0xd8] sm:$0xff] %v5565
    %5658 = vst [vmem:[#allocation2 + $0xe0] sm:$0xff] %v5566
    %5659 = vst [vmem:[#allocation2 + $0xe8] sm:$0xff] %v5567
    %5660 = vst [vmem:[#allocation2 + $0xf0] sm:$0xff] %v5568
    %5661 = vst [vmem:[#allocation2 + $0xf8] sm:$0xff] %v5569
    %5662 = vst [vmem:[#allocation2 + $0x100] sm:$0xff] %v5570
    %5663 = vst [vmem:[#allocation2 + $0x108] sm:$0xff] %v5571
    %5664 = vst [vmem:[#allocation2 + $0x110] sm:$0xff] %v5572
    %5665 = vst [vmem:[#allocation2 + $0x118] sm:$0xff] %v5573
    %5666 = vst [vmem:[#allocation2 + $0x120] sm:$0xff] %v5574
    %5667 = vst [vmem:[#allocation2 + $0x128] sm:$0xff] %v5575
    %5668 = vst [vmem:[#allocation2 + $0x130] sm:$0xff] %v5576
    %5669 = vst [vmem:[#allocation2 + $0x138] sm:$0xff] %v5577
    %5670 = vst [vmem:[#allocation2 + $0x140] sm:$0xff] %v5578
    %5671 = vst [vmem:[#allocation2 + $0x148] sm:$0xff] %v5579
    %5672 = vst [vmem:[#allocation2 + $0x150] sm:$0xff] %v5580
    %5673 = vst [vmem:[#allocation2 + $0x158] sm:$0xff] %v5581
    %5674 = vst [vmem:[#allocation2 + $0x160] sm:$0xff] %v5582
    %5675 = vst [vmem:[#allocation2 + $0x168] sm:$0xff] %v5583
    %5676 = vst [vmem:[#allocation2 + $0x170] sm:$0xff] %v5584
    %5677 = vst [vmem:[#allocation2 + $0x178] sm:$0xff] %v5585
    %5678 = vst [vmem:[#allocation2 + $0x180] sm:$0xff] %v5586
    %5679 = vst [vmem:[#allocation2 + $0x188] sm:$0xff] %v5587
    %5680 = vst [vmem:[#allocation2 + $0x190] sm:$0xff] %v5588
    %5681 = vst [vmem:[#allocation2 + $0x198] sm:$0xff] %v5589
    %5682 = vst [vmem:[#allocation2 + $0x1a0] sm:$0xff] %v5590
    %5683 = vst [vmem:[#allocation2 + $0x1a8] sm:$0xff] %v5591
    %5684 = vst [vmem:[#allocation2 + $0x1b0] sm:$0xff] %v5592
    %5685 = vst [vmem:[#allocation2 + $0x1b8] sm:$0xff] %v5593
    %5686 = vst [vmem:[#allocation2 + $0x1c0] sm:$0xff] %v5594
    %5687 = vst [vmem:[#allocation2 + $0x1c8] sm:$0xff] %v5595
    %5688 = vst [vmem:[#allocation2 + $0x1d0] sm:$0xff] %v5596
    %5689 = vst [vmem:[#allocation2 + $0x1d8] sm:$0xff] %v5597
    %5690 = vst [vmem:[#allocation2 + $0x1e0] sm:$0xff] %v5598
    %5691 = vst [vmem:[#allocation2 + $0x1e8] sm:$0xff] %v5599
    %5692 = vst [vmem:[#allocation2 + $0x1f0] sm:$0xff] %v5600
    %5693 = vst [vmem:[#allocation2 + $0x1f8] sm:$0xff] %v5601
    %5694 = vst [vmem:[#allocation2 + $0x200] sm:$0xff] %v5602
    %5695 = vst [vmem:[#allocation2 + $0x208] sm:$0xff] %v5603
    %5696 = vst [vmem:[#allocation2 + $0x210] sm:$0xff] %v5604
    %5697 = vst [vmem:[#allocation2 + $0x218] sm:$0xff] %v5605
    %5698 = vst [vmem:[#allocation2 + $0x220] sm:$0xff] %v5606
    %5699 = vst [vmem:[#allocation2 + $0x228] sm:$0xff] %v5607
    %5700 = vst [vmem:[#allocation2 + $0x230] sm:$0xff] %v5608
    %5701 = vst [vmem:[#allocation2 + $0x238] sm:$0xff] %v5609
    %5702 = vst [vmem:[#allocation2 + $0x240] sm:$0xff] %v5610
    %5703 = vst [vmem:[#allocation2 + $0x248] sm:$0xff] %v5611
    %5704 = vst [vmem:[#allocation2 + $0x250] sm:$0xff] %v5612
    %5705 = vst [vmem:[#allocation2 + $0x258] sm:$0xff] %v5613
    %5706 = vst [vmem:[#allocation2 + $0x260] sm:$0xff] %v5614
    %5707 = vst [vmem:[#allocation2 + $0x268] sm:$0xff] %v5615
    %5708 = vst [vmem:[#allocation2 + $0x270] sm:$0xff] %v5616
    %5709 = vst [vmem:[#allocation2 + $0x278] sm:$0xff] %v5617
    %5710 = vst [vmem:[#allocation2 + $0x280] sm:$0xff] %v5618
    %5711 = vst [vmem:[#allocation2 + $0x288] sm:$0xff] %v5619
    %5712 = vst [vmem:[#allocation2 + $0x290] sm:$0xff] %v5620
    %5713 = vst [vmem:[#allocation2 + $0x298] sm:$0xff] %v5621
    %5714 = vst [vmem:[#allocation2 + $0x2a0] sm:$0xff] %v5622
    %5715 = vst [vmem:[#allocation2 + $0x2a8] sm:$0xff] %v5623
    %5716 = vst [vmem:[#allocation2 + $0x2b0] sm:$0xff] %v5624
    %5717 = vst [vmem:[#allocation2 + $0x2b8] sm:$0xff] %v5625
    %5718 = vst [vmem:[#allocation2 + $0x2c0] sm:$0x3] %v5626
    %5719 = vst [vmem:[#allocation2 + $0x2c8] sm:$0x3] %v5627
    %5720 = vst [vmem:[#allocation2 + $0x2d0] sm:$0x3] %v5628
    %5721 = vst [vmem:[#allocation2 + $0x2d8] sm:$0x3] %v5629
    %v5722 = vld [vmem:[#allocation2] sm:$0xff]
    %v5723 = vld [vmem:[#allocation2 + $0x8] sm:$0xff]
    %v5724 = vld [vmem:[#allocation2 + $0x10] sm:$0xff]
    %v5725 = vld [vmem:[#allocation2 + $0x18] sm:$0xff]
    %v5726 = vld [vmem:[#allocation2 + $0x20] sm:$0xff]
    %v5727 = vld [vmem:[#allocation2 + $0x28] sm:$0xff]
    %v5728 = vld [vmem:[#allocation2 + $0x30] sm:$0xff]
    %v5729 = vld [vmem:[#allocation2 + $0x38] sm:$0xff]
    %v5730 = vld [vmem:[#allocation2 + $0x40] sm:$0xff]
    %v5731 = vld [vmem:[#allocation2 + $0x48] sm:$0xff]
    %v5732 = vld [vmem:[#allocation2 + $0x50] sm:$0xff]
    %v5733 = vld [vmem:[#allocation2 + $0x58] sm:$0xff]
    %v5734 = vld [vmem:[#allocation2 + $0x60] sm:$0xff]
    %v5735 = vld [vmem:[#allocation2 + $0x68] sm:$0xff]
    %v5736 = vld [vmem:[#allocation2 + $0x70] sm:$0xff]
    %v5737 = vld [vmem:[#allocation2 + $0x78] sm:$0xff]
    %v5738 = vld [vmem:[#allocation2 + $0x80] sm:$0xff]
    %v5739 = vld [vmem:[#allocation2 + $0x88] sm:$0xff]
    %v5740 = vld [vmem:[#allocation2 + $0x90] sm:$0xff]
    %v5741 = vld [vmem:[#allocation2 + $0x98] sm:$0xff]
    %v5742 = vld [vmem:[#allocation2 + $0xa0] sm:$0xff]
    %v5743 = vld [vmem:[#allocation2 + $0xa8] sm:$0xff]
    %v5744 = vld [vmem:[#allocation2 + $0xb0] sm:$0xff]
    %v5745 = vld [vmem:[#allocation2 + $0xb8] sm:$0xff]
    %v5746 = vld [vmem:[#allocation2 + $0xc0] sm:$0xff]
    %v5747 = vld [vmem:[#allocation2 + $0xc8] sm:$0xff]
    %v5748 = vld [vmem:[#allocation2 + $0xd0] sm:$0xff]
    %v5749 = vld [vmem:[#allocation2 + $0xd8] sm:$0xff]
    %v5750 = vld [vmem:[#allocation2 + $0xe0] sm:$0xff]
    %v5751 = vld [vmem:[#allocation2 + $0xe8] sm:$0xff]
    %v5752 = vld [vmem:[#allocation2 + $0xf0] sm:$0xff]
    %v5753 = vld [vmem:[#allocation2 + $0xf8] sm:$0xff]
    %v5754 = vld [vmem:[#allocation2 + $0x100] sm:$0xff]
    %v5755 = vld [vmem:[#allocation2 + $0x108] sm:$0xff]
    %v5756 = vld [vmem:[#allocation2 + $0x110] sm:$0xff]
    %v5757 = vld [vmem:[#allocation2 + $0x118] sm:$0xff]
    %v5758 = vld [vmem:[#allocation2 + $0x120] sm:$0xff]
    %v5759 = vld [vmem:[#allocation2 + $0x128] sm:$0xff]
    %v5760 = vld [vmem:[#allocation2 + $0x130] sm:$0xff]
    %v5761 = vld [vmem:[#allocation2 + $0x138] sm:$0xff]
    %v5762 = vld [vmem:[#allocation2 + $0x140] sm:$0xff]
    %v5763 = vld [vmem:[#allocation2 + $0x148] sm:$0xff]
    %v5764 = vld [vmem:[#allocation2 + $0x150] sm:$0xff]
    %v5765 = vld [vmem:[#allocation2 + $0x158] sm:$0xff]
    %v5766 = vld [vmem:[#allocation2 + $0x160] sm:$0xff]
    %v5767 = vld [vmem:[#allocation2 + $0x168] sm:$0xff]
    %v5768 = vld [vmem:[#allocation2 + $0x170] sm:$0xff]
    %v5769 = vld [vmem:[#allocation2 + $0x178] sm:$0xff]
    %v5770 = vld [vmem:[#allocation2 + $0x180] sm:$0xff]
    %v5771 = vld [vmem:[#allocation2 + $0x188] sm:$0xff]
    %v5772 = vld [vmem:[#allocation2 + $0x190] sm:$0xff]
    %v5773 = vld [vmem:[#allocation2 + $0x198] sm:$0xff]
    %v5774 = vld [vmem:[#allocation2 + $0x1a0] sm:$0xff]
    %v5775 = vld [vmem:[#allocation2 + $0x1a8] sm:$0xff]
    %v5776 = vld [vmem:[#allocation2 + $0x1b0] sm:$0xff]
    %v5777 = vld [vmem:[#allocation2 + $0x1b8] sm:$0xff]
    %v5778 = vld [vmem:[#allocation2 + $0x1c0] sm:$0xff]
    %v5779 = vld [vmem:[#allocation2 + $0x1c8] sm:$0xff]
    %v5780 = vld [vmem:[#allocation2 + $0x1d0] sm:$0xff]
    %v5781 = vld [vmem:[#allocation2 + $0x1d8] sm:$0xff]
    %v5782 = vld [vmem:[#allocation2 + $0x1e0] sm:$0xff]
    %v5783 = vld [vmem:[#allocation2 + $0x1e8] sm:$0xff]
    %v5784 = vld [vmem:[#allocation2 + $0x1f0] sm:$0xff]
    %v5785 = vld [vmem:[#allocation2 + $0x1f8] sm:$0xff]
    %v5786 = vld [vmem:[#allocation2 + $0x200] sm:$0xff]
    %v5787 = vld [vmem:[#allocation2 + $0x208] sm:$0xff]
    %v5788 = vld [vmem:[#allocation2 + $0x210] sm:$0xff]
    %v5789 = vld [vmem:[#allocation2 + $0x218] sm:$0xff]
    %v5790 = vld [vmem:[#allocation2 + $0x220] sm:$0xff]
    %v5791 = vld [vmem:[#allocation2 + $0x228] sm:$0xff]
    %v5792 = vld [vmem:[#allocation2 + $0x230] sm:$0xff]
    %v5793 = vld [vmem:[#allocation2 + $0x238] sm:$0xff]
    %v5794 = vld [vmem:[#allocation2 + $0x240] sm:$0xff]
    %v5795 = vld [vmem:[#allocation2 + $0x248] sm:$0xff]
    %v5796 = vld [vmem:[#allocation2 + $0x250] sm:$0xff]
    %v5797 = vld [vmem:[#allocation2 + $0x258] sm:$0xff]
    %v5798 = vld [vmem:[#allocation2 + $0x260] sm:$0xff]
    %v5799 = vld [vmem:[#allocation2 + $0x268] sm:$0xff]
    %v5800 = vld [vmem:[#allocation2 + $0x270] sm:$0xff]
    %v5801 = vld [vmem:[#allocation2 + $0x278] sm:$0xff]
    %v5802 = vld [vmem:[#allocation2 + $0x280] sm:$0xff]
    %v5803 = vld [vmem:[#allocation2 + $0x288] sm:$0xff]
    %v5804 = vld [vmem:[#allocation2 + $0x290] sm:$0xff]
    %v5805 = vld [vmem:[#allocation2 + $0x298] sm:$0xff]
    %v5806 = vld [vmem:[#allocation2 + $0x2a0] sm:$0xff]
    %v5807 = vld [vmem:[#allocation2 + $0x2a8] sm:$0xff]
    %v5808 = vld [vmem:[#allocation2 + $0x2b0] sm:$0xff]
    %v5809 = vld [vmem:[#allocation2 + $0x2b8] sm:$0xff]
    %v5810 = vld [vmem:[#allocation2 + $0x2c0] sm:$0x3]
    %v5811 = vld [vmem:[#allocation2 + $0x2c8] sm:$0x3]
    %v5812 = vld [vmem:[#allocation2 + $0x2d0] sm:$0x3]
    %v5813 = vld [vmem:[#allocation2 + $0x2d8] sm:$0x3]
    %s5814 = scalar_lea.vmem [#allocation6], 1536
    %v5815 = vld [vmem:[%s5814] sm:$0xff]
    %v5816 = vld [vmem:[%s5814 + $0x8] sm:$0xff]
    %v5817 = vld [vmem:[%s5814 + $0x10] sm:$0xff]
    %v5818 = vld [vmem:[%s5814 + $0x18] sm:$0xff]
    %v5819 = vld [vmem:[%s5814 + $0x20] sm:$0xff]
    %v5820 = vld [vmem:[%s5814 + $0x28] sm:$0xff]
    %v5821 = vld [vmem:[%s5814 + $0x30] sm:$0xff]
    %v5822 = vld [vmem:[%s5814 + $0x38] sm:$0xff]
    %v5823 = vld [vmem:[%s5814 + $0x40] sm:$0xff]
    %v5824 = vld [vmem:[%s5814 + $0x48] sm:$0xff]
    %v5825 = vld [vmem:[%s5814 + $0x50] sm:$0xff]
    %v5826 = vld [vmem:[%s5814 + $0x58] sm:$0xff]
    %v5827 = vld [vmem:[%s5814 + $0x60] sm:$0xff]
    %v5828 = vld [vmem:[%s5814 + $0x68] sm:$0xff]
    %v5829 = vld [vmem:[%s5814 + $0x70] sm:$0xff]
    %v5830 = vld [vmem:[%s5814 + $0x78] sm:$0xff]
    %v5831 = vld [vmem:[%s5814 + $0x80] sm:$0xff]
    %v5832 = vld [vmem:[%s5814 + $0x88] sm:$0xff]
    %v5833 = vld [vmem:[%s5814 + $0x90] sm:$0xff]
    %v5834 = vld [vmem:[%s5814 + $0x98] sm:$0xff]
    %v5835 = vld [vmem:[%s5814 + $0xa0] sm:$0xff]
    %v5836 = vld [vmem:[%s5814 + $0xa8] sm:$0xff]
    %v5837 = vld [vmem:[%s5814 + $0xb0] sm:$0xff]
    %v5838 = vld [vmem:[%s5814 + $0xb8] sm:$0xff]
    %v5839 = vld [vmem:[%s5814 + $0xc0] sm:$0xff]
    %v5840 = vld [vmem:[%s5814 + $0xc8] sm:$0xff]
    %v5841 = vld [vmem:[%s5814 + $0xd0] sm:$0xff]
    %v5842 = vld [vmem:[%s5814 + $0xd8] sm:$0xff]
    %v5843 = vld [vmem:[%s5814 + $0xe0] sm:$0xff]
    %v5844 = vld [vmem:[%s5814 + $0xe8] sm:$0xff]
    %v5845 = vld [vmem:[%s5814 + $0xf0] sm:$0xff]
    %v5846 = vld [vmem:[%s5814 + $0xf8] sm:$0xff]
    %v5848 = vunpack.c.l.b16 %v857
    %v5849 = vpack.c.b16 %v3420, %v1027
    %v5850 = vpack.c.b16 %v5848, %v5848
    %v5851 = vrot.slane %v1029, 2
    %v5852 = vrot.slane %v1030, 2
    %v5853 = vsel %vm5070, %v5851, %v5852
    %v5854 = vrot.slane %v1031, 2
    %v5855 = vsel %vm5070, %v5852, %v5854
    %v5856 = vrot.slane %v1032, 2
    %v5857 = vsel %vm5070, %v5854, %v5856
    %v5858 = vrot.slane %v1033, 2
    %v5859 = vsel %vm5070, %v5856, %v5858
    %v5860 = vrot.slane %v1034, 2
    %v5861 = vsel %vm5070, %v5858, %v5860
    %v5862 = vrot.slane %v1035, 2
    %v5863 = vsel %vm5070, %v5860, %v5862
    %v5864 = vrot.slane %v1036, 2
    %v5865 = vsel %vm5070, %v5862, %v5864
    %v5866 = vrot.slane %v1037, 2
    %v5867 = vsel %vm5070, %v5864, %v5866
    %v5868 = vrot.slane %v1038, 2
    %v5869 = vsel %vm5070, %v5866, %v5868
    %v5870 = vrot.slane %v5849, 2
    %v5871 = vsel %vm5070, %v5868, %v5870
    %v5872 = vrot.slane %v5850, 2
    %v5873 = vsel %vm5070, %v5870, %v5872
    %v5918 = vunpack.c.l.b16 %v5815
    %v5919 = vunpack.c.h.b16 %v5815
    %v5920 = vunpack.c.l.b16 %v5816
    %v5921 = vunpack.c.h.b16 %v5816
    %v5922 = vunpack.c.l.b16 %v5817
    %v5923 = vunpack.c.h.b16 %v5817
    %v5924 = vunpack.c.l.b16 %v5818
    %v5925 = vunpack.c.h.b16 %v5818
    %v5926 = vunpack.c.l.b16 %v5819
    %v5927 = vunpack.c.h.b16 %v5819
    %v5928 = vunpack.c.l.b16 %v5820
    %v5929 = vunpack.c.h.b16 %v5820
    %v5930 = vunpack.c.l.b16 %v5821
    %v5931 = vunpack.c.h.b16 %v5821
    %v5932 = vunpack.c.l.b16 %v5822
    %v5933 = vunpack.c.h.b16 %v5822
    %v5934 = vunpack.c.l.b16 %v5823
    %v5935 = vunpack.c.h.b16 %v5823
    %v5936 = vunpack.c.l.b16 %v5824
    %v5937 = vunpack.c.h.b16 %v5824
    %v5938 = vunpack.c.l.b16 %v5825
    %v5939 = vunpack.c.h.b16 %v5825
    %v5940 = vunpack.c.l.b16 %v5826
    %v5941 = vunpack.c.h.b16 %v5826
    %v5942 = vunpack.c.l.b16 %v5827
    %v5943 = vunpack.c.h.b16 %v5827
    %v5944 = vunpack.c.l.b16 %v5828
    %v5945 = vunpack.c.h.b16 %v5828
    %v5946 = vunpack.c.l.b16 %v5829
    %v5947 = vunpack.c.h.b16 %v5829
    %v5948 = vunpack.c.l.b16 %v5830
    %v5949 = vunpack.c.h.b16 %v5830
    %v5950 = vunpack.c.l.b16 %v5831
    %v5951 = vunpack.c.h.b16 %v5831
    %v5952 = vunpack.c.l.b16 %v5832
    %v5953 = vunpack.c.h.b16 %v5832
    %v5954 = vunpack.c.l.b16 %v5833
    %v5955 = vunpack.c.h.b16 %v5833
    %v5956 = vunpack.c.l.b16 %v5834
    %v5957 = vunpack.c.h.b16 %v5834
    %v5958 = vunpack.c.l.b16 %v5835
    %v5959 = vunpack.c.h.b16 %v5835
    %v5960 = vunpack.c.l.b16 %v5836
    %v5961 = vunpack.c.h.b16 %v5836
    %v5962 = vunpack.c.l.b16 %v5837
    %v5963 = vunpack.c.h.b16 %v5837
    %v5964 = vunpack.c.l.b16 %v5838
    %v5965 = vunpack.c.h.b16 %v5838
    %v5966 = vunpack.c.l.b16 %v5839
    %v5967 = vunpack.c.h.b16 %v5839
    %v5968 = vunpack.c.l.b16 %v5840
    %v5969 = vunpack.c.h.b16 %v5840
    %v5970 = vunpack.c.l.b16 %v5841
    %v5971 = vunpack.c.h.b16 %v5841
    %v5972 = vunpack.c.l.b16 %v5842
    %v5973 = vunpack.c.h.b16 %v5842
    %v5974 = vunpack.c.l.b16 %v5843
    %v5975 = vunpack.c.h.b16 %v5843
    %v5976 = vunpack.c.l.b16 %v5844
    %v5977 = vunpack.c.h.b16 %v5844
    %v5978 = vunpack.c.l.b16 %v5845
    %v5979 = vunpack.c.h.b16 %v5845
    %v5980 = vunpack.c.l.b16 %v5846
    %v5981 = vunpack.c.h.b16 %v5846
    %v5982 = vpack.c.b16 %v5922, %v5918
    %v5983 = vpack.c.b16 %v5923, %v5919
    %v5984 = vpack.c.b16 %v5924, %v5920
    %v5985 = vpack.c.b16 %v5925, %v5921
    %v5986 = vpack.c.b16 %v5930, %v5926
    %v5987 = vpack.c.b16 %v5931, %v5927
    %v5988 = vpack.c.b16 %v5932, %v5928
    %v5989 = vpack.c.b16 %v5933, %v5929
    %v5990 = vpack.c.b16 %v5938, %v5934
    %v5991 = vpack.c.b16 %v5939, %v5935
    %v5992 = vpack.c.b16 %v5940, %v5936
    %v5993 = vpack.c.b16 %v5941, %v5937
    %v5994 = vpack.c.b16 %v5946, %v5942
    %v5995 = vpack.c.b16 %v5947, %v5943
    %v5996 = vpack.c.b16 %v5948, %v5944
    %v5997 = vpack.c.b16 %v5949, %v5945
    %v5998 = vpack.c.b16 %v5954, %v5950
    %v5999 = vpack.c.b16 %v5955, %v5951
    %v6000 = vpack.c.b16 %v5956, %v5952
    %v6001 = vpack.c.b16 %v5957, %v5953
    %v6002 = vpack.c.b16 %v5962, %v5958
    %v6003 = vpack.c.b16 %v5963, %v5959
    %v6004 = vpack.c.b16 %v5964, %v5960
    %v6005 = vpack.c.b16 %v5965, %v5961
    %v6006 = vpack.c.b16 %v5970, %v5966
    %v6007 = vpack.c.b16 %v5971, %v5967
    %v6008 = vpack.c.b16 %v5972, %v5968
    %v6009 = vpack.c.b16 %v5973, %v5969
    %v6010 = vpack.c.b16 %v5978, %v5974
    %v6011 = vpack.c.b16 %v5979, %v5975
    %v6012 = vpack.c.b16 %v5980, %v5976
    %v6013 = vpack.c.b16 %v5981, %v5977
    %6046 = vmatpush.bf16.msra.mxu0 %v6010
    %6047 = vmatpush.bf16.msra.mxu0 %v6006
    %6048 = vmatpush.bf16.msra.mxu0 %v6002
    %6049 = vmatpush.bf16.msra.mxu0 %v5998
    %6050 = vmatpush.bf16.msra.mxu0 %v5994
    %6051 = vmatpush.bf16.msra.mxu0 %v5990
    %6052 = vmatpush.bf16.msra.mxu0 %v5986
    %6053 = vmatpush.bf16.msra.mxu0 %v5982
    %6054 = vmatmul.bf16.gmra.mxu0 %v5853
    %v6055 = vpop.f32.mrf.mxu0
    %v6056 = vadd.f32 0.0, %v6055
    %v6057 = vpop.f32.mrf.mxu0
    %v6058 = vadd.f32 0.0, %v6057
    %6059 = vmatmul.bf16.gmra.mxu0 %v5855
    %v6060 = vpop.f32.mrf.mxu0
    %v6061 = vadd.f32 0.0, %v6060
    %v6062 = vpop.f32.mrf.mxu0
    %v6063 = vadd.f32 0.0, %v6062
    %6064 = vmatmul.bf16.gmra.mxu0 %v5857
    %v6065 = vpop.f32.mrf.mxu0
    %v6066 = vadd.f32 0.0, %v6065
    %v6067 = vpop.f32.mrf.mxu0
    %v6068 = vadd.f32 0.0, %v6067
    %6069 = vmatmul.bf16.gmra.mxu0 %v5859
    %v6070 = vpop.f32.mrf.mxu0
    %v6071 = vadd.f32 0.0, %v6070
    %v6072 = vpop.f32.mrf.mxu0
    %v6073 = vadd.f32 0.0, %v6072
    %6074 = vmatmul.bf16.gmra.mxu0 %v5861
    %v6075 = vpop.f32.mrf.mxu0
    %v6076 = vadd.f32 0.0, %v6075
    %v6077 = vpop.f32.mrf.mxu0
    %v6078 = vadd.f32 0.0, %v6077
    %6079 = vmatmul.bf16.gmra.mxu0 %v5863
    %v6080 = vpop.f32.mrf.mxu0
    %v6081 = vadd.f32 0.0, %v6080
    %v6082 = vpop.f32.mrf.mxu0
    %v6083 = vadd.f32 0.0, %v6082
    %6084 = vmatmul.bf16.gmra.mxu0 %v5865
    %v6085 = vpop.f32.mrf.mxu0
    %v6086 = vadd.f32 0.0, %v6085
    %v6087 = vpop.f32.mrf.mxu0
    %v6088 = vadd.f32 0.0, %v6087
    %6089 = vmatmul.bf16.gmra.mxu0 %v5867
    %v6090 = vpop.f32.mrf.mxu0
    %v6091 = vadd.f32 0.0, %v6090
    %v6092 = vpop.f32.mrf.mxu0
    %v6093 = vadd.f32 0.0, %v6092
    %6094 = vmatmul.bf16.gmra.mxu0 %v5869
    %v6095 = vpop.f32.mrf.mxu0
    %v6096 = vadd.f32 0.0, %v6095
    %v6097 = vpop.f32.mrf.mxu0
    %v6098 = vadd.f32 0.0, %v6097
    %6099 = vmatmul.bf16.gmra.mxu0 %v5871
    %v6100 = vpop.f32.mrf.mxu0
    %v6101 = vadd.f32 0.0, %v6100
    %v6102 = vpop.f32.mrf.mxu0
    %v6103 = vadd.f32 0.0, %v6102
    %6104 = vmatmul.bf16.gmra.mxu0 %v5873
    %v6105 = vpop.f32.mrf.mxu0
    %v6106 = vadd.f32 0.0, %v6105
    %v6107 = vpop.f32.mrf.mxu0
    %v6108 = vadd.f32 0.0, %v6107
    %6109 = vmatmul.bf16.gmra.mxu0 %v5872
    %v6110 = vpop.f32.mrf.mxu0
    %v6111 = vadd.f32 0.0, %v6110
    %v6112 = vpop.f32.mrf.mxu0
    %6113 = vdwg.mxu0
    %6114 = vmatpush.bf16.msra.mxu0 %v6011
    %6115 = vmatpush.bf16.msra.mxu0 %v6007
    %6116 = vmatpush.bf16.msra.mxu0 %v6003
    %6117 = vmatpush.bf16.msra.mxu0 %v5999
    %6118 = vmatpush.bf16.msra.mxu0 %v5995
    %6119 = vmatpush.bf16.msra.mxu0 %v5991
    %6120 = vmatpush.bf16.msra.mxu0 %v5987
    %6121 = vmatpush.bf16.msra.mxu0 %v5983
    %6122 = vmatmul.bf16.gmra.mxu0 %v5853
    %v6123 = vpop.f32.mrf.mxu0
    %v6124 = vadd.f32 0.0, %v6123
    %v6125 = vpop.f32.mrf.mxu0
    %v6126 = vadd.f32 0.0, %v6125
    %6127 = vmatmul.bf16.gmra.mxu0 %v5855
    %v6128 = vpop.f32.mrf.mxu0
    %v6129 = vadd.f32 0.0, %v6128
    %v6130 = vpop.f32.mrf.mxu0
    %v6131 = vadd.f32 0.0, %v6130
    %6132 = vmatmul.bf16.gmra.mxu0 %v5857
    %v6133 = vpop.f32.mrf.mxu0
    %v6134 = vadd.f32 0.0, %v6133
    %v6135 = vpop.f32.mrf.mxu0
    %v6136 = vadd.f32 0.0, %v6135
    %6137 = vmatmul.bf16.gmra.mxu0 %v5859
    %v6138 = vpop.f32.mrf.mxu0
    %v6139 = vadd.f32 0.0, %v6138
    %v6140 = vpop.f32.mrf.mxu0
    %v6141 = vadd.f32 0.0, %v6140
    %6142 = vmatmul.bf16.gmra.mxu0 %v5861
    %v6143 = vpop.f32.mrf.mxu0
    %v6144 = vadd.f32 0.0, %v6143
    %v6145 = vpop.f32.mrf.mxu0
    %v6146 = vadd.f32 0.0, %v6145
    %6147 = vmatmul.bf16.gmra.mxu0 %v5863
    %v6148 = vpop.f32.mrf.mxu0
    %v6149 = vadd.f32 0.0, %v6148
    %v6150 = vpop.f32.mrf.mxu0
    %v6151 = vadd.f32 0.0, %v6150
    %6152 = vmatmul.bf16.gmra.mxu0 %v5865
    %v6153 = vpop.f32.mrf.mxu0
    %v6154 = vadd.f32 0.0, %v6153
    %v6155 = vpop.f32.mrf.mxu0
    %v6156 = vadd.f32 0.0, %v6155
    %6157 = vmatmul.bf16.gmra.mxu0 %v5867
    %v6158 = vpop.f32.mrf.mxu0
    %v6159 = vadd.f32 0.0, %v6158
    %v6160 = vpop.f32.mrf.mxu0
    %v6161 = vadd.f32 0.0, %v6160
    %6162 = vmatmul.bf16.gmra.mxu0 %v5869
    %v6163 = vpop.f32.mrf.mxu0
    %v6164 = vadd.f32 0.0, %v6163
    %v6165 = vpop.f32.mrf.mxu0
    %v6166 = vadd.f32 0.0, %v6165
    %6167 = vmatmul.bf16.gmra.mxu0 %v5871
    %v6168 = vpop.f32.mrf.mxu0
    %v6169 = vadd.f32 0.0, %v6168
    %v6170 = vpop.f32.mrf.mxu0
    %v6171 = vadd.f32 0.0, %v6170
    %6172 = vmatmul.bf16.gmra.mxu0 %v5873
    %v6173 = vpop.f32.mrf.mxu0
    %v6174 = vadd.f32 0.0, %v6173
    %v6175 = vpop.f32.mrf.mxu0
    %v6176 = vadd.f32 0.0, %v6175
    %6177 = vmatmul.bf16.gmra.mxu0 %v5872
    %v6178 = vpop.f32.mrf.mxu0
    %v6179 = vadd.f32 0.0, %v6178
    %v6180 = vpop.f32.mrf.mxu0
    %6181 = vdwg.mxu0
    %6182 = vmatpush.bf16.msra.mxu0 %v6012
    %6183 = vmatpush.bf16.msra.mxu0 %v6008
    %6184 = vmatpush.bf16.msra.mxu0 %v6004
    %6185 = vmatpush.bf16.msra.mxu0 %v6000
    %6186 = vmatpush.bf16.msra.mxu0 %v5996
    %6187 = vmatpush.bf16.msra.mxu0 %v5992
    %6188 = vmatpush.bf16.msra.mxu0 %v5988
    %6189 = vmatpush.bf16.msra.mxu0 %v5984
    %6190 = vmatmul.bf16.gmra.mxu0 %v5853
    %v6191 = vpop.f32.mrf.mxu0
    %v6192 = vadd.f32 0.0, %v6191
    %v6193 = vpop.f32.mrf.mxu0
    %v6194 = vadd.f32 0.0, %v6193
    %6195 = vmatmul.bf16.gmra.mxu0 %v5855
    %v6196 = vpop.f32.mrf.mxu0
    %v6197 = vadd.f32 0.0, %v6196
    %v6198 = vpop.f32.mrf.mxu0
    %v6199 = vadd.f32 0.0, %v6198
    %6200 = vmatmul.bf16.gmra.mxu0 %v5857
    %v6201 = vpop.f32.mrf.mxu0
    %v6202 = vadd.f32 0.0, %v6201
    %v6203 = vpop.f32.mrf.mxu0
    %v6204 = vadd.f32 0.0, %v6203
    %6205 = vmatmul.bf16.gmra.mxu0 %v5859
    %v6206 = vpop.f32.mrf.mxu0
    %v6207 = vadd.f32 0.0, %v6206
    %v6208 = vpop.f32.mrf.mxu0
    %v6209 = vadd.f32 0.0, %v6208
    %6210 = vmatmul.bf16.gmra.mxu0 %v5861
    %v6211 = vpop.f32.mrf.mxu0
    %v6212 = vadd.f32 0.0, %v6211
    %v6213 = vpop.f32.mrf.mxu0
    %v6214 = vadd.f32 0.0, %v6213
    %6215 = vmatmul.bf16.gmra.mxu0 %v5863
    %v6216 = vpop.f32.mrf.mxu0
    %v6217 = vadd.f32 0.0, %v6216
    %v6218 = vpop.f32.mrf.mxu0
    %v6219 = vadd.f32 0.0, %v6218
    %6220 = vmatmul.bf16.gmra.mxu0 %v5865
    %v6221 = vpop.f32.mrf.mxu0
    %v6222 = vadd.f32 0.0, %v6221
    %v6223 = vpop.f32.mrf.mxu0
    %v6224 = vadd.f32 0.0, %v6223
    %6225 = vmatmul.bf16.gmra.mxu0 %v5867
    %v6226 = vpop.f32.mrf.mxu0
    %v6227 = vadd.f32 0.0, %v6226
    %v6228 = vpop.f32.mrf.mxu0
    %v6229 = vadd.f32 0.0, %v6228
    %6230 = vmatmul.bf16.gmra.mxu0 %v5869
    %v6231 = vpop.f32.mrf.mxu0
    %v6232 = vadd.f32 0.0, %v6231
    %v6233 = vpop.f32.mrf.mxu0
    %v6234 = vadd.f32 0.0, %v6233
    %6235 = vmatmul.bf16.gmra.mxu0 %v5871
    %v6236 = vpop.f32.mrf.mxu0
    %v6237 = vadd.f32 0.0, %v6236
    %v6238 = vpop.f32.mrf.mxu0
    %v6239 = vadd.f32 0.0, %v6238
    %6240 = vmatmul.bf16.gmra.mxu0 %v5873
    %v6241 = vpop.f32.mrf.mxu0
    %v6242 = vadd.f32 0.0, %v6241
    %v6243 = vpop.f32.mrf.mxu0
    %v6244 = vadd.f32 0.0, %v6243
    %6245 = vmatmul.bf16.gmra.mxu0 %v5872
    %v6246 = vpop.f32.mrf.mxu0
    %v6247 = vadd.f32 0.0, %v6246
    %v6248 = vpop.f32.mrf.mxu0
    %6249 = vdwg.mxu0
    %6250 = vmatpush.bf16.msra.mxu0 %v6013
    %6251 = vmatpush.bf16.msra.mxu0 %v6009
    %6252 = vmatpush.bf16.msra.mxu0 %v6005
    %6253 = vmatpush.bf16.msra.mxu0 %v6001
    %6254 = vmatpush.bf16.msra.mxu0 %v5997
    %6255 = vmatpush.bf16.msra.mxu0 %v5993
    %6256 = vmatpush.bf16.msra.mxu0 %v5989
    %6257 = vmatpush.bf16.msra.mxu0 %v5985
    %6258 = vmatmul.bf16.gmra.mxu0 %v5853
    %v6259 = vpop.f32.mrf.mxu0
    %v6260 = vadd.f32 0.0, %v6259
    %v6261 = vpop.f32.mrf.mxu0
    %v6262 = vadd.f32 0.0, %v6261
    %6263 = vmatmul.bf16.gmra.mxu0 %v5855
    %v6264 = vpop.f32.mrf.mxu0
    %v6265 = vadd.f32 0.0, %v6264
    %v6266 = vpop.f32.mrf.mxu0
    %v6267 = vadd.f32 0.0, %v6266
    %6268 = vmatmul.bf16.gmra.mxu0 %v5857
    %v6269 = vpop.f32.mrf.mxu0
    %v6270 = vadd.f32 0.0, %v6269
    %v6271 = vpop.f32.mrf.mxu0
    %v6272 = vadd.f32 0.0, %v6271
    %6273 = vmatmul.bf16.gmra.mxu0 %v5859
    %v6274 = vpop.f32.mrf.mxu0
    %v6275 = vadd.f32 0.0, %v6274
    %v6276 = vpop.f32.mrf.mxu0
    %v6277 = vadd.f32 0.0, %v6276
    %6278 = vmatmul.bf16.gmra.mxu0 %v5861
    %v6279 = vpop.f32.mrf.mxu0
    %v6280 = vadd.f32 0.0, %v6279
    %v6281 = vpop.f32.mrf.mxu0
    %v6282 = vadd.f32 0.0, %v6281
    %6283 = vmatmul.bf16.gmra.mxu0 %v5863
    %v6284 = vpop.f32.mrf.mxu0
    %v6285 = vadd.f32 0.0, %v6284
    %v6286 = vpop.f32.mrf.mxu0
    %v6287 = vadd.f32 0.0, %v6286
    %6288 = vmatmul.bf16.gmra.mxu0 %v5865
    %v6289 = vpop.f32.mrf.mxu0
    %v6290 = vadd.f32 0.0, %v6289
    %v6291 = vpop.f32.mrf.mxu0
    %v6292 = vadd.f32 0.0, %v6291
    %6293 = vmatmul.bf16.gmra.mxu0 %v5867
    %v6294 = vpop.f32.mrf.mxu0
    %v6295 = vadd.f32 0.0, %v6294
    %v6296 = vpop.f32.mrf.mxu0
    %v6297 = vadd.f32 0.0, %v6296
    %6298 = vmatmul.bf16.gmra.mxu0 %v5869
    %v6299 = vpop.f32.mrf.mxu0
    %v6300 = vadd.f32 0.0, %v6299
    %v6301 = vpop.f32.mrf.mxu0
    %v6302 = vadd.f32 0.0, %v6301
    %6303 = vmatmul.bf16.gmra.mxu0 %v5871
    %v6304 = vpop.f32.mrf.mxu0
    %v6305 = vadd.f32 0.0, %v6304
    %v6306 = vpop.f32.mrf.mxu0
    %v6307 = vadd.f32 0.0, %v6306
    %6308 = vmatmul.bf16.gmra.mxu0 %v5873
    %v6309 = vpop.f32.mrf.mxu0
    %v6310 = vadd.f32 0.0, %v6309
    %v6311 = vpop.f32.mrf.mxu0
    %v6312 = vadd.f32 0.0, %v6311
    %6313 = vmatmul.bf16.gmra.mxu0 %v5872
    %v6314 = vpop.f32.mrf.mxu0
    %v6315 = vadd.f32 0.0, %v6314
    %v6316 = vpop.f32.mrf.mxu0
    %6317 = vdwg.mxu0
    %v6318 = vadd.f32 %v5722, %v6056
    %v6319 = vadd.f32 %v5723, %v6124
    %v6320 = vadd.f32 %v5724, %v6192
    %v6321 = vadd.f32 %v5725, %v6260
    %v6322 = vadd.f32 %v5726, %v6058
    %v6323 = vadd.f32 %v5727, %v6126
    %v6324 = vadd.f32 %v5728, %v6194
    %v6325 = vadd.f32 %v5729, %v6262
    %v6326 = vadd.f32 %v5730, %v6061
    %v6327 = vadd.f32 %v5731, %v6129
    %v6328 = vadd.f32 %v5732, %v6197
    %v6329 = vadd.f32 %v5733, %v6265
    %v6330 = vadd.f32 %v5734, %v6063
    %v6331 = vadd.f32 %v5735, %v6131
    %v6332 = vadd.f32 %v5736, %v6199
    %v6333 = vadd.f32 %v5737, %v6267
    %v6334 = vadd.f32 %v5738, %v6066
    %v6335 = vadd.f32 %v5739, %v6134
    %v6336 = vadd.f32 %v5740, %v6202
    %v6337 = vadd.f32 %v5741, %v6270
    %v6338 = vadd.f32 %v5742, %v6068
    %v6339 = vadd.f32 %v5743, %v6136
    %v6340 = vadd.f32 %v5744, %v6204
    %v6341 = vadd.f32 %v5745, %v6272
    %v6342 = vadd.f32 %v5746, %v6071
    %v6343 = vadd.f32 %v5747, %v6139
    %v6344 = vadd.f32 %v5748, %v6207
    %v6345 = vadd.f32 %v5749, %v6275
    %v6346 = vadd.f32 %v5750, %v6073
    %v6347 = vadd.f32 %v5751, %v6141
    %v6348 = vadd.f32 %v5752, %v6209
    %v6349 = vadd.f32 %v5753, %v6277
    %v6350 = vadd.f32 %v5754, %v6076
    %v6351 = vadd.f32 %v5755, %v6144
    %v6352 = vadd.f32 %v5756, %v6212
    %v6353 = vadd.f32 %v5757, %v6280
    %v6354 = vadd.f32 %v5758, %v6078
    %v6355 = vadd.f32 %v5759, %v6146
    %v6356 = vadd.f32 %v5760, %v6214
    %v6357 = vadd.f32 %v5761, %v6282
    %v6358 = vadd.f32 %v5762, %v6081
    %v6359 = vadd.f32 %v5763, %v6149
    %v6360 = vadd.f32 %v5764, %v6217
    %v6361 = vadd.f32 %v5765, %v6285
    %v6362 = vadd.f32 %v5766, %v6083
    %v6363 = vadd.f32 %v5767, %v6151
    %v6364 = vadd.f32 %v5768, %v6219
    %v6365 = vadd.f32 %v5769, %v6287
    %v6366 = vadd.f32 %v5770, %v6086
    %v6367 = vadd.f32 %v5771, %v6154
    %v6368 = vadd.f32 %v5772, %v6222
    %v6369 = vadd.f32 %v5773, %v6290
    %v6370 = vadd.f32 %v5774, %v6088
    %v6371 = vadd.f32 %v5775, %v6156
    %v6372 = vadd.f32 %v5776, %v6224
    %v6373 = vadd.f32 %v5777, %v6292
    %v6374 = vadd.f32 %v5778, %v6091
    %v6375 = vadd.f32 %v5779, %v6159
    %v6376 = vadd.f32 %v5780, %v6227
    %v6377 = vadd.f32 %v5781, %v6295
    %v6378 = vadd.f32 %v5782, %v6093
    %v6379 = vadd.f32 %v5783, %v6161
    %v6380 = vadd.f32 %v5784, %v6229
    %v6381 = vadd.f32 %v5785, %v6297
    %v6382 = vadd.f32 %v5786, %v6096
    %v6383 = vadd.f32 %v5787, %v6164
    %v6384 = vadd.f32 %v5788, %v6232
    %v6385 = vadd.f32 %v5789, %v6300
    %v6386 = vadd.f32 %v5790, %v6098
    %v6387 = vadd.f32 %v5791, %v6166
    %v6388 = vadd.f32 %v5792, %v6234
    %v6389 = vadd.f32 %v5793, %v6302
    %v6390 = vadd.f32 %v5794, %v6101
    %v6391 = vadd.f32 %v5795, %v6169
    %v6392 = vadd.f32 %v5796, %v6237
    %v6393 = vadd.f32 %v5797, %v6305
    %v6394 = vadd.f32 %v5798, %v6103
    %v6395 = vadd.f32 %v5799, %v6171
    %v6396 = vadd.f32 %v5800, %v6239
    %v6397 = vadd.f32 %v5801, %v6307
    %v6398 = vadd.f32 %v5802, %v6106
    %v6399 = vadd.f32 %v5803, %v6174
    %v6400 = vadd.f32 %v5804, %v6242
    %v6401 = vadd.f32 %v5805, %v6310
    %v6402 = vadd.f32 %v5806, %v6108
    %v6403 = vadd.f32 %v5807, %v6176
    %v6404 = vadd.f32 %v5808, %v6244
    %v6405 = vadd.f32 %v5809, %v6312
    %v6406 = vadd.f32 %v5810, %v6111
    %v6407 = vadd.f32 %v5811, %v6179
    %v6408 = vadd.f32 %v5812, %v6247
    %v6409 = vadd.f32 %v5813, %v6315
    %6410 = vst [vmem:[#allocation2] sm:$0xff] %v6318
    %6411 = vst [vmem:[#allocation2 + $0x8] sm:$0xff] %v6319
    %6412 = vst [vmem:[#allocation2 + $0x10] sm:$0xff] %v6320
    %6413 = vst [vmem:[#allocation2 + $0x18] sm:$0xff] %v6321
    %6414 = vst [vmem:[#allocation2 + $0x20] sm:$0xff] %v6322
    %6415 = vst [vmem:[#allocation2 + $0x28] sm:$0xff] %v6323
    %6416 = vst [vmem:[#allocation2 + $0x30] sm:$0xff] %v6324
    %6417 = vst [vmem:[#allocation2 + $0x38] sm:$0xff] %v6325
    %6418 = vst [vmem:[#allocation2 + $0x40] sm:$0xff] %v6326
    %6419 = vst [vmem:[#allocation2 + $0x48] sm:$0xff] %v6327
    %6420 = vst [vmem:[#allocation2 + $0x50] sm:$0xff] %v6328
    %6421 = vst [vmem:[#allocation2 + $0x58] sm:$0xff] %v6329
    %6422 = vst [vmem:[#allocation2 + $0x60] sm:$0xff] %v6330
    %6423 = vst [vmem:[#allocation2 + $0x68] sm:$0xff] %v6331
    %6424 = vst [vmem:[#allocation2 + $0x70] sm:$0xff] %v6332
    %6425 = vst [vmem:[#allocation2 + $0x78] sm:$0xff] %v6333
    %6426 = vst [vmem:[#allocation2 + $0x80] sm:$0xff] %v6334
    %6427 = vst [vmem:[#allocation2 + $0x88] sm:$0xff] %v6335
    %6428 = vst [vmem:[#allocation2 + $0x90] sm:$0xff] %v6336
    %6429 = vst [vmem:[#allocation2 + $0x98] sm:$0xff] %v6337
    %6430 = vst [vmem:[#allocation2 + $0xa0] sm:$0xff] %v6338
    %6431 = vst [vmem:[#allocation2 + $0xa8] sm:$0xff] %v6339
    %6432 = vst [vmem:[#allocation2 + $0xb0] sm:$0xff] %v6340
    %6433 = vst [vmem:[#allocation2 + $0xb8] sm:$0xff] %v6341
    %6434 = vst [vmem:[#allocation2 + $0xc0] sm:$0xff] %v6342
    %6435 = vst [vmem:[#allocation2 + $0xc8] sm:$0xff] %v6343
    %6436 = vst [vmem:[#allocation2 + $0xd0] sm:$0xff] %v6344
    %6437 = vst [vmem:[#allocation2 + $0xd8] sm:$0xff] %v6345
    %6438 = vst [vmem:[#allocation2 + $0xe0] sm:$0xff] %v6346
    %6439 = vst [vmem:[#allocation2 + $0xe8] sm:$0xff] %v6347
    %6440 = vst [vmem:[#allocation2 + $0xf0] sm:$0xff] %v6348
    %6441 = vst [vmem:[#allocation2 + $0xf8] sm:$0xff] %v6349
    %6442 = vst [vmem:[#allocation2 + $0x100] sm:$0xff] %v6350
    %6443 = vst [vmem:[#allocation2 + $0x108] sm:$0xff] %v6351
    %6444 = vst [vmem:[#allocation2 + $0x110] sm:$0xff] %v6352
    %6445 = vst [vmem:[#allocation2 + $0x118] sm:$0xff] %v6353
    %6446 = vst [vmem:[#allocation2 + $0x120] sm:$0xff] %v6354
    %6447 = vst [vmem:[#allocation2 + $0x128] sm:$0xff] %v6355
    %6448 = vst [vmem:[#allocation2 + $0x130] sm:$0xff] %v6356
    %6449 = vst [vmem:[#allocation2 + $0x138] sm:$0xff] %v6357
    %6450 = vst [vmem:[#allocation2 + $0x140] sm:$0xff] %v6358
    %6451 = vst [vmem:[#allocation2 + $0x148] sm:$0xff] %v6359
    %6452 = vst [vmem:[#allocation2 + $0x150] sm:$0xff] %v6360
    %6453 = vst [vmem:[#allocation2 + $0x158] sm:$0xff] %v6361
    %6454 = vst [vmem:[#allocation2 + $0x160] sm:$0xff] %v6362
    %6455 = vst [vmem:[#allocation2 + $0x168] sm:$0xff] %v6363
    %6456 = vst [vmem:[#allocation2 + $0x170] sm:$0xff] %v6364
    %6457 = vst [vmem:[#allocation2 + $0x178] sm:$0xff] %v6365
    %6458 = vst [vmem:[#allocation2 + $0x180] sm:$0xff] %v6366
    %6459 = vst [vmem:[#allocation2 + $0x188] sm:$0xff] %v6367
    %6460 = vst [vmem:[#allocation2 + $0x190] sm:$0xff] %v6368
    %6461 = vst [vmem:[#allocation2 + $0x198] sm:$0xff] %v6369
    %6462 = vst [vmem:[#allocation2 + $0x1a0] sm:$0xff] %v6370
    %6463 = vst [vmem:[#allocation2 + $0x1a8] sm:$0xff] %v6371
    %6464 = vst [vmem:[#allocation2 + $0x1b0] sm:$0xff] %v6372
    %6465 = vst [vmem:[#allocation2 + $0x1b8] sm:$0xff] %v6373
    %6466 = vst [vmem:[#allocation2 + $0x1c0] sm:$0xff] %v6374
    %6467 = vst [vmem:[#allocation2 + $0x1c8] sm:$0xff] %v6375
    %6468 = vst [vmem:[#allocation2 + $0x1d0] sm:$0xff] %v6376
    %6469 = vst [vmem:[#allocation2 + $0x1d8] sm:$0xff] %v6377
    %6470 = vst [vmem:[#allocation2 + $0x1e0] sm:$0xff] %v6378
    %6471 = vst [vmem:[#allocation2 + $0x1e8] sm:$0xff] %v6379
    %6472 = vst [vmem:[#allocation2 + $0x1f0] sm:$0xff] %v6380
    %6473 = vst [vmem:[#allocation2 + $0x1f8] sm:$0xff] %v6381
    %6474 = vst [vmem:[#allocation2 + $0x200] sm:$0xff] %v6382
    %6475 = vst [vmem:[#allocation2 + $0x208] sm:$0xff] %v6383
    %6476 = vst [vmem:[#allocation2 + $0x210] sm:$0xff] %v6384
    %6477 = vst [vmem:[#allocation2 + $0x218] sm:$0xff] %v6385
    %6478 = vst [vmem:[#allocation2 + $0x220] sm:$0xff] %v6386
    %6479 = vst [vmem:[#allocation2 + $0x228] sm:$0xff] %v6387
    %6480 = vst [vmem:[#allocation2 + $0x230] sm:$0xff] %v6388
    %6481 = vst [vmem:[#allocation2 + $0x238] sm:$0xff] %v6389
    %6482 = vst [vmem:[#allocation2 + $0x240] sm:$0xff] %v6390
    %6483 = vst [vmem:[#allocation2 + $0x248] sm:$0xff] %v6391
    %6484 = vst [vmem:[#allocation2 + $0x250] sm:$0xff] %v6392
    %6485 = vst [vmem:[#allocation2 + $0x258] sm:$0xff] %v6393
    %6486 = vst [vmem:[#allocation2 + $0x260] sm:$0xff] %v6394
    %6487 = vst [vmem:[#allocation2 + $0x268] sm:$0xff] %v6395
    %6488 = vst [vmem:[#allocation2 + $0x270] sm:$0xff] %v6396
    %6489 = vst [vmem:[#allocation2 + $0x278] sm:$0xff] %v6397
    %6490 = vst [vmem:[#allocation2 + $0x280] sm:$0xff] %v6398
    %6491 = vst [vmem:[#allocation2 + $0x288] sm:$0xff] %v6399
    %6492 = vst [vmem:[#allocation2 + $0x290] sm:$0xff] %v6400
    %6493 = vst [vmem:[#allocation2 + $0x298] sm:$0xff] %v6401
    %6494 = vst [vmem:[#allocation2 + $0x2a0] sm:$0xff] %v6402
    %6495 = vst [vmem:[#allocation2 + $0x2a8] sm:$0xff] %v6403
    %6496 = vst [vmem:[#allocation2 + $0x2b0] sm:$0xff] %v6404
    %6497 = vst [vmem:[#allocation2 + $0x2b8] sm:$0xff] %v6405
    %6498 = vst [vmem:[#allocation2 + $0x2c0] sm:$0x3] %v6406
    %6499 = vst [vmem:[#allocation2 + $0x2c8] sm:$0x3] %v6407
    %6500 = vst [vmem:[#allocation2 + $0x2d0] sm:$0x3] %v6408
    %6501 = vst [vmem:[#allocation2 + $0x2d8] sm:$0x3] %v6409
    %v6502 = vld [vmem:[#allocation2] sm:$0xff]
    %v6503 = vld [vmem:[#allocation2 + $0x8] sm:$0xff]
    %v6504 = vld [vmem:[#allocation2 + $0x10] sm:$0xff]
    %v6505 = vld [vmem:[#allocation2 + $0x18] sm:$0xff]
    %v6506 = vld [vmem:[#allocation2 + $0x20] sm:$0xff]
    %v6507 = vld [vmem:[#allocation2 + $0x28] sm:$0xff]
    %v6508 = vld [vmem:[#allocation2 + $0x30] sm:$0xff]
    %v6509 = vld [vmem:[#allocation2 + $0x38] sm:$0xff]
    %v6510 = vld [vmem:[#allocation2 + $0x40] sm:$0xff]
    %v6511 = vld [vmem:[#allocation2 + $0x48] sm:$0xff]
    %v6512 = vld [vmem:[#allocation2 + $0x50] sm:$0xff]
    %v6513 = vld [vmem:[#allocation2 + $0x58] sm:$0xff]
    %v6514 = vld [vmem:[#allocation2 + $0x60] sm:$0xff]
    %v6515 = vld [vmem:[#allocation2 + $0x68] sm:$0xff]
    %v6516 = vld [vmem:[#allocation2 + $0x70] sm:$0xff]
    %v6517 = vld [vmem:[#allocation2 + $0x78] sm:$0xff]
    %v6518 = vld [vmem:[#allocation2 + $0x80] sm:$0xff]
    %v6519 = vld [vmem:[#allocation2 + $0x88] sm:$0xff]
    %v6520 = vld [vmem:[#allocation2 + $0x90] sm:$0xff]
    %v6521 = vld [vmem:[#allocation2 + $0x98] sm:$0xff]
    %v6522 = vld [vmem:[#allocation2 + $0xa0] sm:$0xff]
    %v6523 = vld [vmem:[#allocation2 + $0xa8] sm:$0xff]
    %v6524 = vld [vmem:[#allocation2 + $0xb0] sm:$0xff]
    %v6525 = vld [vmem:[#allocation2 + $0xb8] sm:$0xff]
    %v6526 = vld [vmem:[#allocation2 + $0xc0] sm:$0xff]
    %v6527 = vld [vmem:[#allocation2 + $0xc8] sm:$0xff]
    %v6528 = vld [vmem:[#allocation2 + $0xd0] sm:$0xff]
    %v6529 = vld [vmem:[#allocation2 + $0xd8] sm:$0xff]
    %v6530 = vld [vmem:[#allocation2 + $0xe0] sm:$0xff]
    %v6531 = vld [vmem:[#allocation2 + $0xe8] sm:$0xff]
    %v6532 = vld [vmem:[#allocation2 + $0xf0] sm:$0xff]
    %v6533 = vld [vmem:[#allocation2 + $0xf8] sm:$0xff]
    %v6534 = vld [vmem:[#allocation2 + $0x100] sm:$0xff]
    %v6535 = vld [vmem:[#allocation2 + $0x108] sm:$0xff]
    %v6536 = vld [vmem:[#allocation2 + $0x110] sm:$0xff]
    %v6537 = vld [vmem:[#allocation2 + $0x118] sm:$0xff]
    %v6538 = vld [vmem:[#allocation2 + $0x120] sm:$0xff]
    %v6539 = vld [vmem:[#allocation2 + $0x128] sm:$0xff]
    %v6540 = vld [vmem:[#allocation2 + $0x130] sm:$0xff]
    %v6541 = vld [vmem:[#allocation2 + $0x138] sm:$0xff]
    %v6542 = vld [vmem:[#allocation2 + $0x140] sm:$0xff]
    %v6543 = vld [vmem:[#allocation2 + $0x148] sm:$0xff]
    %v6544 = vld [vmem:[#allocation2 + $0x150] sm:$0xff]
    %v6545 = vld [vmem:[#allocation2 + $0x158] sm:$0xff]
    %v6546 = vld [vmem:[#allocation2 + $0x160] sm:$0xff]
    %v6547 = vld [vmem:[#allocation2 + $0x168] sm:$0xff]
    %v6548 = vld [vmem:[#allocation2 + $0x170] sm:$0xff]
    %v6549 = vld [vmem:[#allocation2 + $0x178] sm:$0xff]
    %v6550 = vld [vmem:[#allocation2 + $0x180] sm:$0xff]
    %v6551 = vld [vmem:[#allocation2 + $0x188] sm:$0xff]
    %v6552 = vld [vmem:[#allocation2 + $0x190] sm:$0xff]
    %v6553 = vld [vmem:[#allocation2 + $0x198] sm:$0xff]
    %v6554 = vld [vmem:[#allocation2 + $0x1a0] sm:$0xff]
    %v6555 = vld [vmem:[#allocation2 + $0x1a8] sm:$0xff]
    %v6556 = vld [vmem:[#allocation2 + $0x1b0] sm:$0xff]
    %v6557 = vld [vmem:[#allocation2 + $0x1b8] sm:$0xff]
    %v6558 = vld [vmem:[#allocation2 + $0x1c0] sm:$0xff]
    %v6559 = vld [vmem:[#allocation2 + $0x1c8] sm:$0xff]
    %v6560 = vld [vmem:[#allocation2 + $0x1d0] sm:$0xff]
    %v6561 = vld [vmem:[#allocation2 + $0x1d8] sm:$0xff]
    %v6562 = vld [vmem:[#allocation2 + $0x1e0] sm:$0xff]
    %v6563 = vld [vmem:[#allocation2 + $0x1e8] sm:$0xff]
    %v6564 = vld [vmem:[#allocation2 + $0x1f0] sm:$0xff]
    %v6565 = vld [vmem:[#allocation2 + $0x1f8] sm:$0xff]
    %v6566 = vld [vmem:[#allocation2 + $0x200] sm:$0xff]
    %v6567 = vld [vmem:[#allocation2 + $0x208] sm:$0xff]
    %v6568 = vld [vmem:[#allocation2 + $0x210] sm:$0xff]
    %v6569 = vld [vmem:[#allocation2 + $0x218] sm:$0xff]
    %v6570 = vld [vmem:[#allocation2 + $0x220] sm:$0xff]
    %v6571 = vld [vmem:[#allocation2 + $0x228] sm:$0xff]
    %v6572 = vld [vmem:[#allocation2 + $0x230] sm:$0xff]
    %v6573 = vld [vmem:[#allocation2 + $0x238] sm:$0xff]
    %v6574 = vld [vmem:[#allocation2 + $0x240] sm:$0xff]
    %v6575 = vld [vmem:[#allocation2 + $0x248] sm:$0xff]
    %v6576 = vld [vmem:[#allocation2 + $0x250] sm:$0xff]
    %v6577 = vld [vmem:[#allocation2 + $0x258] sm:$0xff]
    %v6578 = vld [vmem:[#allocation2 + $0x260] sm:$0xff]
    %v6579 = vld [vmem:[#allocation2 + $0x268] sm:$0xff]
    %v6580 = vld [vmem:[#allocation2 + $0x270] sm:$0xff]
    %v6581 = vld [vmem:[#allocation2 + $0x278] sm:$0xff]
    %v6582 = vld [vmem:[#allocation2 + $0x280] sm:$0xff]
    %v6583 = vld [vmem:[#allocation2 + $0x288] sm:$0xff]
    %v6584 = vld [vmem:[#allocation2 + $0x290] sm:$0xff]
    %v6585 = vld [vmem:[#allocation2 + $0x298] sm:$0xff]
    %v6586 = vld [vmem:[#allocation2 + $0x2a0] sm:$0xff]
    %v6587 = vld [vmem:[#allocation2 + $0x2a8] sm:$0xff]
    %v6588 = vld [vmem:[#allocation2 + $0x2b0] sm:$0xff]
    %v6589 = vld [vmem:[#allocation2 + $0x2b8] sm:$0xff]
    %v6590 = vld [vmem:[#allocation2 + $0x2c0] sm:$0x3]
    %v6591 = vld [vmem:[#allocation2 + $0x2c8] sm:$0x3]
    %v6592 = vld [vmem:[#allocation2 + $0x2d0] sm:$0x3]
    %v6593 = vld [vmem:[#allocation2 + $0x2d8] sm:$0x3]
    %s6594 = scalar_lea.vmem [#allocation6], 1792
    %v6595 = vld [vmem:[%s6594] sm:$0xff]
    %v6596 = vld [vmem:[%s6594 + $0x8] sm:$0xff]
    %v6597 = vld [vmem:[%s6594 + $0x10] sm:$0xff]
    %v6598 = vld [vmem:[%s6594 + $0x18] sm:$0xff]
    %v6599 = vld [vmem:[%s6594 + $0x20] sm:$0xff]
    %v6600 = vld [vmem:[%s6594 + $0x28] sm:$0xff]
    %v6601 = vld [vmem:[%s6594 + $0x30] sm:$0xff]
    %v6602 = vld [vmem:[%s6594 + $0x38] sm:$0xff]
    %v6603 = vld [vmem:[%s6594 + $0x40] sm:$0xff]
    %v6604 = vld [vmem:[%s6594 + $0x48] sm:$0xff]
    %v6605 = vld [vmem:[%s6594 + $0x50] sm:$0xff]
    %v6606 = vld [vmem:[%s6594 + $0x58] sm:$0xff]
    %v6607 = vld [vmem:[%s6594 + $0x60] sm:$0xff]
    %v6608 = vld [vmem:[%s6594 + $0x68] sm:$0xff]
    %v6609 = vld [vmem:[%s6594 + $0x70] sm:$0xff]
    %v6610 = vld [vmem:[%s6594 + $0x78] sm:$0xff]
    %v6611 = vld [vmem:[%s6594 + $0x80] sm:$0xff]
    %v6612 = vld [vmem:[%s6594 + $0x88] sm:$0xff]
    %v6613 = vld [vmem:[%s6594 + $0x90] sm:$0xff]
    %v6614 = vld [vmem:[%s6594 + $0x98] sm:$0xff]
    %v6615 = vld [vmem:[%s6594 + $0xa0] sm:$0xff]
    %v6616 = vld [vmem:[%s6594 + $0xa8] sm:$0xff]
    %v6617 = vld [vmem:[%s6594 + $0xb0] sm:$0xff]
    %v6618 = vld [vmem:[%s6594 + $0xb8] sm:$0xff]
    %v6619 = vld [vmem:[%s6594 + $0xc0] sm:$0xff]
    %v6620 = vld [vmem:[%s6594 + $0xc8] sm:$0xff]
    %v6621 = vld [vmem:[%s6594 + $0xd0] sm:$0xff]
    %v6622 = vld [vmem:[%s6594 + $0xd8] sm:$0xff]
    %v6623 = vld [vmem:[%s6594 + $0xe0] sm:$0xff]
    %v6624 = vld [vmem:[%s6594 + $0xe8] sm:$0xff]
    %v6625 = vld [vmem:[%s6594 + $0xf0] sm:$0xff]
    %v6626 = vld [vmem:[%s6594 + $0xf8] sm:$0xff]
    %vm6627 = vsmask.f32 5376
    %v6628 = vrot.slane %v1806, 2
    %v6629 = vrot.slane %v1802, 3
    %v6630 = vor.u32 %v6628, %v6629
    %v6631 = vrot.slane %v1814, 2
    %v6632 = vrot.slane %v1810, 3
    %v6633 = vor.u32 %v6631, %v6632
    %v6634 = vsel %vm6627, %v6630, %v6633
    %v6635 = vrot.slane %v1822, 2
    %v6636 = vrot.slane %v1818, 3
    %v6637 = vor.u32 %v6635, %v6636
    %v6638 = vsel %vm6627, %v6633, %v6637
    %v6639 = vrot.slane %v1830, 2
    %v6640 = vrot.slane %v1826, 3
    %v6641 = vor.u32 %v6639, %v6640
    %v6642 = vsel %vm6627, %v6637, %v6641
    %v6643 = vrot.slane %v1838, 2
    %v6644 = vrot.slane %v1834, 3
    %v6645 = vor.u32 %v6643, %v6644
    %v6646 = vsel %vm6627, %v6641, %v6645
    %v6647 = vrot.slane %v1846, 2
    %v6648 = vrot.slane %v1842, 3
    %v6649 = vor.u32 %v6647, %v6648
    %v6650 = vsel %vm6627, %v6645, %v6649
    %v6651 = vrot.slane %v1854, 2
    %v6652 = vrot.slane %v1850, 3
    %v6653 = vor.u32 %v6651, %v6652
    %v6654 = vsel %vm6627, %v6649, %v6653
    %v6655 = vrot.slane %v1862, 2
    %v6656 = vrot.slane %v1858, 3
    %v6657 = vor.u32 %v6655, %v6656
    %v6658 = vsel %vm6627, %v6653, %v6657
    %v6659 = vrot.slane %v1870, 2
    %v6660 = vrot.slane %v1866, 3
    %v6661 = vor.u32 %v6659, %v6660
    %v6662 = vsel %vm6627, %v6657, %v6661
    %v6663 = vrot.slane %v1878, 2
    %v6664 = vrot.slane %v1874, 3
    %v6665 = vor.u32 %v6663, %v6664
    %v6666 = vsel %vm6627, %v6661, %v6665
    %v6668 = vshrl.u32 %v5849, 16
    %v6670 = vrot.slane %v6668, 2
    %v6671 = vshll.u32 %v5849, 16
    %v6673 = vrot.slane %v6671, 3
    %v6674 = vor.u32 %v6670, %v6673
    %v6675 = vsel %vm6627, %v6665, %v6674
    %v6677 = vshrl.u32 %v5850, 16
    %v6679 = vrot.slane %v6677, 2
    %v6680 = vshll.u32 %v5850, 16
    %v6682 = vrot.slane %v6680, 3
    %v6683 = vor.u32 %v6679, %v6682
    %v6684 = vsel %vm6627, %v6674, %v6683
    %v6729 = vunpack.c.l.b16 %v6595
    %v6730 = vunpack.c.h.b16 %v6595
    %v6731 = vunpack.c.l.b16 %v6596
    %v6732 = vunpack.c.h.b16 %v6596
    %v6733 = vunpack.c.l.b16 %v6597
    %v6734 = vunpack.c.h.b16 %v6597
    %v6735 = vunpack.c.l.b16 %v6598
    %v6736 = vunpack.c.h.b16 %v6598
    %v6737 = vunpack.c.l.b16 %v6599
    %v6738 = vunpack.c.h.b16 %v6599
    %v6739 = vunpack.c.l.b16 %v6600
    %v6740 = vunpack.c.h.b16 %v6600
    %v6741 = vunpack.c.l.b16 %v6601
    %v6742 = vunpack.c.h.b16 %v6601
    %v6743 = vunpack.c.l.b16 %v6602
    %v6744 = vunpack.c.h.b16 %v6602
    %v6745 = vunpack.c.l.b16 %v6603
    %v6746 = vunpack.c.h.b16 %v6603
    %v6747 = vunpack.c.l.b16 %v6604
    %v6748 = vunpack.c.h.b16 %v6604
    %v6749 = vunpack.c.l.b16 %v6605
    %v6750 = vunpack.c.h.b16 %v6605
    %v6751 = vunpack.c.l.b16 %v6606
    %v6752 = vunpack.c.h.b16 %v6606
    %v6753 = vunpack.c.l.b16 %v6607
    %v6754 = vunpack.c.h.b16 %v6607
    %v6755 = vunpack.c.l.b16 %v6608
    %v6756 = vunpack.c.h.b16 %v6608
    %v6757 = vunpack.c.l.b16 %v6609
    %v6758 = vunpack.c.h.b16 %v6609
    %v6759 = vunpack.c.l.b16 %v6610
    %v6760 = vunpack.c.h.b16 %v6610
    %v6761 = vunpack.c.l.b16 %v6611
    %v6762 = vunpack.c.h.b16 %v6611
    %v6763 = vunpack.c.l.b16 %v6612
    %v6764 = vunpack.c.h.b16 %v6612
    %v6765 = vunpack.c.l.b16 %v6613
    %v6766 = vunpack.c.h.b16 %v6613
    %v6767 = vunpack.c.l.b16 %v6614
    %v6768 = vunpack.c.h.b16 %v6614
    %v6769 = vunpack.c.l.b16 %v6615
    %v6770 = vunpack.c.h.b16 %v6615
    %v6771 = vunpack.c.l.b16 %v6616
    %v6772 = vunpack.c.h.b16 %v6616
    %v6773 = vunpack.c.l.b16 %v6617
    %v6774 = vunpack.c.h.b16 %v6617
    %v6775 = vunpack.c.l.b16 %v6618
    %v6776 = vunpack.c.h.b16 %v6618
    %v6777 = vunpack.c.l.b16 %v6619
    %v6778 = vunpack.c.h.b16 %v6619
    %v6779 = vunpack.c.l.b16 %v6620
    %v6780 = vunpack.c.h.b16 %v6620
    %v6781 = vunpack.c.l.b16 %v6621
    %v6782 = vunpack.c.h.b16 %v6621
    %v6783 = vunpack.c.l.b16 %v6622
    %v6784 = vunpack.c.h.b16 %v6622
    %v6785 = vunpack.c.l.b16 %v6623
    %v6786 = vunpack.c.h.b16 %v6623
    %v6787 = vunpack.c.l.b16 %v6624
    %v6788 = vunpack.c.h.b16 %v6624
    %v6789 = vunpack.c.l.b16 %v6625
    %v6790 = vunpack.c.h.b16 %v6625
    %v6791 = vunpack.c.l.b16 %v6626
    %v6792 = vunpack.c.h.b16 %v6626
    %v6793 = vpack.c.b16 %v6733, %v6729
    %v6794 = vpack.c.b16 %v6734, %v6730
    %v6795 = vpack.c.b16 %v6735, %v6731
    %v6796 = vpack.c.b16 %v6736, %v6732
    %v6797 = vpack.c.b16 %v6741, %v6737
    %v6798 = vpack.c.b16 %v6742, %v6738
    %v6799 = vpack.c.b16 %v6743, %v6739
    %v6800 = vpack.c.b16 %v6744, %v6740
    %v6801 = vpack.c.b16 %v6749, %v6745
    %v6802 = vpack.c.b16 %v6750, %v6746
    %v6803 = vpack.c.b16 %v6751, %v6747
    %v6804 = vpack.c.b16 %v6752, %v6748
    %v6805 = vpack.c.b16 %v6757, %v6753
    %v6806 = vpack.c.b16 %v6758, %v6754
    %v6807 = vpack.c.b16 %v6759, %v6755
    %v6808 = vpack.c.b16 %v6760, %v6756
    %v6809 = vpack.c.b16 %v6765, %v6761
    %v6810 = vpack.c.b16 %v6766, %v6762
    %v6811 = vpack.c.b16 %v6767, %v6763
    %v6812 = vpack.c.b16 %v6768, %v6764
    %v6813 = vpack.c.b16 %v6773, %v6769
    %v6814 = vpack.c.b16 %v6774, %v6770
    %v6815 = vpack.c.b16 %v6775, %v6771
    %v6816 = vpack.c.b16 %v6776, %v6772
    %v6817 = vpack.c.b16 %v6781, %v6777
    %v6818 = vpack.c.b16 %v6782, %v6778
    %v6819 = vpack.c.b16 %v6783, %v6779
    %v6820 = vpack.c.b16 %v6784, %v6780
    %v6821 = vpack.c.b16 %v6789, %v6785
    %v6822 = vpack.c.b16 %v6790, %v6786
    %v6823 = vpack.c.b16 %v6791, %v6787
    %v6824 = vpack.c.b16 %v6792, %v6788
    %6857 = vmatpush.bf16.msra.mxu0 %v6821
    %6858 = vmatpush.bf16.msra.mxu0 %v6817
    %6859 = vmatpush.bf16.msra.mxu0 %v6813
    %6860 = vmatpush.bf16.msra.mxu0 %v6809
    %6861 = vmatpush.bf16.msra.mxu0 %v6805
    %6862 = vmatpush.bf16.msra.mxu0 %v6801
    %6863 = vmatpush.bf16.msra.mxu0 %v6797
    %6864 = vmatpush.bf16.msra.mxu0 %v6793
    %6865 = vmatmul.bf16.gmra.mxu0 %v6634
    %v6866 = vpop.f32.mrf.mxu0
    %v6867 = vadd.f32 0.0, %v6866
    %v6868 = vpop.f32.mrf.mxu0
    %v6869 = vadd.f32 0.0, %v6868
    %6870 = vmatmul.bf16.gmra.mxu0 %v6638
    %v6871 = vpop.f32.mrf.mxu0
    %v6872 = vadd.f32 0.0, %v6871
    %v6873 = vpop.f32.mrf.mxu0
    %v6874 = vadd.f32 0.0, %v6873
    %6875 = vmatmul.bf16.gmra.mxu0 %v6642
    %v6876 = vpop.f32.mrf.mxu0
    %v6877 = vadd.f32 0.0, %v6876
    %v6878 = vpop.f32.mrf.mxu0
    %v6879 = vadd.f32 0.0, %v6878
    %6880 = vmatmul.bf16.gmra.mxu0 %v6646
    %v6881 = vpop.f32.mrf.mxu0
    %v6882 = vadd.f32 0.0, %v6881
    %v6883 = vpop.f32.mrf.mxu0
    %v6884 = vadd.f32 0.0, %v6883
    %6885 = vmatmul.bf16.gmra.mxu0 %v6650
    %v6886 = vpop.f32.mrf.mxu0
    %v6887 = vadd.f32 0.0, %v6886
    %v6888 = vpop.f32.mrf.mxu0
    %v6889 = vadd.f32 0.0, %v6888
    %6890 = vmatmul.bf16.gmra.mxu0 %v6654
    %v6891 = vpop.f32.mrf.mxu0
    %v6892 = vadd.f32 0.0, %v6891
    %v6893 = vpop.f32.mrf.mxu0
    %v6894 = vadd.f32 0.0, %v6893
    %6895 = vmatmul.bf16.gmra.mxu0 %v6658
    %v6896 = vpop.f32.mrf.mxu0
    %v6897 = vadd.f32 0.0, %v6896
    %v6898 = vpop.f32.mrf.mxu0
    %v6899 = vadd.f32 0.0, %v6898
    %6900 = vmatmul.bf16.gmra.mxu0 %v6662
    %v6901 = vpop.f32.mrf.mxu0
    %v6902 = vadd.f32 0.0, %v6901
    %v6903 = vpop.f32.mrf.mxu0
    %v6904 = vadd.f32 0.0, %v6903
    %6905 = vmatmul.bf16.gmra.mxu0 %v6666
    %v6906 = vpop.f32.mrf.mxu0
    %v6907 = vadd.f32 0.0, %v6906
    %v6908 = vpop.f32.mrf.mxu0
    %v6909 = vadd.f32 0.0, %v6908
    %6910 = vmatmul.bf16.gmra.mxu0 %v6675
    %v6911 = vpop.f32.mrf.mxu0
    %v6912 = vadd.f32 0.0, %v6911
    %v6913 = vpop.f32.mrf.mxu0
    %v6914 = vadd.f32 0.0, %v6913
    %6915 = vmatmul.bf16.gmra.mxu0 %v6684
    %v6916 = vpop.f32.mrf.mxu0
    %v6917 = vadd.f32 0.0, %v6916
    %v6918 = vpop.f32.mrf.mxu0
    %v6919 = vadd.f32 0.0, %v6918
    %6920 = vmatmul.bf16.gmra.mxu0 %v6683
    %v6921 = vpop.f32.mrf.mxu0
    %v6922 = vadd.f32 0.0, %v6921
    %v6923 = vpop.f32.mrf.mxu0
    %6924 = vdwg.mxu0
    %6925 = vmatpush.bf16.msra.mxu0 %v6822
    %6926 = vmatpush.bf16.msra.mxu0 %v6818
    %6927 = vmatpush.bf16.msra.mxu0 %v6814
    %6928 = vmatpush.bf16.msra.mxu0 %v6810
    %6929 = vmatpush.bf16.msra.mxu0 %v6806
    %6930 = vmatpush.bf16.msra.mxu0 %v6802
    %6931 = vmatpush.bf16.msra.mxu0 %v6798
    %6932 = vmatpush.bf16.msra.mxu0 %v6794
    %6933 = vmatmul.bf16.gmra.mxu0 %v6634
    %v6934 = vpop.f32.mrf.mxu0
    %v6935 = vadd.f32 0.0, %v6934
    %v6936 = vpop.f32.mrf.mxu0
    %v6937 = vadd.f32 0.0, %v6936
    %6938 = vmatmul.bf16.gmra.mxu0 %v6638
    %v6939 = vpop.f32.mrf.mxu0
    %v6940 = vadd.f32 0.0, %v6939
    %v6941 = vpop.f32.mrf.mxu0
    %v6942 = vadd.f32 0.0, %v6941
    %6943 = vmatmul.bf16.gmra.mxu0 %v6642
    %v6944 = vpop.f32.mrf.mxu0
    %v6945 = vadd.f32 0.0, %v6944
    %v6946 = vpop.f32.mrf.mxu0
    %v6947 = vadd.f32 0.0, %v6946
    %6948 = vmatmul.bf16.gmra.mxu0 %v6646
    %v6949 = vpop.f32.mrf.mxu0
    %v6950 = vadd.f32 0.0, %v6949
    %v6951 = vpop.f32.mrf.mxu0
    %v6952 = vadd.f32 0.0, %v6951
    %6953 = vmatmul.bf16.gmra.mxu0 %v6650
    %v6954 = vpop.f32.mrf.mxu0
    %v6955 = vadd.f32 0.0, %v6954
    %v6956 = vpop.f32.mrf.mxu0
    %v6957 = vadd.f32 0.0, %v6956
    %6958 = vmatmul.bf16.gmra.mxu0 %v6654
    %v6959 = vpop.f32.mrf.mxu0
    %v6960 = vadd.f32 0.0, %v6959
    %v6961 = vpop.f32.mrf.mxu0
    %v6962 = vadd.f32 0.0, %v6961
    %6963 = vmatmul.bf16.gmra.mxu0 %v6658
    %v6964 = vpop.f32.mrf.mxu0
    %v6965 = vadd.f32 0.0, %v6964
    %v6966 = vpop.f32.mrf.mxu0
    %v6967 = vadd.f32 0.0, %v6966
    %6968 = vmatmul.bf16.gmra.mxu0 %v6662
    %v6969 = vpop.f32.mrf.mxu0
    %v6970 = vadd.f32 0.0, %v6969
    %v6971 = vpop.f32.mrf.mxu0
    %v6972 = vadd.f32 0.0, %v6971
    %6973 = vmatmul.bf16.gmra.mxu0 %v6666
    %v6974 = vpop.f32.mrf.mxu0
    %v6975 = vadd.f32 0.0, %v6974
    %v6976 = vpop.f32.mrf.mxu0
    %v6977 = vadd.f32 0.0, %v6976
    %6978 = vmatmul.bf16.gmra.mxu0 %v6675
    %v6979 = vpop.f32.mrf.mxu0
    %v6980 = vadd.f32 0.0, %v6979
    %v6981 = vpop.f32.mrf.mxu0
    %v6982 = vadd.f32 0.0, %v6981
    %6983 = vmatmul.bf16.gmra.mxu0 %v6684
    %v6984 = vpop.f32.mrf.mxu0
    %v6985 = vadd.f32 0.0, %v6984
    %v6986 = vpop.f32.mrf.mxu0
    %v6987 = vadd.f32 0.0, %v6986
    %6988 = vmatmul.bf16.gmra.mxu0 %v6683
    %v6989 = vpop.f32.mrf.mxu0
    %v6990 = vadd.f32 0.0, %v6989
    %v6991 = vpop.f32.mrf.mxu0
    %6992 = vdwg.mxu0
    %6993 = vmatpush.bf16.msra.mxu0 %v6823
    %6994 = vmatpush.bf16.msra.mxu0 %v6819
    %6995 = vmatpush.bf16.msra.mxu0 %v6815
    %6996 = vmatpush.bf16.msra.mxu0 %v6811
    %6997 = vmatpush.bf16.msra.mxu0 %v6807
    %6998 = vmatpush.bf16.msra.mxu0 %v6803
    %6999 = vmatpush.bf16.msra.mxu0 %v6799
    %7000 = vmatpush.bf16.msra.mxu0 %v6795
    %7001 = vmatmul.bf16.gmra.mxu0 %v6634
    %v7002 = vpop.f32.mrf.mxu0
    %v7003 = vadd.f32 0.0, %v7002
    %v7004 = vpop.f32.mrf.mxu0
    %v7005 = vadd.f32 0.0, %v7004
    %7006 = vmatmul.bf16.gmra.mxu0 %v6638
    %v7007 = vpop.f32.mrf.mxu0
    %v7008 = vadd.f32 0.0, %v7007
    %v7009 = vpop.f32.mrf.mxu0
    %v7010 = vadd.f32 0.0, %v7009
    %7011 = vmatmul.bf16.gmra.mxu0 %v6642
    %v7012 = vpop.f32.mrf.mxu0
    %v7013 = vadd.f32 0.0, %v7012
    %v7014 = vpop.f32.mrf.mxu0
    %v7015 = vadd.f32 0.0, %v7014
    %7016 = vmatmul.bf16.gmra.mxu0 %v6646
    %v7017 = vpop.f32.mrf.mxu0
    %v7018 = vadd.f32 0.0, %v7017
    %v7019 = vpop.f32.mrf.mxu0
    %v7020 = vadd.f32 0.0, %v7019
    %7021 = vmatmul.bf16.gmra.mxu0 %v6650
    %v7022 = vpop.f32.mrf.mxu0
    %v7023 = vadd.f32 0.0, %v7022
    %v7024 = vpop.f32.mrf.mxu0
    %v7025 = vadd.f32 0.0, %v7024
    %7026 = vmatmul.bf16.gmra.mxu0 %v6654
    %v7027 = vpop.f32.mrf.mxu0
    %v7028 = vadd.f32 0.0, %v7027
    %v7029 = vpop.f32.mrf.mxu0
    %v7030 = vadd.f32 0.0, %v7029
    %7031 = vmatmul.bf16.gmra.mxu0 %v6658
    %v7032 = vpop.f32.mrf.mxu0
    %v7033 = vadd.f32 0.0, %v7032
    %v7034 = vpop.f32.mrf.mxu0
    %v7035 = vadd.f32 0.0, %v7034
    %7036 = vmatmul.bf16.gmra.mxu0 %v6662
    %v7037 = vpop.f32.mrf.mxu0
    %v7038 = vadd.f32 0.0, %v7037
    %v7039 = vpop.f32.mrf.mxu0
    %v7040 = vadd.f32 0.0, %v7039
    %7041 = vmatmul.bf16.gmra.mxu0 %v6666
    %v7042 = vpop.f32.mrf.mxu0
    %v7043 = vadd.f32 0.0, %v7042
    %v7044 = vpop.f32.mrf.mxu0
    %v7045 = vadd.f32 0.0, %v7044
    %7046 = vmatmul.bf16.gmra.mxu0 %v6675
    %v7047 = vpop.f32.mrf.mxu0
    %v7048 = vadd.f32 0.0, %v7047
    %v7049 = vpop.f32.mrf.mxu0
    %v7050 = vadd.f32 0.0, %v7049
    %7051 = vmatmul.bf16.gmra.mxu0 %v6684
    %v7052 = vpop.f32.mrf.mxu0
    %v7053 = vadd.f32 0.0, %v7052
    %v7054 = vpop.f32.mrf.mxu0
    %v7055 = vadd.f32 0.0, %v7054
    %7056 = vmatmul.bf16.gmra.mxu0 %v6683
    %v7057 = vpop.f32.mrf.mxu0
    %v7058 = vadd.f32 0.0, %v7057
    %v7059 = vpop.f32.mrf.mxu0
    %7060 = vdwg.mxu0
    %7061 = vmatpush.bf16.msra.mxu0 %v6824
    %7062 = vmatpush.bf16.msra.mxu0 %v6820
    %7063 = vmatpush.bf16.msra.mxu0 %v6816
    %7064 = vmatpush.bf16.msra.mxu0 %v6812
    %7065 = vmatpush.bf16.msra.mxu0 %v6808
    %7066 = vmatpush.bf16.msra.mxu0 %v6804
    %7067 = vmatpush.bf16.msra.mxu0 %v6800
    %7068 = vmatpush.bf16.msra.mxu0 %v6796
    %7069 = vmatmul.bf16.gmra.mxu0 %v6634
    %v7070 = vpop.f32.mrf.mxu0
    %v7071 = vadd.f32 0.0, %v7070
    %v7072 = vpop.f32.mrf.mxu0
    %v7073 = vadd.f32 0.0, %v7072
    %7074 = vmatmul.bf16.gmra.mxu0 %v6638
    %v7075 = vpop.f32.mrf.mxu0
    %v7076 = vadd.f32 0.0, %v7075
    %v7077 = vpop.f32.mrf.mxu0
    %v7078 = vadd.f32 0.0, %v7077
    %7079 = vmatmul.bf16.gmra.mxu0 %v6642
    %v7080 = vpop.f32.mrf.mxu0
    %v7081 = vadd.f32 0.0, %v7080
    %v7082 = vpop.f32.mrf.mxu0
    %v7083 = vadd.f32 0.0, %v7082
    %7084 = vmatmul.bf16.gmra.mxu0 %v6646
    %v7085 = vpop.f32.mrf.mxu0
    %v7086 = vadd.f32 0.0, %v7085
    %v7087 = vpop.f32.mrf.mxu0
    %v7088 = vadd.f32 0.0, %v7087
    %7089 = vmatmul.bf16.gmra.mxu0 %v6650
    %v7090 = vpop.f32.mrf.mxu0
    %v7091 = vadd.f32 0.0, %v7090
    %v7092 = vpop.f32.mrf.mxu0
    %v7093 = vadd.f32 0.0, %v7092
    %7094 = vmatmul.bf16.gmra.mxu0 %v6654
    %v7095 = vpop.f32.mrf.mxu0
    %v7096 = vadd.f32 0.0, %v7095
    %v7097 = vpop.f32.mrf.mxu0
    %v7098 = vadd.f32 0.0, %v7097
    %7099 = vmatmul.bf16.gmra.mxu0 %v6658
    %v7100 = vpop.f32.mrf.mxu0
    %v7101 = vadd.f32 0.0, %v7100
    %v7102 = vpop.f32.mrf.mxu0
    %v7103 = vadd.f32 0.0, %v7102
    %7104 = vmatmul.bf16.gmra.mxu0 %v6662
    %v7105 = vpop.f32.mrf.mxu0
    %v7106 = vadd.f32 0.0, %v7105
    %v7107 = vpop.f32.mrf.mxu0
    %v7108 = vadd.f32 0.0, %v7107
    %7109 = vmatmul.bf16.gmra.mxu0 %v6666
    %v7110 = vpop.f32.mrf.mxu0
    %v7111 = vadd.f32 0.0, %v7110
    %v7112 = vpop.f32.mrf.mxu0
    %v7113 = vadd.f32 0.0, %v7112
    %7114 = vmatmul.bf16.gmra.mxu0 %v6675
    %v7115 = vpop.f32.mrf.mxu0
    %v7116 = vadd.f32 0.0, %v7115
    %v7117 = vpop.f32.mrf.mxu0
    %v7118 = vadd.f32 0.0, %v7117
    %7119 = vmatmul.bf16.gmra.mxu0 %v6684
    %v7120 = vpop.f32.mrf.mxu0
    %v7121 = vadd.f32 0.0, %v7120
    %v7122 = vpop.f32.mrf.mxu0
    %v7123 = vadd.f32 0.0, %v7122
    %7124 = vmatmul.bf16.gmra.mxu0 %v6683
    %v7125 = vpop.f32.mrf.mxu0
    %v7126 = vadd.f32 0.0, %v7125
    %v7127 = vpop.f32.mrf.mxu0
    %7128 = vdwg.mxu0
    %v7129 = vadd.f32 %v6502, %v6867
    %v7130 = vadd.f32 %v6503, %v6935
    %v7131 = vadd.f32 %v6504, %v7003
    %v7132 = vadd.f32 %v6505, %v7071
    %v7133 = vadd.f32 %v6506, %v6869
    %v7134 = vadd.f32 %v6507, %v6937
    %v7135 = vadd.f32 %v6508, %v7005
    %v7136 = vadd.f32 %v6509, %v7073
    %v7137 = vadd.f32 %v6510, %v6872
    %v7138 = vadd.f32 %v6511, %v6940
    %v7139 = vadd.f32 %v6512, %v7008
    %v7140 = vadd.f32 %v6513, %v7076
    %v7141 = vadd.f32 %v6514, %v6874
    %v7142 = vadd.f32 %v6515, %v6942
    %v7143 = vadd.f32 %v6516, %v7010
    %v7144 = vadd.f32 %v6517, %v7078
    %v7145 = vadd.f32 %v6518, %v6877
    %v7146 = vadd.f32 %v6519, %v6945
    %v7147 = vadd.f32 %v6520, %v7013
    %v7148 = vadd.f32 %v6521, %v7081
    %v7149 = vadd.f32 %v6522, %v6879
    %v7150 = vadd.f32 %v6523, %v6947
    %v7151 = vadd.f32 %v6524, %v7015
    %v7152 = vadd.f32 %v6525, %v7083
    %v7153 = vadd.f32 %v6526, %v6882
    %v7154 = vadd.f32 %v6527, %v6950
    %v7155 = vadd.f32 %v6528, %v7018
    %v7156 = vadd.f32 %v6529, %v7086
    %v7157 = vadd.f32 %v6530, %v6884
    %v7158 = vadd.f32 %v6531, %v6952
    %v7159 = vadd.f32 %v6532, %v7020
    %v7160 = vadd.f32 %v6533, %v7088
    %v7161 = vadd.f32 %v6534, %v6887
    %v7162 = vadd.f32 %v6535, %v6955
    %v7163 = vadd.f32 %v6536, %v7023
    %v7164 = vadd.f32 %v6537, %v7091
    %v7165 = vadd.f32 %v6538, %v6889
    %v7166 = vadd.f32 %v6539, %v6957
    %v7167 = vadd.f32 %v6540, %v7025
    %v7168 = vadd.f32 %v6541, %v7093
    %v7169 = vadd.f32 %v6542, %v6892
    %v7170 = vadd.f32 %v6543, %v6960
    %v7171 = vadd.f32 %v6544, %v7028
    %v7172 = vadd.f32 %v6545, %v7096
    %v7173 = vadd.f32 %v6546, %v6894
    %v7174 = vadd.f32 %v6547, %v6962
    %v7175 = vadd.f32 %v6548, %v7030
    %v7176 = vadd.f32 %v6549, %v7098
    %v7177 = vadd.f32 %v6550, %v6897
    %v7178 = vadd.f32 %v6551, %v6965
    %v7179 = vadd.f32 %v6552, %v7033
    %v7180 = vadd.f32 %v6553, %v7101
    %v7181 = vadd.f32 %v6554, %v6899
    %v7182 = vadd.f32 %v6555, %v6967
    %v7183 = vadd.f32 %v6556, %v7035
    %v7184 = vadd.f32 %v6557, %v7103
    %v7185 = vadd.f32 %v6558, %v6902
    %v7186 = vadd.f32 %v6559, %v6970
    %v7187 = vadd.f32 %v6560, %v7038
    %v7188 = vadd.f32 %v6561, %v7106
    %v7189 = vadd.f32 %v6562, %v6904
    %v7190 = vadd.f32 %v6563, %v6972
    %v7191 = vadd.f32 %v6564, %v7040
    %v7192 = vadd.f32 %v6565, %v7108
    %v7193 = vadd.f32 %v6566, %v6907
    %v7194 = vadd.f32 %v6567, %v6975
    %v7195 = vadd.f32 %v6568, %v7043
    %v7196 = vadd.f32 %v6569, %v7111
    %v7197 = vadd.f32 %v6570, %v6909
    %v7198 = vadd.f32 %v6571, %v6977
    %v7199 = vadd.f32 %v6572, %v7045
    %v7200 = vadd.f32 %v6573, %v7113
    %v7201 = vadd.f32 %v6574, %v6912
    %v7202 = vadd.f32 %v6575, %v6980
    %v7203 = vadd.f32 %v6576, %v7048
    %v7204 = vadd.f32 %v6577, %v7116
    %v7205 = vadd.f32 %v6578, %v6914
    %v7206 = vadd.f32 %v6579, %v6982
    %v7207 = vadd.f32 %v6580, %v7050
    %v7208 = vadd.f32 %v6581, %v7118
    %v7209 = vadd.f32 %v6582, %v6917
    %v7210 = vadd.f32 %v6583, %v6985
    %v7211 = vadd.f32 %v6584, %v7053
    %v7212 = vadd.f32 %v6585, %v7121
    %v7213 = vadd.f32 %v6586, %v6919
    %v7214 = vadd.f32 %v6587, %v6987
    %v7215 = vadd.f32 %v6588, %v7055
    %v7216 = vadd.f32 %v6589, %v7123
    %v7217 = vadd.f32 %v6590, %v6922
    %v7218 = vadd.f32 %v6591, %v6990
    %v7219 = vadd.f32 %v6592, %v7058
    %v7220 = vadd.f32 %v6593, %v7126
    %7221 = vst [vmem:[#allocation2] sm:$0xff] %v7129
    %7222 = vst [vmem:[#allocation2 + $0x8] sm:$0xff] %v7130
    %7223 = vst [vmem:[#allocation2 + $0x10] sm:$0xff] %v7131
    %7224 = vst [vmem:[#allocation2 + $0x18] sm:$0xff] %v7132
    %7225 = vst [vmem:[#allocation2 + $0x20] sm:$0xff] %v7133
    %7226 = vst [vmem:[#allocation2 + $0x28] sm:$0xff] %v7134
    %7227 = vst [vmem:[#allocation2 + $0x30] sm:$0xff] %v7135
    %7228 = vst [vmem:[#allocation2 + $0x38] sm:$0xff] %v7136
    %7229 = vst [vmem:[#allocation2 + $0x40] sm:$0xff] %v7137
    %7230 = vst [vmem:[#allocation2 + $0x48] sm:$0xff] %v7138
    %7231 = vst [vmem:[#allocation2 + $0x50] sm:$0xff] %v7139
    %7232 = vst [vmem:[#allocation2 + $0x58] sm:$0xff] %v7140
    %7233 = vst [vmem:[#allocation2 + $0x60] sm:$0xff] %v7141
    %7234 = vst [vmem:[#allocation2 + $0x68] sm:$0xff] %v7142
    %7235 = vst [vmem:[#allocation2 + $0x70] sm:$0xff] %v7143
    %7236 = vst [vmem:[#allocation2 + $0x78] sm:$0xff] %v7144
    %7237 = vst [vmem:[#allocation2 + $0x80] sm:$0xff] %v7145
    %7238 = vst [vmem:[#allocation2 + $0x88] sm:$0xff] %v7146
    %7239 = vst [vmem:[#allocation2 + $0x90] sm:$0xff] %v7147
    %7240 = vst [vmem:[#allocation2 + $0x98] sm:$0xff] %v7148
    %7241 = vst [vmem:[#allocation2 + $0xa0] sm:$0xff] %v7149
    %7242 = vst [vmem:[#allocation2 + $0xa8] sm:$0xff] %v7150
    %7243 = vst [vmem:[#allocation2 + $0xb0] sm:$0xff] %v7151
    %7244 = vst [vmem:[#allocation2 + $0xb8] sm:$0xff] %v7152
    %7245 = vst [vmem:[#allocation2 + $0xc0] sm:$0xff] %v7153
    %7246 = vst [vmem:[#allocation2 + $0xc8] sm:$0xff] %v7154
    %7247 = vst [vmem:[#allocation2 + $0xd0] sm:$0xff] %v7155
    %7248 = vst [vmem:[#allocation2 + $0xd8] sm:$0xff] %v7156
    %7249 = vst [vmem:[#allocation2 + $0xe0] sm:$0xff] %v7157
    %7250 = vst [vmem:[#allocation2 + $0xe8] sm:$0xff] %v7158
    %7251 = vst [vmem:[#allocation2 + $0xf0] sm:$0xff] %v7159
    %7252 = vst [vmem:[#allocation2 + $0xf8] sm:$0xff] %v7160
    %7253 = vst [vmem:[#allocation2 + $0x100] sm:$0xff] %v7161
    %7254 = vst [vmem:[#allocation2 + $0x108] sm:$0xff] %v7162
    %7255 = vst [vmem:[#allocation2 + $0x110] sm:$0xff] %v7163
    %7256 = vst [vmem:[#allocation2 + $0x118] sm:$0xff] %v7164
    %7257 = vst [vmem:[#allocation2 + $0x120] sm:$0xff] %v7165
    %7258 = vst [vmem:[#allocation2 + $0x128] sm:$0xff] %v7166
    %7259 = vst [vmem:[#allocation2 + $0x130] sm:$0xff] %v7167
    %7260 = vst [vmem:[#allocation2 + $0x138] sm:$0xff] %v7168
    %7261 = vst [vmem:[#allocation2 + $0x140] sm:$0xff] %v7169
    %7262 = vst [vmem:[#allocation2 + $0x148] sm:$0xff] %v7170
    %7263 = vst [vmem:[#allocation2 + $0x150] sm:$0xff] %v7171
    %7264 = vst [vmem:[#allocation2 + $0x158] sm:$0xff] %v7172
    %7265 = vst [vmem:[#allocation2 + $0x160] sm:$0xff] %v7173
    %7266 = vst [vmem:[#allocation2 + $0x168] sm:$0xff] %v7174
    %7267 = vst [vmem:[#allocation2 + $0x170] sm:$0xff] %v7175
    %7268 = vst [vmem:[#allocation2 + $0x178] sm:$0xff] %v7176
    %7269 = vst [vmem:[#allocation2 + $0x180] sm:$0xff] %v7177
    %7270 = vst [vmem:[#allocation2 + $0x188] sm:$0xff] %v7178
    %7271 = vst [vmem:[#allocation2 + $0x190] sm:$0xff] %v7179
    %7272 = vst [vmem:[#allocation2 + $0x198] sm:$0xff] %v7180
    %7273 = vst [vmem:[#allocation2 + $0x1a0] sm:$0xff] %v7181
    %7274 = vst [vmem:[#allocation2 + $0x1a8] sm:$0xff] %v7182
    %7275 = vst [vmem:[#allocation2 + $0x1b0] sm:$0xff] %v7183
    %7276 = vst [vmem:[#allocation2 + $0x1b8] sm:$0xff] %v7184
    %7277 = vst [vmem:[#allocation2 + $0x1c0] sm:$0xff] %v7185
    %7278 = vst [vmem:[#allocation2 + $0x1c8] sm:$0xff] %v7186
    %7279 = vst [vmem:[#allocation2 + $0x1d0] sm:$0xff] %v7187
    %7280 = vst [vmem:[#allocation2 + $0x1d8] sm:$0xff] %v7188
    %7281 = vst [vmem:[#allocation2 + $0x1e0] sm:$0xff] %v7189
    %7282 = vst [vmem:[#allocation2 + $0x1e8] sm:$0xff] %v7190
    %7283 = vst [vmem:[#allocation2 + $0x1f0] sm:$0xff] %v7191
    %7284 = vst [vmem:[#allocation2 + $0x1f8] sm:$0xff] %v7192
    %7285 = vst [vmem:[#allocation2 + $0x200] sm:$0xff] %v7193
    %7286 = vst [vmem:[#allocation2 + $0x208] sm:$0xff] %v7194
    %7287 = vst [vmem:[#allocation2 + $0x210] sm:$0xff] %v7195
    %7288 = vst [vmem:[#allocation2 + $0x218] sm:$0xff] %v7196
    %7289 = vst [vmem:[#allocation2 + $0x220] sm:$0xff] %v7197
    %7290 = vst [vmem:[#allocation2 + $0x228] sm:$0xff] %v7198
    %7291 = vst [vmem:[#allocation2 + $0x230] sm:$0xff] %v7199
    %7292 = vst [vmem:[#allocation2 + $0x238] sm:$0xff] %v7200
    %7293 = vst [vmem:[#allocation2 + $0x240] sm:$0xff] %v7201
    %7294 = vst [vmem:[#allocation2 + $0x248] sm:$0xff] %v7202
    %7295 = vst [vmem:[#allocation2 + $0x250] sm:$0xff] %v7203
    %7296 = vst [vmem:[#allocation2 + $0x258] sm:$0xff] %v7204
    %7297 = vst [vmem:[#allocation2 + $0x260] sm:$0xff] %v7205
    %7298 = vst [vmem:[#allocation2 + $0x268] sm:$0xff] %v7206
    %7299 = vst [vmem:[#allocation2 + $0x270] sm:$0xff] %v7207
    %7300 = vst [vmem:[#allocation2 + $0x278] sm:$0xff] %v7208
    %7301 = vst [vmem:[#allocation2 + $0x280] sm:$0xff] %v7209
    %7302 = vst [vmem:[#allocation2 + $0x288] sm:$0xff] %v7210
    %7303 = vst [vmem:[#allocation2 + $0x290] sm:$0xff] %v7211
    %7304 = vst [vmem:[#allocation2 + $0x298] sm:$0xff] %v7212
    %7305 = vst [vmem:[#allocation2 + $0x2a0] sm:$0xff] %v7213
    %7306 = vst [vmem:[#allocation2 + $0x2a8] sm:$0xff] %v7214
    %7307 = vst [vmem:[#allocation2 + $0x2b0] sm:$0xff] %v7215
    %7308 = vst [vmem:[#allocation2 + $0x2b8] sm:$0xff] %v7216
    %7309 = vst [vmem:[#allocation2 + $0x2c0] sm:$0x3] %v7217
    %7310 = vst [vmem:[#allocation2 + $0x2c8] sm:$0x3] %v7218
    %7311 = vst [vmem:[#allocation2 + $0x2d0] sm:$0x3] %v7219
    %7312 = vst [vmem:[#allocation2 + $0x2d8] sm:$0x3] %v7220
    %v7313 = vld [vmem:[#allocation2] sm:$0xff]
    %v7314 = vld [vmem:[#allocation2 + $0x8] sm:$0xff]
    %v7315 = vld [vmem:[#allocation2 + $0x10] sm:$0xff]
    %v7316 = vld [vmem:[#allocation2 + $0x18] sm:$0xff]
    %v7317 = vld [vmem:[#allocation2 + $0x20] sm:$0xff]
    %v7318 = vld [vmem:[#allocation2 + $0x28] sm:$0xff]
    %v7319 = vld [vmem:[#allocation2 + $0x30] sm:$0xff]
    %v7320 = vld [vmem:[#allocation2 + $0x38] sm:$0xff]
    %v7321 = vld [vmem:[#allocation2 + $0x40] sm:$0xff]
    %v7322 = vld [vmem:[#allocation2 + $0x48] sm:$0xff]
    %v7323 = vld [vmem:[#allocation2 + $0x50] sm:$0xff]
    %v7324 = vld [vmem:[#allocation2 + $0x58] sm:$0xff]
    %v7325 = vld [vmem:[#allocation2 + $0x60] sm:$0xff]
    %v7326 = vld [vmem:[#allocation2 + $0x68] sm:$0xff]
    %v7327 = vld [vmem:[#allocation2 + $0x70] sm:$0xff]
    %v7328 = vld [vmem:[#allocation2 + $0x78] sm:$0xff]
    %v7329 = vld [vmem:[#allocation2 + $0x80] sm:$0xff]
    %v7330 = vld [vmem:[#allocation2 + $0x88] sm:$0xff]
    %v7331 = vld [vmem:[#allocation2 + $0x90] sm:$0xff]
    %v7332 = vld [vmem:[#allocation2 + $0x98] sm:$0xff]
    %v7333 = vld [vmem:[#allocation2 + $0xa0] sm:$0xff]
    %v7334 = vld [vmem:[#allocation2 + $0xa8] sm:$0xff]
    %v7335 = vld [vmem:[#allocation2 + $0xb0] sm:$0xff]
    %v7336 = vld [vmem:[#allocation2 + $0xb8] sm:$0xff]
    %v7337 = vld [vmem:[#allocation2 + $0xc0] sm:$0xff]
    %v7338 = vld [vmem:[#allocation2 + $0xc8] sm:$0xff]
    %v7339 = vld [vmem:[#allocation2 + $0xd0] sm:$0xff]
    %v7340 = vld [vmem:[#allocation2 + $0xd8] sm:$0xff]
    %v7341 = vld [vmem:[#allocation2 + $0xe0] sm:$0xff]
    %v7342 = vld [vmem:[#allocation2 + $0xe8] sm:$0xff]
    %v7343 = vld [vmem:[#allocation2 + $0xf0] sm:$0xff]
    %v7344 = vld [vmem:[#allocation2 + $0xf8] sm:$0xff]
    %v7345 = vld [vmem:[#allocation2 + $0x100] sm:$0xff]
    %v7346 = vld [vmem:[#allocation2 + $0x108] sm:$0xff]
    %v7347 = vld [vmem:[#allocation2 + $0x110] sm:$0xff]
    %v7348 = vld [vmem:[#allocation2 + $0x118] sm:$0xff]
    %v7349 = vld [vmem:[#allocation2 + $0x120] sm:$0xff]
    %v7350 = vld [vmem:[#allocation2 + $0x128] sm:$0xff]
    %v7351 = vld [vmem:[#allocation2 + $0x130] sm:$0xff]
    %v7352 = vld [vmem:[#allocation2 + $0x138] sm:$0xff]
    %v7353 = vld [vmem:[#allocation2 + $0x140] sm:$0xff]
    %v7354 = vld [vmem:[#allocation2 + $0x148] sm:$0xff]
    %v7355 = vld [vmem:[#allocation2 + $0x150] sm:$0xff]
    %v7356 = vld [vmem:[#allocation2 + $0x158] sm:$0xff]
    %v7357 = vld [vmem:[#allocation2 + $0x160] sm:$0xff]
    %v7358 = vld [vmem:[#allocation2 + $0x168] sm:$0xff]
    %v7359 = vld [vmem:[#allocation2 + $0x170] sm:$0xff]
    %v7360 = vld [vmem:[#allocation2 + $0x178] sm:$0xff]
    %v7361 = vld [vmem:[#allocation2 + $0x180] sm:$0xff]
    %v7362 = vld [vmem:[#allocation2 + $0x188] sm:$0xff]
    %v7363 = vld [vmem:[#allocation2 + $0x190] sm:$0xff]
    %v7364 = vld [vmem:[#allocation2 + $0x198] sm:$0xff]
    %v7365 = vld [vmem:[#allocation2 + $0x1a0] sm:$0xff]
    %v7366 = vld [vmem:[#allocation2 + $0x1a8] sm:$0xff]
    %v7367 = vld [vmem:[#allocation2 + $0x1b0] sm:$0xff]
    %v7368 = vld [vmem:[#allocation2 + $0x1b8] sm:$0xff]
    %v7369 = vld [vmem:[#allocation2 + $0x1c0] sm:$0xff]
    %v7370 = vld [vmem:[#allocation2 + $0x1c8] sm:$0xff]
    %v7371 = vld [vmem:[#allocation2 + $0x1d0] sm:$0xff]
    %v7372 = vld [vmem:[#allocation2 + $0x1d8] sm:$0xff]
    %v7373 = vld [vmem:[#allocation2 + $0x1e0] sm:$0xff]
    %v7374 = vld [vmem:[#allocation2 + $0x1e8] sm:$0xff]
    %v7375 = vld [vmem:[#allocation2 + $0x1f0] sm:$0xff]
    %v7376 = vld [vmem:[#allocation2 + $0x1f8] sm:$0xff]
    %v7377 = vld [vmem:[#allocation2 + $0x200] sm:$0xff]
    %v7378 = vld [vmem:[#allocation2 + $0x208] sm:$0xff]
    %v7379 = vld [vmem:[#allocation2 + $0x210] sm:$0xff]
    %v7380 = vld [vmem:[#allocation2 + $0x218] sm:$0xff]
    %v7381 = vld [vmem:[#allocation2 + $0x220] sm:$0xff]
    %v7382 = vld [vmem:[#allocation2 + $0x228] sm:$0xff]
    %v7383 = vld [vmem:[#allocation2 + $0x230] sm:$0xff]
    %v7384 = vld [vmem:[#allocation2 + $0x238] sm:$0xff]
    %v7385 = vld [vmem:[#allocation2 + $0x240] sm:$0xff]
    %v7386 = vld [vmem:[#allocation2 + $0x248] sm:$0xff]
    %v7387 = vld [vmem:[#allocation2 + $0x250] sm:$0xff]
    %v7388 = vld [vmem:[#allocation2 + $0x258] sm:$0xff]
    %v7389 = vld [vmem:[#allocation2 + $0x260] sm:$0xff]
    %v7390 = vld [vmem:[#allocation2 + $0x268] sm:$0xff]
    %v7391 = vld [vmem:[#allocation2 + $0x270] sm:$0xff]
    %v7392 = vld [vmem:[#allocation2 + $0x278] sm:$0xff]
    %v7393 = vld [vmem:[#allocation2 + $0x280] sm:$0xff]
    %v7394 = vld [vmem:[#allocation2 + $0x288] sm:$0xff]
    %v7395 = vld [vmem:[#allocation2 + $0x290] sm:$0xff]
    %v7396 = vld [vmem:[#allocation2 + $0x298] sm:$0xff]
    %v7397 = vld [vmem:[#allocation2 + $0x2a0] sm:$0xff]
    %v7398 = vld [vmem:[#allocation2 + $0x2a8] sm:$0xff]
    %v7399 = vld [vmem:[#allocation2 + $0x2b0] sm:$0xff]
    %v7400 = vld [vmem:[#allocation2 + $0x2b8] sm:$0xff]
    %v7401 = vld [vmem:[#allocation2 + $0x2c0] sm:$0x3]
    %v7402 = vld [vmem:[#allocation2 + $0x2c8] sm:$0x3]
    %v7403 = vld [vmem:[#allocation2 + $0x2d0] sm:$0x3]
    %v7404 = vld [vmem:[#allocation2 + $0x2d8] sm:$0x3]
    %s7405 = scalar_lea.vmem [#allocation6], 2048
    %v7406 = vld [vmem:[%s7405] sm:$0xff]
    %v7407 = vld [vmem:[%s7405 + $0x8] sm:$0xff]
    %v7408 = vld [vmem:[%s7405 + $0x10] sm:$0xff]
    %v7409 = vld [vmem:[%s7405 + $0x18] sm:$0xff]
    %v7410 = vld [vmem:[%s7405 + $0x20] sm:$0xff]
    %v7411 = vld [vmem:[%s7405 + $0x28] sm:$0xff]
    %v7412 = vld [vmem:[%s7405 + $0x30] sm:$0xff]
    %v7413 = vld [vmem:[%s7405 + $0x38] sm:$0xff]
    %v7414 = vld [vmem:[%s7405 + $0x40] sm:$0xff]
    %v7415 = vld [vmem:[%s7405 + $0x48] sm:$0xff]
    %v7416 = vld [vmem:[%s7405 + $0x50] sm:$0xff]
    %v7417 = vld [vmem:[%s7405 + $0x58] sm:$0xff]
    %v7418 = vld [vmem:[%s7405 + $0x60] sm:$0xff]
    %v7419 = vld [vmem:[%s7405 + $0x68] sm:$0xff]
    %v7420 = vld [vmem:[%s7405 + $0x70] sm:$0xff]
    %v7421 = vld [vmem:[%s7405 + $0x78] sm:$0xff]
    %v7422 = vld [vmem:[%s7405 + $0x80] sm:$0xff]
    %v7423 = vld [vmem:[%s7405 + $0x88] sm:$0xff]
    %v7424 = vld [vmem:[%s7405 + $0x90] sm:$0xff]
    %v7425 = vld [vmem:[%s7405 + $0x98] sm:$0xff]
    %v7426 = vld [vmem:[%s7405 + $0xa0] sm:$0xff]
    %v7427 = vld [vmem:[%s7405 + $0xa8] sm:$0xff]
    %v7428 = vld [vmem:[%s7405 + $0xb0] sm:$0xff]
    %v7429 = vld [vmem:[%s7405 + $0xb8] sm:$0xff]
    %v7430 = vld [vmem:[%s7405 + $0xc0] sm:$0xff]
    %v7431 = vld [vmem:[%s7405 + $0xc8] sm:$0xff]
    %v7432 = vld [vmem:[%s7405 + $0xd0] sm:$0xff]
    %v7433 = vld [vmem:[%s7405 + $0xd8] sm:$0xff]
    %v7434 = vld [vmem:[%s7405 + $0xe0] sm:$0xff]
    %v7435 = vld [vmem:[%s7405 + $0xe8] sm:$0xff]
    %v7436 = vld [vmem:[%s7405 + $0xf0] sm:$0xff]
    %v7437 = vld [vmem:[%s7405 + $0xf8] sm:$0xff]
    %vm7438 = vcmask 1044480
    %v7439 = vrot.slane %v1029, 3
    %v7440 = vrot.slane %v1030, 3
    %v7441 = vsel %vm7438, %v7439, %v7440
    %v7442 = vrot.slane %v1031, 3
    %v7443 = vsel %vm7438, %v7440, %v7442
    %v7444 = vrot.slane %v1032, 3
    %v7445 = vsel %vm7438, %v7442, %v7444
    %v7446 = vrot.slane %v1033, 3
    %v7447 = vsel %vm7438, %v7444, %v7446
    %v7448 = vrot.slane %v1034, 3
    %v7449 = vsel %vm7438, %v7446, %v7448
    %v7450 = vrot.slane %v1035, 3
    %v7451 = vsel %vm7438, %v7448, %v7450
    %v7452 = vrot.slane %v1036, 3
    %v7453 = vsel %vm7438, %v7450, %v7452
    %v7454 = vrot.slane %v1037, 3
    %v7455 = vsel %vm7438, %v7452, %v7454
    %v7456 = vrot.slane %v1038, 3
    %v7457 = vsel %vm7438, %v7454, %v7456
    %v7458 = vrot.slane %v5849, 3
    %v7459 = vsel %vm7438, %v7456, %v7458
    %v7460 = vrot.slane %v5850, 3
    %v7461 = vsel %vm7438, %v7458, %v7460
    %v7506 = vunpack.c.l.b16 %v7406
    %v7507 = vunpack.c.h.b16 %v7406
    %v7508 = vunpack.c.l.b16 %v7407
    %v7509 = vunpack.c.h.b16 %v7407
    %v7510 = vunpack.c.l.b16 %v7408
    %v7511 = vunpack.c.h.b16 %v7408
    %v7512 = vunpack.c.l.b16 %v7409
    %v7513 = vunpack.c.h.b16 %v7409
    %v7514 = vunpack.c.l.b16 %v7410
    %v7515 = vunpack.c.h.b16 %v7410
    %v7516 = vunpack.c.l.b16 %v7411
    %v7517 = vunpack.c.h.b16 %v7411
    %v7518 = vunpack.c.l.b16 %v7412
    %v7519 = vunpack.c.h.b16 %v7412
    %v7520 = vunpack.c.l.b16 %v7413
    %v7521 = vunpack.c.h.b16 %v7413
    %v7522 = vunpack.c.l.b16 %v7414
    %v7523 = vunpack.c.h.b16 %v7414
    %v7524 = vunpack.c.l.b16 %v7415
    %v7525 = vunpack.c.h.b16 %v7415
    %v7526 = vunpack.c.l.b16 %v7416
    %v7527 = vunpack.c.h.b16 %v7416
    %v7528 = vunpack.c.l.b16 %v7417
    %v7529 = vunpack.c.h.b16 %v7417
    %v7530 = vunpack.c.l.b16 %v7418
    %v7531 = vunpack.c.h.b16 %v7418
    %v7532 = vunpack.c.l.b16 %v7419
    %v7533 = vunpack.c.h.b16 %v7419
    %v7534 = vunpack.c.l.b16 %v7420
    %v7535 = vunpack.c.h.b16 %v7420
    %v7536 = vunpack.c.l.b16 %v7421
    %v7537 = vunpack.c.h.b16 %v7421
    %v7538 = vunpack.c.l.b16 %v7422
    %v7539 = vunpack.c.h.b16 %v7422
    %v7540 = vunpack.c.l.b16 %v7423
    %v7541 = vunpack.c.h.b16 %v7423
    %v7542 = vunpack.c.l.b16 %v7424
    %v7543 = vunpack.c.h.b16 %v7424
    %v7544 = vunpack.c.l.b16 %v7425
    %v7545 = vunpack.c.h.b16 %v7425
    %v7546 = vunpack.c.l.b16 %v7426
    %v7547 = vunpack.c.h.b16 %v7426
    %v7548 = vunpack.c.l.b16 %v7427
    %v7549 = vunpack.c.h.b16 %v7427
    %v7550 = vunpack.c.l.b16 %v7428
    %v7551 = vunpack.c.h.b16 %v7428
    %v7552 = vunpack.c.l.b16 %v7429
    %v7553 = vunpack.c.h.b16 %v7429
    %v7554 = vunpack.c.l.b16 %v7430
    %v7555 = vunpack.c.h.b16 %v7430
    %v7556 = vunpack.c.l.b16 %v7431
    %v7557 = vunpack.c.h.b16 %v7431
    %v7558 = vunpack.c.l.b16 %v7432
    %v7559 = vunpack.c.h.b16 %v7432
    %v7560 = vunpack.c.l.b16 %v7433
    %v7561 = vunpack.c.h.b16 %v7433
    %v7562 = vunpack.c.l.b16 %v7434
    %v7563 = vunpack.c.h.b16 %v7434
    %v7564 = vunpack.c.l.b16 %v7435
    %v7565 = vunpack.c.h.b16 %v7435
    %v7566 = vunpack.c.l.b16 %v7436
    %v7567 = vunpack.c.h.b16 %v7436
    %v7568 = vunpack.c.l.b16 %v7437
    %v7569 = vunpack.c.h.b16 %v7437
    %v7570 = vpack.c.b16 %v7510, %v7506
    %v7571 = vpack.c.b16 %v7511, %v7507
    %v7572 = vpack.c.b16 %v7512, %v7508
    %v7573 = vpack.c.b16 %v7513, %v7509
    %v7574 = vpack.c.b16 %v7518, %v7514
    %v7575 = vpack.c.b16 %v7519, %v7515
    %v7576 = vpack.c.b16 %v7520, %v7516
    %v7577 = vpack.c.b16 %v7521, %v7517
    %v7578 = vpack.c.b16 %v7526, %v7522
    %v7579 = vpack.c.b16 %v7527, %v7523
    %v7580 = vpack.c.b16 %v7528, %v7524
    %v7581 = vpack.c.b16 %v7529, %v7525
    %v7582 = vpack.c.b16 %v7534, %v7530
    %v7583 = vpack.c.b16 %v7535, %v7531
    %v7584 = vpack.c.b16 %v7536, %v7532
    %v7585 = vpack.c.b16 %v7537, %v7533
    %v7586 = vpack.c.b16 %v7542, %v7538
    %v7587 = vpack.c.b16 %v7543, %v7539
    %v7588 = vpack.c.b16 %v7544, %v7540
    %v7589 = vpack.c.b16 %v7545, %v7541
    %v7590 = vpack.c.b16 %v7550, %v7546
    %v7591 = vpack.c.b16 %v7551, %v7547
    %v7592 = vpack.c.b16 %v7552, %v7548
    %v7593 = vpack.c.b16 %v7553, %v7549
    %v7594 = vpack.c.b16 %v7558, %v7554
    %v7595 = vpack.c.b16 %v7559, %v7555
    %v7596 = vpack.c.b16 %v7560, %v7556
    %v7597 = vpack.c.b16 %v7561, %v7557
    %v7598 = vpack.c.b16 %v7566, %v7562
    %v7599 = vpack.c.b16 %v7567, %v7563
    %v7600 = vpack.c.b16 %v7568, %v7564
    %v7601 = vpack.c.b16 %v7569, %v7565
    %7634 = vmatpush.bf16.msra.mxu0 %v7598
    %7635 = vmatpush.bf16.msra.mxu0 %v7594
    %7636 = vmatpush.bf16.msra.mxu0 %v7590
    %7637 = vmatpush.bf16.msra.mxu0 %v7586
    %7638 = vmatpush.bf16.msra.mxu0 %v7582
    %7639 = vmatpush.bf16.msra.mxu0 %v7578
    %7640 = vmatpush.bf16.msra.mxu0 %v7574
    %7641 = vmatpush.bf16.msra.mxu0 %v7570
    %7642 = vmatmul.bf16.gmra.mxu0 %v7441
    %v7643 = vpop.f32.mrf.mxu0
    %v7644 = vadd.f32 0.0, %v7643
    %v7645 = vpop.f32.mrf.mxu0
    %v7646 = vadd.f32 0.0, %v7645
    %7647 = vmatmul.bf16.gmra.mxu0 %v7443
    %v7648 = vpop.f32.mrf.mxu0
    %v7649 = vadd.f32 0.0, %v7648
    %v7650 = vpop.f32.mrf.mxu0
    %v7651 = vadd.f32 0.0, %v7650
    %7652 = vmatmul.bf16.gmra.mxu0 %v7445
    %v7653 = vpop.f32.mrf.mxu0
    %v7654 = vadd.f32 0.0, %v7653
    %v7655 = vpop.f32.mrf.mxu0
    %v7656 = vadd.f32 0.0, %v7655
    %7657 = vmatmul.bf16.gmra.mxu0 %v7447
    %v7658 = vpop.f32.mrf.mxu0
    %v7659 = vadd.f32 0.0, %v7658
    %v7660 = vpop.f32.mrf.mxu0
    %v7661 = vadd.f32 0.0, %v7660
    %7662 = vmatmul.bf16.gmra.mxu0 %v7449
    %v7663 = vpop.f32.mrf.mxu0
    %v7664 = vadd.f32 0.0, %v7663
    %v7665 = vpop.f32.mrf.mxu0
    %v7666 = vadd.f32 0.0, %v7665
    %7667 = vmatmul.bf16.gmra.mxu0 %v7451
    %v7668 = vpop.f32.mrf.mxu0
    %v7669 = vadd.f32 0.0, %v7668
    %v7670 = vpop.f32.mrf.mxu0
    %v7671 = vadd.f32 0.0, %v7670
    %7672 = vmatmul.bf16.gmra.mxu0 %v7453
    %v7673 = vpop.f32.mrf.mxu0
    %v7674 = vadd.f32 0.0, %v7673
    %v7675 = vpop.f32.mrf.mxu0
    %v7676 = vadd.f32 0.0, %v7675
    %7677 = vmatmul.bf16.gmra.mxu0 %v7455
    %v7678 = vpop.f32.mrf.mxu0
    %v7679 = vadd.f32 0.0, %v7678
    %v7680 = vpop.f32.mrf.mxu0
    %v7681 = vadd.f32 0.0, %v7680
    %7682 = vmatmul.bf16.gmra.mxu0 %v7457
    %v7683 = vpop.f32.mrf.mxu0
    %v7684 = vadd.f32 0.0, %v7683
    %v7685 = vpop.f32.mrf.mxu0
    %v7686 = vadd.f32 0.0, %v7685
    %7687 = vmatmul.bf16.gmra.mxu0 %v7459
    %v7688 = vpop.f32.mrf.mxu0
    %v7689 = vadd.f32 0.0, %v7688
    %v7690 = vpop.f32.mrf.mxu0
    %v7691 = vadd.f32 0.0, %v7690
    %7692 = vmatmul.bf16.gmra.mxu0 %v7461
    %v7693 = vpop.f32.mrf.mxu0
    %v7694 = vadd.f32 0.0, %v7693
    %v7695 = vpop.f32.mrf.mxu0
    %v7696 = vadd.f32 0.0, %v7695
    %7697 = vmatmul.bf16.gmra.mxu0 %v7460
    %v7698 = vpop.f32.mrf.mxu0
    %v7699 = vadd.f32 0.0, %v7698
    %v7700 = vpop.f32.mrf.mxu0
    %7701 = vdwg.mxu0
    %7702 = vmatpush.bf16.msra.mxu0 %v7599
    %7703 = vmatpush.bf16.msra.mxu0 %v7595
    %7704 = vmatpush.bf16.msra.mxu0 %v7591
    %7705 = vmatpush.bf16.msra.mxu0 %v7587
    %7706 = vmatpush.bf16.msra.mxu0 %v7583
    %7707 = vmatpush.bf16.msra.mxu0 %v7579
    %7708 = vmatpush.bf16.msra.mxu0 %v7575
    %7709 = vmatpush.bf16.msra.mxu0 %v7571
    %7710 = vmatmul.bf16.gmra.mxu0 %v7441
    %v7711 = vpop.f32.mrf.mxu0
    %v7712 = vadd.f32 0.0, %v7711
    %v7713 = vpop.f32.mrf.mxu0
    %v7714 = vadd.f32 0.0, %v7713
    %7715 = vmatmul.bf16.gmra.mxu0 %v7443
    %v7716 = vpop.f32.mrf.mxu0
    %v7717 = vadd.f32 0.0, %v7716
    %v7718 = vpop.f32.mrf.mxu0
    %v7719 = vadd.f32 0.0, %v7718
    %7720 = vmatmul.bf16.gmra.mxu0 %v7445
    %v7721 = vpop.f32.mrf.mxu0
    %v7722 = vadd.f32 0.0, %v7721
    %v7723 = vpop.f32.mrf.mxu0
    %v7724 = vadd.f32 0.0, %v7723
    %7725 = vmatmul.bf16.gmra.mxu0 %v7447
    %v7726 = vpop.f32.mrf.mxu0
    %v7727 = vadd.f32 0.0, %v7726
    %v7728 = vpop.f32.mrf.mxu0
    %v7729 = vadd.f32 0.0, %v7728
    %7730 = vmatmul.bf16.gmra.mxu0 %v7449
    %v7731 = vpop.f32.mrf.mxu0
    %v7732 = vadd.f32 0.0, %v7731
    %v7733 = vpop.f32.mrf.mxu0
    %v7734 = vadd.f32 0.0, %v7733
    %7735 = vmatmul.bf16.gmra.mxu0 %v7451
    %v7736 = vpop.f32.mrf.mxu0
    %v7737 = vadd.f32 0.0, %v7736
    %v7738 = vpop.f32.mrf.mxu0
    %v7739 = vadd.f32 0.0, %v7738
    %7740 = vmatmul.bf16.gmra.mxu0 %v7453
    %v7741 = vpop.f32.mrf.mxu0
    %v7742 = vadd.f32 0.0, %v7741
    %v7743 = vpop.f32.mrf.mxu0
    %v7744 = vadd.f32 0.0, %v7743
    %7745 = vmatmul.bf16.gmra.mxu0 %v7455
    %v7746 = vpop.f32.mrf.mxu0
    %v7747 = vadd.f32 0.0, %v7746
    %v7748 = vpop.f32.mrf.mxu0
    %v7749 = vadd.f32 0.0, %v7748
    %7750 = vmatmul.bf16.gmra.mxu0 %v7457
    %v7751 = vpop.f32.mrf.mxu0
    %v7752 = vadd.f32 0.0, %v7751
    %v7753 = vpop.f32.mrf.mxu0
    %v7754 = vadd.f32 0.0, %v7753
    %7755 = vmatmul.bf16.gmra.mxu0 %v7459
    %v7756 = vpop.f32.mrf.mxu0
    %v7757 = vadd.f32 0.0, %v7756
    %v7758 = vpop.f32.mrf.mxu0
    %v7759 = vadd.f32 0.0, %v7758
    %7760 = vmatmul.bf16.gmra.mxu0 %v7461
    %v7761 = vpop.f32.mrf.mxu0
    %v7762 = vadd.f32 0.0, %v7761
    %v7763 = vpop.f32.mrf.mxu0
    %v7764 = vadd.f32 0.0, %v7763
    %7765 = vmatmul.bf16.gmra.mxu0 %v7460
    %v7766 = vpop.f32.mrf.mxu0
    %v7767 = vadd.f32 0.0, %v7766
    %v7768 = vpop.f32.mrf.mxu0
    %7769 = vdwg.mxu0
    %7770 = vmatpush.bf16.msra.mxu0 %v7600
    %7771 = vmatpush.bf16.msra.mxu0 %v7596
    %7772 = vmatpush.bf16.msra.mxu0 %v7592
    %7773 = vmatpush.bf16.msra.mxu0 %v7588
    %7774 = vmatpush.bf16.msra.mxu0 %v7584
    %7775 = vmatpush.bf16.msra.mxu0 %v7580
    %7776 = vmatpush.bf16.msra.mxu0 %v7576
    %7777 = vmatpush.bf16.msra.mxu0 %v7572
    %7778 = vmatmul.bf16.gmra.mxu0 %v7441
    %v7779 = vpop.f32.mrf.mxu0
    %v7780 = vadd.f32 0.0, %v7779
    %v7781 = vpop.f32.mrf.mxu0
    %v7782 = vadd.f32 0.0, %v7781
    %7783 = vmatmul.bf16.gmra.mxu0 %v7443
    %v7784 = vpop.f32.mrf.mxu0
    %v7785 = vadd.f32 0.0, %v7784
    %v7786 = vpop.f32.mrf.mxu0
    %v7787 = vadd.f32 0.0, %v7786
    %7788 = vmatmul.bf16.gmra.mxu0 %v7445
    %v7789 = vpop.f32.mrf.mxu0
    %v7790 = vadd.f32 0.0, %v7789
    %v7791 = vpop.f32.mrf.mxu0
    %v7792 = vadd.f32 0.0, %v7791
    %7793 = vmatmul.bf16.gmra.mxu0 %v7447
    %v7794 = vpop.f32.mrf.mxu0
    %v7795 = vadd.f32 0.0, %v7794
    %v7796 = vpop.f32.mrf.mxu0
    %v7797 = vadd.f32 0.0, %v7796
    %7798 = vmatmul.bf16.gmra.mxu0 %v7449
    %v7799 = vpop.f32.mrf.mxu0
    %v7800 = vadd.f32 0.0, %v7799
    %v7801 = vpop.f32.mrf.mxu0
    %v7802 = vadd.f32 0.0, %v7801
    %7803 = vmatmul.bf16.gmra.mxu0 %v7451
    %v7804 = vpop.f32.mrf.mxu0
    %v7805 = vadd.f32 0.0, %v7804
    %v7806 = vpop.f32.mrf.mxu0
    %v7807 = vadd.f32 0.0, %v7806
    %7808 = vmatmul.bf16.gmra.mxu0 %v7453
    %v7809 = vpop.f32.mrf.mxu0
    %v7810 = vadd.f32 0.0, %v7809
    %v7811 = vpop.f32.mrf.mxu0
    %v7812 = vadd.f32 0.0, %v7811
    %7813 = vmatmul.bf16.gmra.mxu0 %v7455
    %v7814 = vpop.f32.mrf.mxu0
    %v7815 = vadd.f32 0.0, %v7814
    %v7816 = vpop.f32.mrf.mxu0
    %v7817 = vadd.f32 0.0, %v7816
    %7818 = vmatmul.bf16.gmra.mxu0 %v7457
    %v7819 = vpop.f32.mrf.mxu0
    %v7820 = vadd.f32 0.0, %v7819
    %v7821 = vpop.f32.mrf.mxu0
    %v7822 = vadd.f32 0.0, %v7821
    %7823 = vmatmul.bf16.gmra.mxu0 %v7459
    %v7824 = vpop.f32.mrf.mxu0
    %v7825 = vadd.f32 0.0, %v7824
    %v7826 = vpop.f32.mrf.mxu0
    %v7827 = vadd.f32 0.0, %v7826
    %7828 = vmatmul.bf16.gmra.mxu0 %v7461
    %v7829 = vpop.f32.mrf.mxu0
    %v7830 = vadd.f32 0.0, %v7829
    %v7831 = vpop.f32.mrf.mxu0
    %v7832 = vadd.f32 0.0, %v7831
    %7833 = vmatmul.bf16.gmra.mxu0 %v7460
    %v7834 = vpop.f32.mrf.mxu0
    %v7835 = vadd.f32 0.0, %v7834
    %v7836 = vpop.f32.mrf.mxu0
    %7837 = vdwg.mxu0
    %7838 = vmatpush.bf16.msra.mxu0 %v7601
    %7839 = vmatpush.bf16.msra.mxu0 %v7597
    %7840 = vmatpush.bf16.msra.mxu0 %v7593
    %7841 = vmatpush.bf16.msra.mxu0 %v7589
    %7842 = vmatpush.bf16.msra.mxu0 %v7585
    %7843 = vmatpush.bf16.msra.mxu0 %v7581
    %7844 = vmatpush.bf16.msra.mxu0 %v7577
    %7845 = vmatpush.bf16.msra.mxu0 %v7573
    %7846 = vmatmul.bf16.gmra.mxu0 %v7441
    %v7847 = vpop.f32.mrf.mxu0
    %v7848 = vadd.f32 0.0, %v7847
    %v7849 = vpop.f32.mrf.mxu0
    %v7850 = vadd.f32 0.0, %v7849
    %7851 = vmatmul.bf16.gmra.mxu0 %v7443
    %v7852 = vpop.f32.mrf.mxu0
    %v7853 = vadd.f32 0.0, %v7852
    %v7854 = vpop.f32.mrf.mxu0
    %v7855 = vadd.f32 0.0, %v7854
    %7856 = vmatmul.bf16.gmra.mxu0 %v7445
    %v7857 = vpop.f32.mrf.mxu0
    %v7858 = vadd.f32 0.0, %v7857
    %v7859 = vpop.f32.mrf.mxu0
    %v7860 = vadd.f32 0.0, %v7859
    %7861 = vmatmul.bf16.gmra.mxu0 %v7447
    %v7862 = vpop.f32.mrf.mxu0
    %v7863 = vadd.f32 0.0, %v7862
    %v7864 = vpop.f32.mrf.mxu0
    %v7865 = vadd.f32 0.0, %v7864
    %7866 = vmatmul.bf16.gmra.mxu0 %v7449
    %v7867 = vpop.f32.mrf.mxu0
    %v7868 = vadd.f32 0.0, %v7867
    %v7869 = vpop.f32.mrf.mxu0
    %v7870 = vadd.f32 0.0, %v7869
    %7871 = vmatmul.bf16.gmra.mxu0 %v7451
    %v7872 = vpop.f32.mrf.mxu0
    %v7873 = vadd.f32 0.0, %v7872
    %v7874 = vpop.f32.mrf.mxu0
    %v7875 = vadd.f32 0.0, %v7874
    %7876 = vmatmul.bf16.gmra.mxu0 %v7453
    %v7877 = vpop.f32.mrf.mxu0
    %v7878 = vadd.f32 0.0, %v7877
    %v7879 = vpop.f32.mrf.mxu0
    %v7880 = vadd.f32 0.0, %v7879
    %7881 = vmatmul.bf16.gmra.mxu0 %v7455
    %v7882 = vpop.f32.mrf.mxu0
    %v7883 = vadd.f32 0.0, %v7882
    %v7884 = vpop.f32.mrf.mxu0
    %v7885 = vadd.f32 0.0, %v7884
    %7886 = vmatmul.bf16.gmra.mxu0 %v7457
    %v7887 = vpop.f32.mrf.mxu0
    %v7888 = vadd.f32 0.0, %v7887
    %v7889 = vpop.f32.mrf.mxu0
    %v7890 = vadd.f32 0.0, %v7889
    %7891 = vmatmul.bf16.gmra.mxu0 %v7459
    %v7892 = vpop.f32.mrf.mxu0
    %v7893 = vadd.f32 0.0, %v7892
    %v7894 = vpop.f32.mrf.mxu0
    %v7895 = vadd.f32 0.0, %v7894
    %7896 = vmatmul.bf16.gmra.mxu0 %v7461
    %v7897 = vpop.f32.mrf.mxu0
    %v7898 = vadd.f32 0.0, %v7897
    %v7899 = vpop.f32.mrf.mxu0
    %v7900 = vadd.f32 0.0, %v7899
    %7901 = vmatmul.bf16.gmra.mxu0 %v7460
    %v7902 = vpop.f32.mrf.mxu0
    %v7903 = vadd.f32 0.0, %v7902
    %v7904 = vpop.f32.mrf.mxu0
    %7905 = vdwg.mxu0
    %v7906 = vadd.f32 %v7313, %v7644
    %v7907 = vadd.f32 %v7314, %v7712
    %v7908 = vadd.f32 %v7315, %v7780
    %v7909 = vadd.f32 %v7316, %v7848
    %v7910 = vadd.f32 %v7317, %v7646
    %v7911 = vadd.f32 %v7318, %v7714
    %v7912 = vadd.f32 %v7319, %v7782
    %v7913 = vadd.f32 %v7320, %v7850
    %v7914 = vadd.f32 %v7321, %v7649
    %v7915 = vadd.f32 %v7322, %v7717
    %v7916 = vadd.f32 %v7323, %v7785
    %v7917 = vadd.f32 %v7324, %v7853
    %v7918 = vadd.f32 %v7325, %v7651
    %v7919 = vadd.f32 %v7326, %v7719
    %v7920 = vadd.f32 %v7327, %v7787
    %v7921 = vadd.f32 %v7328, %v7855
    %v7922 = vadd.f32 %v7329, %v7654
    %v7923 = vadd.f32 %v7330, %v7722
    %v7924 = vadd.f32 %v7331, %v7790
    %v7925 = vadd.f32 %v7332, %v7858
    %v7926 = vadd.f32 %v7333, %v7656
    %v7927 = vadd.f32 %v7334, %v7724
    %v7928 = vadd.f32 %v7335, %v7792
    %v7929 = vadd.f32 %v7336, %v7860
    %v7930 = vadd.f32 %v7337, %v7659
    %v7931 = vadd.f32 %v7338, %v7727
    %v7932 = vadd.f32 %v7339, %v7795
    %v7933 = vadd.f32 %v7340, %v7863
    %v7934 = vadd.f32 %v7341, %v7661
    %v7935 = vadd.f32 %v7342, %v7729
    %v7936 = vadd.f32 %v7343, %v7797
    %v7937 = vadd.f32 %v7344, %v7865
    %v7938 = vadd.f32 %v7345, %v7664
    %v7939 = vadd.f32 %v7346, %v7732
    %v7940 = vadd.f32 %v7347, %v7800
    %v7941 = vadd.f32 %v7348, %v7868
    %v7942 = vadd.f32 %v7349, %v7666
    %v7943 = vadd.f32 %v7350, %v7734
    %v7944 = vadd.f32 %v7351, %v7802
    %v7945 = vadd.f32 %v7352, %v7870
    %v7946 = vadd.f32 %v7353, %v7669
    %v7947 = vadd.f32 %v7354, %v7737
    %v7948 = vadd.f32 %v7355, %v7805
    %v7949 = vadd.f32 %v7356, %v7873
    %v7950 = vadd.f32 %v7357, %v7671
    %v7951 = vadd.f32 %v7358, %v7739
    %v7952 = vadd.f32 %v7359, %v7807
    %v7953 = vadd.f32 %v7360, %v7875
    %v7954 = vadd.f32 %v7361, %v7674
    %v7955 = vadd.f32 %v7362, %v7742
    %v7956 = vadd.f32 %v7363, %v7810
    %v7957 = vadd.f32 %v7364, %v7878
    %v7958 = vadd.f32 %v7365, %v7676
    %v7959 = vadd.f32 %v7366, %v7744
    %v7960 = vadd.f32 %v7367, %v7812
    %v7961 = vadd.f32 %v7368, %v7880
    %v7962 = vadd.f32 %v7369, %v7679
    %v7963 = vadd.f32 %v7370, %v7747
    %v7964 = vadd.f32 %v7371, %v7815
    %v7965 = vadd.f32 %v7372, %v7883
    %v7966 = vadd.f32 %v7373, %v7681
    %v7967 = vadd.f32 %v7374, %v7749
    %v7968 = vadd.f32 %v7375, %v7817
    %v7969 = vadd.f32 %v7376, %v7885
    %v7970 = vadd.f32 %v7377, %v7684
    %v7971 = vadd.f32 %v7378, %v7752
    %v7972 = vadd.f32 %v7379, %v7820
    %v7973 = vadd.f32 %v7380, %v7888
    %v7974 = vadd.f32 %v7381, %v7686
    %v7975 = vadd.f32 %v7382, %v7754
    %v7976 = vadd.f32 %v7383, %v7822
    %v7977 = vadd.f32 %v7384, %v7890
    %v7978 = vadd.f32 %v7385, %v7689
    %v7979 = vadd.f32 %v7386, %v7757
    %v7980 = vadd.f32 %v7387, %v7825
    %v7981 = vadd.f32 %v7388, %v7893
    %v7982 = vadd.f32 %v7389, %v7691
    %v7983 = vadd.f32 %v7390, %v7759
    %v7984 = vadd.f32 %v7391, %v7827
    %v7985 = vadd.f32 %v7392, %v7895
    %v7986 = vadd.f32 %v7393, %v7694
    %v7987 = vadd.f32 %v7394, %v7762
    %v7988 = vadd.f32 %v7395, %v7830
    %v7989 = vadd.f32 %v7396, %v7898
    %v7990 = vadd.f32 %v7397, %v7696
    %v7991 = vadd.f32 %v7398, %v7764
    %v7992 = vadd.f32 %v7399, %v7832
    %v7993 = vadd.f32 %v7400, %v7900
    %v7994 = vadd.f32 %v7401, %v7699
    %v7995 = vadd.f32 %v7402, %v7767
    %v7996 = vadd.f32 %v7403, %v7835
    %v7997 = vadd.f32 %v7404, %v7903
    %7998 = vst [vmem:[#allocation2] sm:$0xff] %v7906
    %7999 = vst [vmem:[#allocation2 + $0x8] sm:$0xff] %v7907
    %8000 = vst [vmem:[#allocation2 + $0x10] sm:$0xff] %v7908
    %8001 = vst [vmem:[#allocation2 + $0x18] sm:$0xff] %v7909
    %8002 = vst [vmem:[#allocation2 + $0x20] sm:$0xff] %v7910
    %8003 = vst [vmem:[#allocation2 + $0x28] sm:$0xff] %v7911
    %8004 = vst [vmem:[#allocation2 + $0x30] sm:$0xff] %v7912
    %8005 = vst [vmem:[#allocation2 + $0x38] sm:$0xff] %v7913
    %8006 = vst [vmem:[#allocation2 + $0x40] sm:$0xff] %v7914
    %8007 = vst [vmem:[#allocation2 + $0x48] sm:$0xff] %v7915
    %8008 = vst [vmem:[#allocation2 + $0x50] sm:$0xff] %v7916
    %8009 = vst [vmem:[#allocation2 + $0x58] sm:$0xff] %v7917
    %8010 = vst [vmem:[#allocation2 + $0x60] sm:$0xff] %v7918
    %8011 = vst [vmem:[#allocation2 + $0x68] sm:$0xff] %v7919
    %8012 = vst [vmem:[#allocation2 + $0x70] sm:$0xff] %v7920
    %8013 = vst [vmem:[#allocation2 + $0x78] sm:$0xff] %v7921
    %8014 = vst [vmem:[#allocation2 + $0x80] sm:$0xff] %v7922
    %8015 = vst [vmem:[#allocation2 + $0x88] sm:$0xff] %v7923
    %8016 = vst [vmem:[#allocation2 + $0x90] sm:$0xff] %v7924
    %8017 = vst [vmem:[#allocation2 + $0x98] sm:$0xff] %v7925
    %8018 = vst [vmem:[#allocation2 + $0xa0] sm:$0xff] %v7926
    %8019 = vst [vmem:[#allocation2 + $0xa8] sm:$0xff] %v7927
    %8020 = vst [vmem:[#allocation2 + $0xb0] sm:$0xff] %v7928
    %8021 = vst [vmem:[#allocation2 + $0xb8] sm:$0xff] %v7929
    %8022 = vst [vmem:[#allocation2 + $0xc0] sm:$0xff] %v7930
    %8023 = vst [vmem:[#allocation2 + $0xc8] sm:$0xff] %v7931
    %8024 = vst [vmem:[#allocation2 + $0xd0] sm:$0xff] %v7932
    %8025 = vst [vmem:[#allocation2 + $0xd8] sm:$0xff] %v7933
    %8026 = vst [vmem:[#allocation2 + $0xe0] sm:$0xff] %v7934
    %8027 = vst [vmem:[#allocation2 + $0xe8] sm:$0xff] %v7935
    %8028 = vst [vmem:[#allocation2 + $0xf0] sm:$0xff] %v7936
    %8029 = vst [vmem:[#allocation2 + $0xf8] sm:$0xff] %v7937
    %8030 = vst [vmem:[#allocation2 + $0x100] sm:$0xff] %v7938
    %8031 = vst [vmem:[#allocation2 + $0x108] sm:$0xff] %v7939
    %8032 = vst [vmem:[#allocation2 + $0x110] sm:$0xff] %v7940
    %8033 = vst [vmem:[#allocation2 + $0x118] sm:$0xff] %v7941
    %8034 = vst [vmem:[#allocation2 + $0x120] sm:$0xff] %v7942
    %8035 = vst [vmem:[#allocation2 + $0x128] sm:$0xff] %v7943
    %8036 = vst [vmem:[#allocation2 + $0x130] sm:$0xff] %v7944
    %8037 = vst [vmem:[#allocation2 + $0x138] sm:$0xff] %v7945
    %8038 = vst [vmem:[#allocation2 + $0x140] sm:$0xff] %v7946
    %8039 = vst [vmem:[#allocation2 + $0x148] sm:$0xff] %v7947
    %8040 = vst [vmem:[#allocation2 + $0x150] sm:$0xff] %v7948
    %8041 = vst [vmem:[#allocation2 + $0x158] sm:$0xff] %v7949
    %8042 = vst [vmem:[#allocation2 + $0x160] sm:$0xff] %v7950
    %8043 = vst [vmem:[#allocation2 + $0x168] sm:$0xff] %v7951
    %8044 = vst [vmem:[#allocation2 + $0x170] sm:$0xff] %v7952
    %8045 = vst [vmem:[#allocation2 + $0x178] sm:$0xff] %v7953
    %8046 = vst [vmem:[#allocation2 + $0x180] sm:$0xff] %v7954
    %8047 = vst [vmem:[#allocation2 + $0x188] sm:$0xff] %v7955
    %8048 = vst [vmem:[#allocation2 + $0x190] sm:$0xff] %v7956
    %8049 = vst [vmem:[#allocation2 + $0x198] sm:$0xff] %v7957
    %8050 = vst [vmem:[#allocation2 + $0x1a0] sm:$0xff] %v7958
    %8051 = vst [vmem:[#allocation2 + $0x1a8] sm:$0xff] %v7959
    %8052 = vst [vmem:[#allocation2 + $0x1b0] sm:$0xff] %v7960
    %8053 = vst [vmem:[#allocation2 + $0x1b8] sm:$0xff] %v7961
    %8054 = vst [vmem:[#allocation2 + $0x1c0] sm:$0xff] %v7962
    %8055 = vst [vmem:[#allocation2 + $0x1c8] sm:$0xff] %v7963
    %8056 = vst [vmem:[#allocation2 + $0x1d0] sm:$0xff] %v7964
    %8057 = vst [vmem:[#allocation2 + $0x1d8] sm:$0xff] %v7965
    %8058 = vst [vmem:[#allocation2 + $0x1e0] sm:$0xff] %v7966
    %8059 = vst [vmem:[#allocation2 + $0x1e8] sm:$0xff] %v7967
    %8060 = vst [vmem:[#allocation2 + $0x1f0] sm:$0xff] %v7968
    %8061 = vst [vmem:[#allocation2 + $0x1f8] sm:$0xff] %v7969
    %8062 = vst [vmem:[#allocation2 + $0x200] sm:$0xff] %v7970
    %8063 = vst [vmem:[#allocation2 + $0x208] sm:$0xff] %v7971
    %8064 = vst [vmem:[#allocation2 + $0x210] sm:$0xff] %v7972
    %8065 = vst [vmem:[#allocation2 + $0x218] sm:$0xff] %v7973
    %8066 = vst [vmem:[#allocation2 + $0x220] sm:$0xff] %v7974
    %8067 = vst [vmem:[#allocation2 + $0x228] sm:$0xff] %v7975
    %8068 = vst [vmem:[#allocation2 + $0x230] sm:$0xff] %v7976
    %8069 = vst [vmem:[#allocation2 + $0x238] sm:$0xff] %v7977
    %8070 = vst [vmem:[#allocation2 + $0x240] sm:$0xff] %v7978
    %8071 = vst [vmem:[#allocation2 + $0x248] sm:$0xff] %v7979
    %8072 = vst [vmem:[#allocation2 + $0x250] sm:$0xff] %v7980
    %8073 = vst [vmem:[#allocation2 + $0x258] sm:$0xff] %v7981
    %8074 = vst [vmem:[#allocation2 + $0x260] sm:$0xff] %v7982
    %8075 = vst [vmem:[#allocation2 + $0x268] sm:$0xff] %v7983
    %8076 = vst [vmem:[#allocation2 + $0x270] sm:$0xff] %v7984
    %8077 = vst [vmem:[#allocation2 + $0x278] sm:$0xff] %v7985
    %8078 = vst [vmem:[#allocation2 + $0x280] sm:$0xff] %v7986
    %8079 = vst [vmem:[#allocation2 + $0x288] sm:$0xff] %v7987
    %8080 = vst [vmem:[#allocation2 + $0x290] sm:$0xff] %v7988
    %8081 = vst [vmem:[#allocation2 + $0x298] sm:$0xff] %v7989
    %8082 = vst [vmem:[#allocation2 + $0x2a0] sm:$0xff] %v7990
    %8083 = vst [vmem:[#allocation2 + $0x2a8] sm:$0xff] %v7991
    %8084 = vst [vmem:[#allocation2 + $0x2b0] sm:$0xff] %v7992
    %8085 = vst [vmem:[#allocation2 + $0x2b8] sm:$0xff] %v7993
    %8086 = vst [vmem:[#allocation2 + $0x2c0] sm:$0x3] %v7994
    %8087 = vst [vmem:[#allocation2 + $0x2c8] sm:$0x3] %v7995
    %8088 = vst [vmem:[#allocation2 + $0x2d0] sm:$0x3] %v7996
    %8089 = vst [vmem:[#allocation2 + $0x2d8] sm:$0x3] %v7997
    // Predicated region
    $region54: #{tpu_custom_call.1} parent=1 // pred_check
      %p8090 = pneg %p112
    $region55: #{tpu_custom_call.1} parent=1 // pred_check_branch
      %8092 = sbr.rel (%p8090) target = $region57
    $region56: #{tpu_custom_call.1} parent=1 // pred_region
      %v8093 = vld [vmem:[#allocation2] sm:$0xff]
      %v8094 = vld [vmem:[#allocation2 + $0x8] sm:$0xff]
      %v8095 = vld [vmem:[#allocation2 + $0x10] sm:$0xff]
      %v8096 = vld [vmem:[#allocation2 + $0x18] sm:$0xff]
      %v8097 = vld [vmem:[#allocation2 + $0x20] sm:$0xff]
      %v8098 = vld [vmem:[#allocation2 + $0x28] sm:$0xff]
      %v8099 = vld [vmem:[#allocation2 + $0x30] sm:$0xff]
      %v8100 = vld [vmem:[#allocation2 + $0x38] sm:$0xff]
      %v8101 = vld [vmem:[#allocation2 + $0x40] sm:$0xff]
      %v8102 = vld [vmem:[#allocation2 + $0x48] sm:$0xff]
      %v8103 = vld [vmem:[#allocation2 + $0x50] sm:$0xff]
      %v8104 = vld [vmem:[#allocation2 + $0x58] sm:$0xff]
      %v8105 = vld [vmem:[#allocation2 + $0x60] sm:$0xff]
      %v8106 = vld [vmem:[#allocation2 + $0x68] sm:$0xff]
      %v8107 = vld [vmem:[#allocation2 + $0x70] sm:$0xff]
      %v8108 = vld [vmem:[#allocation2 + $0x78] sm:$0xff]
      %v8109 = vld [vmem:[#allocation2 + $0x80] sm:$0xff]
      %v8110 = vld [vmem:[#allocation2 + $0x88] sm:$0xff]
      %v8111 = vld [vmem:[#allocation2 + $0x90] sm:$0xff]
      %v8112 = vld [vmem:[#allocation2 + $0x98] sm:$0xff]
      %v8113 = vld [vmem:[#allocation2 + $0xa0] sm:$0xff]
      %v8114 = vld [vmem:[#allocation2 + $0xa8] sm:$0xff]
      %v8115 = vld [vmem:[#allocation2 + $0xb0] sm:$0xff]
      %v8116 = vld [vmem:[#allocation2 + $0xb8] sm:$0xff]
      %v8117 = vld [vmem:[#allocation2 + $0xc0] sm:$0xff]
      %v8118 = vld [vmem:[#allocation2 + $0xc8] sm:$0xff]
      %v8119 = vld [vmem:[#allocation2 + $0xd0] sm:$0xff]
      %v8120 = vld [vmem:[#allocation2 + $0xd8] sm:$0xff]
      %v8121 = vld [vmem:[#allocation2 + $0xe0] sm:$0xff]
      %v8122 = vld [vmem:[#allocation2 + $0xe8] sm:$0xff]
      %v8123 = vld [vmem:[#allocation2 + $0xf0] sm:$0xff]
      %v8124 = vld [vmem:[#allocation2 + $0xf8] sm:$0xff]
      %v8125 = vld [vmem:[#allocation2 + $0x100] sm:$0xff]
      %v8126 = vld [vmem:[#allocation2 + $0x108] sm:$0xff]
      %v8127 = vld [vmem:[#allocation2 + $0x110] sm:$0xff]
      %v8128 = vld [vmem:[#allocation2 + $0x118] sm:$0xff]
      %v8129 = vld [vmem:[#allocation2 + $0x120] sm:$0xff]
      %v8130 = vld [vmem:[#allocation2 + $0x128] sm:$0xff]
      %v8131 = vld [vmem:[#allocation2 + $0x130] sm:$0xff]
      %v8132 = vld [vmem:[#allocation2 + $0x138] sm:$0xff]
      %v8133 = vld [vmem:[#allocation2 + $0x140] sm:$0xff]
      %v8134 = vld [vmem:[#allocation2 + $0x148] sm:$0xff]
      %v8135 = vld [vmem:[#allocation2 + $0x150] sm:$0xff]
      %v8136 = vld [vmem:[#allocation2 + $0x158] sm:$0xff]
      %v8137 = vld [vmem:[#allocation2 + $0x160] sm:$0xff]
      %v8138 = vld [vmem:[#allocation2 + $0x168] sm:$0xff]
      %v8139 = vld [vmem:[#allocation2 + $0x170] sm:$0xff]
      %v8140 = vld [vmem:[#allocation2 + $0x178] sm:$0xff]
      %v8141 = vld [vmem:[#allocation2 + $0x180] sm:$0xff]
      %v8142 = vld [vmem:[#allocation2 + $0x188] sm:$0xff]
      %v8143 = vld [vmem:[#allocation2 + $0x190] sm:$0xff]
      %v8144 = vld [vmem:[#allocation2 + $0x198] sm:$0xff]
      %v8145 = vld [vmem:[#allocation2 + $0x1a0] sm:$0xff]
      %v8146 = vld [vmem:[#allocation2 + $0x1a8] sm:$0xff]
      %v8147 = vld [vmem:[#allocation2 + $0x1b0] sm:$0xff]
      %v8148 = vld [vmem:[#allocation2 + $0x1b8] sm:$0xff]
      %v8149 = vld [vmem:[#allocation2 + $0x1c0] sm:$0xff]
      %v8150 = vld [vmem:[#allocation2 + $0x1c8] sm:$0xff]
      %v8151 = vld [vmem:[#allocation2 + $0x1d0] sm:$0xff]
      %v8152 = vld [vmem:[#allocation2 + $0x1d8] sm:$0xff]
      %v8153 = vld [vmem:[#allocation2 + $0x1e0] sm:$0xff]
      %v8154 = vld [vmem:[#allocation2 + $0x1e8] sm:$0xff]
      %v8155 = vld [vmem:[#allocation2 + $0x1f0] sm:$0xff]
      %v8156 = vld [vmem:[#allocation2 + $0x1f8] sm:$0xff]
      %v8157 = vld [vmem:[#allocation2 + $0x200] sm:$0xff]
      %v8158 = vld [vmem:[#allocation2 + $0x208] sm:$0xff]
      %v8159 = vld [vmem:[#allocation2 + $0x210] sm:$0xff]
      %v8160 = vld [vmem:[#allocation2 + $0x218] sm:$0xff]
      %v8161 = vld [vmem:[#allocation2 + $0x220] sm:$0xff]
      %v8162 = vld [vmem:[#allocation2 + $0x228] sm:$0xff]
      %v8163 = vld [vmem:[#allocation2 + $0x230] sm:$0xff]
      %v8164 = vld [vmem:[#allocation2 + $0x238] sm:$0xff]
      %v8165 = vld [vmem:[#allocation2 + $0x240] sm:$0xff]
      %v8166 = vld [vmem:[#allocation2 + $0x248] sm:$0xff]
      %v8167 = vld [vmem:[#allocation2 + $0x250] sm:$0xff]
      %v8168 = vld [vmem:[#allocation2 + $0x258] sm:$0xff]
      %v8169 = vld [vmem:[#allocation2 + $0x260] sm:$0xff]
      %v8170 = vld [vmem:[#allocation2 + $0x268] sm:$0xff]
      %v8171 = vld [vmem:[#allocation2 + $0x270] sm:$0xff]
      %v8172 = vld [vmem:[#allocation2 + $0x278] sm:$0xff]
      %v8173 = vld [vmem:[#allocation2 + $0x280] sm:$0xff]
      %v8174 = vld [vmem:[#allocation2 + $0x288] sm:$0xff]
      %v8175 = vld [vmem:[#allocation2 + $0x290] sm:$0xff]
      %v8176 = vld [vmem:[#allocation2 + $0x298] sm:$0xff]
      %v8177 = vld [vmem:[#allocation2 + $0x2a0] sm:$0xff]
      %v8178 = vld [vmem:[#allocation2 + $0x2a8] sm:$0xff]
      %v8179 = vld [vmem:[#allocation2 + $0x2b0] sm:$0xff]
      %v8180 = vld [vmem:[#allocation2 + $0x2b8] sm:$0xff]
      %v8181 = vld [vmem:[#allocation2 + $0x2c0] sm:$0x3]
      %v8182 = vld [vmem:[#allocation2 + $0x2c8] sm:$0x3]
      %v8183 = vld [vmem:[#allocation2 + $0x2d0] sm:$0x3]
      %v8184 = vld [vmem:[#allocation2 + $0x2d8] sm:$0x3]
      %v8185 = vld [vmem:[#allocation8] sm:$0xf]
      %v8187 = vperm.slane %v8185, 0
      %v8188 = vperm.slane %v8185, 1
      %v8189 = vperm.slane %v8185, 2
      %v8190 = vperm.slane %v8185, 3
      %v8195 = vadd.f32 %v8093, %v8187
      %v8196 = vadd.f32 %v8094, %v8188
      %v8197 = vadd.f32 %v8095, %v8189
      %v8198 = vadd.f32 %v8096, %v8190
      %v8199 = vadd.f32 %v8097, %v8187
      %v8200 = vadd.f32 %v8098, %v8188
      %v8201 = vadd.f32 %v8099, %v8189
      %v8202 = vadd.f32 %v8100, %v8190
      %v8203 = vadd.f32 %v8101, %v8187
      %v8204 = vadd.f32 %v8102, %v8188
      %v8205 = vadd.f32 %v8103, %v8189
      %v8206 = vadd.f32 %v8104, %v8190
      %v8207 = vadd.f32 %v8105, %v8187
      %v8208 = vadd.f32 %v8106, %v8188
      %v8209 = vadd.f32 %v8107, %v8189
      %v8210 = vadd.f32 %v8108, %v8190
      %v8211 = vadd.f32 %v8109, %v8187
      %v8212 = vadd.f32 %v8110, %v8188
      %v8213 = vadd.f32 %v8111, %v8189
      %v8214 = vadd.f32 %v8112, %v8190
      %v8215 = vadd.f32 %v8113, %v8187
      %v8216 = vadd.f32 %v8114, %v8188
      %v8217 = vadd.f32 %v8115, %v8189
      %v8218 = vadd.f32 %v8116, %v8190
      %v8219 = vadd.f32 %v8117, %v8187
      %v8220 = vadd.f32 %v8118, %v8188
      %v8221 = vadd.f32 %v8119, %v8189
      %v8222 = vadd.f32 %v8120, %v8190
      %v8223 = vadd.f32 %v8121, %v8187
      %v8224 = vadd.f32 %v8122, %v8188
      %v8225 = vadd.f32 %v8123, %v8189
      %v8226 = vadd.f32 %v8124, %v8190
      %v8227 = vadd.f32 %v8125, %v8187
      %v8228 = vadd.f32 %v8126, %v8188
      %v8229 = vadd.f32 %v8127, %v8189
      %v8230 = vadd.f32 %v8128, %v8190
      %v8231 = vadd.f32 %v8129, %v8187
      %v8232 = vadd.f32 %v8130, %v8188
      %v8233 = vadd.f32 %v8131, %v8189
      %v8234 = vadd.f32 %v8132, %v8190
      %v8235 = vadd.f32 %v8133, %v8187
      %v8236 = vadd.f32 %v8134, %v8188
      %v8237 = vadd.f32 %v8135, %v8189
      %v8238 = vadd.f32 %v8136, %v8190
      %v8239 = vadd.f32 %v8137, %v8187
      %v8240 = vadd.f32 %v8138, %v8188
      %v8241 = vadd.f32 %v8139, %v8189
      %v8242 = vadd.f32 %v8140, %v8190
      %v8243 = vadd.f32 %v8141, %v8187
      %v8244 = vadd.f32 %v8142, %v8188
      %v8245 = vadd.f32 %v8143, %v8189
      %v8246 = vadd.f32 %v8144, %v8190
      %v8247 = vadd.f32 %v8145, %v8187
      %v8248 = vadd.f32 %v8146, %v8188
      %v8249 = vadd.f32 %v8147, %v8189
      %v8250 = vadd.f32 %v8148, %v8190
      %v8251 = vadd.f32 %v8149, %v8187
      %v8252 = vadd.f32 %v8150, %v8188
      %v8253 = vadd.f32 %v8151, %v8189
      %v8254 = vadd.f32 %v8152, %v8190
      %v8255 = vadd.f32 %v8153, %v8187
      %v8256 = vadd.f32 %v8154, %v8188
      %v8257 = vadd.f32 %v8155, %v8189
      %v8258 = vadd.f32 %v8156, %v8190
      %v8259 = vadd.f32 %v8157, %v8187
      %v8260 = vadd.f32 %v8158, %v8188
      %v8261 = vadd.f32 %v8159, %v8189
      %v8262 = vadd.f32 %v8160, %v8190
      %v8263 = vadd.f32 %v8161, %v8187
      %v8264 = vadd.f32 %v8162, %v8188
      %v8265 = vadd.f32 %v8163, %v8189
      %v8266 = vadd.f32 %v8164, %v8190
      %v8267 = vadd.f32 %v8165, %v8187
      %v8268 = vadd.f32 %v8166, %v8188
      %v8269 = vadd.f32 %v8167, %v8189
      %v8270 = vadd.f32 %v8168, %v8190
      %v8271 = vadd.f32 %v8169, %v8187
      %v8272 = vadd.f32 %v8170, %v8188
      %v8273 = vadd.f32 %v8171, %v8189
      %v8274 = vadd.f32 %v8172, %v8190
      %v8275 = vadd.f32 %v8173, %v8187
      %v8276 = vadd.f32 %v8174, %v8188
      %v8277 = vadd.f32 %v8175, %v8189
      %v8278 = vadd.f32 %v8176, %v8190
      %v8279 = vadd.f32 %v8177, %v8187
      %v8280 = vadd.f32 %v8178, %v8188
      %v8281 = vadd.f32 %v8179, %v8189
      %v8282 = vadd.f32 %v8180, %v8190
      %v8283 = vadd.f32 %v8181, %v8187
      %v8284 = vadd.f32 %v8182, %v8188
      %v8285 = vadd.f32 %v8183, %v8189
      %v8286 = vadd.f32 %v8184, %v8190
      %v8287 = vmax.f32 %v8195, 1e-06
      %v8288 = vmax.f32 %v8196, 1e-06
      %v8289 = vmax.f32 %v8197, 1e-06
      %v8290 = vmax.f32 %v8198, 1e-06
      %v8291 = vmax.f32 %v8199, 1e-06
      %v8292 = vmax.f32 %v8200, 1e-06
      %v8293 = vmax.f32 %v8201, 1e-06
      %v8294 = vmax.f32 %v8202, 1e-06
      %v8295 = vmax.f32 %v8203, 1e-06
      %v8296 = vmax.f32 %v8204, 1e-06
      %v8297 = vmax.f32 %v8205, 1e-06
      %v8298 = vmax.f32 %v8206, 1e-06
      %v8299 = vmax.f32 %v8207, 1e-06
      %v8300 = vmax.f32 %v8208, 1e-06
      %v8301 = vmax.f32 %v8209, 1e-06
      %v8302 = vmax.f32 %v8210, 1e-06
      %v8303 = vmax.f32 %v8211, 1e-06
      %v8304 = vmax.f32 %v8212, 1e-06
      %v8305 = vmax.f32 %v8213, 1e-06
      %v8306 = vmax.f32 %v8214, 1e-06
      %v8307 = vmax.f32 %v8215, 1e-06
      %v8308 = vmax.f32 %v8216, 1e-06
      %v8309 = vmax.f32 %v8217, 1e-06
      %v8310 = vmax.f32 %v8218, 1e-06
      %v8311 = vmax.f32 %v8219, 1e-06
      %v8312 = vmax.f32 %v8220, 1e-06
      %v8313 = vmax.f32 %v8221, 1e-06
      %v8314 = vmax.f32 %v8222, 1e-06
      %v8315 = vmax.f32 %v8223, 1e-06
      %v8316 = vmax.f32 %v8224, 1e-06
      %v8317 = vmax.f32 %v8225, 1e-06
      %v8318 = vmax.f32 %v8226, 1e-06
      %v8319 = vmax.f32 %v8227, 1e-06
      %v8320 = vmax.f32 %v8228, 1e-06
      %v8321 = vmax.f32 %v8229, 1e-06
      %v8322 = vmax.f32 %v8230, 1e-06
      %v8323 = vmax.f32 %v8231, 1e-06
      %v8324 = vmax.f32 %v8232, 1e-06
      %v8325 = vmax.f32 %v8233, 1e-06
      %v8326 = vmax.f32 %v8234, 1e-06
      %v8327 = vmax.f32 %v8235, 1e-06
      %v8328 = vmax.f32 %v8236, 1e-06
      %v8329 = vmax.f32 %v8237, 1e-06
      %v8330 = vmax.f32 %v8238, 1e-06
      %v8331 = vmax.f32 %v8239, 1e-06
      %v8332 = vmax.f32 %v8240, 1e-06
      %v8333 = vmax.f32 %v8241, 1e-06
      %v8334 = vmax.f32 %v8242, 1e-06
      %v8335 = vmax.f32 %v8243, 1e-06
      %v8336 = vmax.f32 %v8244, 1e-06
      %v8337 = vmax.f32 %v8245, 1e-06
      %v8338 = vmax.f32 %v8246, 1e-06
      %v8339 = vmax.f32 %v8247, 1e-06
      %v8340 = vmax.f32 %v8248, 1e-06
      %v8341 = vmax.f32 %v8249, 1e-06
      %v8342 = vmax.f32 %v8250, 1e-06
      %v8343 = vmax.f32 %v8251, 1e-06
      %v8344 = vmax.f32 %v8252, 1e-06
      %v8345 = vmax.f32 %v8253, 1e-06
      %v8346 = vmax.f32 %v8254, 1e-06
      %v8347 = vmax.f32 %v8255, 1e-06
      %v8348 = vmax.f32 %v8256, 1e-06
      %v8349 = vmax.f32 %v8257, 1e-06
      %v8350 = vmax.f32 %v8258, 1e-06
      %v8351 = vmax.f32 %v8259, 1e-06
      %v8352 = vmax.f32 %v8260, 1e-06
      %v8353 = vmax.f32 %v8261, 1e-06
      %v8354 = vmax.f32 %v8262, 1e-06
      %v8355 = vmax.f32 %v8263, 1e-06
      %v8356 = vmax.f32 %v8264, 1e-06
      %v8357 = vmax.f32 %v8265, 1e-06
      %v8358 = vmax.f32 %v8266, 1e-06
      %v8359 = vmax.f32 %v8267, 1e-06
      %v8360 = vmax.f32 %v8268, 1e-06
      %v8361 = vmax.f32 %v8269, 1e-06
      %v8362 = vmax.f32 %v8270, 1e-06
      %v8363 = vmax.f32 %v8271, 1e-06
      %v8364 = vmax.f32 %v8272, 1e-06
      %v8365 = vmax.f32 %v8273, 1e-06
      %v8366 = vmax.f32 %v8274, 1e-06
      %v8367 = vmax.f32 %v8275, 1e-06
      %v8368 = vmax.f32 %v8276, 1e-06
      %v8369 = vmax.f32 %v8277, 1e-06
      %v8370 = vmax.f32 %v8278, 1e-06
      %v8371 = vmax.f32 %v8279, 1e-06
      %v8372 = vmax.f32 %v8280, 1e-06
      %v8373 = vmax.f32 %v8281, 1e-06
      %v8374 = vmax.f32 %v8282, 1e-06
      %v8375 = vmax.f32 %v8283, 1e-06
      %v8376 = vmax.f32 %v8284, 1e-06
      %v8377 = vmax.f32 %v8285, 1e-06
      %v8378 = vmax.f32 %v8286, 1e-06
      %v8379 = vmul.f32 %v8287, %v8287
      %v8380 = vmul.f32 %v8288, %v8288
      %v8381 = vmul.f32 %v8289, %v8289
      %v8382 = vmul.f32 %v8290, %v8290
      %v8383 = vmul.f32 %v8291, %v8291
      %v8384 = vmul.f32 %v8292, %v8292
      %v8385 = vmul.f32 %v8293, %v8293
      %v8386 = vmul.f32 %v8294, %v8294
      %v8387 = vmul.f32 %v8295, %v8295
      %v8388 = vmul.f32 %v8296, %v8296
      %v8389 = vmul.f32 %v8297, %v8297
      %v8390 = vmul.f32 %v8298, %v8298
      %v8391 = vmul.f32 %v8299, %v8299
      %v8392 = vmul.f32 %v8300, %v8300
      %v8393 = vmul.f32 %v8301, %v8301
      %v8394 = vmul.f32 %v8302, %v8302
      %v8395 = vmul.f32 %v8303, %v8303
      %v8396 = vmul.f32 %v8304, %v8304
      %v8397 = vmul.f32 %v8305, %v8305
      %v8398 = vmul.f32 %v8306, %v8306
      %v8399 = vmul.f32 %v8307, %v8307
      %v8400 = vmul.f32 %v8308, %v8308
      %v8401 = vmul.f32 %v8309, %v8309
      %v8402 = vmul.f32 %v8310, %v8310
      %v8403 = vmul.f32 %v8311, %v8311
      %v8404 = vmul.f32 %v8312, %v8312
      %v8405 = vmul.f32 %v8313, %v8313
      %v8406 = vmul.f32 %v8314, %v8314
      %v8407 = vmul.f32 %v8315, %v8315
      %v8408 = vmul.f32 %v8316, %v8316
      %v8409 = vmul.f32 %v8317, %v8317
      %v8410 = vmul.f32 %v8318, %v8318
      %v8411 = vmul.f32 %v8319, %v8319
      %v8412 = vmul.f32 %v8320, %v8320
      %v8413 = vmul.f32 %v8321, %v8321
      %v8414 = vmul.f32 %v8322, %v8322
      %v8415 = vmul.f32 %v8323, %v8323
      %v8416 = vmul.f32 %v8324, %v8324
      %v8417 = vmul.f32 %v8325, %v8325
      %v8418 = vmul.f32 %v8326, %v8326
      %v8419 = vmul.f32 %v8327, %v8327
      %v8420 = vmul.f32 %v8328, %v8328
      %v8421 = vmul.f32 %v8329, %v8329
      %v8422 = vmul.f32 %v8330, %v8330
      %v8423 = vmul.f32 %v8331, %v8331
      %v8424 = vmul.f32 %v8332, %v8332
      %v8425 = vmul.f32 %v8333, %v8333
      %v8426 = vmul.f32 %v8334, %v8334
      %v8427 = vmul.f32 %v8335, %v8335
      %v8428 = vmul.f32 %v8336, %v8336
      %v8429 = vmul.f32 %v8337, %v8337
      %v8430 = vmul.f32 %v8338, %v8338
      %v8431 = vmul.f32 %v8339, %v8339
      %v8432 = vmul.f32 %v8340, %v8340
      %v8433 = vmul.f32 %v8341, %v8341
      %v8434 = vmul.f32 %v8342, %v8342
      %v8435 = vmul.f32 %v8343, %v8343
      %v8436 = vmul.f32 %v8344, %v8344
      %v8437 = vmul.f32 %v8345, %v8345
      %v8438 = vmul.f32 %v8346, %v8346
      %v8439 = vmul.f32 %v8347, %v8347
      %v8440 = vmul.f32 %v8348, %v8348
      %v8441 = vmul.f32 %v8349, %v8349
      %v8442 = vmul.f32 %v8350, %v8350
      %v8443 = vmul.f32 %v8351, %v8351
      %v8444 = vmul.f32 %v8352, %v8352
      %v8445 = vmul.f32 %v8353, %v8353
      %v8446 = vmul.f32 %v8354, %v8354
      %v8447 = vmul.f32 %v8355, %v8355
      %v8448 = vmul.f32 %v8356, %v8356
      %v8449 = vmul.f32 %v8357, %v8357
      %v8450 = vmul.f32 %v8358, %v8358
      %v8451 = vmul.f32 %v8359, %v8359
      %v8452 = vmul.f32 %v8360, %v8360
      %v8453 = vmul.f32 %v8361, %v8361
      %v8454 = vmul.f32 %v8362, %v8362
      %v8455 = vmul.f32 %v8363, %v8363
      %v8456 = vmul.f32 %v8364, %v8364
      %v8457 = vmul.f32 %v8365, %v8365
      %v8458 = vmul.f32 %v8366, %v8366
      %v8459 = vmul.f32 %v8367, %v8367
      %v8460 = vmul.f32 %v8368, %v8368
      %v8461 = vmul.f32 %v8369, %v8369
      %v8462 = vmul.f32 %v8370, %v8370
      %v8463 = vmul.f32 %v8371, %v8371
      %v8464 = vmul.f32 %v8372, %v8372
      %v8465 = vmul.f32 %v8373, %v8373
      %v8466 = vmul.f32 %v8374, %v8374
      %v8467 = vmul.f32 %v8375, %v8375
      %v8468 = vmul.f32 %v8376, %v8376
      %v8469 = vmul.f32 %v8377, %v8377
      %v8470 = vmul.f32 %v8378, %v8378
      %v8471 = vmul.f32 %v8379, %v8287
      %v8472 = vmul.f32 %v8380, %v8288
      %v8473 = vmul.f32 %v8381, %v8289
      %v8474 = vmul.f32 %v8382, %v8290
      %v8475 = vmul.f32 %v8383, %v8291
      %v8476 = vmul.f32 %v8384, %v8292
      %v8477 = vmul.f32 %v8385, %v8293
      %v8478 = vmul.f32 %v8386, %v8294
      %v8479 = vmul.f32 %v8387, %v8295
      %v8480 = vmul.f32 %v8388, %v8296
      %v8481 = vmul.f32 %v8389, %v8297
      %v8482 = vmul.f32 %v8390, %v8298
      %v8483 = vmul.f32 %v8391, %v8299
      %v8484 = vmul.f32 %v8392, %v8300
      %v8485 = vmul.f32 %v8393, %v8301
      %v8486 = vmul.f32 %v8394, %v8302
      %v8487 = vmul.f32 %v8395, %v8303
      %v8488 = vmul.f32 %v8396, %v8304
      %v8489 = vmul.f32 %v8397, %v8305
      %v8490 = vmul.f32 %v8398, %v8306
      %v8491 = vmul.f32 %v8399, %v8307
      %v8492 = vmul.f32 %v8400, %v8308
      %v8493 = vmul.f32 %v8401, %v8309
      %v8494 = vmul.f32 %v8402, %v8310
      %v8495 = vmul.f32 %v8403, %v8311
      %v8496 = vmul.f32 %v8404, %v8312
      %v8497 = vmul.f32 %v8405, %v8313
      %v8498 = vmul.f32 %v8406, %v8314
      %v8499 = vmul.f32 %v8407, %v8315
      %v8500 = vmul.f32 %v8408, %v8316
      %v8501 = vmul.f32 %v8409, %v8317
      %v8502 = vmul.f32 %v8410, %v8318
      %v8503 = vmul.f32 %v8411, %v8319
      %v8504 = vmul.f32 %v8412, %v8320
      %v8505 = vmul.f32 %v8413, %v8321
      %v8506 = vmul.f32 %v8414, %v8322
      %v8507 = vmul.f32 %v8415, %v8323
      %v8508 = vmul.f32 %v8416, %v8324
      %v8509 = vmul.f32 %v8417, %v8325
      %v8510 = vmul.f32 %v8418, %v8326
      %v8511 = vmul.f32 %v8419, %v8327
      %v8512 = vmul.f32 %v8420, %v8328
      %v8513 = vmul.f32 %v8421, %v8329
      %v8514 = vmul.f32 %v8422, %v8330
      %v8515 = vmul.f32 %v8423, %v8331
      %v8516 = vmul.f32 %v8424, %v8332
      %v8517 = vmul.f32 %v8425, %v8333
      %v8518 = vmul.f32 %v8426, %v8334
      %v8519 = vmul.f32 %v8427, %v8335
      %v8520 = vmul.f32 %v8428, %v8336
      %v8521 = vmul.f32 %v8429, %v8337
      %v8522 = vmul.f32 %v8430, %v8338
      %v8523 = vmul.f32 %v8431, %v8339
      %v8524 = vmul.f32 %v8432, %v8340
      %v8525 = vmul.f32 %v8433, %v8341
      %v8526 = vmul.f32 %v8434, %v8342
      %v8527 = vmul.f32 %v8435, %v8343
      %v8528 = vmul.f32 %v8436, %v8344
      %v8529 = vmul.f32 %v8437, %v8345
      %v8530 = vmul.f32 %v8438, %v8346
      %v8531 = vmul.f32 %v8439, %v8347
      %v8532 = vmul.f32 %v8440, %v8348
      %v8533 = vmul.f32 %v8441, %v8349
      %v8534 = vmul.f32 %v8442, %v8350
      %v8535 = vmul.f32 %v8443, %v8351
      %v8536 = vmul.f32 %v8444, %v8352
      %v8537 = vmul.f32 %v8445, %v8353
      %v8538 = vmul.f32 %v8446, %v8354
      %v8539 = vmul.f32 %v8447, %v8355
      %v8540 = vmul.f32 %v8448, %v8356
      %v8541 = vmul.f32 %v8449, %v8357
      %v8542 = vmul.f32 %v8450, %v8358
      %v8543 = vmul.f32 %v8451, %v8359
      %v8544 = vmul.f32 %v8452, %v8360
      %v8545 = vmul.f32 %v8453, %v8361
      %v8546 = vmul.f32 %v8454, %v8362
      %v8547 = vmul.f32 %v8455, %v8363
      %v8548 = vmul.f32 %v8456, %v8364
      %v8549 = vmul.f32 %v8457, %v8365
      %v8550 = vmul.f32 %v8458, %v8366
      %v8551 = vmul.f32 %v8459, %v8367
      %v8552 = vmul.f32 %v8460, %v8368
      %v8553 = vmul.f32 %v8461, %v8369
      %v8554 = vmul.f32 %v8462, %v8370
      %v8555 = vmul.f32 %v8463, %v8371
      %v8556 = vmul.f32 %v8464, %v8372
      %v8557 = vmul.f32 %v8465, %v8373
      %v8558 = vmul.f32 %v8466, %v8374
      %v8559 = vmul.f32 %v8467, %v8375
      %v8560 = vmul.f32 %v8468, %v8376
      %v8561 = vmul.f32 %v8469, %v8377
      %v8562 = vmul.f32 %v8470, %v8378
      %v8563 = vld [vmem:[#allocation9] sm:$0xf]
      %8565 = vst [vmem:[#allocation1] ss:$4 sm:$0xff] %v8563
      %v8566 = vld.sshfl [vmem:[#allocation1] sm:$0xff pattern:$0x73625140]
      %v8567 = vld.sshfl [vmem:[#allocation1 + $0x8] sm:$0xff pattern:$0x73625140]
      %vm8569 = vcmask 408576
      %v8570 = vsel %vm8569, %v8567, 0
      %vm8572 = vcmask 1041408
      %v8574 = vsel %vm8572, %v8559, 0
      %v8577 = vsel %vm8572, %v8560, 0
      %v8580 = vsel %vm8572, %v8561, 0
      %v8583 = vsel %vm8572, %v8562, 0
      %8585 = vmatpush.msra.mxu0 %v8531
      %8586 = vmatpush.msra.mxu0 %v8527
      %8587 = vmatpush.msra.mxu0 %v8523
      %8588 = vmatpush.msra.mxu0 %v8519
      %8589 = vmatpush.msra.mxu0 %v8515
      %8590 = vmatpush.msra.mxu0 %v8511
      %8591 = vmatpush.msra.mxu0 %v8507
      %8592 = vmatpush.msra.mxu0 %v8503
      %8593 = vmatpush.msra.mxu0 %v8499
      %8594 = vmatpush.msra.mxu0 %v8495
      %8595 = vmatpush.msra.mxu0 %v8491
      %8596 = vmatpush.msra.mxu0 %v8487
      %8597 = vmatpush.msra.mxu0 %v8483
      %8598 = vmatpush.msra.mxu0 %v8479
      %8599 = vmatpush.msra.mxu0 %v8475
      %8600 = vmatpush.msra.mxu0 %v8471
      %8601 = vmatmul.f32.gmra.mxu0 %v8566
      %v8602 = vpop.f32.mrf.mxu0
      %v8603 = vadd.f32 0.0, %v8602
      %8604 = vdwg.mxu0
      %8605 = vmatpush.msra.mxu0 0.0
      %8606 = vmatpush.msra.mxu0 0.0
      %8607 = vmatpush.msra.mxu0 0.0
      %8608 = vmatpush.msra.mxu0 0.0
      %8609 = vmatpush.msra.mxu0 0.0
      %8610 = vmatpush.msra.mxu0 0.0
      %8611 = vmatpush.msra.mxu0 0.0
      %8612 = vmatpush.msra.mxu0 0.0
      %8613 = vmatpush.msra.mxu0 0.0
      %8614 = vmatpush.msra.mxu0 %v8574
      %8615 = vmatpush.msra.mxu0 %v8555
      %8616 = vmatpush.msra.mxu0 %v8551
      %8617 = vmatpush.msra.mxu0 %v8547
      %8618 = vmatpush.msra.mxu0 %v8543
      %8619 = vmatpush.msra.mxu0 %v8539
      %8620 = vmatpush.msra.mxu0 %v8535
      %8621 = vmatmul.f32.gmra.mxu0 %v8570
      %v8622 = vpop.f32.mrf.mxu0
      %v8623 = vadd.f32 %v8603, %v8622
      %8624 = vdwg.mxu0
      %8625 = vmatpush.msra.mxu0 %v8532
      %8626 = vmatpush.msra.mxu0 %v8528
      %8627 = vmatpush.msra.mxu0 %v8524
      %8628 = vmatpush.msra.mxu0 %v8520
      %8629 = vmatpush.msra.mxu0 %v8516
      %8630 = vmatpush.msra.mxu0 %v8512
      %8631 = vmatpush.msra.mxu0 %v8508
      %8632 = vmatpush.msra.mxu0 %v8504
      %8633 = vmatpush.msra.mxu0 %v8500
      %8634 = vmatpush.msra.mxu0 %v8496
      %8635 = vmatpush.msra.mxu0 %v8492
      %8636 = vmatpush.msra.mxu0 %v8488
      %8637 = vmatpush.msra.mxu0 %v8484
      %8638 = vmatpush.msra.mxu0 %v8480
      %8639 = vmatpush.msra.mxu0 %v8476
      %8640 = vmatpush.msra.mxu0 %v8472
      %8641 = vmatmul.f32.gmra.mxu0 %v8566
      %v8642 = vpop.f32.mrf.mxu0
      %v8643 = vadd.f32 0.0, %v8642
      %8644 = vdwg.mxu0
      %8645 = vmatpush.msra.mxu0 0.0
      %8646 = vmatpush.msra.mxu0 0.0
      %8647 = vmatpush.msra.mxu0 0.0
      %8648 = vmatpush.msra.mxu0 0.0
      %8649 = vmatpush.msra.mxu0 0.0
      %8650 = vmatpush.msra.mxu0 0.0
      %8651 = vmatpush.msra.mxu0 0.0
      %8652 = vmatpush.msra.mxu0 0.0
      %8653 = vmatpush.msra.mxu0 0.0
      %8654 = vmatpush.msra.mxu0 %v8577
      %8655 = vmatpush.msra.mxu0 %v8556
      %8656 = vmatpush.msra.mxu0 %v8552
      %8657 = vmatpush.msra.mxu0 %v8548
      %8658 = vmatpush.msra.mxu0 %v8544
      %8659 = vmatpush.msra.mxu0 %v8540
      %8660 = vmatpush.msra.mxu0 %v8536
      %8661 = vmatmul.f32.gmra.mxu0 %v8570
      %v8662 = vpop.f32.mrf.mxu0
      %v8663 = vadd.f32 %v8643, %v8662
      %8664 = vdwg.mxu0
      %8665 = vmatpush.msra.mxu0 %v8533
      %8666 = vmatpush.msra.mxu0 %v8529
      %8667 = vmatpush.msra.mxu0 %v8525
      %8668 = vmatpush.msra.mxu0 %v8521
      %8669 = vmatpush.msra.mxu0 %v8517
      %8670 = vmatpush.msra.mxu0 %v8513
      %8671 = vmatpush.msra.mxu0 %v8509
      %8672 = vmatpush.msra.mxu0 %v8505
      %8673 = vmatpush.msra.mxu0 %v8501
      %8674 = vmatpush.msra.mxu0 %v8497
      %8675 = vmatpush.msra.mxu0 %v8493
      %8676 = vmatpush.msra.mxu0 %v8489
      %8677 = vmatpush.msra.mxu0 %v8485
      %8678 = vmatpush.msra.mxu0 %v8481
      %8679 = vmatpush.msra.mxu0 %v8477
      %8680 = vmatpush.msra.mxu0 %v8473
      %8681 = vmatmul.f32.gmra.mxu0 %v8566
      %v8682 = vpop.f32.mrf.mxu0
      %v8683 = vadd.f32 0.0, %v8682
      %8684 = vdwg.mxu0
      %8685 = vmatpush.msra.mxu0 0.0
      %8686 = vmatpush.msra.mxu0 0.0
      %8687 = vmatpush.msra.mxu0 0.0
      %8688 = vmatpush.msra.mxu0 0.0
      %8689 = vmatpush.msra.mxu0 0.0
      %8690 = vmatpush.msra.mxu0 0.0
      %8691 = vmatpush.msra.mxu0 0.0
      %8692 = vmatpush.msra.mxu0 0.0
      %8693 = vmatpush.msra.mxu0 0.0
      %8694 = vmatpush.msra.mxu0 %v8580
      %8695 = vmatpush.msra.mxu0 %v8557
      %8696 = vmatpush.msra.mxu0 %v8553
      %8697 = vmatpush.msra.mxu0 %v8549
      %8698 = vmatpush.msra.mxu0 %v8545
      %8699 = vmatpush.msra.mxu0 %v8541
      %8700 = vmatpush.msra.mxu0 %v8537
      %8701 = vmatmul.f32.gmra.mxu0 %v8570
      %v8702 = vpop.f32.mrf.mxu0
      %v8703 = vadd.f32 %v8683, %v8702
      %8704 = vdwg.mxu0
      %8705 = vmatpush.msra.mxu0 %v8534
      %8706 = vmatpush.msra.mxu0 %v8530
      %8707 = vmatpush.msra.mxu0 %v8526
      %8708 = vmatpush.msra.mxu0 %v8522
      %8709 = vmatpush.msra.mxu0 %v8518
      %8710 = vmatpush.msra.mxu0 %v8514
      %8711 = vmatpush.msra.mxu0 %v8510
      %8712 = vmatpush.msra.mxu0 %v8506
      %8713 = vmatpush.msra.mxu0 %v8502
      %8714 = vmatpush.msra.mxu0 %v8498
      %8715 = vmatpush.msra.mxu0 %v8494
      %8716 = vmatpush.msra.mxu0 %v8490
      %8717 = vmatpush.msra.mxu0 %v8486
      %8718 = vmatpush.msra.mxu0 %v8482
      %8719 = vmatpush.msra.mxu0 %v8478
      %8720 = vmatpush.msra.mxu0 %v8474
      %8721 = vmatmul.f32.gmra.mxu0 %v8566
      %v8722 = vpop.f32.mrf.mxu0
      %v8723 = vadd.f32 0.0, %v8722
      %8724 = vdwg.mxu0
      %8725 = vmatpush.msra.mxu0 0.0
      %8726 = vmatpush.msra.mxu0 0.0
      %8727 = vmatpush.msra.mxu0 0.0
      %8728 = vmatpush.msra.mxu0 0.0
      %8729 = vmatpush.msra.mxu0 0.0
      %8730 = vmatpush.msra.mxu0 0.0
      %8731 = vmatpush.msra.mxu0 0.0
      %8732 = vmatpush.msra.mxu0 0.0
      %8733 = vmatpush.msra.mxu0 0.0
      %8734 = vmatpush.msra.mxu0 %v8583
      %8735 = vmatpush.msra.mxu0 %v8558
      %8736 = vmatpush.msra.mxu0 %v8554
      %8737 = vmatpush.msra.mxu0 %v8550
      %8738 = vmatpush.msra.mxu0 %v8546
      %8739 = vmatpush.msra.mxu0 %v8542
      %8740 = vmatpush.msra.mxu0 %v8538
      %8741 = vmatmul.f32.gmra.mxu0 %v8570
      %v8742 = vpop.f32.mrf.mxu0
      %v8743 = vadd.f32 %v8723, %v8742
      %8744 = vdwg.mxu0
      %v8745 = vlog2.pop %v8623
      %v8746 = vmul.f32 %v8745, 0.6931472
      %v8747 = vlog2.pop %v8663
      %v8748 = vmul.f32 %v8747, 0.6931472
      %v8749 = vlog2.pop %v8703
      %v8750 = vmul.f32 %v8749, 0.6931472
      %v8751 = vlog2.pop %v8743
      %v8752 = vmul.f32 %v8751, 0.6931472
      %v8753 = vmul.f32 %v8746, 0.33333334
      %v8754 = vmul.f32 %v8748, 0.33333334
      %v8755 = vmul.f32 %v8750, 0.33333334
      %v8756 = vmul.f32 %v8752, 0.33333334
      %v8757 = vmul.f32 %v8753, 1.442695
      %v8758 = vpow.pop %v8757
      %v8759 = vmul.f32 %v8754, 1.442695
      %v8760 = vpow.pop %v8759
      %v8761 = vmul.f32 %v8755, 1.442695
      %v8762 = vpow.pop %v8761
      %v8763 = vmul.f32 %v8756, 1.442695
      %v8764 = vpow.pop %v8763
      %v8765 = vld [vmem:[#allocation11] sm:$0xff]
      %v8766 = vld [vmem:[#allocation11 + $0x8] sm:$0xff]
      %v8767 = vld [vmem:[#allocation11 + $0x10] sm:$0xff]
      %v8768 = vld [vmem:[#allocation11 + $0x18] sm:$0xff]
      %v8769 = vld [vmem:[#allocation11 + $0x20] sm:$0xff]
      %v8770 = vld [vmem:[#allocation11 + $0x28] sm:$0xff]
      %v8771 = vld [vmem:[#allocation11 + $0x30] sm:$0xff]
      %v8772 = vld [vmem:[#allocation11 + $0x38] sm:$0xff]
      %v8773 = vld [vmem:[#allocation11 + $0x40] sm:$0xff]
      %v8774 = vld [vmem:[#allocation11 + $0x48] sm:$0xff]
      %v8775 = vld [vmem:[#allocation11 + $0x50] sm:$0xff]
      %v8776 = vld [vmem:[#allocation11 + $0x58] sm:$0xff]
      %v8777 = vld [vmem:[#allocation11 + $0x60] sm:$0xff]
      %v8778 = vld [vmem:[#allocation11 + $0x68] sm:$0xff]
      %v8779 = vld [vmem:[#allocation11 + $0x70] sm:$0xff]
      %v8780 = vld [vmem:[#allocation11 + $0x78] sm:$0xff]
      %v8781 = vld [vmem:[#allocation11 + $0x80] sm:$0xff]
      %v8782 = vld [vmem:[#allocation11 + $0x88] sm:$0xff]
      %v8783 = vld [vmem:[#allocation11 + $0x90] sm:$0xff]
      %v8784 = vld [vmem:[#allocation11 + $0x98] sm:$0xff]
      %v8785 = vld [vmem:[#allocation11 + $0xa0] sm:$0xff]
      %v8786 = vld [vmem:[#allocation11 + $0xa8] sm:$0xff]
      %v8787 = vld [vmem:[#allocation11 + $0xb0] sm:$0xff]
      %v8788 = vld [vmem:[#allocation11 + $0xb8] sm:$0xff]
      %v8789 = vld [vmem:[#allocation11 + $0xc0] sm:$0xff]
      %v8790 = vld [vmem:[#allocation11 + $0xc8] sm:$0xff]
      %v8791 = vld [vmem:[#allocation11 + $0xd0] sm:$0xff]
      %v8792 = vld [vmem:[#allocation11 + $0xd8] sm:$0xff]
      %v8793 = vld [vmem:[#allocation11 + $0xe0] sm:$0xff]
      %v8794 = vld [vmem:[#allocation11 + $0xe8] sm:$0xff]
      %v8795 = vld [vmem:[#allocation11 + $0xf0] sm:$0xff]
      %v8796 = vld [vmem:[#allocation11 + $0xf8] sm:$0xff]
      %v8797 = vld [vmem:[#allocation11 + $0x100] sm:$0xff]
      %v8798 = vld [vmem:[#allocation11 + $0x108] sm:$0xff]
      %v8799 = vld [vmem:[#allocation11 + $0x110] sm:$0xff]
      %v8800 = vld [vmem:[#allocation11 + $0x118] sm:$0xff]
      %v8801 = vld [vmem:[#allocation11 + $0x120] sm:$0xff]
      %v8802 = vld [vmem:[#allocation11 + $0x128] sm:$0xff]
      %v8803 = vld [vmem:[#allocation11 + $0x130] sm:$0xff]
      %v8804 = vld [vmem:[#allocation11 + $0x138] sm:$0xff]
      %v8805 = vld [vmem:[#allocation11 + $0x140] sm:$0xff]
      %v8806 = vld [vmem:[#allocation11 + $0x148] sm:$0xff]
      %v8807 = vld [vmem:[#allocation11 + $0x150] sm:$0xff]
      %v8808 = vld [vmem:[#allocation11 + $0x158] sm:$0xff]
      %v8809 = vld [vmem:[#allocation11 + $0x160] sm:$0xff]
      %v8810 = vld [vmem:[#allocation11 + $0x168] sm:$0xff]
      %v8811 = vld [vmem:[#allocation11 + $0x170] sm:$0xff]
      %v8812 = vld [vmem:[#allocation11 + $0x178] sm:$0xff]
      %v8813 = vld [vmem:[#allocation11 + $0x180] sm:$0xff]
      %v8814 = vld [vmem:[#allocation11 + $0x188] sm:$0xff]
      %v8815 = vld [vmem:[#allocation11 + $0x190] sm:$0xff]
      %v8816 = vld [vmem:[#allocation11 + $0x198] sm:$0xff]
      %v8817 = vld [vmem:[#allocation11 + $0x1a0] sm:$0xff]
      %v8818 = vld [vmem:[#allocation11 + $0x1a8] sm:$0xff]
      %v8819 = vld [vmem:[#allocation11 + $0x1b0] sm:$0xff]
      %v8820 = vld [vmem:[#allocation11 + $0x1b8] sm:$0xff]
      %v8821 = vld [vmem:[#allocation11 + $0x1c0] sm:$0xff]
      %v8822 = vld [vmem:[#allocation11 + $0x1c8] sm:$0xff]
      %v8823 = vld [vmem:[#allocation11 + $0x1d0] sm:$0xff]
      %v8824 = vld [vmem:[#allocation11 + $0x1d8] sm:$0xff]
      %v8825 = vld [vmem:[#allocation11 + $0x1e0] sm:$0xff]
      %v8826 = vld [vmem:[#allocation11 + $0x1e8] sm:$0xff]
      %v8827 = vld [vmem:[#allocation11 + $0x1f0] sm:$0xff]
      %v8828 = vld [vmem:[#allocation11 + $0x1f8] sm:$0xff]
      %v8829 = vld [vmem:[#allocation12] sm:$0x1]
      %v8831 = vperm.slane %v8829, 0
      %8833 = vmatpush.msra.mxu0 %v8780
      %8834 = vmatpush.msra.mxu0 %v8779
      %8835 = vmatpush.msra.mxu0 %v8778
      %8836 = vmatpush.msra.mxu0 %v8777
      %8837 = vmatpush.msra.mxu0 %v8776
      %8838 = vmatpush.msra.mxu0 %v8775
      %8839 = vmatpush.msra.mxu0 %v8774
      %8840 = vmatpush.msra.mxu0 %v8773
      %8841 = vmatpush.msra.mxu0 %v8772
      %8842 = vmatpush.msra.mxu0 %v8771
      %8843 = vmatpush.msra.mxu0 %v8770
      %8844 = vmatpush.msra.mxu0 %v8769
      %8845 = vmatpush.msra.mxu0 %v8768
      %8846 = vmatpush.msra.mxu0 %v8767
      %8847 = vmatpush.msra.mxu0 %v8766
      %8848 = vmatpush.msra.mxu0 %v8765
      %8849 = vmatmul.f32.gmra.mxu0 %v8758
      %v8850 = vpop.f32.mrf.mxu0
      %v8851 = vadd.f32 %v8831, %v8850
      %8852 = vdwg.mxu0
      %8853 = vmatpush.msra.mxu0 %v8796
      %8854 = vmatpush.msra.mxu0 %v8795
      %8855 = vmatpush.msra.mxu0 %v8794
      %8856 = vmatpush.msra.mxu0 %v8793
      %8857 = vmatpush.msra.mxu0 %v8792
      %8858 = vmatpush.msra.mxu0 %v8791
      %8859 = vmatpush.msra.mxu0 %v8790
      %8860 = vmatpush.msra.mxu0 %v8789
      %8861 = vmatpush.msra.mxu0 %v8788
      %8862 = vmatpush.msra.mxu0 %v8787
      %8863 = vmatpush.msra.mxu0 %v8786
      %8864 = vmatpush.msra.mxu0 %v8785
      %8865 = vmatpush.msra.mxu0 %v8784
      %8866 = vmatpush.msra.mxu0 %v8783
      %8867 = vmatpush.msra.mxu0 %v8782
      %8868 = vmatpush.msra.mxu0 %v8781
      %8869 = vmatmul.f32.gmra.mxu0 %v8760
      %v8870 = vpop.f32.mrf.mxu0
      %v8871 = vadd.f32 %v8851, %v8870
      %8872 = vdwg.mxu0
      %8873 = vmatpush.msra.mxu0 %v8812
      %8874 = vmatpush.msra.mxu0 %v8811
      %8875 = vmatpush.msra.mxu0 %v8810
      %8876 = vmatpush.msra.mxu0 %v8809
      %8877 = vmatpush.msra.mxu0 %v8808
      %8878 = vmatpush.msra.mxu0 %v8807
      %8879 = vmatpush.msra.mxu0 %v8806
      %8880 = vmatpush.msra.mxu0 %v8805
      %8881 = vmatpush.msra.mxu0 %v8804
      %8882 = vmatpush.msra.mxu0 %v8803
      %8883 = vmatpush.msra.mxu0 %v8802
      %8884 = vmatpush.msra.mxu0 %v8801
      %8885 = vmatpush.msra.mxu0 %v8800
      %8886 = vmatpush.msra.mxu0 %v8799
      %8887 = vmatpush.msra.mxu0 %v8798
      %8888 = vmatpush.msra.mxu0 %v8797
      %8889 = vmatmul.f32.gmra.mxu0 %v8762
      %v8890 = vpop.f32.mrf.mxu0
      %v8891 = vadd.f32 %v8871, %v8890
      %8892 = vdwg.mxu0
      %8893 = vmatpush.msra.mxu0 %v8828
      %8894 = vmatpush.msra.mxu0 %v8827
      %8895 = vmatpush.msra.mxu0 %v8826
      %8896 = vmatpush.msra.mxu0 %v8825
      %8897 = vmatpush.msra.mxu0 %v8824
      %8898 = vmatpush.msra.mxu0 %v8823
      %8899 = vmatpush.msra.mxu0 %v8822
      %8900 = vmatpush.msra.mxu0 %v8821
      %8901 = vmatpush.msra.mxu0 %v8820
      %8902 = vmatpush.msra.mxu0 %v8819
      %8903 = vmatpush.msra.mxu0 %v8818
      %8904 = vmatpush.msra.mxu0 %v8817
      %8905 = vmatpush.msra.mxu0 %v8816
      %8906 = vmatpush.msra.mxu0 %v8815
      %8907 = vmatpush.msra.mxu0 %v8814
      %8908 = vmatpush.msra.mxu0 %v8813
      %8909 = vmatmul.f32.gmra.mxu0 %v8764
      %v8910 = vpop.f32.mrf.mxu0
      %v8911 = vadd.f32 %v8891, %v8910
      %8912 = vdwg.mxu0
      %8913 = vst [vmem:[#allocation14] sm:$0x3] %v8911
    $region57: #{tpu_custom_call.1} parent=1 // pred_fallthru
      _
    // Predicated region
    $region58: #{tpu_custom_call.1} parent=1 // pred_check
      _
    $region59: #{tpu_custom_call.1} parent=1 // pred_check_branch
      %8915 = sbr.rel (0) target = $region61
    $region60: #{tpu_custom_call.1} parent=1 // pred_region
      %8917 = vsyncadd [#allocation5], 0
      %s8919 = sshll.u32 [#allocation14], 4
      %s8920 = int_to_ptr.vmem [resolvable:$true] %s8919
      %s8921 = sshll.u32 %s6, 4
      %s8922 = int_to_ptr.hbm [resolvable:$true] %s8921
      %8924 = dma.vmem_to_hbm [thread:$0]  %s8920, 32, %s8922, [#allocation5]
    $region61: #{tpu_custom_call.1} parent=1 // pred_fallthru
      _
    // Predicated region
    $region62: #{tpu_custom_call.1} parent=1 // pred_check
      _
    $region63: #{tpu_custom_call.1} parent=1 // pred_check_branch
      %8926 = sbr.rel (0) target = $region65
    $region64: #{tpu_custom_call.1} parent=1 // pred_region
      %8928 = dma.done [#allocation5], 32
    $region65: #{tpu_custom_call.1} parent=1 // pred_fallthru
      _
    %8929 = vsyncpa [#allocation4], 1
    %8930 = vsyncpa [#allocation7], 1
    %8931 = vsyncpa [#allocation10], 1
    %8932 = vsyncpa [#allocation13], 1
    %8933 = vsyncpa [#allocation5], 1

</llo_original>
